<compile_context>
chip_gen: v6e
topology: v6e:2x2x1
jax: 0.10.0
libtpu: 0.0.40
codegen_flags: <defaults>
</compile_context>

<pallas_src>
import jax
import jax.numpy as jnp
import numpy as np
from jax.experimental import pallas as pl
from jax.experimental.pallas import tpu as pltpu

# ----------------------------------------------------------------------------
# Small, module-consistent configuration
# (real Karel: GRID_SIZE=(15,18,18), channels=64, e=512, history_length=10)
# ----------------------------------------------------------------------------
GRID_SIZE = (4, 8, 8)          # (C, H, W)
CHANNELS = 8                   # conv-encoder embedding size ("channels")
E = 32                         # output embedding size ("e")
HISTORY_LENGTH = 4
NUM_TOKENS = 10                # len(TOKENS)
VOCAB = NUM_TOKENS + 1         # nn.Embedding(len(TOKENS)+1, e)

C, H, W = GRID_SIZE
FLAT = CHANNELS * H * W        # project in_features = channels*GRID_SIZE[1]*GRID_SIZE[2]
TN = 8                         # I/O pairs per grid step in Kernel A (multiple of 8)
TK = 256                       # K-tile of the projection in Kernel B


# ----------------------------------------------------------------------------
# Kernel A: fused conv3x3+ReLU -> conv3x3+ReLU
#   9 accumulating bf16 matmuls per conv, halo-only scratch zeroing,
#   lane-dense transposed bf16 output.
# ----------------------------------------------------------------------------
def _conv_stack_kernel(x_ref, w1_ref, b1_ref, w2_ref, b2_ref, out_ref,
                       h1pad_ref):
    tn, hpad, wpad, c2 = x_ref.shape
    h, w = hpad - 2, wpad - 2
    ch = w2_ref.shape[2]
    m = tn * h * w

    # Zero ONLY the 1-pixel halo of the h1 scratch each step (interior is fully
    # overwritten below).  Do NOT guard this with program_id()==0: the grid axis
    # is megacore-parallel, so the second core never executes step 0.
    h1pad_ref[:, 0:1, :, :] = jnp.zeros((tn, 1, wpad, ch), jnp.float32)
    h1pad_ref[:, h + 1:h + 2, :, :] = jnp.zeros((tn, 1, wpad, ch), jnp.float32)
    h1pad_ref[:, :, 0:1, :] = jnp.zeros((tn, hpad, 1, ch), jnp.float32)
    h1pad_ref[:, :, w + 1:w + 2, :] = jnp.zeros((tn, hpad, 1, ch), jnp.float32)

    def conv3x3_relu(src_ref, k_in, w9_ref, b_ref):
        # 3x3 'same' conv as 9 accumulating (m, k_in) @ (k_in, ch) matmuls into
        # one f32 accumulator: no 9-way lane concat, no (m, 9*k_in) im2col
        # buffer (this kernel is copy-bound, not MXU-bound, at these widths).
        # Matmul operands bf16; accumulation and bias/ReLU stay f32.
        acc = None
        for i in range(9):
            dy, dx = divmod(i, 3)
            win = src_ref[:, dy:dy + h, dx:dx + w, :].reshape(m, k_in)
            part = jnp.dot(win.astype(jnp.bfloat16), w9_ref[i],
                           preferred_element_type=jnp.float32)
            acc = part if acc is None else acc + part
        return jnp.maximum(acc + b_ref[...], 0.0)            # (m, ch) f32

    h1 = conv3x3_relu(x_ref, c2, w1_ref, b1_ref)             # (m, ch)
    h1pad_ref[:, 1:h + 1, 1:w + 1, :] = h1.reshape(tn, h, w, ch)
    h2 = conv3x3_relu(h1pad_ref, ch, w2_ref, b2_ref)         # (m, ch)

    # Lane-dense unmasked store: emit the tile transposed as (ch, tn*h*w) bf16
    # (512 lanes) instead of ch(=8)-lane masked partial stores.
    out_ref[...] = h2.T.astype(jnp.bfloat16)


def conv_stack(x, w1, b1, w2, b2):
    npad, hpad, wpad, c2 = x.shape
    h, w = hpad - 2, wpad - 2
    ch = w2.shape[2]
    return pl.pallas_call(
        _conv_stack_kernel,
        out_shape=jax.ShapeDtypeStruct((ch, npad * h * w), jnp.bfloat16),
        grid=(npad // TN,),
        in_specs=[
            pl.BlockSpec((TN, hpad, wpad, c2), lambda i: (i, 0, 0, 0)),
            pl.BlockSpec(w1.shape, lambda i: (0, 0, 0)),
            pl.BlockSpec(b1.shape, lambda i: (0, 0)),
            pl.BlockSpec(w2.shape, lambda i: (0, 0, 0)),
            pl.BlockSpec(b2.shape, lambda i: (0, 0)),
        ],
        out_specs=pl.BlockSpec((ch, TN * h * w), lambda i: (0, i)),
        scratch_shapes=[pltpu.VMEM((TN, hpad, wpad, ch), jnp.float32)],
        compiler_params=pltpu.CompilerParams(
            dimension_semantics=("parallel",)),
    )(x, w1, b1, w2, b2)


# ----------------------------------------------------------------------------
# Kernel B: K-tiled projection + jagged consecutive max-pool + history add
#   (segment offsets scalar-prefetched into SMEM, single lane-dense store)
# ----------------------------------------------------------------------------
def _project_pool_kernel(off_ref, feat_ref, wp_ref, bp_ref, hist_ref, out_ref,
                         emb_ref):
    k = pl.program_id(0)

    @pl.when(k == 0)
    def _init():
        emb_ref[...] = jnp.zeros_like(emb_ref)

    # Streamed K-tile of the projection: bf16 operands, f32 accumulation.
    emb_ref[...] += jnp.dot(feat_ref[...], wp_ref[...],
                            preferred_element_type=jnp.float32)

    @pl.when(k == pl.num_programs(0) - 1)
    def _finalize():
        npad, e = emb_ref.shape
        batch = out_ref.shape[0]
        emb = emb_ref[...] + bp_ref[...]                     # (npad, e) f32

        # JaggedEmbeddings.consecutive(...).max_pool(): segment offsets come
        # from SMEM.  Padded rows (if any) are excluded because offsets[-1]==n.
        # NOTE: assumes every state has >= 1 I/O pair (module invariant).
        row = jax.lax.broadcasted_iota(jnp.int32, (npad, e), 0)
        pooled = []
        for b in range(batch):                 # batch is small and static
            in_seg = jnp.logical_and(row >= off_ref[b], row < off_ref[b + 1])
            pooled.append(jnp.max(jnp.where(in_seg, emb, -jnp.inf),
                                  axis=0, keepdims=True))
        # ONE store: pooled + history projection (computed in XLA).
        out_ref[...] = jnp.concatenate(pooled, axis=0) + hist_ref[...]


def project_pool(offsets, feat, wp, bp, hist, batch):
    npad, flat = feat.shape
    e = wp.shape[1]
    grid_spec = pltpu.PrefetchScalarGridSpec(
        num_scalar_prefetch=1, grid=(flat // TK,),
        in_specs=[
            pl.BlockSpec((npad, TK), lambda k, off: (0, k)),
            pl.BlockSpec((TK, e), lambda k, off: (k, 0)),
            pl.BlockSpec(bp.shape, lambda k, off: (0, 0)),
            pl.BlockSpec(hist.shape, lambda k, off: (0, 0)),
        ],
        out_specs=pl.BlockSpec((batch, e), lambda k, off: (0, 0)),
        scratch_shapes=[pltpu.VMEM((npad, e), jnp.float32)],
    )
    return pl.pallas_call(
        _project_pool_kernel,
        out_shape=jax.ShapeDtypeStruct((batch, e), jnp.float32),
        grid_spec=grid_spec,
        compiler_params=pltpu.CompilerParams(
            dimension_semantics=("arbitrary",)),
    )(offsets, feat, wp, bp, hist)


# ----------------------------------------------------------------------------
# Parameters (deterministic synthetic init, PyTorch-layout shapes)
# ----------------------------------------------------------------------------
def init_params(key):
    ks = jax.random.split(key, 8)
    s = 0.1
    return {
        # KarelTaskEncoder (reconstructed, see TODO above), OIHW conv weights
        "conv1_w": s * jax.random.normal(ks[0], (CHANNELS, 2 * C, 3, 3), jnp.float32),
        "conv1_b": s * jax.random.normal(ks[1], (CHANNELS,), jnp.float32),
        "conv2_w": s * jax.random.normal(ks[2], (CHANNELS, CHANNELS, 3, 3), jnp.float32),
        "conv2_b": s * jax.random.normal(ks[3], (CHANNELS,), jnp.float32),
        # project = nn.Linear(channels*H*W, e); PyTorch weight shape (e, F)
        "proj_w": s * jax.random.normal(ks[4], (E, FLAT), jnp.float32),
        "proj_b": s * jax.random.normal(ks[5], (E,), jnp.float32),
        # history_embedding = nn.Embedding(len(TOKENS)+1, e)
        "hist_table": s * jax.random.normal(ks[6], (VOCAB, E), jnp.float32),
        # history_embedding_project = nn.Linear(e*history_length, e)
        "hist_w": s * jax.random.normal(ks[7], (E, E * HISTORY_LENGTH), jnp.float32),
        "hist_b": jnp.zeros((E,), jnp.float32),
    }


def _conv_w9(w):
    # (Cout, Cin, 3, 3) -> (9, Cin, Cout) bf16, index = 3*dy + dx
    cout, cin, kh, kw = w.shape
    return jnp.transpose(w, (2, 3, 1, 0)).reshape(kh * kw, cin, cout).astype(
        jnp.bfloat16)


# ----------------------------------------------------------------------------
# Forward pass (numeric part of KarelSequentialEmbedding.forward)
# ----------------------------------------------------------------------------
def karel_sequential_embedding(params, currents, outs, lengths, history_ids):
    """
    currents, outs : (N, C, H, W) float32, NCHW;  N = sum(lengths) I/O pairs
    lengths        : python list, number of pairs per state (len = batch)
    history_ids    : (batch, history_length) int32 token ids (already padded)
    returns        : (batch, E) float32
    """
    n = currents.shape[0]
    batch = len(lengths)
    assert all(l > 0 for l in lengths), "every state needs >= 1 I/O pair"
    assert FLAT % TK == 0
    npad = ((n + TN - 1) // TN) * TN

    # Channel-concat current/output grids, NCHW->NHWC, 'same' spatial pad and
    # N pad, all folded into one XLA copy (no in-kernel concat / pad).
    x = jnp.concatenate([currents, outs], axis=1).astype(jnp.float32)  # (n,2C,H,W)
    x = jnp.transpose(x, (0, 2, 3, 1))                                 # (n,H,W,2C)
    x = jnp.pad(x, ((0, npad - n), (1, 1), (1, 1), (0, 0)))            # (npad,H+2,W+2,2C)

    # fused conv1 -> conv2; activation comes back transposed (CH, npad*H*W) bf16
    fT = conv_stack(x,
                    _conv_w9(params["conv1_w"]), params["conv1_b"].reshape(1, -1),
                    _conv_w9(params["conv2_w"]), params["conv2_b"].reshape(1, -1))
    # tiny XLA transpose back to (npad, C*H*W) rows in PyTorch-native CHW
    # flatten order, so the projection weight needs no spatial permutation.
    feat = jnp.transpose(fT.reshape(CHANNELS, npad, H * W), (1, 0, 2))
    feat = feat.reshape(npad, FLAT)                                    # bf16

    wp = params["proj_w"].T.astype(jnp.bfloat16)                       # (FLAT, E)
    bp = params["proj_b"].reshape(1, -1)

    # History path: cheap XLA gather + tiny (B, L*E) @ (L*E, E) matmul, kept out
    # of the Pallas kernel (M=batch is a terrible MXU shape; at real scale the
    # weight would otherwise pin ~10 MiB of VMEM for the whole call).
    hist = params["hist_table"][history_ids.astype(jnp.int32)].reshape(batch, -1)
    hist = jnp.dot(hist, params["hist_w"].T,
                   precision=jax.lax.Precision.HIGHEST) + params["hist_b"]

    # segment offsets for the jagged consecutive max-pool (scalar-prefetched)
    offsets = jnp.asarray(np.concatenate([[0], np.cumsum(lengths)]), jnp.int32)

    return project_pool(offsets, feat, wp, bp, hist, batch)


# ----------------------------------------------------------------------------
# Pure-JAX reference (same math, independent formulation) for validation.
# bf16 rounding points mirror the kernel (matmul operands bf16, f32 accumulate).
# ----------------------------------------------------------------------------
def reference_forward(params, currents, outs, lengths, history_ids):
    n = currents.shape[0]
    batch = len(lengths)
    bf = lambda a: a.astype(jnp.bfloat16).astype(jnp.float32)

    x = jnp.concatenate([currents, outs], axis=1).astype(jnp.float32)

    def conv(x_nchw, w, b):
        y = jax.lax.conv_general_dilated(
            bf(x_nchw), bf(w), window_strides=(1, 1), padding="SAME",
            dimension_numbers=("NCHW", "OIHW", "NCHW"),
            precision=jax.lax.Precision.HIGHEST)
        return jax.nn.relu(y + b.reshape(1, -1, 1, 1))

    h = conv(x, params["conv1_w"], params["conv1_b"])
    h = conv(h, params["conv2_w"], params["conv2_b"])
    feat = h.reshape(n, -1)
    emb = jnp.dot(bf(feat), bf(params["proj_w"]).T,
                  precision=jax.lax.Precision.HIGHEST) + params["proj_b"]

    offs = np.concatenate([[0], np.cumsum(lengths)])
    pooled = jnp.stack([jnp.max(emb[int(offs[i]):int(offs[i + 1])], axis=0)
                        for i in range(batch)], axis=0)

    hist = params["hist_table"][history_ids].reshape(batch, -1)
    hist = jnp.dot(hist, params["hist_w"].T,
                   precision=jax.lax.Precision.HIGHEST) + params["hist_b"]
    return pooled + hist


# ----------------------------------------------------------------------------
if __name__ == "__main__":
    key = jax.random.PRNGKey(0)
    pkey, dkey = jax.random.split(key)
    params = init_params(pkey)

    lengths = [6, 4, 7, 5, 6, 4]        # six states, 32 I/O pairs total
    n = sum(lengths)
    batch = len(lengths)

    k1, k2, k3 = jax.random.split(dkey, 3)
    currents = jax.random.bernoulli(k1, 0.3, (n, C, H, W)).astype(jnp.float32)
    outs = jax.random.bernoulli(k2, 0.3, (n, C, H, W)).astype(jnp.float32)
    # history token ids, left-padded with len(TOKENS)-1 as in the module
    history_ids = jax.random.randint(k3, (batch, HISTORY_LENGTH), 0, NUM_TOKENS)
    history_ids = history_ids.at[0, :2].set(NUM_TOKENS - 1).astype(jnp.int32)

    out = karel_sequential_embedding(params, currents, outs, lengths,
                                     history_ids)
    out = jax.block_until_ready(out)

    ref = reference_forward(params, currents, outs, lengths, history_ids)
    assert out.shape == (batch, E), out.shape
    np.testing.assert_allclose(np.asarray(out), np.asarray(ref),
                               rtol=1e-3, atol=1e-3)
    print("KERNEL_OK")
</pallas_src>

<mosaic_0001>
module attributes {stable_mosaic.version = 11 : i64} {
  func.func @_conv_stack_kernel(%arg0: i32, %arg1: memref<8x10x10x8xf32, #tpu.memory_space<vmem>>, %arg2: memref<9x8x8xbf16, #tpu.memory_space<vmem>>, %arg3: memref<1x8xf32, #tpu.memory_space<vmem>>, %arg4: memref<9x8x8xbf16, #tpu.memory_space<vmem>>, %arg5: memref<1x8xf32, #tpu.memory_space<vmem>>, %arg6: memref<8x512xbf16, #tpu.memory_space<vmem>>, %arg7: memref<8x10x10x8xf32, #tpu.memory_space<vmem>>) attributes {dimension_semantics = [#tpu.dimension_semantics<parallel>], iteration_bounds = array<i64: 4>, scalar_prefetch = 0 : i64, scratch_operands = 1 : i64, tpu.core_type = #tpu.core_type<tc>, window_params = [{transform_indices = @transform_0, window_bounds = array<i64: 8, 10, 10, 8>}, {pipeline_mode = #tpu.pipeline_mode<synchronous>, transform_indices = @transform_1, window_bounds = array<i64: 9, 8, 8>}, {pipeline_mode = #tpu.pipeline_mode<synchronous>, transform_indices = @transform_2, window_bounds = array<i64: 1, 8>}, {pipeline_mode = #tpu.pipeline_mode<synchronous>, transform_indices = @transform_3, window_bounds = array<i64: 9, 8, 8>}, {pipeline_mode = #tpu.pipeline_mode<synchronous>, transform_indices = @transform_4, window_bounds = array<i64: 1, 8>}, {transform_indices = @transform_5, window_bounds = array<i64: 8, 512>}]} {
    %cst = arith.constant 0.000000e+00 : f32
    %0 = vector.broadcast %cst : f32 to vector<8x1x10x8xf32>
    %c0 = arith.constant 0 : index
    %c0_0 = arith.constant 0 : index
    %c0_1 = arith.constant 0 : index
    %c0_2 = arith.constant 0 : index
    %1 = vector.load %arg7[%c0, %c0_0, %c0_1, %c0_2] : memref<8x10x10x8xf32, #tpu.memory_space<vmem>>, vector<8x1x10x8xf32>
    tpu.vector_store %arg7[%c0, %c0_0, %c0_1, %c0_2], %0 {strides = array<i32>} : memref<8x10x10x8xf32, #tpu.memory_space<vmem>>, vector<8x1x10x8xf32>,
    %cst_3 = arith.constant 0.000000e+00 : f32
    %2 = vector.broadcast %cst_3 : f32 to vector<8x1x10x8xf32>
    %c0_4 = arith.constant 0 : index
    %c9 = arith.constant 9 : index
    %c0_5 = arith.constant 0 : index
    %c0_6 = arith.constant 0 : index
    %3 = vector.load %arg7[%c0_4, %c9, %c0_5, %c0_6] : memref<8x10x10x8xf32, #tpu.memory_space<vmem>>, vector<8x1x10x8xf32>
    tpu.vector_store %arg7[%c0_4, %c9, %c0_5, %c0_6], %2 {strides = array<i32>} : memref<8x10x10x8xf32, #tpu.memory_space<vmem>>, vector<8x1x10x8xf32>,
    %cst_7 = arith.constant 0.000000e+00 : f32
    %4 = vector.broadcast %cst_7 : f32 to vector<8x10x1x8xf32>
    %c0_8 = arith.constant 0 : index
    %c0_9 = arith.constant 0 : index
    %c0_10 = arith.constant 0 : index
    %c0_11 = arith.constant 0 : index
    %5 = vector.load %arg7[%c0_8, %c0_9, %c0_10, %c0_11] : memref<8x10x10x8xf32, #tpu.memory_space<vmem>>, vector<8x10x1x8xf32>
    tpu.vector_store %arg7[%c0_8, %c0_9, %c0_10, %c0_11], %4 {strides = array<i32>} : memref<8x10x10x8xf32, #tpu.memory_space<vmem>>, vector<8x10x1x8xf32>,
    %cst_12 = arith.constant 0.000000e+00 : f32
    %6 = vector.broadcast %cst_12 : f32 to vector<8x10x1x8xf32>
    %c0_13 = arith.constant 0 : index
    %c0_14 = arith.constant 0 : index
    %c9_15 = arith.constant 9 : index
    %c0_16 = arith.constant 0 : index
    %7 = vector.load %arg7[%c0_13, %c0_14, %c9_15, %c0_16] : memref<8x10x10x8xf32, #tpu.memory_space<vmem>>, vector<8x10x1x8xf32>
    tpu.vector_store %arg7[%c0_13, %c0_14, %c9_15, %c0_16], %6 {strides = array<i32>} : memref<8x10x10x8xf32, #tpu.memory_space<vmem>>, vector<8x10x1x8xf32>,
    %c0_17 = arith.constant 0 : index
    %c0_18 = arith.constant 0 : index
    %c0_19 = arith.constant 0 : index
    %c0_20 = arith.constant 0 : index
    %8 = vector.load %arg1[%c0_17, %c0_18, %c0_19, %c0_20] : memref<8x10x10x8xf32, #tpu.memory_space<vmem>>, vector<8x8x8x8xf32>
    %9 = vector.shape_cast %8 : vector<8x8x8x8xf32> to vector<512x8xf32>
    %10 = arith.truncf %9 : vector<512x8xf32> to vector<512x8xbf16>
    %c0_21 = arith.constant 0 : index
    %c0_22 = arith.constant 0 : index
    %c0_23 = arith.constant 0 : index
    %11 = vector.load %arg2[%c0_21, %c0_22, %c0_23] : memref<9x8x8xbf16, #tpu.memory_space<vmem>>, vector<1x8x8xbf16>
    %12 = vector.shape_cast %11 : vector<1x8x8xbf16> to vector<8x8xbf16>
    %cst_24 = arith.constant dense<0.000000e+00> : vector<512x8xf32>
    %13 = tpu.matmul %10, %12, %cst_24 {dimension_numbers = #tpu.dot_dimension_numbers<[1], [0], [0], [1], [0, 0, 1, 1], [], []>} : vector<512x8xbf16>, vector<8x8xbf16>, vector<512x8xf32> -> vector<512x8xf32>
    %c0_25 = arith.constant 0 : index
    %c0_26 = arith.constant 0 : index
    %c1 = arith.constant 1 : index
    %c0_27 = arith.constant 0 : index
    %14 = vector.load %arg1[%c0_25, %c0_26, %c1, %c0_27] : memref<8x10x10x8xf32, #tpu.memory_space<vmem>>, vector<8x8x8x8xf32>
    %15 = vector.shape_cast %14 : vector<8x8x8x8xf32> to vector<512x8xf32>
    %16 = arith.truncf %15 : vector<512x8xf32> to vector<512x8xbf16>
    %c1_28 = arith.constant 1 : index
    %c0_29 = arith.constant 0 : index
    %c0_30 = arith.constant 0 : index
    %17 = vector.load %arg2[%c1_28, %c0_29, %c0_30] : memref<9x8x8xbf16, #tpu.memory_space<vmem>>, vector<1x8x8xbf16>
    %18 = vector.shape_cast %17 : vector<1x8x8xbf16> to vector<8x8xbf16>
    %cst_31 = arith.constant dense<0.000000e+00> : vector<512x8xf32>
    %19 = tpu.matmul %16, %18, %cst_31 {dimension_numbers = #tpu.dot_dimension_numbers<[1], [0], [0], [1], [0, 0, 1, 1], [], []>} : vector<512x8xbf16>, vector<8x8xbf16>, vector<512x8xf32> -> vector<512x8xf32>
    %20 = arith.addf %13, %19 : vector<512x8xf32>
    %c0_32 = arith.constant 0 : index
    %c0_33 = arith.constant 0 : index
    %c2 = arith.constant 2 : index
    %c0_34 = arith.constant 0 : index
    %21 = vector.load %arg1[%c0_32, %c0_33, %c2, %c0_34] : memref<8x10x10x8xf32, #tpu.memory_space<vmem>>, vector<8x8x8x8xf32>
    %22 = vector.shape_cast %21 : vector<8x8x8x8xf32> to vector<512x8xf32>
    %23 = arith.truncf %22 : vector<512x8xf32> to vector<512x8xbf16>
    %c2_35 = arith.constant 2 : index
    %c0_36 = arith.constant 0 : index
    %c0_37 = arith.constant 0 : index
    %24 = vector.load %arg2[%c2_35, %c0_36, %c0_37] : memref<9x8x8xbf16, #tpu.memory_space<vmem>>, vector<1x8x8xbf16>
    %25 = vector.shape_cast %24 : vector<1x8x8xbf16> to vector<8x8xbf16>
    %cst_38 = arith.constant dense<0.000000e+00> : vector<512x8xf32>
    %26 = tpu.matmul %23, %25, %cst_38 {dimension_numbers = #tpu.dot_dimension_numbers<[1], [0], [0], [1], [0, 0, 1, 1], [], []>} : vector<512x8xbf16>, vector<8x8xbf16>, vector<512x8xf32> -> vector<512x8xf32>
    %27 = arith.addf %20, %26 : vector<512x8xf32>
    %c0_39 = arith.constant 0 : index
    %c1_40 = arith.constant 1 : index
    %c0_41 = arith.constant 0 : index
    %c0_42 = arith.constant 0 : index
    %28 = vector.load %arg1[%c0_39, %c1_40, %c0_41, %c0_42] : memref<8x10x10x8xf32, #tpu.memory_space<vmem>>, vector<8x8x8x8xf32>
    %29 = vector.shape_cast %28 : vector<8x8x8x8xf32> to vector<512x8xf32>
    %30 = arith.truncf %29 : vector<512x8xf32> to vector<512x8xbf16>
    %c3 = arith.constant 3 : index
    %c0_43 = arith.constant 0 : index
    %c0_44 = arith.constant 0 : index
    %31 = vector.load %arg2[%c3, %c0_43, %c0_44] : memref<9x8x8xbf16, #tpu.memory_space<vmem>>, vector<1x8x8xbf16>
    %32 = vector.shape_cast %31 : vector<1x8x8xbf16> to vector<8x8xbf16>
    %cst_45 = arith.constant dense<0.000000e+00> : vector<512x8xf32>
    %33 = tpu.matmul %30, %32, %cst_45 {dimension_numbers = #tpu.dot_dimension_numbers<[1], [0], [0], [1], [0, 0, 1, 1], [], []>} : vector<512x8xbf16>, vector<8x8xbf16>, vector<512x8xf32> -> vector<512x8xf32>
    %34 = arith.addf %27, %33 : vector<512x8xf32>
    %c0_46 = arith.constant 0 : index
    %c1_47 = arith.constant 1 : index
    %c1_48 = arith.constant 1 : index
    %c0_49 = arith.constant 0 : index
    %35 = vector.load %arg1[%c0_46, %c1_47, %c1_48, %c0_49] : memref<8x10x10x8xf32, #tpu.memory_space<vmem>>, vector<8x8x8x8xf32>
    %36 = vector.shape_cast %35 : vector<8x8x8x8xf32> to vector<512x8xf32>
    %37 = arith.truncf %36 : vector<512x8xf32> to vector<512x8xbf16>
    %c4 = arith.constant 4 : index
    %c0_50 = arith.constant 0 : index
    %c0_51 = arith.constant 0 : index
    %38 = vector.load %arg2[%c4, %c0_50, %c0_51] : memref<9x8x8xbf16, #tpu.memory_space<vmem>>, vector<1x8x8xbf16>
    %39 = vector.shape_cast %38 : vector<1x8x8xbf16> to vector<8x8xbf16>
    %cst_52 = arith.constant dense<0.000000e+00> : vector<512x8xf32>
    %40 = tpu.matmul %37, %39, %cst_52 {dimension_numbers = #tpu.dot_dimension_numbers<[1], [0], [0], [1], [0, 0, 1, 1], [], []>} : vector<512x8xbf16>, vector<8x8xbf16>, vector<512x8xf32> -> vector<512x8xf32>
    %41 = arith.addf %34, %40 : vector<512x8xf32>
    %c0_53 = arith.constant 0 : index
    %c1_54 = arith.constant 1 : index
    %c2_55 = arith.constant 2 : index
    %c0_56 = arith.constant 0 : index
    %42 = vector.load %arg1[%c0_53, %c1_54, %c2_55, %c0_56] : memref<8x10x10x8xf32, #tpu.memory_space<vmem>>, vector<8x8x8x8xf32>
    %43 = vector.shape_cast %42 : vector<8x8x8x8xf32> to vector<512x8xf32>
    %44 = arith.truncf %43 : vector<512x8xf32> to vector<512x8xbf16>
    %c5 = arith.constant 5 : index
    %c0_57 = arith.constant 0 : index
    %c0_58 = arith.constant 0 : index
    %45 = vector.load %arg2[%c5, %c0_57, %c0_58] : memref<9x8x8xbf16, #tpu.memory_space<vmem>>, vector<1x8x8xbf16>
    %46 = vector.shape_cast %45 : vector<1x8x8xbf16> to vector<8x8xbf16>
    %cst_59 = arith.constant dense<0.000000e+00> : vector<512x8xf32>
    %47 = tpu.matmul %44, %46, %cst_59 {dimension_numbers = #tpu.dot_dimension_numbers<[1], [0], [0], [1], [0, 0, 1, 1], [], []>} : vector<512x8xbf16>, vector<8x8xbf16>, vector<512x8xf32> -> vector<512x8xf32>
    %48 = arith.addf %41, %47 : vector<512x8xf32>
    %c0_60 = arith.constant 0 : index
    %c2_61 = arith.constant 2 : index
    %c0_62 = arith.constant 0 : index
    %c0_63 = arith.constant 0 : index
    %49 = vector.load %arg1[%c0_60, %c2_61, %c0_62, %c0_63] : memref<8x10x10x8xf32, #tpu.memory_space<vmem>>, vector<8x8x8x8xf32>
    %50 = vector.shape_cast %49 : vector<8x8x8x8xf32> to vector<512x8xf32>
    %51 = arith.truncf %50 : vector<512x8xf32> to vector<512x8xbf16>
    %c6 = arith.constant 6 : index
    %c0_64 = arith.constant 0 : index
    %c0_65 = arith.constant 0 : index
    %52 = vector.load %arg2[%c6, %c0_64, %c0_65] : memref<9x8x8xbf16, #tpu.memory_space<vmem>>, vector<1x8x8xbf16>
    %53 = vector.shape_cast %52 : vector<1x8x8xbf16> to vector<8x8xbf16>
    %cst_66 = arith.constant dense<0.000000e+00> : vector<512x8xf32>
    %54 = tpu.matmul %51, %53, %cst_66 {dimension_numbers = #tpu.dot_dimension_numbers<[1], [0], [0], [1], [0, 0, 1, 1], [], []>} : vector<512x8xbf16>, vector<8x8xbf16>, vector<512x8xf32> -> vector<512x8xf32>
    %55 = arith.addf %48, %54 : vector<512x8xf32>
    %c0_67 = arith.constant 0 : index
    %c2_68 = arith.constant 2 : index
    %c1_69 = arith.constant 1 : index
    %c0_70 = arith.constant 0 : index
    %56 = vector.load %arg1[%c0_67, %c2_68, %c1_69, %c0_70] : memref<8x10x10x8xf32, #tpu.memory_space<vmem>>, vector<8x8x8x8xf32>
    %57 = vector.shape_cast %56 : vector<8x8x8x8xf32> to vector<512x8xf32>
    %58 = arith.truncf %57 : vector<512x8xf32> to vector<512x8xbf16>
    %c7 = arith.constant 7 : index
    %c0_71 = arith.constant 0 : index
    %c0_72 = arith.constant 0 : index
    %59 = vector.load %arg2[%c7, %c0_71, %c0_72] : memref<9x8x8xbf16, #tpu.memory_space<vmem>>, vector<1x8x8xbf16>
    %60 = vector.shape_cast %59 : vector<1x8x8xbf16> to vector<8x8xbf16>
    %cst_73 = arith.constant dense<0.000000e+00> : vector<512x8xf32>
    %61 = tpu.matmul %58, %60, %cst_73 {dimension_numbers = #tpu.dot_dimension_numbers<[1], [0], [0], [1], [0, 0, 1, 1], [], []>} : vector<512x8xbf16>, vector<8x8xbf16>, vector<512x8xf32> -> vector<512x8xf32>
    %62 = arith.addf %55, %61 : vector<512x8xf32>
    %c0_74 = arith.constant 0 : index
    %c2_75 = arith.constant 2 : index
    %c2_76 = arith.constant 2 : index
    %c0_77 = arith.constant 0 : index
    %63 = vector.load %arg1[%c0_74, %c2_75, %c2_76, %c0_77] : memref<8x10x10x8xf32, #tpu.memory_space<vmem>>, vector<8x8x8x8xf32>
    %64 = vector.shape_cast %63 : vector<8x8x8x8xf32> to vector<512x8xf32>
    %65 = arith.truncf %64 : vector<512x8xf32> to vector<512x8xbf16>
    %c8 = arith.constant 8 : index
    %c0_78 = arith.constant 0 : index
    %c0_79 = arith.constant 0 : index
    %66 = vector.load %arg2[%c8, %c0_78, %c0_79] : memref<9x8x8xbf16, #tpu.memory_space<vmem>>, vector<1x8x8xbf16>
    %67 = vector.shape_cast %66 : vector<1x8x8xbf16> to vector<8x8xbf16>
    %cst_80 = arith.constant dense<0.000000e+00> : vector<512x8xf32>
    %68 = tpu.matmul %65, %67, %cst_80 {dimension_numbers = #tpu.dot_dimension_numbers<[1], [0], [0], [1], [0, 0, 1, 1], [], []>} : vector<512x8xbf16>, vector<8x8xbf16>, vector<512x8xf32> -> vector<512x8xf32>
    %69 = arith.addf %62, %68 : vector<512x8xf32>
    %c0_81 = arith.constant 0 : index
    %c0_82 = arith.constant 0 : index
    %70 = vector.load %arg3[%c0_81, %c0_82] : memref<1x8xf32, #tpu.memory_space<vmem>>, vector<1x8xf32>
    %71 = vector.broadcast %70 : vector<1x8xf32> to vector<512x8xf32>
    %72 = arith.addf %69, %71 : vector<512x8xf32>
    %cst_83 = arith.constant 0.000000e+00 : f32
    %73 = vector.broadcast %cst_83 : f32 to vector<512x8xf32>
    %74 = arith.maximumf %72, %73 : vector<512x8xf32>
    %75 = vector.shape_cast %74 : vector<512x8xf32> to vector<8x8x8x8xf32>
    %c0_84 = arith.constant 0 : index
    %c1_85 = arith.constant 1 : index
    %c1_86 = arith.constant 1 : index
    %c0_87 = arith.constant 0 : index
    %76 = vector.load %arg7[%c0_84, %c1_85, %c1_86, %c0_87] : memref<8x10x10x8xf32, #tpu.memory_space<vmem>>, vector<8x8x8x8xf32>
    tpu.vector_store %arg7[%c0_84, %c1_85, %c1_86, %c0_87], %75 {strides = array<i32>} : memref<8x10x10x8xf32, #tpu.memory_space<vmem>>, vector<8x8x8x8xf32>,
    %c0_88 = arith.constant 0 : index
    %c0_89 = arith.constant 0 : index
    %c0_90 = arith.constant 0 : index
    %c0_91 = arith.constant 0 : index
    %77 = vector.load %arg7[%c0_88, %c0_89, %c0_90, %c0_91] : memref<8x10x10x8xf32, #tpu.memory_space<vmem>>, vector<8x8x8x8xf32>
    %78 = vector.shape_cast %77 : vector<8x8x8x8xf32> to vector<512x8xf32>
    %79 = arith.truncf %78 : vector<512x8xf32> to vector<512x8xbf16>
    %c0_92 = arith.constant 0 : index
    %c0_93 = arith.constant 0 : index
    %c0_94 = arith.constant 0 : index
    %80 = vector.load %arg4[%c0_92, %c0_93, %c0_94] : memref<9x8x8xbf16, #tpu.memory_space<vmem>>, vector<1x8x8xbf16>
    %81 = vector.shape_cast %80 : vector<1x8x8xbf16> to vector<8x8xbf16>
    %cst_95 = arith.constant dense<0.000000e+00> : vector<512x8xf32>
    %82 = tpu.matmul %79, %81, %cst_95 {dimension_numbers = #tpu.dot_dimension_numbers<[1], [0], [0], [1], [0, 0, 1, 1], [], []>} : vector<512x8xbf16>, vector<8x8xbf16>, vector<512x8xf32> -> vector<512x8xf32>
    %c0_96 = arith.constant 0 : index
    %c0_97 = arith.constant 0 : index
    %c1_98 = arith.constant 1 : index
    %c0_99 = arith.constant 0 : index
    %83 = vector.load %arg7[%c0_96, %c0_97, %c1_98, %c0_99] : memref<8x10x10x8xf32, #tpu.memory_space<vmem>>, vector<8x8x8x8xf32>
    %84 = vector.shape_cast %83 : vector<8x8x8x8xf32> to vector<512x8xf32>
    %85 = arith.truncf %84 : vector<512x8xf32> to vector<512x8xbf16>
    %c1_100 = arith.constant 1 : index
    %c0_101 = arith.constant 0 : index
    %c0_102 = arith.constant 0 : index
    %86 = vector.load %arg4[%c1_100, %c0_101, %c0_102] : memref<9x8x8xbf16, #tpu.memory_space<vmem>>, vector<1x8x8xbf16>
    %87 = vector.shape_cast %86 : vector<1x8x8xbf16> to vector<8x8xbf16>
    %cst_103 = arith.constant dense<0.000000e+00> : vector<512x8xf32>
    %88 = tpu.matmul %85, %87, %cst_103 {dimension_numbers = #tpu.dot_dimension_numbers<[1], [0], [0], [1], [0, 0, 1, 1], [], []>} : vector<512x8xbf16>, vector<8x8xbf16>, vector<512x8xf32> -> vector<512x8xf32>
    %89 = arith.addf %82, %88 : vector<512x8xf32>
    %c0_104 = arith.constant 0 : index
    %c0_105 = arith.constant 0 : index
    %c2_106 = arith.constant 2 : index
    %c0_107 = arith.constant 0 : index
    %90 = vector.load %arg7[%c0_104, %c0_105, %c2_106, %c0_107] : memref<8x10x10x8xf32, #tpu.memory_space<vmem>>, vector<8x8x8x8xf32>
    %91 = vector.shape_cast %90 : vector<8x8x8x8xf32> to vector<512x8xf32>
    %92 = arith.truncf %91 : vector<512x8xf32> to vector<512x8xbf16>
    %c2_108 = arith.constant 2 : index
    %c0_109 = arith.constant 0 : index
    %c0_110 = arith.constant 0 : index
    %93 = vector.load %arg4[%c2_108, %c0_109, %c0_110] : memref<9x8x8xbf16, #tpu.memory_space<vmem>>, vector<1x8x8xbf16>
    %94 = vector.shape_cast %93 : vector<1x8x8xbf16> to vector<8x8xbf16>
    %cst_111 = arith.constant dense<0.000000e+00> : vector<512x8xf32>
    %95 = tpu.matmul %92, %94, %cst_111 {dimension_numbers = #tpu.dot_dimension_numbers<[1], [0], [0], [1], [0, 0, 1, 1], [], []>} : vector<512x8xbf16>, vector<8x8xbf16>, vector<512x8xf32> -> vector<512x8xf32>
    %96 = arith.addf %89, %95 : vector<512x8xf32>
    %c0_112 = arith.constant 0 : index
    %c1_113 = arith.constant 1 : index
    %c0_114 = arith.constant 0 : index
    %c0_115 = arith.constant 0 : index
    %97 = vector.load %arg7[%c0_112, %c1_113, %c0_114, %c0_115] : memref<8x10x10x8xf32, #tpu.memory_space<vmem>>, vector<8x8x8x8xf32>
    %98 = vector.shape_cast %97 : vector<8x8x8x8xf32> to vector<512x8xf32>
    %99 = arith.truncf %98 : vector<512x8xf32> to vector<512x8xbf16>
    %c3_116 = arith.constant 3 : index
    %c0_117 = arith.constant 0 : index
    %c0_118 = arith.constant 0 : index
    %100 = vector.load %arg4[%c3_116, %c0_117, %c0_118] : memref<9x8x8xbf16, #tpu.memory_space<vmem>>, vector<1x8x8xbf16>
    %101 = vector.shape_cast %100 : vector<1x8x8xbf16> to vector<8x8xbf16>
    %cst_119 = arith.constant dense<0.000000e+00> : vector<512x8xf32>
    %102 = tpu.matmul %99, %101, %cst_119 {dimension_numbers = #tpu.dot_dimension_numbers<[1], [0], [0], [1], [0, 0, 1, 1], [], []>} : vector<512x8xbf16>, vector<8x8xbf16>, vector<512x8xf32> -> vector<512x8xf32>
    %103 = arith.addf %96, %102 : vector<512x8xf32>
    %c0_120 = arith.constant 0 : index
    %c1_121 = arith.constant 1 : index
    %c1_122 = arith.constant 1 : index
    %c0_123 = arith.constant 0 : index
    %104 = vector.load %arg7[%c0_120, %c1_121, %c1_122, %c0_123] : memref<8x10x10x8xf32, #tpu.memory_space<vmem>>, vector<8x8x8x8xf32>
    %105 = vector.shape_cast %104 : vector<8x8x8x8xf32> to vector<512x8xf32>
    %106 = arith.truncf %105 : vector<512x8xf32> to vector<512x8xbf16>
    %c4_124 = arith.constant 4 : index
    %c0_125 = arith.constant 0 : index
    %c0_126 = arith.constant 0 : index
    %107 = vector.load %arg4[%c4_124, %c0_125, %c0_126] : memref<9x8x8xbf16, #tpu.memory_space<vmem>>, vector<1x8x8xbf16>
    %108 = vector.shape_cast %107 : vector<1x8x8xbf16> to vector<8x8xbf16>
    %cst_127 = arith.constant dense<0.000000e+00> : vector<512x8xf32>
    %109 = tpu.matmul %106, %108, %cst_127 {dimension_numbers = #tpu.dot_dimension_numbers<[1], [0], [0], [1], [0, 0, 1, 1], [], []>} : vector<512x8xbf16>, vector<8x8xbf16>, vector<512x8xf32> -> vector<512x8xf32>
    %110 = arith.addf %103, %109 : vector<512x8xf32>
    %c0_128 = arith.constant 0 : index
    %c1_129 = arith.constant 1 : index
    %c2_130 = arith.constant 2 : index
    %c0_131 = arith.constant 0 : index
    %111 = vector.load %arg7[%c0_128, %c1_129, %c2_130, %c0_131] : memref<8x10x10x8xf32, #tpu.memory_space<vmem>>, vector<8x8x8x8xf32>
    %112 = vector.shape_cast %111 : vector<8x8x8x8xf32> to vector<512x8xf32>
    %113 = arith.truncf %112 : vector<512x8xf32> to vector<512x8xbf16>
    %c5_132 = arith.constant 5 : index
    %c0_133 = arith.constant 0 : index
    %c0_134 = arith.constant 0 : index
    %114 = vector.load %arg4[%c5_132, %c0_133, %c0_134] : memref<9x8x8xbf16, #tpu.memory_space<vmem>>, vector<1x8x8xbf16>
    %115 = vector.shape_cast %114 : vector<1x8x8xbf16> to vector<8x8xbf16>
    %cst_135 = arith.constant dense<0.000000e+00> : vector<512x8xf32>
    %116 = tpu.matmul %113, %115, %cst_135 {dimension_numbers = #tpu.dot_dimension_numbers<[1], [0], [0], [1], [0, 0, 1, 1], [], []>} : vector<512x8xbf16>, vector<8x8xbf16>, vector<512x8xf32> -> vector<512x8xf32>
    %117 = arith.addf %110, %116 : vector<512x8xf32>
    %c0_136 = arith.constant 0 : index
    %c2_137 = arith.constant 2 : index
    %c0_138 = arith.constant 0 : index
    %c0_139 = arith.constant 0 : index
    %118 = vector.load %arg7[%c0_136, %c2_137, %c0_138, %c0_139] : memref<8x10x10x8xf32, #tpu.memory_space<vmem>>, vector<8x8x8x8xf32>
    %119 = vector.shape_cast %118 : vector<8x8x8x8xf32> to vector<512x8xf32>
    %120 = arith.truncf %119 : vector<512x8xf32> to vector<512x8xbf16>
    %c6_140 = arith.constant 6 : index
    %c0_141 = arith.constant 0 : index
    %c0_142 = arith.constant 0 : index
    %121 = vector.load %arg4[%c6_140, %c0_141, %c0_142] : memref<9x8x8xbf16, #tpu.memory_space<vmem>>, vector<1x8x8xbf16>
    %122 = vector.shape_cast %121 : vector<1x8x8xbf16> to vector<8x8xbf16>
    %cst_143 = arith.constant dense<0.000000e+00> : vector<512x8xf32>
    %123 = tpu.matmul %120, %122, %cst_143 {dimension_numbers = #tpu.dot_dimension_numbers<[1], [0], [0], [1], [0, 0, 1, 1], [], []>} : vector<512x8xbf16>, vector<8x8xbf16>, vector<512x8xf32> -> vector<512x8xf32>
    %124 = arith.addf %117, %123 : vector<512x8xf32>
    %c0_144 = arith.constant 0 : index
    %c2_145 = arith.constant 2 : index
    %c1_146 = arith.constant 1 : index
    %c0_147 = arith.constant 0 : index
    %125 = vector.load %arg7[%c0_144, %c2_145, %c1_146, %c0_147] : memref<8x10x10x8xf32, #tpu.memory_space<vmem>>, vector<8x8x8x8xf32>
    %126 = vector.shape_cast %125 : vector<8x8x8x8xf32> to vector<512x8xf32>
    %127 = arith.truncf %126 : vector<512x8xf32> to vector<512x8xbf16>
    %c7_148 = arith.constant 7 : index
    %c0_149 = arith.constant 0 : index
    %c0_150 = arith.constant 0 : index
    %128 = vector.load %arg4[%c7_148, %c0_149, %c0_150] : memref<9x8x8xbf16, #tpu.memory_space<vmem>>, vector<1x8x8xbf16>
    %129 = vector.shape_cast %128 : vector<1x8x8xbf16> to vector<8x8xbf16>
    %cst_151 = arith.constant dense<0.000000e+00> : vector<512x8xf32>
    %130 = tpu.matmul %127, %129, %cst_151 {dimension_numbers = #tpu.dot_dimension_numbers<[1], [0], [0], [1], [0, 0, 1, 1], [], []>} : vector<512x8xbf16>, vector<8x8xbf16>, vector<512x8xf32> -> vector<512x8xf32>
    %131 = arith.addf %124, %130 : vector<512x8xf32>
    %c0_152 = arith.constant 0 : index
    %c2_153 = arith.constant 2 : index
    %c2_154 = arith.constant 2 : index
    %c0_155 = arith.constant 0 : index
    %132 = vector.load %arg7[%c0_152, %c2_153, %c2_154, %c0_155] : memref<8x10x10x8xf32, #tpu.memory_space<vmem>>, vector<8x8x8x8xf32>
    %133 = vector.shape_cast %132 : vector<8x8x8x8xf32> to vector<512x8xf32>
    %134 = arith.truncf %133 : vector<512x8xf32> to vector<512x8xbf16>
    %c8_156 = arith.constant 8 : index
    %c0_157 = arith.constant 0 : index
    %c0_158 = arith.constant 0 : index
    %135 = vector.load %arg4[%c8_156, %c0_157, %c0_158] : memref<9x8x8xbf16, #tpu.memory_space<vmem>>, vector<1x8x8xbf16>
    %136 = vector.shape_cast %135 : vector<1x8x8xbf16> to vector<8x8xbf16>
    %cst_159 = arith.constant dense<0.000000e+00> : vector<512x8xf32>
    %137 = tpu.matmul %134, %136, %cst_159 {dimension_numbers = #tpu.dot_dimension_numbers<[1], [0], [0], [1], [0, 0, 1, 1], [], []>} : vector<512x8xbf16>, vector<8x8xbf16>, vector<512x8xf32> -> vector<512x8xf32>
    %138 = arith.addf %131, %137 : vector<512x8xf32>
    %c0_160 = arith.constant 0 : index
    %c0_161 = arith.constant 0 : index
    %139 = vector.load %arg5[%c0_160, %c0_161] : memref<1x8xf32, #tpu.memory_space<vmem>>, vector<1x8xf32>
    %140 = vector.broadcast %139 : vector<1x8xf32> to vector<512x8xf32>
    %141 = arith.addf %138, %140 : vector<512x8xf32>
    %cst_162 = arith.constant 0.000000e+00 : f32
    %142 = vector.broadcast %cst_162 : f32 to vector<512x8xf32>
    %143 = arith.maximumf %141, %142 : vector<512x8xf32>
    %144 = tpu.transpose %143, [1, 0] : vector<512x8xf32> -> vector<8x512xf32>
    %145 = arith.truncf %144 : vector<8x512xf32> to vector<8x512xbf16>
    %c0_163 = arith.constant 0 : index
    %c0_164 = arith.constant 0 : index
    %146 = vector.load %arg6[%c0_163, %c0_164] : memref<8x512xbf16, #tpu.memory_space<vmem>>, vector<8x512xbf16>
    tpu.vector_store %arg6[%c0_163, %c0_164], %145 {strides = array<i32>} : memref<8x512xbf16, #tpu.memory_space<vmem>>, vector<8x512xbf16>,
    return
  }
  func.func @transform_0(%arg0: i32) -> (i32, i32, i32, i32) {
    %c0_i32 = arith.constant 0 : i32
    %c0_i32_0 = arith.constant 0 : i32
    %c0_i32_1 = arith.constant 0 : i32
    %c0_i32_2 = arith.constant 0 : i32
    return %arg0, %c0_i32, %c0_i32_0, %c0_i32_1 : i32, i32, i32, i32
  }
  func.func @transform_1(%arg0: i32) -> (i32, i32, i32) {
    %c0_i32 = arith.constant 0 : i32
    %c0_i32_0 = arith.constant 0 : i32
    %c0_i32_1 = arith.constant 0 : i32
    %c0_i32_2 = arith.constant 0 : i32
    return %c0_i32, %c0_i32_0, %c0_i32_1 : i32, i32, i32
  }
  func.func @transform_2(%arg0: i32) -> (i32, i32) {
    %c0_i32 = arith.constant 0 : i32
    %c0_i32_0 = arith.constant 0 : i32
    %c0_i32_1 = arith.constant 0 : i32
    return %c0_i32, %c0_i32_0 : i32, i32
  }
  func.func @transform_3(%arg0: i32) -> (i32, i32, i32) {
    %c0_i32 = arith.constant 0 : i32
    %c0_i32_0 = arith.constant 0 : i32
    %c0_i32_1 = arith.constant 0 : i32
    %c0_i32_2 = arith.constant 0 : i32
    return %c0_i32, %c0_i32_0, %c0_i32_1 : i32, i32, i32
  }
  func.func @transform_4(%arg0: i32) -> (i32, i32) {
    %c0_i32 = arith.constant 0 : i32
    %c0_i32_0 = arith.constant 0 : i32
    %c0_i32_1 = arith.constant 0 : i32
    return %c0_i32, %c0_i32_0 : i32, i32
  }
  func.func @transform_5(%arg0: i32) -> (i32, i32) {
    %c0_i32 = arith.constant 0 : i32
    %c0_i32_0 = arith.constant 0 : i32
    return %c0_i32, %arg0 : i32, i32
  }
}

</mosaic_0001>

<llo_original>
// kernel: tpu_custom_call.1
$region0: #{tpu_custom_call.1}
  #allocation0 [shape = 'u32[]', space=smem, size = 0x4, offset = 0x4, fixed_abs, tag = 'smem constant byte address 0x4 - core index']
  #allocation1 [shape = 'u32[144,128]{1,0:T(1,128)}', space=vmem, size = 0x12000, scoped, tag = 'internal scratch']
  #allocation2 [shape = 'f32[8,10,10,8]{3,2,1,0:T(8,128)}', space=vmem, size = 0xa0000, scoped, tag = 'scratch operand']
  %s0 = inlined_call_operand.vmem [shape: f32[32,10,10,8], index: 0, kind: input, shape index: {}]
  %s1 = inlined_call_operand.vmem [shape: bf16[9,8,8], index: 1, kind: input, shape index: {}]
  %s2 = inlined_call_operand.vmem [shape: f32[1,8], index: 2, kind: input, shape index: {}]
  %s3 = inlined_call_operand.vmem [shape: bf16[9,8,8], index: 3, kind: input, shape index: {}]
  %s4 = inlined_call_operand.vmem [shape: f32[1,8], index: 4, kind: input, shape index: {}]
  %s5 = inlined_call_operand.hbm [shape: bf16[8,2048], index: 5, kind: output, shape index: {}]
  %s6 = sld [smem:[#allocation0]]
  $region53: #{tpu_custom_call.1} parent=0
    _
  %s8 = ssub.s32 1, %s6
  %s9 = scalar_select 0, %s8, %s6
  $region1: #{tpu_custom_call.1} parent=0
    #allocation3 [shape = 'u8[16384]{0}', space=vmem, size = 0x4000, scoped, tag = 'output window, operand 0']
    #allocation4 [shape = 's32[2]{0}', space=sflag, size = 0x8, scoped, tag = 'scoped memory for tpu_custom_call.1']
    %10 = vsyncpa [#allocation4], 0
    %s11 = scalar_lea.sflag [#allocation4], 1
    %12 = vsyncpa %s11, 0
    loop: start=0, step=1, limit=6
    $region2: #{tpu_custom_call.1} parent=1 // loop_pre_header
      _
    $region3: #{tpu_custom_call.1} parent=1 // loop_header
      %s14 = sphi 0, %s18
      %p15 = scmp.ge.s32.totalorder %s14, 6
      %s24 = sphi 0, %s26
      %s27 = sphi 0, %s24
      %s28 = sphi 0, %s27
      %s44 = sphi 0, %s28
      %s48 = sphi 0, %s48
      %s50 = sphi 0, %s48
      %s51 = sphi 0, %s50
      %s65 = sphi 0, %s51
      %s69 = sphi 0, %s69
      %s71 = sphi 0, %s69
      %s72 = sphi 0, %s71
      %s86 = sphi 0, %s72
      %s90 = sphi 0, %s90
      %s92 = sphi 0, %s90
      %s93 = sphi 0, %s92
      %s107 = sphi 0, %s93
      %s111 = sphi 0, %s111
      %s113 = sphi 0, %s111
      %s114 = sphi 0, %s113
      %s128 = sphi 0, %s114
      %s134 = sphi 0, %s136
      %s137 = sphi 0, %s134
      %s138 = sphi 0, %s137
      %s154 = sphi 0, %s138
    $region4: #{tpu_custom_call.1} parent=1 // loop_header_branch
      %17 = sbr.rel (%p15) target = $region8
    $region5: #{tpu_custom_call.1} parent=1 // loop_body
      %s19 = ssub.s32 %s14, 1
      %s20 = ssub.s32 %s14, 2
      %s21 = sadd.s32 %s14, 1
      %s22 = ssub.s32 %s14, %s21
      %p23 = scmp.eq.s32.totalorder %s22, 0
      %s25 = sadd.s32 %s24, 1
      %s26 = scalar_select %p23, %s24, %s25
      %p29 = pneg %p23
      %p30 = scmp.eq.s32.totalorder %s14, 3
      %p31 = por %p29, %p30
      %p32 = scmp.ne.s32.totalorder %s24, %s27
      %p33 = scmp.eq.s32.totalorder %s14, 0
      %p34 = por %p32, %p33
      %p35 = scmp.ne.s32.totalorder %s24, %s27
      %p36 = scmp.eq.s32.totalorder %s19, 3
      %p37 = por %p35, %p36
      %p38 = scmp.ne.s32.totalorder %s27, %s28
      %p39 = scmp.eq.s32.totalorder %s19, 0
      %p40 = por %p38, %p39
      %p41 = scmp.ne.s32.totalorder %s27, %s28
      %p42 = scmp.eq.s32.totalorder %s20, 3
      %p43 = por %p41, %p42
      %p45 = scmp.ne.s32.totalorder %s28, %s44
      %p46 = scmp.eq.s32.totalorder %s20, 0
      %p47 = por %p45, %p46
      %s49 = sadd.s32 %s48, 1
      %p52 = scmp.eq.s32.totalorder %s14, 3
      %p53 = scmp.ne.s32.totalorder %s48, %s50
      %p54 = scmp.eq.s32.totalorder %s14, 0
      %p55 = por %p53, %p54
      %p56 = scmp.ne.s32.totalorder %s48, %s50
      %p57 = scmp.eq.s32.totalorder %s19, 3
      %p58 = por %p56, %p57
      %p59 = scmp.ne.s32.totalorder %s50, %s51
      %p60 = scmp.eq.s32.totalorder %s19, 0
      %p61 = por %p59, %p60
      %p62 = scmp.ne.s32.totalorder %s50, %s51
      %p63 = scmp.eq.s32.totalorder %s20, 3
      %p64 = por %p62, %p63
      %p66 = scmp.ne.s32.totalorder %s51, %s65
      %p67 = scmp.eq.s32.totalorder %s20, 0
      %p68 = por %p66, %p67
      %s70 = sadd.s32 %s69, 1
      %p73 = scmp.eq.s32.totalorder %s14, 3
      %p74 = scmp.ne.s32.totalorder %s69, %s71
      %p75 = scmp.eq.s32.totalorder %s14, 0
      %p76 = por %p74, %p75
      %p77 = scmp.ne.s32.totalorder %s69, %s71
      %p78 = scmp.eq.s32.totalorder %s19, 3
      %p79 = por %p77, %p78
      %p80 = scmp.ne.s32.totalorder %s71, %s72
      %p81 = scmp.eq.s32.totalorder %s19, 0
      %p82 = por %p80, %p81
      %p83 = scmp.ne.s32.totalorder %s71, %s72
      %p84 = scmp.eq.s32.totalorder %s20, 3
      %p85 = por %p83, %p84
      %p87 = scmp.ne.s32.totalorder %s72, %s86
      %p88 = scmp.eq.s32.totalorder %s20, 0
      %p89 = por %p87, %p88
      %s91 = sadd.s32 %s90, 1
      %p94 = scmp.eq.s32.totalorder %s14, 3
      %p95 = scmp.ne.s32.totalorder %s90, %s92
      %p96 = scmp.eq.s32.totalorder %s14, 0
      %p97 = por %p95, %p96
      %p98 = scmp.ne.s32.totalorder %s90, %s92
      %p99 = scmp.eq.s32.totalorder %s19, 3
      %p100 = por %p98, %p99
      %p101 = scmp.ne.s32.totalorder %s92, %s93
      %p102 = scmp.eq.s32.totalorder %s19, 0
      %p103 = por %p101, %p102
      %p104 = scmp.ne.s32.totalorder %s92, %s93
      %p105 = scmp.eq.s32.totalorder %s20, 3
      %p106 = por %p104, %p105
      %p108 = scmp.ne.s32.totalorder %s93, %s107
      %p109 = scmp.eq.s32.totalorder %s20, 0
      %p110 = por %p108, %p109
      %s112 = sadd.s32 %s111, 1
      %p115 = scmp.eq.s32.totalorder %s14, 3
      %p116 = scmp.ne.s32.totalorder %s111, %s113
      %p117 = scmp.eq.s32.totalorder %s14, 0
      %p118 = por %p116, %p117
      %p119 = scmp.ne.s32.totalorder %s111, %s113
      %p120 = scmp.eq.s32.totalorder %s19, 3
      %p121 = por %p119, %p120
      %p122 = scmp.ne.s32.totalorder %s113, %s114
      %p123 = scmp.eq.s32.totalorder %s19, 0
      %p124 = por %p122, %p123
      %p125 = scmp.ne.s32.totalorder %s113, %s114
      %p126 = scmp.eq.s32.totalorder %s20, 3
      %p127 = por %p125, %p126
      %p129 = scmp.ne.s32.totalorder %s114, %s128
      %p130 = scmp.eq.s32.totalorder %s20, 0
      %p131 = por %p129, %p130
      %s132 = ssub.s32 %s14, %s21
      %p133 = scmp.eq.s32.totalorder %s132, 0
      %s135 = sadd.s32 %s134, 1
      %s136 = scalar_select %p133, %s134, %s135
      %p139 = pneg %p133
      %p140 = scmp.eq.s32.totalorder %s14, 3
      %p141 = por %p139, %p140
      %p142 = scmp.ne.s32.totalorder %s134, %s137
      %p143 = scmp.eq.s32.totalorder %s14, 0
      %p144 = por %p142, %p143
      %p145 = scmp.ne.s32.totalorder %s134, %s137
      %p146 = scmp.eq.s32.totalorder %s19, 3
      %p147 = por %p145, %p146
      %p148 = scmp.ne.s32.totalorder %s137, %s138
      %p149 = scmp.eq.s32.totalorder %s19, 0
      %p150 = por %p148, %p149
      %p151 = scmp.ne.s32.totalorder %s137, %s138
      %p152 = scmp.eq.s32.totalorder %s20, 3
      %p153 = por %p151, %p152
      %p155 = scmp.ne.s32.totalorder %s138, %s154
      %p156 = scmp.eq.s32.totalorder %s20, 0
      %p157 = por %p155, %p156
      %p158 = scmp.le.s32.totalorder 1, %s14
      %p159 = scmp.lt.s32.totalorder %s14, 5
      %p160 = pnand %p158, %p159
      %p161 = pneg %p160
      // Predicated region
      $region9: #{tpu_custom_call.1} parent=5 // pred_check
        _
      $region10: #{tpu_custom_call.1} parent=5 // pred_check_branch
        %163 = sbr.rel (%p160) target = $region12
      $region11: #{tpu_custom_call.1} parent=5 // pred_region
        %s164 = ssub.s32 %s14, 1
        // Predicated region
        $region13: #{tpu_custom_call.1} parent=11 // pred_check
          %p165 = pneg %p61
        $region14: #{tpu_custom_call.1} parent=11 // pred_check_branch
          %167 = sbr.rel (%p165) target = $region16
        $region15: #{tpu_custom_call.1} parent=11 // pred_region
          _
        $region16: #{tpu_custom_call.1} parent=11 // pred_fallthru
          _
        // Predicated region
        $region17: #{tpu_custom_call.1} parent=11 // pred_check
          %p168 = pneg %p82
        $region18: #{tpu_custom_call.1} parent=11 // pred_check_branch
          %170 = sbr.rel (%p168) target = $region20
        $region19: #{tpu_custom_call.1} parent=11 // pred_region
          _
        $region20: #{tpu_custom_call.1} parent=11 // pred_fallthru
          _
        // Predicated region
        $region21: #{tpu_custom_call.1} parent=11 // pred_check
          %p171 = pneg %p103
        $region22: #{tpu_custom_call.1} parent=11 // pred_check_branch
          %173 = sbr.rel (%p171) target = $region24
        $region23: #{tpu_custom_call.1} parent=11 // pred_region
          _
        $region24: #{tpu_custom_call.1} parent=11 // pred_fallthru
          _
        // Predicated region
        $region25: #{tpu_custom_call.1} parent=11 // pred_check
          %p174 = pneg %p124
        $region26: #{tpu_custom_call.1} parent=11 // pred_check_branch
          %176 = sbr.rel (%p174) target = $region28
        $region27: #{tpu_custom_call.1} parent=11 // pred_region
          _
        $region28: #{tpu_custom_call.1} parent=11 // pred_fallthru
          _
      $region12: #{tpu_custom_call.1} parent=5 // pred_fallthru
        _
      %p177 = scmp.lt.s32.totalorder %s14, 4
      // Predicated region
      $region29: #{tpu_custom_call.1} parent=5 // pred_check
        %p178 = pneg %p177
      $region30: #{tpu_custom_call.1} parent=5 // pred_check_branch
        %180 = sbr.rel (%p178) target = $region32
      $region31: #{tpu_custom_call.1} parent=5 // pred_region
        // Predicated region
        $region33: #{tpu_custom_call.1} parent=31 // pred_check
          %p181 = pneg %p34
        $region34: #{tpu_custom_call.1} parent=31 // pred_check_branch
          %183 = sbr.rel (%p181) target = $region36
        $region35: #{tpu_custom_call.1} parent=31 // pred_region
          %s184 = smul.u32 8, %s14
          %p185 = scmp.lt.s32.totalorder %s184, 31
          %s186 = scalar_select %p185, %s184, 31
          %s187 = smul.addr %s186, 20
          %s188 = smul.addr %s187, 8
          %s189 = scalar_lea.vmem %s0, %s188
          %s190 = smul.u32 8, %s14
        $region36: #{tpu_custom_call.1} parent=31 // pred_fallthru
          _
      $region32: #{tpu_custom_call.1} parent=5 // pred_fallthru
        _
      %p191 = scmp.le.s32.totalorder 1, %s14
      %p192 = scmp.lt.s32.totalorder %s14, 5
      %p193 = pnand %p191, %p192
      %p194 = pneg %p193
      // Predicated region
      $region37: #{tpu_custom_call.1} parent=5 // pred_check
        _
      $region38: #{tpu_custom_call.1} parent=5 // pred_check_branch
        %196 = sbr.rel (%p193) target = $region40
      $region39: #{tpu_custom_call.1} parent=5 // pred_region
        %s197 = ssub.s32 %s14, 1
        %s198 = smul.u32 8, %s19
        %p199 = scmp.lt.s32.totalorder %s198, 31
        %s200 = scalar_select %p199, %s198, 31
        %s201 = smul.addr %s200, 20
        %s202 = smul.addr %s201, 8
        %s203 = scalar_lea.vmem %s0, %s202
        %p204 = pneg %p40
        %p205 = pneg %p37
        %p206 = pneg %p61
        %p207 = pneg %p58
        %p208 = pneg %p82
        %p209 = pneg %p79
        %p210 = pneg %p103
        %p211 = pneg %p100
        %p212 = pneg %p124
        %p213 = pneg %p121
        %p214 = pneg %p150
        %p215 = pneg %p147
        %s216 = sand.u32 %s137, 1
        %s217 = scalar_lea.sflag [#allocation4], %s216
        %s218 = sand.u32 %s137, 1
        %s219 = smul.addr %s218, 16
        %s220 = scalar_lea.vmem [#allocation3], %s219
        %s221 = smul.u32 8, %s19
        %p222 = scmp.lt.s32.totalorder %s221, 31
        %s223 = scalar_select %p222, %s221, 31
        %s224 = smul.addr %s223, 20
        %s225 = smul.addr %s224, 8
        %s226 = scalar_lea.vmem %s0, %s225
        %s227 = smul.u32 8, %s19
        %s228 = smul.u32 4, %s19
        %vm230 = vcmask 64512
        %231 = vst.msk [vmem:[#allocation2] sm:$0xff] %vm230, 0.0
        %vm232 = vcmask 58368
        %233 = vst.msk [vmem:[#allocation2 + $0x8] sm:$0x3] %vm232, 0.0
        %234 = vst.msk [vmem:[#allocation2 + $0xa0] sm:$0xff] %vm230, 0.0
        %235 = vst.msk [vmem:[#allocation2 + $0xa8] sm:$0x3] %vm232, 0.0
        %236 = vst.msk [vmem:[#allocation2 + $0x140] sm:$0xff] %vm230, 0.0
        %237 = vst.msk [vmem:[#allocation2 + $0x148] sm:$0x3] %vm232, 0.0
        %238 = vst.msk [vmem:[#allocation2 + $0x1e0] sm:$0xff] %vm230, 0.0
        %239 = vst.msk [vmem:[#allocation2 + $0x1e8] sm:$0x3] %vm232, 0.0
        %240 = vst.msk [vmem:[#allocation2 + $0x280] sm:$0xff] %vm230, 0.0
        %241 = vst.msk [vmem:[#allocation2 + $0x288] sm:$0x3] %vm232, 0.0
        %242 = vst.msk [vmem:[#allocation2 + $0x320] sm:$0xff] %vm230, 0.0
        %243 = vst.msk [vmem:[#allocation2 + $0x328] sm:$0x3] %vm232, 0.0
        %244 = vst.msk [vmem:[#allocation2 + $0x3c0] sm:$0xff] %vm230, 0.0
        %245 = vst.msk [vmem:[#allocation2 + $0x3c8] sm:$0x3] %vm232, 0.0
        %246 = vst.msk [vmem:[#allocation2 + $0x460] sm:$0xff] %vm230, 0.0
        %247 = vst.msk [vmem:[#allocation2 + $0x468] sm:$0x3] %vm232, 0.0
        %s248 = scalar_lea.vmem [#allocation2], 144
        %249 = vst.msk [vmem:[%s248] sm:$0xff] %vm230, 0.0
        %250 = vst.msk [vmem:[%s248 + $0x8] sm:$0x3] %vm232, 0.0
        %251 = vst.msk [vmem:[%s248 + $0xa0] sm:$0xff] %vm230, 0.0
        %252 = vst.msk [vmem:[%s248 + $0xa8] sm:$0x3] %vm232, 0.0
        %253 = vst.msk [vmem:[%s248 + $0x140] sm:$0xff] %vm230, 0.0
        %254 = vst.msk [vmem:[%s248 + $0x148] sm:$0x3] %vm232, 0.0
        %255 = vst.msk [vmem:[%s248 + $0x1e0] sm:$0xff] %vm230, 0.0
        %256 = vst.msk [vmem:[%s248 + $0x1e8] sm:$0x3] %vm232, 0.0
        %257 = vst.msk [vmem:[%s248 + $0x280] sm:$0xff] %vm230, 0.0
        %258 = vst.msk [vmem:[%s248 + $0x288] sm:$0x3] %vm232, 0.0
        %259 = vst.msk [vmem:[%s248 + $0x320] sm:$0xff] %vm230, 0.0
        %260 = vst.msk [vmem:[%s248 + $0x328] sm:$0x3] %vm232, 0.0
        %261 = vst.msk [vmem:[%s248 + $0x3c0] sm:$0xff] %vm230, 0.0
        %262 = vst.msk [vmem:[%s248 + $0x3c8] sm:$0x3] %vm232, 0.0
        %263 = vst.msk [vmem:[%s248 + $0x460] sm:$0xff] %vm230, 0.0
        %264 = vst.msk [vmem:[%s248 + $0x468] sm:$0x3] %vm232, 0.0
        %vm265 = vcmask 57344
        %266 = vst.msk [vmem:[#allocation2] sm:$0x1] %vm265, 0.0
        %267 = vst.msk [vmem:[#allocation2 + $0x10] sm:$0x1] %vm265, 0.0
        %268 = vst.msk [vmem:[#allocation2 + $0x20] sm:$0x1] %vm265, 0.0
        %269 = vst.msk [vmem:[#allocation2 + $0x30] sm:$0x1] %vm265, 0.0
        %270 = vst.msk [vmem:[#allocation2 + $0x40] sm:$0x1] %vm265, 0.0
        %271 = vst.msk [vmem:[#allocation2 + $0x50] sm:$0x1] %vm265, 0.0
        %272 = vst.msk [vmem:[#allocation2 + $0x60] sm:$0x1] %vm265, 0.0
        %273 = vst.msk [vmem:[#allocation2 + $0x70] sm:$0x1] %vm265, 0.0
        %274 = vst.msk [vmem:[#allocation2 + $0x80] sm:$0x1] %vm265, 0.0
        %275 = vst.msk [vmem:[#allocation2 + $0x90] sm:$0x1] %vm265, 0.0
        %276 = vst.msk [vmem:[#allocation2 + $0xa0] sm:$0x1] %vm265, 0.0
        %277 = vst.msk [vmem:[#allocation2 + $0xb0] sm:$0x1] %vm265, 0.0
        %278 = vst.msk [vmem:[#allocation2 + $0xc0] sm:$0x1] %vm265, 0.0
        %279 = vst.msk [vmem:[#allocation2 + $0xd0] sm:$0x1] %vm265, 0.0
        %280 = vst.msk [vmem:[#allocation2 + $0xe0] sm:$0x1] %vm265, 0.0
        %281 = vst.msk [vmem:[#allocation2 + $0xf0] sm:$0x1] %vm265, 0.0
        %282 = vst.msk [vmem:[#allocation2 + $0x100] sm:$0x1] %vm265, 0.0
        %283 = vst.msk [vmem:[#allocation2 + $0x110] sm:$0x1] %vm265, 0.0
        %284 = vst.msk [vmem:[#allocation2 + $0x120] sm:$0x1] %vm265, 0.0
        %285 = vst.msk [vmem:[#allocation2 + $0x130] sm:$0x1] %vm265, 0.0
        %286 = vst.msk [vmem:[#allocation2 + $0x140] sm:$0x1] %vm265, 0.0
        %287 = vst.msk [vmem:[#allocation2 + $0x150] sm:$0x1] %vm265, 0.0
        %288 = vst.msk [vmem:[#allocation2 + $0x160] sm:$0x1] %vm265, 0.0
        %289 = vst.msk [vmem:[#allocation2 + $0x170] sm:$0x1] %vm265, 0.0
        %290 = vst.msk [vmem:[#allocation2 + $0x180] sm:$0x1] %vm265, 0.0
        %291 = vst.msk [vmem:[#allocation2 + $0x190] sm:$0x1] %vm265, 0.0
        %292 = vst.msk [vmem:[#allocation2 + $0x1a0] sm:$0x1] %vm265, 0.0
        %293 = vst.msk [vmem:[#allocation2 + $0x1b0] sm:$0x1] %vm265, 0.0
        %294 = vst.msk [vmem:[#allocation2 + $0x1c0] sm:$0x1] %vm265, 0.0
        %295 = vst.msk [vmem:[#allocation2 + $0x1d0] sm:$0x1] %vm265, 0.0
        %296 = vst.msk [vmem:[#allocation2 + $0x1e0] sm:$0x1] %vm265, 0.0
        %297 = vst.msk [vmem:[#allocation2 + $0x1f0] sm:$0x1] %vm265, 0.0
        %298 = vst.msk [vmem:[#allocation2 + $0x200] sm:$0x1] %vm265, 0.0
        %299 = vst.msk [vmem:[#allocation2 + $0x210] sm:$0x1] %vm265, 0.0
        %300 = vst.msk [vmem:[#allocation2 + $0x220] sm:$0x1] %vm265, 0.0
        %301 = vst.msk [vmem:[#allocation2 + $0x230] sm:$0x1] %vm265, 0.0
        %302 = vst.msk [vmem:[#allocation2 + $0x240] sm:$0x1] %vm265, 0.0
        %303 = vst.msk [vmem:[#allocation2 + $0x250] sm:$0x1] %vm265, 0.0
        %304 = vst.msk [vmem:[#allocation2 + $0x260] sm:$0x1] %vm265, 0.0
        %305 = vst.msk [vmem:[#allocation2 + $0x270] sm:$0x1] %vm265, 0.0
        %306 = vst.msk [vmem:[#allocation2 + $0x280] sm:$0x1] %vm265, 0.0
        %307 = vst.msk [vmem:[#allocation2 + $0x290] sm:$0x1] %vm265, 0.0
        %308 = vst.msk [vmem:[#allocation2 + $0x2a0] sm:$0x1] %vm265, 0.0
        %309 = vst.msk [vmem:[#allocation2 + $0x2b0] sm:$0x1] %vm265, 0.0
        %310 = vst.msk [vmem:[#allocation2 + $0x2c0] sm:$0x1] %vm265, 0.0
        %311 = vst.msk [vmem:[#allocation2 + $0x2d0] sm:$0x1] %vm265, 0.0
        %312 = vst.msk [vmem:[#allocation2 + $0x2e0] sm:$0x1] %vm265, 0.0
        %313 = vst.msk [vmem:[#allocation2 + $0x2f0] sm:$0x1] %vm265, 0.0
        %314 = vst.msk [vmem:[#allocation2 + $0x300] sm:$0x1] %vm265, 0.0
        %315 = vst.msk [vmem:[#allocation2 + $0x310] sm:$0x1] %vm265, 0.0
        %316 = vst.msk [vmem:[#allocation2 + $0x320] sm:$0x1] %vm265, 0.0
        %317 = vst.msk [vmem:[#allocation2 + $0x330] sm:$0x1] %vm265, 0.0
        %318 = vst.msk [vmem:[#allocation2 + $0x340] sm:$0x1] %vm265, 0.0
        %319 = vst.msk [vmem:[#allocation2 + $0x350] sm:$0x1] %vm265, 0.0
        %320 = vst.msk [vmem:[#allocation2 + $0x360] sm:$0x1] %vm265, 0.0
        %321 = vst.msk [vmem:[#allocation2 + $0x370] sm:$0x1] %vm265, 0.0
        %322 = vst.msk [vmem:[#allocation2 + $0x380] sm:$0x1] %vm265, 0.0
        %323 = vst.msk [vmem:[#allocation2 + $0x390] sm:$0x1] %vm265, 0.0
        %324 = vst.msk [vmem:[#allocation2 + $0x3a0] sm:$0x1] %vm265, 0.0
        %325 = vst.msk [vmem:[#allocation2 + $0x3b0] sm:$0x1] %vm265, 0.0
        %326 = vst.msk [vmem:[#allocation2 + $0x3c0] sm:$0x1] %vm265, 0.0
        %327 = vst.msk [vmem:[#allocation2 + $0x3d0] sm:$0x1] %vm265, 0.0
        %328 = vst.msk [vmem:[#allocation2 + $0x3e0] sm:$0x1] %vm265, 0.0
        %329 = vst.msk [vmem:[#allocation2 + $0x3f0] sm:$0x1] %vm265, 0.0
        %330 = vst.msk [vmem:[#allocation2 + $0x400] sm:$0x1] %vm265, 0.0
        %331 = vst.msk [vmem:[#allocation2 + $0x410] sm:$0x1] %vm265, 0.0
        %332 = vst.msk [vmem:[#allocation2 + $0x420] sm:$0x1] %vm265, 0.0
        %333 = vst.msk [vmem:[#allocation2 + $0x430] sm:$0x1] %vm265, 0.0
        %334 = vst.msk [vmem:[#allocation2 + $0x440] sm:$0x1] %vm265, 0.0
        %335 = vst.msk [vmem:[#allocation2 + $0x450] sm:$0x1] %vm265, 0.0
        %336 = vst.msk [vmem:[#allocation2 + $0x460] sm:$0x1] %vm265, 0.0
        %337 = vst.msk [vmem:[#allocation2 + $0x470] sm:$0x1] %vm265, 0.0
        %338 = vst.msk [vmem:[#allocation2 + $0x480] sm:$0x1] %vm265, 0.0
        %339 = vst.msk [vmem:[#allocation2 + $0x490] sm:$0x1] %vm265, 0.0
        %340 = vst.msk [vmem:[#allocation2 + $0x4a0] sm:$0x1] %vm265, 0.0
        %341 = vst.msk [vmem:[#allocation2 + $0x4b0] sm:$0x1] %vm265, 0.0
        %342 = vst.msk [vmem:[#allocation2 + $0x4c0] sm:$0x1] %vm265, 0.0
        %343 = vst.msk [vmem:[#allocation2 + $0x4d0] sm:$0x1] %vm265, 0.0
        %344 = vst.msk [vmem:[#allocation2 + $0x4e0] sm:$0x1] %vm265, 0.0
        %345 = vst.msk [vmem:[#allocation2 + $0x4f0] sm:$0x1] %vm265, 0.0
        %346 = vst.msk [vmem:[#allocation2 + $0x9] sm:$0x1] %vm265, 0.0
        %347 = vst.msk [vmem:[#allocation2 + $0x19] sm:$0x1] %vm265, 0.0
        %348 = vst.msk [vmem:[#allocation2 + $0x29] sm:$0x1] %vm265, 0.0
        %349 = vst.msk [vmem:[#allocation2 + $0x39] sm:$0x1] %vm265, 0.0
        %350 = vst.msk [vmem:[#allocation2 + $0x49] sm:$0x1] %vm265, 0.0
        %351 = vst.msk [vmem:[#allocation2 + $0x59] sm:$0x1] %vm265, 0.0
        %352 = vst.msk [vmem:[#allocation2 + $0x69] sm:$0x1] %vm265, 0.0
        %353 = vst.msk [vmem:[#allocation2 + $0x79] sm:$0x1] %vm265, 0.0
        %354 = vst.msk [vmem:[#allocation2 + $0x89] sm:$0x1] %vm265, 0.0
        %355 = vst.msk [vmem:[#allocation2 + $0x99] sm:$0x1] %vm265, 0.0
        %356 = vst.msk [vmem:[#allocation2 + $0xa9] sm:$0x1] %vm265, 0.0
        %357 = vst.msk [vmem:[#allocation2 + $0xb9] sm:$0x1] %vm265, 0.0
        %358 = vst.msk [vmem:[#allocation2 + $0xc9] sm:$0x1] %vm265, 0.0
        %359 = vst.msk [vmem:[#allocation2 + $0xd9] sm:$0x1] %vm265, 0.0
        %360 = vst.msk [vmem:[#allocation2 + $0xe9] sm:$0x1] %vm265, 0.0
        %361 = vst.msk [vmem:[#allocation2 + $0xf9] sm:$0x1] %vm265, 0.0
        %362 = vst.msk [vmem:[#allocation2 + $0x109] sm:$0x1] %vm265, 0.0
        %363 = vst.msk [vmem:[#allocation2 + $0x119] sm:$0x1] %vm265, 0.0
        %364 = vst.msk [vmem:[#allocation2 + $0x129] sm:$0x1] %vm265, 0.0
        %365 = vst.msk [vmem:[#allocation2 + $0x139] sm:$0x1] %vm265, 0.0
        %366 = vst.msk [vmem:[#allocation2 + $0x149] sm:$0x1] %vm265, 0.0
        %367 = vst.msk [vmem:[#allocation2 + $0x159] sm:$0x1] %vm265, 0.0
        %368 = vst.msk [vmem:[#allocation2 + $0x169] sm:$0x1] %vm265, 0.0
        %369 = vst.msk [vmem:[#allocation2 + $0x179] sm:$0x1] %vm265, 0.0
        %370 = vst.msk [vmem:[#allocation2 + $0x189] sm:$0x1] %vm265, 0.0
        %371 = vst.msk [vmem:[#allocation2 + $0x199] sm:$0x1] %vm265, 0.0
        %372 = vst.msk [vmem:[#allocation2 + $0x1a9] sm:$0x1] %vm265, 0.0
        %373 = vst.msk [vmem:[#allocation2 + $0x1b9] sm:$0x1] %vm265, 0.0
        %374 = vst.msk [vmem:[#allocation2 + $0x1c9] sm:$0x1] %vm265, 0.0
        %375 = vst.msk [vmem:[#allocation2 + $0x1d9] sm:$0x1] %vm265, 0.0
        %376 = vst.msk [vmem:[#allocation2 + $0x1e9] sm:$0x1] %vm265, 0.0
        %377 = vst.msk [vmem:[#allocation2 + $0x1f9] sm:$0x1] %vm265, 0.0
        %378 = vst.msk [vmem:[#allocation2 + $0x209] sm:$0x1] %vm265, 0.0
        %379 = vst.msk [vmem:[#allocation2 + $0x219] sm:$0x1] %vm265, 0.0
        %380 = vst.msk [vmem:[#allocation2 + $0x229] sm:$0x1] %vm265, 0.0
        %381 = vst.msk [vmem:[#allocation2 + $0x239] sm:$0x1] %vm265, 0.0
        %382 = vst.msk [vmem:[#allocation2 + $0x249] sm:$0x1] %vm265, 0.0
        %383 = vst.msk [vmem:[#allocation2 + $0x259] sm:$0x1] %vm265, 0.0
        %384 = vst.msk [vmem:[#allocation2 + $0x269] sm:$0x1] %vm265, 0.0
        %385 = vst.msk [vmem:[#allocation2 + $0x279] sm:$0x1] %vm265, 0.0
        %386 = vst.msk [vmem:[#allocation2 + $0x289] sm:$0x1] %vm265, 0.0
        %387 = vst.msk [vmem:[#allocation2 + $0x299] sm:$0x1] %vm265, 0.0
        %388 = vst.msk [vmem:[#allocation2 + $0x2a9] sm:$0x1] %vm265, 0.0
        %389 = vst.msk [vmem:[#allocation2 + $0x2b9] sm:$0x1] %vm265, 0.0
        %390 = vst.msk [vmem:[#allocation2 + $0x2c9] sm:$0x1] %vm265, 0.0
        %391 = vst.msk [vmem:[#allocation2 + $0x2d9] sm:$0x1] %vm265, 0.0
        %392 = vst.msk [vmem:[#allocation2 + $0x2e9] sm:$0x1] %vm265, 0.0
        %393 = vst.msk [vmem:[#allocation2 + $0x2f9] sm:$0x1] %vm265, 0.0
        %394 = vst.msk [vmem:[#allocation2 + $0x309] sm:$0x1] %vm265, 0.0
        %395 = vst.msk [vmem:[#allocation2 + $0x319] sm:$0x1] %vm265, 0.0
        %396 = vst.msk [vmem:[#allocation2 + $0x329] sm:$0x1] %vm265, 0.0
        %397 = vst.msk [vmem:[#allocation2 + $0x339] sm:$0x1] %vm265, 0.0
        %398 = vst.msk [vmem:[#allocation2 + $0x349] sm:$0x1] %vm265, 0.0
        %399 = vst.msk [vmem:[#allocation2 + $0x359] sm:$0x1] %vm265, 0.0
        %400 = vst.msk [vmem:[#allocation2 + $0x369] sm:$0x1] %vm265, 0.0
        %401 = vst.msk [vmem:[#allocation2 + $0x379] sm:$0x1] %vm265, 0.0
        %402 = vst.msk [vmem:[#allocation2 + $0x389] sm:$0x1] %vm265, 0.0
        %403 = vst.msk [vmem:[#allocation2 + $0x399] sm:$0x1] %vm265, 0.0
        %404 = vst.msk [vmem:[#allocation2 + $0x3a9] sm:$0x1] %vm265, 0.0
        %405 = vst.msk [vmem:[#allocation2 + $0x3b9] sm:$0x1] %vm265, 0.0
        %406 = vst.msk [vmem:[#allocation2 + $0x3c9] sm:$0x1] %vm265, 0.0
        %407 = vst.msk [vmem:[#allocation2 + $0x3d9] sm:$0x1] %vm265, 0.0
        %408 = vst.msk [vmem:[#allocation2 + $0x3e9] sm:$0x1] %vm265, 0.0
        %409 = vst.msk [vmem:[#allocation2 + $0x3f9] sm:$0x1] %vm265, 0.0
        %410 = vst.msk [vmem:[#allocation2 + $0x409] sm:$0x1] %vm265, 0.0
        %411 = vst.msk [vmem:[#allocation2 + $0x419] sm:$0x1] %vm265, 0.0
        %412 = vst.msk [vmem:[#allocation2 + $0x429] sm:$0x1] %vm265, 0.0
        %413 = vst.msk [vmem:[#allocation2 + $0x439] sm:$0x1] %vm265, 0.0
        %414 = vst.msk [vmem:[#allocation2 + $0x449] sm:$0x1] %vm265, 0.0
        %415 = vst.msk [vmem:[#allocation2 + $0x459] sm:$0x1] %vm265, 0.0
        %416 = vst.msk [vmem:[#allocation2 + $0x469] sm:$0x1] %vm265, 0.0
        %417 = vst.msk [vmem:[#allocation2 + $0x479] sm:$0x1] %vm265, 0.0
        %418 = vst.msk [vmem:[#allocation2 + $0x489] sm:$0x1] %vm265, 0.0
        %419 = vst.msk [vmem:[#allocation2 + $0x499] sm:$0x1] %vm265, 0.0
        %420 = vst.msk [vmem:[#allocation2 + $0x4a9] sm:$0x1] %vm265, 0.0
        %421 = vst.msk [vmem:[#allocation2 + $0x4b9] sm:$0x1] %vm265, 0.0
        %422 = vst.msk [vmem:[#allocation2 + $0x4c9] sm:$0x1] %vm265, 0.0
        %423 = vst.msk [vmem:[#allocation2 + $0x4d9] sm:$0x1] %vm265, 0.0
        %424 = vst.msk [vmem:[#allocation2 + $0x4e9] sm:$0x1] %vm265, 0.0
        %425 = vst.msk [vmem:[#allocation2 + $0x4f9] sm:$0x1] %vm265, 0.0
        %v426 = vld [vmem:[%s226] sm:$0xff]
        %v427 = vld [vmem:[%s226 + $0x10] sm:$0xff]
        %v428 = vld [vmem:[%s226 + $0x20] sm:$0xff]
        %v429 = vld [vmem:[%s226 + $0x30] sm:$0xff]
        %v430 = vld [vmem:[%s226 + $0x40] sm:$0xff]
        %v431 = vld [vmem:[%s226 + $0x50] sm:$0xff]
        %v432 = vld [vmem:[%s226 + $0x60] sm:$0xff]
        %v433 = vld [vmem:[%s226 + $0x70] sm:$0xff]
        %v434 = vld [vmem:[%s226 + $0xa0] sm:$0xff]
        %v435 = vld [vmem:[%s226 + $0xb0] sm:$0xff]
        %v436 = vld [vmem:[%s226 + $0xc0] sm:$0xff]
        %v437 = vld [vmem:[%s226 + $0xd0] sm:$0xff]
        %v438 = vld [vmem:[%s226 + $0xe0] sm:$0xff]
        %v439 = vld [vmem:[%s226 + $0xf0] sm:$0xff]
        %v440 = vld [vmem:[%s226 + $0x100] sm:$0xff]
        %v441 = vld [vmem:[%s226 + $0x110] sm:$0xff]
        %v442 = vld [vmem:[%s226 + $0x140] sm:$0xff]
        %v443 = vld [vmem:[%s226 + $0x150] sm:$0xff]
        %v444 = vld [vmem:[%s226 + $0x160] sm:$0xff]
        %v445 = vld [vmem:[%s226 + $0x170] sm:$0xff]
        %v446 = vld [vmem:[%s226 + $0x180] sm:$0xff]
        %v447 = vld [vmem:[%s226 + $0x190] sm:$0xff]
        %v448 = vld [vmem:[%s226 + $0x1a0] sm:$0xff]
        %v449 = vld [vmem:[%s226 + $0x1b0] sm:$0xff]
        %v450 = vld [vmem:[%s226 + $0x1e0] sm:$0xff]
        %v451 = vld [vmem:[%s226 + $0x1f0] sm:$0xff]
        %v452 = vld [vmem:[%s226 + $0x200] sm:$0xff]
        %v453 = vld [vmem:[%s226 + $0x210] sm:$0xff]
        %v454 = vld [vmem:[%s226 + $0x220] sm:$0xff]
        %v455 = vld [vmem:[%s226 + $0x230] sm:$0xff]
        %v456 = vld [vmem:[%s226 + $0x240] sm:$0xff]
        %v457 = vld [vmem:[%s226 + $0x250] sm:$0xff]
        %v458 = vld [vmem:[%s226 + $0x280] sm:$0xff]
        %v459 = vld [vmem:[%s226 + $0x290] sm:$0xff]
        %v460 = vld [vmem:[%s226 + $0x2a0] sm:$0xff]
        %v461 = vld [vmem:[%s226 + $0x2b0] sm:$0xff]
        %v462 = vld [vmem:[%s226 + $0x2c0] sm:$0xff]
        %v463 = vld [vmem:[%s226 + $0x2d0] sm:$0xff]
        %v464 = vld [vmem:[%s226 + $0x2e0] sm:$0xff]
        %v465 = vld [vmem:[%s226 + $0x2f0] sm:$0xff]
        %v466 = vld [vmem:[%s226 + $0x320] sm:$0xff]
        %v467 = vld [vmem:[%s226 + $0x330] sm:$0xff]
        %v468 = vld [vmem:[%s226 + $0x340] sm:$0xff]
        %v469 = vld [vmem:[%s226 + $0x350] sm:$0xff]
        %v470 = vld [vmem:[%s226 + $0x360] sm:$0xff]
        %v471 = vld [vmem:[%s226 + $0x370] sm:$0xff]
        %v472 = vld [vmem:[%s226 + $0x380] sm:$0xff]
        %v473 = vld [vmem:[%s226 + $0x390] sm:$0xff]
        %v474 = vld [vmem:[%s226 + $0x3c0] sm:$0xff]
        %v475 = vld [vmem:[%s226 + $0x3d0] sm:$0xff]
        %v476 = vld [vmem:[%s226 + $0x3e0] sm:$0xff]
        %v477 = vld [vmem:[%s226 + $0x3f0] sm:$0xff]
        %v478 = vld [vmem:[%s226 + $0x400] sm:$0xff]
        %v479 = vld [vmem:[%s226 + $0x410] sm:$0xff]
        %v480 = vld [vmem:[%s226 + $0x420] sm:$0xff]
        %v481 = vld [vmem:[%s226 + $0x430] sm:$0xff]
        %v482 = vld [vmem:[%s226 + $0x460] sm:$0xff]
        %v483 = vld [vmem:[%s226 + $0x470] sm:$0xff]
        %v484 = vld [vmem:[%s226 + $0x480] sm:$0xff]
        %v485 = vld [vmem:[%s226 + $0x490] sm:$0xff]
        %v486 = vld [vmem:[%s226 + $0x4a0] sm:$0xff]
        %v487 = vld [vmem:[%s226 + $0x4b0] sm:$0xff]
        %v488 = vld [vmem:[%s226 + $0x4c0] sm:$0xff]
        %v489 = vld [vmem:[%s226 + $0x4d0] sm:$0xff]
        %v490 = vpack.c.bf16 %v427, %v426
        %v491 = vpack.c.bf16 %v429, %v428
        %v492 = vpack.c.bf16 %v431, %v430
        %v493 = vpack.c.bf16 %v433, %v432
        %v494 = vpack.c.bf16 %v435, %v434
        %v495 = vpack.c.bf16 %v437, %v436
        %v496 = vpack.c.bf16 %v439, %v438
        %v497 = vpack.c.bf16 %v441, %v440
        %v498 = vpack.c.bf16 %v443, %v442
        %v499 = vpack.c.bf16 %v445, %v444
        %v500 = vpack.c.bf16 %v447, %v446
        %v501 = vpack.c.bf16 %v449, %v448
        %v502 = vpack.c.bf16 %v451, %v450
        %v503 = vpack.c.bf16 %v453, %v452
        %v504 = vpack.c.bf16 %v455, %v454
        %v505 = vpack.c.bf16 %v457, %v456
        %v506 = vpack.c.bf16 %v459, %v458
        %v507 = vpack.c.bf16 %v461, %v460
        %v508 = vpack.c.bf16 %v463, %v462
        %v509 = vpack.c.bf16 %v465, %v464
        %v510 = vpack.c.bf16 %v467, %v466
        %v511 = vpack.c.bf16 %v469, %v468
        %v512 = vpack.c.bf16 %v471, %v470
        %v513 = vpack.c.bf16 %v473, %v472
        %v514 = vpack.c.bf16 %v475, %v474
        %v515 = vpack.c.bf16 %v477, %v476
        %v516 = vpack.c.bf16 %v479, %v478
        %v517 = vpack.c.bf16 %v481, %v480
        %v518 = vpack.c.bf16 %v483, %v482
        %v519 = vpack.c.bf16 %v485, %v484
        %v520 = vpack.c.bf16 %v487, %v486
        %v521 = vpack.c.bf16 %v489, %v488
        %v522 = vld [vmem:[%s1] sm:$0xf]
        %v523 = vld [vmem:[%s226 + $0x1] sm:$0xff]
        %v524 = vld [vmem:[%s226 + $0x11] sm:$0xff]
        %v525 = vld [vmem:[%s226 + $0x21] sm:$0xff]
        %v526 = vld [vmem:[%s226 + $0x31] sm:$0xff]
        %v527 = vld [vmem:[%s226 + $0x41] sm:$0xff]
        %v528 = vld [vmem:[%s226 + $0x51] sm:$0xff]
        %v529 = vld [vmem:[%s226 + $0x61] sm:$0xff]
        %v530 = vld [vmem:[%s226 + $0x71] sm:$0xff]
        %v531 = vld [vmem:[%s226 + $0xa1] sm:$0xff]
        %v532 = vld [vmem:[%s226 + $0xb1] sm:$0xff]
        %v533 = vld [vmem:[%s226 + $0xc1] sm:$0xff]
        %v534 = vld [vmem:[%s226 + $0xd1] sm:$0xff]
        %v535 = vld [vmem:[%s226 + $0xe1] sm:$0xff]
        %v536 = vld [vmem:[%s226 + $0xf1] sm:$0xff]
        %v537 = vld [vmem:[%s226 + $0x101] sm:$0xff]
        %v538 = vld [vmem:[%s226 + $0x111] sm:$0xff]
        %v539 = vld [vmem:[%s226 + $0x141] sm:$0xff]
        %v540 = vld [vmem:[%s226 + $0x151] sm:$0xff]
        %v541 = vld [vmem:[%s226 + $0x161] sm:$0xff]
        %v542 = vld [vmem:[%s226 + $0x171] sm:$0xff]
        %v543 = vld [vmem:[%s226 + $0x181] sm:$0xff]
        %v544 = vld [vmem:[%s226 + $0x191] sm:$0xff]
        %v545 = vld [vmem:[%s226 + $0x1a1] sm:$0xff]
        %v546 = vld [vmem:[%s226 + $0x1b1] sm:$0xff]
        %v547 = vld [vmem:[%s226 + $0x1e1] sm:$0xff]
        %v548 = vld [vmem:[%s226 + $0x1f1] sm:$0xff]
        %v549 = vld [vmem:[%s226 + $0x201] sm:$0xff]
        %v550 = vld [vmem:[%s226 + $0x211] sm:$0xff]
        %v551 = vld [vmem:[%s226 + $0x221] sm:$0xff]
        %v552 = vld [vmem:[%s226 + $0x231] sm:$0xff]
        %v553 = vld [vmem:[%s226 + $0x241] sm:$0xff]
        %v554 = vld [vmem:[%s226 + $0x251] sm:$0xff]
        %v555 = vld [vmem:[%s226 + $0x281] sm:$0xff]
        %v556 = vld [vmem:[%s226 + $0x291] sm:$0xff]
        %v557 = vld [vmem:[%s226 + $0x2a1] sm:$0xff]
        %v558 = vld [vmem:[%s226 + $0x2b1] sm:$0xff]
        %v559 = vld [vmem:[%s226 + $0x2c1] sm:$0xff]
        %v560 = vld [vmem:[%s226 + $0x2d1] sm:$0xff]
        %v561 = vld [vmem:[%s226 + $0x2e1] sm:$0xff]
        %v562 = vld [vmem:[%s226 + $0x2f1] sm:$0xff]
        %v563 = vld [vmem:[%s226 + $0x321] sm:$0xff]
        %v564 = vld [vmem:[%s226 + $0x331] sm:$0xff]
        %v565 = vld [vmem:[%s226 + $0x341] sm:$0xff]
        %v566 = vld [vmem:[%s226 + $0x351] sm:$0xff]
        %v567 = vld [vmem:[%s226 + $0x361] sm:$0xff]
        %v568 = vld [vmem:[%s226 + $0x371] sm:$0xff]
        %v569 = vld [vmem:[%s226 + $0x381] sm:$0xff]
        %v570 = vld [vmem:[%s226 + $0x391] sm:$0xff]
        %v571 = vld [vmem:[%s226 + $0x3c1] sm:$0xff]
        %v572 = vld [vmem:[%s226 + $0x3d1] sm:$0xff]
        %v573 = vld [vmem:[%s226 + $0x3e1] sm:$0xff]
        %v574 = vld [vmem:[%s226 + $0x3f1] sm:$0xff]
        %v575 = vld [vmem:[%s226 + $0x401] sm:$0xff]
        %v576 = vld [vmem:[%s226 + $0x411] sm:$0xff]
        %v577 = vld [vmem:[%s226 + $0x421] sm:$0xff]
        %v578 = vld [vmem:[%s226 + $0x431] sm:$0xff]
        %v579 = vld [vmem:[%s226 + $0x461] sm:$0xff]
        %v580 = vld [vmem:[%s226 + $0x471] sm:$0xff]
        %v581 = vld [vmem:[%s226 + $0x481] sm:$0xff]
        %v582 = vld [vmem:[%s226 + $0x491] sm:$0xff]
        %v583 = vld [vmem:[%s226 + $0x4a1] sm:$0xff]
        %v584 = vld [vmem:[%s226 + $0x4b1] sm:$0xff]
        %v585 = vld [vmem:[%s226 + $0x4c1] sm:$0xff]
        %v586 = vld [vmem:[%s226 + $0x4d1] sm:$0xff]
        %v587 = vpack.c.bf16 %v524, %v523
        %v588 = vpack.c.bf16 %v526, %v525
        %v589 = vpack.c.bf16 %v528, %v527
        %v590 = vpack.c.bf16 %v530, %v529
        %v591 = vpack.c.bf16 %v532, %v531
        %v592 = vpack.c.bf16 %v534, %v533
        %v593 = vpack.c.bf16 %v536, %v535
        %v594 = vpack.c.bf16 %v538, %v537
        %v595 = vpack.c.bf16 %v540, %v539
        %v596 = vpack.c.bf16 %v542, %v541
        %v597 = vpack.c.bf16 %v544, %v543
        %v598 = vpack.c.bf16 %v546, %v545
        %v599 = vpack.c.bf16 %v548, %v547
        %v600 = vpack.c.bf16 %v550, %v549
        %v601 = vpack.c.bf16 %v552, %v551
        %v602 = vpack.c.bf16 %v554, %v553
        %v603 = vpack.c.bf16 %v556, %v555
        %v604 = vpack.c.bf16 %v558, %v557
        %v605 = vpack.c.bf16 %v560, %v559
        %v606 = vpack.c.bf16 %v562, %v561
        %v607 = vpack.c.bf16 %v564, %v563
        %v608 = vpack.c.bf16 %v566, %v565
        %v609 = vpack.c.bf16 %v568, %v567
        %v610 = vpack.c.bf16 %v570, %v569
        %v611 = vpack.c.bf16 %v572, %v571
        %v612 = vpack.c.bf16 %v574, %v573
        %v613 = vpack.c.bf16 %v576, %v575
        %v614 = vpack.c.bf16 %v578, %v577
        %v615 = vpack.c.bf16 %v580, %v579
        %v616 = vpack.c.bf16 %v582, %v581
        %v617 = vpack.c.bf16 %v584, %v583
        %v618 = vpack.c.bf16 %v586, %v585
        %s619 = scalar_lea.vmem %s1, 4
        %v620 = vld [vmem:[%s619] sm:$0xf]
        %v622 = vsel %vm230, %v587, 0
        %v625 = vsel %vm230, %v588, 0
        %v628 = vsel %vm230, %v589, 0
        %v631 = vsel %vm230, %v590, 0
        %v634 = vsel %vm230, %v591, 0
        %v637 = vsel %vm230, %v592, 0
        %v640 = vsel %vm230, %v593, 0
        %v643 = vsel %vm230, %v594, 0
        %v646 = vsel %vm230, %v595, 0
        %v649 = vsel %vm230, %v596, 0
        %v652 = vsel %vm230, %v597, 0
        %v655 = vsel %vm230, %v598, 0
        %v658 = vsel %vm230, %v599, 0
        %v661 = vsel %vm230, %v600, 0
        %v664 = vsel %vm230, %v601, 0
        %v667 = vsel %vm230, %v602, 0
        %v670 = vsel %vm230, %v603, 0
        %v673 = vsel %vm230, %v604, 0
        %v676 = vsel %vm230, %v605, 0
        %v679 = vsel %vm230, %v606, 0
        %v682 = vsel %vm230, %v607, 0
        %v685 = vsel %vm230, %v608, 0
        %v688 = vsel %vm230, %v609, 0
        %v691 = vsel %vm230, %v610, 0
        %v694 = vsel %vm230, %v611, 0
        %v697 = vsel %vm230, %v612, 0
        %v700 = vsel %vm230, %v613, 0
        %v703 = vsel %vm230, %v614, 0
        %v706 = vsel %vm230, %v615, 0
        %v709 = vsel %vm230, %v616, 0
        %v712 = vsel %vm230, %v617, 0
        %v715 = vsel %vm230, %v618, 0
        %vm717 = vcmask 1043456
        %v719 = vsel %vm717, %v620, 0
        %721 = vmatprep.subr.bf16.mxu0 0
        %722 = vmatpush1.bf16.msra.mxu0 0
        %723 = vmatprep.subr.bf16.mxu0 0
        %724 = vmatpush1.bf16.msra.mxu0 0
        %725 = vmatprep.subr.bf16.mxu0 0
        %726 = vmatpush1.bf16.msra.mxu0 0
        %727 = vmatprep.subr.bf16.mxu0 0
        %728 = vmatpush1.bf16.msra.mxu0 0
        %729 = vmatprep.subr.bf16.mxu0 0
        %730 = vmatpush1.bf16.msra.mxu0 0
        %731 = vmatprep.subr.bf16.mxu0 0
        %732 = vmatpush1.bf16.msra.mxu0 0
        %733 = vmatprep.subr.bf16.mxu0 0
        %734 = vmatpush1.bf16.msra.mxu0 0
        %735 = vmatprep.subr.bf16.mxu0 0
        %736 = vmatpush1.bf16.msra.mxu0 %v719
        %737 = vmatprep.subr.bf16.mxu0 0
        %738 = vmatpush2.bf16.msra.mxu0 0
        %739 = vmatprep.subr.bf16.mxu0 0
        %740 = vmatpush2.bf16.msra.mxu0 0
        %741 = vmatprep.subr.bf16.mxu0 0
        %742 = vmatpush2.bf16.msra.mxu0 0
        %743 = vmatprep.subr.bf16.mxu0 0
        %744 = vmatpush2.bf16.msra.mxu0 0
        %745 = vmatprep.subr.bf16.mxu0 0
        %746 = vmatpush2.bf16.msra.mxu0 0
        %747 = vmatprep.subr.bf16.mxu0 0
        %748 = vmatpush2.bf16.msra.mxu0 0
        %749 = vmatprep.subr.bf16.mxu0 0
        %750 = vmatpush2.bf16.msra.mxu0 0
        %751 = vmatprep.subr.bf16.mxu0 0
        %752 = vmatpush2.bf16.msra.mxu0 0
        %753 = vmatprep.mubr.bf16.mxu0 0
        %754 = vmatmul.mubr.bf16.gmra.mxu0 %v622
        %v755 = vpop.f32.mrf.mxu0
        %v756 = vadd.f32 0.0, %v755
        %v757 = vpop.f32.mrf.mxu0
        %v758 = vpop.f32.mrf.mxu0
        %v759 = vadd.f32 0.0, %v758
        %v760 = vpop.f32.mrf.mxu0
        %761 = vmatprep.mubr.bf16.mxu0 0
        %762 = vmatmul.mubr.bf16.gmra.mxu0 %v625
        %v763 = vpop.f32.mrf.mxu0
        %v764 = vadd.f32 0.0, %v763
        %v765 = vpop.f32.mrf.mxu0
        %v766 = vpop.f32.mrf.mxu0
        %v767 = vadd.f32 0.0, %v766
        %v768 = vpop.f32.mrf.mxu0
        %769 = vmatprep.mubr.bf16.mxu0 0
        %770 = vmatmul.mubr.bf16.gmra.mxu0 %v628
        %v771 = vpop.f32.mrf.mxu0
        %v772 = vadd.f32 0.0, %v771
        %v773 = vpop.f32.mrf.mxu0
        %v774 = vpop.f32.mrf.mxu0
        %v775 = vadd.f32 0.0, %v774
        %v776 = vpop.f32.mrf.mxu0
        %777 = vmatprep.mubr.bf16.mxu0 0
        %778 = vmatmul.mubr.bf16.gmra.mxu0 %v631
        %v779 = vpop.f32.mrf.mxu0
        %v780 = vadd.f32 0.0, %v779
        %v781 = vpop.f32.mrf.mxu0
        %v782 = vpop.f32.mrf.mxu0
        %v783 = vadd.f32 0.0, %v782
        %v784 = vpop.f32.mrf.mxu0
        %785 = vmatprep.mubr.bf16.mxu0 0
        %786 = vmatmul.mubr.bf16.gmra.mxu0 %v634
        %v787 = vpop.f32.mrf.mxu0
        %v788 = vadd.f32 0.0, %v787
        %v789 = vpop.f32.mrf.mxu0
        %v790 = vpop.f32.mrf.mxu0
        %v791 = vadd.f32 0.0, %v790
        %v792 = vpop.f32.mrf.mxu0
        %793 = vmatprep.mubr.bf16.mxu0 0
        %794 = vmatmul.mubr.bf16.gmra.mxu0 %v637
        %v795 = vpop.f32.mrf.mxu0
        %v796 = vadd.f32 0.0, %v795
        %v797 = vpop.f32.mrf.mxu0
        %v798 = vpop.f32.mrf.mxu0
        %v799 = vadd.f32 0.0, %v798
        %v800 = vpop.f32.mrf.mxu0
        %801 = vmatprep.mubr.bf16.mxu0 0
        %802 = vmatmul.mubr.bf16.gmra.mxu0 %v640
        %v803 = vpop.f32.mrf.mxu0
        %v804 = vadd.f32 0.0, %v803
        %v805 = vpop.f32.mrf.mxu0
        %v806 = vpop.f32.mrf.mxu0
        %v807 = vadd.f32 0.0, %v806
        %v808 = vpop.f32.mrf.mxu0
        %809 = vmatprep.mubr.bf16.mxu0 0
        %810 = vmatmul.mubr.bf16.gmra.mxu0 %v643
        %v811 = vpop.f32.mrf.mxu0
        %v812 = vadd.f32 0.0, %v811
        %v813 = vpop.f32.mrf.mxu0
        %v814 = vpop.f32.mrf.mxu0
        %v815 = vadd.f32 0.0, %v814
        %v816 = vpop.f32.mrf.mxu0
        %817 = vmatprep.mubr.bf16.mxu0 0
        %818 = vmatmul.mubr.bf16.gmra.mxu0 %v646
        %v819 = vpop.f32.mrf.mxu0
        %v820 = vadd.f32 0.0, %v819
        %v821 = vpop.f32.mrf.mxu0
        %v822 = vpop.f32.mrf.mxu0
        %v823 = vadd.f32 0.0, %v822
        %v824 = vpop.f32.mrf.mxu0
        %825 = vmatprep.mubr.bf16.mxu0 0
        %826 = vmatmul.mubr.bf16.gmra.mxu0 %v649
        %v827 = vpop.f32.mrf.mxu0
        %v828 = vadd.f32 0.0, %v827
        %v829 = vpop.f32.mrf.mxu0
        %v830 = vpop.f32.mrf.mxu0
        %v831 = vadd.f32 0.0, %v830
        %v832 = vpop.f32.mrf.mxu0
        %833 = vmatprep.mubr.bf16.mxu0 0
        %834 = vmatmul.mubr.bf16.gmra.mxu0 %v652
        %v835 = vpop.f32.mrf.mxu0
        %v836 = vadd.f32 0.0, %v835
        %v837 = vpop.f32.mrf.mxu0
        %v838 = vpop.f32.mrf.mxu0
        %v839 = vadd.f32 0.0, %v838
        %v840 = vpop.f32.mrf.mxu0
        %841 = vmatprep.mubr.bf16.mxu0 0
        %842 = vmatmul.mubr.bf16.gmra.mxu0 %v655
        %v843 = vpop.f32.mrf.mxu0
        %v844 = vadd.f32 0.0, %v843
        %v845 = vpop.f32.mrf.mxu0
        %v846 = vpop.f32.mrf.mxu0
        %v847 = vadd.f32 0.0, %v846
        %v848 = vpop.f32.mrf.mxu0
        %849 = vmatprep.mubr.bf16.mxu0 0
        %850 = vmatmul.mubr.bf16.gmra.mxu0 %v658
        %v851 = vpop.f32.mrf.mxu0
        %v852 = vadd.f32 0.0, %v851
        %v853 = vpop.f32.mrf.mxu0
        %v854 = vpop.f32.mrf.mxu0
        %v855 = vadd.f32 0.0, %v854
        %v856 = vpop.f32.mrf.mxu0
        %857 = vmatprep.mubr.bf16.mxu0 0
        %858 = vmatmul.mubr.bf16.gmra.mxu0 %v661
        %v859 = vpop.f32.mrf.mxu0
        %v860 = vadd.f32 0.0, %v859
        %v861 = vpop.f32.mrf.mxu0
        %v862 = vpop.f32.mrf.mxu0
        %v863 = vadd.f32 0.0, %v862
        %v864 = vpop.f32.mrf.mxu0
        %865 = vmatprep.mubr.bf16.mxu0 0
        %866 = vmatmul.mubr.bf16.gmra.mxu0 %v664
        %v867 = vpop.f32.mrf.mxu0
        %v868 = vadd.f32 0.0, %v867
        %v869 = vpop.f32.mrf.mxu0
        %v870 = vpop.f32.mrf.mxu0
        %v871 = vadd.f32 0.0, %v870
        %v872 = vpop.f32.mrf.mxu0
        %873 = vmatprep.mubr.bf16.mxu0 0
        %874 = vmatmul.mubr.bf16.gmra.mxu0 %v667
        %v875 = vpop.f32.mrf.mxu0
        %v876 = vadd.f32 0.0, %v875
        %v877 = vpop.f32.mrf.mxu0
        %v878 = vpop.f32.mrf.mxu0
        %v879 = vadd.f32 0.0, %v878
        %v880 = vpop.f32.mrf.mxu0
        %881 = vmatprep.mubr.bf16.mxu0 0
        %882 = vmatmul.mubr.bf16.gmra.mxu0 %v670
        %v883 = vpop.f32.mrf.mxu0
        %v884 = vadd.f32 0.0, %v883
        %v885 = vpop.f32.mrf.mxu0
        %v886 = vpop.f32.mrf.mxu0
        %v887 = vadd.f32 0.0, %v886
        %v888 = vpop.f32.mrf.mxu0
        %889 = vmatprep.mubr.bf16.mxu0 0
        %890 = vmatmul.mubr.bf16.gmra.mxu0 %v673
        %v891 = vpop.f32.mrf.mxu0
        %v892 = vadd.f32 0.0, %v891
        %v893 = vpop.f32.mrf.mxu0
        %v894 = vpop.f32.mrf.mxu0
        %v895 = vadd.f32 0.0, %v894
        %v896 = vpop.f32.mrf.mxu0
        %897 = vmatprep.mubr.bf16.mxu0 0
        %898 = vmatmul.mubr.bf16.gmra.mxu0 %v676
        %v899 = vpop.f32.mrf.mxu0
        %v900 = vadd.f32 0.0, %v899
        %v901 = vpop.f32.mrf.mxu0
        %v902 = vpop.f32.mrf.mxu0
        %v903 = vadd.f32 0.0, %v902
        %v904 = vpop.f32.mrf.mxu0
        %905 = vmatprep.mubr.bf16.mxu0 0
        %906 = vmatmul.mubr.bf16.gmra.mxu0 %v679
        %v907 = vpop.f32.mrf.mxu0
        %v908 = vadd.f32 0.0, %v907
        %v909 = vpop.f32.mrf.mxu0
        %v910 = vpop.f32.mrf.mxu0
        %v911 = vadd.f32 0.0, %v910
        %v912 = vpop.f32.mrf.mxu0
        %913 = vmatprep.mubr.bf16.mxu0 0
        %914 = vmatmul.mubr.bf16.gmra.mxu0 %v682
        %v915 = vpop.f32.mrf.mxu0
        %v916 = vadd.f32 0.0, %v915
        %v917 = vpop.f32.mrf.mxu0
        %v918 = vpop.f32.mrf.mxu0
        %v919 = vadd.f32 0.0, %v918
        %v920 = vpop.f32.mrf.mxu0
        %921 = vmatprep.mubr.bf16.mxu0 0
        %922 = vmatmul.mubr.bf16.gmra.mxu0 %v685
        %v923 = vpop.f32.mrf.mxu0
        %v924 = vadd.f32 0.0, %v923
        %v925 = vpop.f32.mrf.mxu0
        %v926 = vpop.f32.mrf.mxu0
        %v927 = vadd.f32 0.0, %v926
        %v928 = vpop.f32.mrf.mxu0
        %929 = vmatprep.mubr.bf16.mxu0 0
        %930 = vmatmul.mubr.bf16.gmra.mxu0 %v688
        %v931 = vpop.f32.mrf.mxu0
        %v932 = vadd.f32 0.0, %v931
        %v933 = vpop.f32.mrf.mxu0
        %v934 = vpop.f32.mrf.mxu0
        %v935 = vadd.f32 0.0, %v934
        %v936 = vpop.f32.mrf.mxu0
        %937 = vmatprep.mubr.bf16.mxu0 0
        %938 = vmatmul.mubr.bf16.gmra.mxu0 %v691
        %v939 = vpop.f32.mrf.mxu0
        %v940 = vadd.f32 0.0, %v939
        %v941 = vpop.f32.mrf.mxu0
        %v942 = vpop.f32.mrf.mxu0
        %v943 = vadd.f32 0.0, %v942
        %v944 = vpop.f32.mrf.mxu0
        %945 = vmatprep.mubr.bf16.mxu0 0
        %946 = vmatmul.mubr.bf16.gmra.mxu0 %v694
        %v947 = vpop.f32.mrf.mxu0
        %v948 = vadd.f32 0.0, %v947
        %v949 = vpop.f32.mrf.mxu0
        %v950 = vpop.f32.mrf.mxu0
        %v951 = vadd.f32 0.0, %v950
        %v952 = vpop.f32.mrf.mxu0
        %953 = vmatprep.mubr.bf16.mxu0 0
        %954 = vmatmul.mubr.bf16.gmra.mxu0 %v697
        %v955 = vpop.f32.mrf.mxu0
        %v956 = vadd.f32 0.0, %v955
        %v957 = vpop.f32.mrf.mxu0
        %v958 = vpop.f32.mrf.mxu0
        %v959 = vadd.f32 0.0, %v958
        %v960 = vpop.f32.mrf.mxu0
        %961 = vmatprep.mubr.bf16.mxu0 0
        %962 = vmatmul.mubr.bf16.gmra.mxu0 %v700
        %v963 = vpop.f32.mrf.mxu0
        %v964 = vadd.f32 0.0, %v963
        %v965 = vpop.f32.mrf.mxu0
        %v966 = vpop.f32.mrf.mxu0
        %v967 = vadd.f32 0.0, %v966
        %v968 = vpop.f32.mrf.mxu0
        %969 = vmatprep.mubr.bf16.mxu0 0
        %970 = vmatmul.mubr.bf16.gmra.mxu0 %v703
        %v971 = vpop.f32.mrf.mxu0
        %v972 = vadd.f32 0.0, %v971
        %v973 = vpop.f32.mrf.mxu0
        %v974 = vpop.f32.mrf.mxu0
        %v975 = vadd.f32 0.0, %v974
        %v976 = vpop.f32.mrf.mxu0
        %977 = vmatprep.mubr.bf16.mxu0 0
        %978 = vmatmul.mubr.bf16.gmra.mxu0 %v706
        %v979 = vpop.f32.mrf.mxu0
        %v980 = vadd.f32 0.0, %v979
        %v981 = vpop.f32.mrf.mxu0
        %v982 = vpop.f32.mrf.mxu0
        %v983 = vadd.f32 0.0, %v982
        %v984 = vpop.f32.mrf.mxu0
        %985 = vmatprep.mubr.bf16.mxu0 0
        %986 = vmatmul.mubr.bf16.gmra.mxu0 %v709
        %v987 = vpop.f32.mrf.mxu0
        %v988 = vadd.f32 0.0, %v987
        %v989 = vpop.f32.mrf.mxu0
        %v990 = vpop.f32.mrf.mxu0
        %v991 = vadd.f32 0.0, %v990
        %v992 = vpop.f32.mrf.mxu0
        %993 = vmatprep.mubr.bf16.mxu0 0
        %994 = vmatmul.mubr.bf16.gmra.mxu0 %v712
        %v995 = vpop.f32.mrf.mxu0
        %v996 = vadd.f32 0.0, %v995
        %v997 = vpop.f32.mrf.mxu0
        %v998 = vpop.f32.mrf.mxu0
        %v999 = vadd.f32 0.0, %v998
        %v1000 = vpop.f32.mrf.mxu0
        %1001 = vmatprep.mubr.bf16.mxu0 0
        %1002 = vmatmul.mubr.bf16.gmra.mxu0 %v715
        %v1003 = vpop.f32.mrf.mxu0
        %v1004 = vadd.f32 0.0, %v1003
        %v1005 = vpop.f32.mrf.mxu0
        %v1006 = vpop.f32.mrf.mxu0
        %v1007 = vadd.f32 0.0, %v1006
        %v1008 = vpop.f32.mrf.mxu0
        %1009 = vdwg.mxu0
        %v1011 = vsel %vm230, %v490, 0
        %v1014 = vsel %vm230, %v491, 0
        %v1017 = vsel %vm230, %v492, 0
        %v1020 = vsel %vm230, %v493, 0
        %v1023 = vsel %vm230, %v494, 0
        %v1026 = vsel %vm230, %v495, 0
        %v1029 = vsel %vm230, %v496, 0
        %v1032 = vsel %vm230, %v497, 0
        %v1035 = vsel %vm230, %v498, 0
        %v1038 = vsel %vm230, %v499, 0
        %v1041 = vsel %vm230, %v500, 0
        %v1044 = vsel %vm230, %v501, 0
        %v1047 = vsel %vm230, %v502, 0
        %v1050 = vsel %vm230, %v503, 0
        %v1053 = vsel %vm230, %v504, 0
        %v1056 = vsel %vm230, %v505, 0
        %v1059 = vsel %vm230, %v506, 0
        %v1062 = vsel %vm230, %v507, 0
        %v1065 = vsel %vm230, %v508, 0
        %v1068 = vsel %vm230, %v509, 0
        %v1071 = vsel %vm230, %v510, 0
        %v1074 = vsel %vm230, %v511, 0
        %v1077 = vsel %vm230, %v512, 0
        %v1080 = vsel %vm230, %v513, 0
        %v1083 = vsel %vm230, %v514, 0
        %v1086 = vsel %vm230, %v515, 0
        %v1089 = vsel %vm230, %v516, 0
        %v1092 = vsel %vm230, %v517, 0
        %v1095 = vsel %vm230, %v518, 0
        %v1098 = vsel %vm230, %v519, 0
        %v1101 = vsel %vm230, %v520, 0
        %v1104 = vsel %vm230, %v521, 0
        %v1107 = vsel %vm717, %v522, 0
        %1109 = vmatprep.subr.bf16.mxu0 0
        %1110 = vmatpush1.bf16.msra.mxu0 0
        %1111 = vmatprep.subr.bf16.mxu0 0
        %1112 = vmatpush1.bf16.msra.mxu0 0
        %1113 = vmatprep.subr.bf16.mxu0 0
        %1114 = vmatpush1.bf16.msra.mxu0 0
        %1115 = vmatprep.subr.bf16.mxu0 0
        %1116 = vmatpush1.bf16.msra.mxu0 0
        %1117 = vmatprep.subr.bf16.mxu0 0
        %1118 = vmatpush1.bf16.msra.mxu0 0
        %1119 = vmatprep.subr.bf16.mxu0 0
        %1120 = vmatpush1.bf16.msra.mxu0 0
        %1121 = vmatprep.subr.bf16.mxu0 0
        %1122 = vmatpush1.bf16.msra.mxu0 0
        %1123 = vmatprep.subr.bf16.mxu0 0
        %1124 = vmatpush1.bf16.msra.mxu0 %v1107
        %1125 = vmatprep.subr.bf16.mxu0 0
        %1126 = vmatpush2.bf16.msra.mxu0 0
        %1127 = vmatprep.subr.bf16.mxu0 0
        %1128 = vmatpush2.bf16.msra.mxu0 0
        %1129 = vmatprep.subr.bf16.mxu0 0
        %1130 = vmatpush2.bf16.msra.mxu0 0
        %1131 = vmatprep.subr.bf16.mxu0 0
        %1132 = vmatpush2.bf16.msra.mxu0 0
        %1133 = vmatprep.subr.bf16.mxu0 0
        %1134 = vmatpush2.bf16.msra.mxu0 0
        %1135 = vmatprep.subr.bf16.mxu0 0
        %1136 = vmatpush2.bf16.msra.mxu0 0
        %1137 = vmatprep.subr.bf16.mxu0 0
        %1138 = vmatpush2.bf16.msra.mxu0 0
        %1139 = vmatprep.subr.bf16.mxu0 0
        %1140 = vmatpush2.bf16.msra.mxu0 0
        %1141 = vmatprep.mubr.bf16.mxu0 0
        %1142 = vmatmul.mubr.bf16.gmra.mxu0 %v1011
        %v1143 = vpop.f32.mrf.mxu0
        %v1144 = vadd.f32 %v756, %v1143
        %v1145 = vpop.f32.mrf.mxu0
        %v1146 = vpop.f32.mrf.mxu0
        %v1147 = vadd.f32 %v759, %v1146
        %v1148 = vpop.f32.mrf.mxu0
        %1149 = vmatprep.mubr.bf16.mxu0 0
        %1150 = vmatmul.mubr.bf16.gmra.mxu0 %v1014
        %v1151 = vpop.f32.mrf.mxu0
        %v1152 = vadd.f32 %v764, %v1151
        %v1153 = vpop.f32.mrf.mxu0
        %v1154 = vpop.f32.mrf.mxu0
        %v1155 = vadd.f32 %v767, %v1154
        %v1156 = vpop.f32.mrf.mxu0
        %1157 = vmatprep.mubr.bf16.mxu0 0
        %1158 = vmatmul.mubr.bf16.gmra.mxu0 %v1017
        %v1159 = vpop.f32.mrf.mxu0
        %v1160 = vadd.f32 %v772, %v1159
        %v1161 = vpop.f32.mrf.mxu0
        %v1162 = vpop.f32.mrf.mxu0
        %v1163 = vadd.f32 %v775, %v1162
        %v1164 = vpop.f32.mrf.mxu0
        %1165 = vmatprep.mubr.bf16.mxu0 0
        %1166 = vmatmul.mubr.bf16.gmra.mxu0 %v1020
        %v1167 = vpop.f32.mrf.mxu0
        %v1168 = vadd.f32 %v780, %v1167
        %v1169 = vpop.f32.mrf.mxu0
        %v1170 = vpop.f32.mrf.mxu0
        %v1171 = vadd.f32 %v783, %v1170
        %v1172 = vpop.f32.mrf.mxu0
        %1173 = vmatprep.mubr.bf16.mxu0 0
        %1174 = vmatmul.mubr.bf16.gmra.mxu0 %v1023
        %v1175 = vpop.f32.mrf.mxu0
        %v1176 = vadd.f32 %v788, %v1175
        %v1177 = vpop.f32.mrf.mxu0
        %v1178 = vpop.f32.mrf.mxu0
        %v1179 = vadd.f32 %v791, %v1178
        %v1180 = vpop.f32.mrf.mxu0
        %1181 = vmatprep.mubr.bf16.mxu0 0
        %1182 = vmatmul.mubr.bf16.gmra.mxu0 %v1026
        %v1183 = vpop.f32.mrf.mxu0
        %v1184 = vadd.f32 %v796, %v1183
        %v1185 = vpop.f32.mrf.mxu0
        %v1186 = vpop.f32.mrf.mxu0
        %v1187 = vadd.f32 %v799, %v1186
        %v1188 = vpop.f32.mrf.mxu0
        %1189 = vmatprep.mubr.bf16.mxu0 0
        %1190 = vmatmul.mubr.bf16.gmra.mxu0 %v1029
        %v1191 = vpop.f32.mrf.mxu0
        %v1192 = vadd.f32 %v804, %v1191
        %v1193 = vpop.f32.mrf.mxu0
        %v1194 = vpop.f32.mrf.mxu0
        %v1195 = vadd.f32 %v807, %v1194
        %v1196 = vpop.f32.mrf.mxu0
        %1197 = vmatprep.mubr.bf16.mxu0 0
        %1198 = vmatmul.mubr.bf16.gmra.mxu0 %v1032
        %v1199 = vpop.f32.mrf.mxu0
        %v1200 = vadd.f32 %v812, %v1199
        %v1201 = vpop.f32.mrf.mxu0
        %v1202 = vpop.f32.mrf.mxu0
        %v1203 = vadd.f32 %v815, %v1202
        %v1204 = vpop.f32.mrf.mxu0
        %1205 = vmatprep.mubr.bf16.mxu0 0
        %1206 = vmatmul.mubr.bf16.gmra.mxu0 %v1035
        %v1207 = vpop.f32.mrf.mxu0
        %v1208 = vadd.f32 %v820, %v1207
        %v1209 = vpop.f32.mrf.mxu0
        %v1210 = vpop.f32.mrf.mxu0
        %v1211 = vadd.f32 %v823, %v1210
        %v1212 = vpop.f32.mrf.mxu0
        %1213 = vmatprep.mubr.bf16.mxu0 0
        %1214 = vmatmul.mubr.bf16.gmra.mxu0 %v1038
        %v1215 = vpop.f32.mrf.mxu0
        %v1216 = vadd.f32 %v828, %v1215
        %v1217 = vpop.f32.mrf.mxu0
        %v1218 = vpop.f32.mrf.mxu0
        %v1219 = vadd.f32 %v831, %v1218
        %v1220 = vpop.f32.mrf.mxu0
        %1221 = vmatprep.mubr.bf16.mxu0 0
        %1222 = vmatmul.mubr.bf16.gmra.mxu0 %v1041
        %v1223 = vpop.f32.mrf.mxu0
        %v1224 = vadd.f32 %v836, %v1223
        %v1225 = vpop.f32.mrf.mxu0
        %v1226 = vpop.f32.mrf.mxu0
        %v1227 = vadd.f32 %v839, %v1226
        %v1228 = vpop.f32.mrf.mxu0
        %1229 = vmatprep.mubr.bf16.mxu0 0
        %1230 = vmatmul.mubr.bf16.gmra.mxu0 %v1044
        %v1231 = vpop.f32.mrf.mxu0
        %v1232 = vadd.f32 %v844, %v1231
        %v1233 = vpop.f32.mrf.mxu0
        %v1234 = vpop.f32.mrf.mxu0
        %v1235 = vadd.f32 %v847, %v1234
        %v1236 = vpop.f32.mrf.mxu0
        %1237 = vmatprep.mubr.bf16.mxu0 0
        %1238 = vmatmul.mubr.bf16.gmra.mxu0 %v1047
        %v1239 = vpop.f32.mrf.mxu0
        %v1240 = vadd.f32 %v852, %v1239
        %v1241 = vpop.f32.mrf.mxu0
        %v1242 = vpop.f32.mrf.mxu0
        %v1243 = vadd.f32 %v855, %v1242
        %v1244 = vpop.f32.mrf.mxu0
        %1245 = vmatprep.mubr.bf16.mxu0 0
        %1246 = vmatmul.mubr.bf16.gmra.mxu0 %v1050
        %v1247 = vpop.f32.mrf.mxu0
        %v1248 = vadd.f32 %v860, %v1247
        %v1249 = vpop.f32.mrf.mxu0
        %v1250 = vpop.f32.mrf.mxu0
        %v1251 = vadd.f32 %v863, %v1250
        %v1252 = vpop.f32.mrf.mxu0
        %1253 = vmatprep.mubr.bf16.mxu0 0
        %1254 = vmatmul.mubr.bf16.gmra.mxu0 %v1053
        %v1255 = vpop.f32.mrf.mxu0
        %v1256 = vadd.f32 %v868, %v1255
        %v1257 = vpop.f32.mrf.mxu0
        %v1258 = vpop.f32.mrf.mxu0
        %v1259 = vadd.f32 %v871, %v1258
        %v1260 = vpop.f32.mrf.mxu0
        %1261 = vmatprep.mubr.bf16.mxu0 0
        %1262 = vmatmul.mubr.bf16.gmra.mxu0 %v1056
        %v1263 = vpop.f32.mrf.mxu0
        %v1264 = vadd.f32 %v876, %v1263
        %v1265 = vpop.f32.mrf.mxu0
        %v1266 = vpop.f32.mrf.mxu0
        %v1267 = vadd.f32 %v879, %v1266
        %v1268 = vpop.f32.mrf.mxu0
        %1269 = vmatprep.mubr.bf16.mxu0 0
        %1270 = vmatmul.mubr.bf16.gmra.mxu0 %v1059
        %v1271 = vpop.f32.mrf.mxu0
        %v1272 = vadd.f32 %v884, %v1271
        %v1273 = vpop.f32.mrf.mxu0
        %v1274 = vpop.f32.mrf.mxu0
        %v1275 = vadd.f32 %v887, %v1274
        %v1276 = vpop.f32.mrf.mxu0
        %1277 = vmatprep.mubr.bf16.mxu0 0
        %1278 = vmatmul.mubr.bf16.gmra.mxu0 %v1062
        %v1279 = vpop.f32.mrf.mxu0
        %v1280 = vadd.f32 %v892, %v1279
        %v1281 = vpop.f32.mrf.mxu0
        %v1282 = vpop.f32.mrf.mxu0
        %v1283 = vadd.f32 %v895, %v1282
        %v1284 = vpop.f32.mrf.mxu0
        %1285 = vmatprep.mubr.bf16.mxu0 0
        %1286 = vmatmul.mubr.bf16.gmra.mxu0 %v1065
        %v1287 = vpop.f32.mrf.mxu0
        %v1288 = vadd.f32 %v900, %v1287
        %v1289 = vpop.f32.mrf.mxu0
        %v1290 = vpop.f32.mrf.mxu0
        %v1291 = vadd.f32 %v903, %v1290
        %v1292 = vpop.f32.mrf.mxu0
        %1293 = vmatprep.mubr.bf16.mxu0 0
        %1294 = vmatmul.mubr.bf16.gmra.mxu0 %v1068
        %v1295 = vpop.f32.mrf.mxu0
        %v1296 = vadd.f32 %v908, %v1295
        %v1297 = vpop.f32.mrf.mxu0
        %v1298 = vpop.f32.mrf.mxu0
        %v1299 = vadd.f32 %v911, %v1298
        %v1300 = vpop.f32.mrf.mxu0
        %1301 = vmatprep.mubr.bf16.mxu0 0
        %1302 = vmatmul.mubr.bf16.gmra.mxu0 %v1071
        %v1303 = vpop.f32.mrf.mxu0
        %v1304 = vadd.f32 %v916, %v1303
        %v1305 = vpop.f32.mrf.mxu0
        %v1306 = vpop.f32.mrf.mxu0
        %v1307 = vadd.f32 %v919, %v1306
        %v1308 = vpop.f32.mrf.mxu0
        %1309 = vmatprep.mubr.bf16.mxu0 0
        %1310 = vmatmul.mubr.bf16.gmra.mxu0 %v1074
        %v1311 = vpop.f32.mrf.mxu0
        %v1312 = vadd.f32 %v924, %v1311
        %v1313 = vpop.f32.mrf.mxu0
        %v1314 = vpop.f32.mrf.mxu0
        %v1315 = vadd.f32 %v927, %v1314
        %v1316 = vpop.f32.mrf.mxu0
        %1317 = vmatprep.mubr.bf16.mxu0 0
        %1318 = vmatmul.mubr.bf16.gmra.mxu0 %v1077
        %v1319 = vpop.f32.mrf.mxu0
        %v1320 = vadd.f32 %v932, %v1319
        %v1321 = vpop.f32.mrf.mxu0
        %v1322 = vpop.f32.mrf.mxu0
        %v1323 = vadd.f32 %v935, %v1322
        %v1324 = vpop.f32.mrf.mxu0
        %1325 = vmatprep.mubr.bf16.mxu0 0
        %1326 = vmatmul.mubr.bf16.gmra.mxu0 %v1080
        %v1327 = vpop.f32.mrf.mxu0
        %v1328 = vadd.f32 %v940, %v1327
        %v1329 = vpop.f32.mrf.mxu0
        %v1330 = vpop.f32.mrf.mxu0
        %v1331 = vadd.f32 %v943, %v1330
        %v1332 = vpop.f32.mrf.mxu0
        %1333 = vmatprep.mubr.bf16.mxu0 0
        %1334 = vmatmul.mubr.bf16.gmra.mxu0 %v1083
        %v1335 = vpop.f32.mrf.mxu0
        %v1336 = vadd.f32 %v948, %v1335
        %v1337 = vpop.f32.mrf.mxu0
        %v1338 = vpop.f32.mrf.mxu0
        %v1339 = vadd.f32 %v951, %v1338
        %v1340 = vpop.f32.mrf.mxu0
        %1341 = vmatprep.mubr.bf16.mxu0 0
        %1342 = vmatmul.mubr.bf16.gmra.mxu0 %v1086
        %v1343 = vpop.f32.mrf.mxu0
        %v1344 = vadd.f32 %v956, %v1343
        %v1345 = vpop.f32.mrf.mxu0
        %v1346 = vpop.f32.mrf.mxu0
        %v1347 = vadd.f32 %v959, %v1346
        %v1348 = vpop.f32.mrf.mxu0
        %1349 = vmatprep.mubr.bf16.mxu0 0
        %1350 = vmatmul.mubr.bf16.gmra.mxu0 %v1089
        %v1351 = vpop.f32.mrf.mxu0
        %v1352 = vadd.f32 %v964, %v1351
        %v1353 = vpop.f32.mrf.mxu0
        %v1354 = vpop.f32.mrf.mxu0
        %v1355 = vadd.f32 %v967, %v1354
        %v1356 = vpop.f32.mrf.mxu0
        %1357 = vmatprep.mubr.bf16.mxu0 0
        %1358 = vmatmul.mubr.bf16.gmra.mxu0 %v1092
        %v1359 = vpop.f32.mrf.mxu0
        %v1360 = vadd.f32 %v972, %v1359
        %v1361 = vpop.f32.mrf.mxu0
        %v1362 = vpop.f32.mrf.mxu0
        %v1363 = vadd.f32 %v975, %v1362
        %v1364 = vpop.f32.mrf.mxu0
        %1365 = vmatprep.mubr.bf16.mxu0 0
        %1366 = vmatmul.mubr.bf16.gmra.mxu0 %v1095
        %v1367 = vpop.f32.mrf.mxu0
        %v1368 = vadd.f32 %v980, %v1367
        %v1369 = vpop.f32.mrf.mxu0
        %v1370 = vpop.f32.mrf.mxu0
        %v1371 = vadd.f32 %v983, %v1370
        %v1372 = vpop.f32.mrf.mxu0
        %1373 = vmatprep.mubr.bf16.mxu0 0
        %1374 = vmatmul.mubr.bf16.gmra.mxu0 %v1098
        %v1375 = vpop.f32.mrf.mxu0
        %v1376 = vadd.f32 %v988, %v1375
        %v1377 = vpop.f32.mrf.mxu0
        %v1378 = vpop.f32.mrf.mxu0
        %v1379 = vadd.f32 %v991, %v1378
        %v1380 = vpop.f32.mrf.mxu0
        %1381 = vmatprep.mubr.bf16.mxu0 0
        %1382 = vmatmul.mubr.bf16.gmra.mxu0 %v1101
        %v1383 = vpop.f32.mrf.mxu0
        %v1384 = vadd.f32 %v996, %v1383
        %v1385 = vpop.f32.mrf.mxu0
        %v1386 = vpop.f32.mrf.mxu0
        %v1387 = vadd.f32 %v999, %v1386
        %v1388 = vpop.f32.mrf.mxu0
        %1389 = vmatprep.mubr.bf16.mxu0 0
        %1390 = vmatmul.mubr.bf16.gmra.mxu0 %v1104
        %v1391 = vpop.f32.mrf.mxu0
        %v1392 = vadd.f32 %v1004, %v1391
        %v1393 = vpop.f32.mrf.mxu0
        %v1394 = vpop.f32.mrf.mxu0
        %v1395 = vadd.f32 %v1007, %v1394
        %v1396 = vpop.f32.mrf.mxu0
        %1397 = vdwg.mxu0
        %v1398 = vld [vmem:[%s226 + $0x2] sm:$0xff]
        %v1399 = vld [vmem:[%s226 + $0x12] sm:$0xff]
        %v1400 = vld [vmem:[%s226 + $0x22] sm:$0xff]
        %v1401 = vld [vmem:[%s226 + $0x32] sm:$0xff]
        %v1402 = vld [vmem:[%s226 + $0x42] sm:$0xff]
        %v1403 = vld [vmem:[%s226 + $0x52] sm:$0xff]
        %v1404 = vld [vmem:[%s226 + $0x62] sm:$0xff]
        %v1405 = vld [vmem:[%s226 + $0x72] sm:$0xff]
        %v1406 = vld [vmem:[%s226 + $0xa2] sm:$0xff]
        %v1407 = vld [vmem:[%s226 + $0xb2] sm:$0xff]
        %v1408 = vld [vmem:[%s226 + $0xc2] sm:$0xff]
        %v1409 = vld [vmem:[%s226 + $0xd2] sm:$0xff]
        %v1410 = vld [vmem:[%s226 + $0xe2] sm:$0xff]
        %v1411 = vld [vmem:[%s226 + $0xf2] sm:$0xff]
        %v1412 = vld [vmem:[%s226 + $0x102] sm:$0xff]
        %v1413 = vld [vmem:[%s226 + $0x112] sm:$0xff]
        %v1414 = vld [vmem:[%s226 + $0x142] sm:$0xff]
        %v1415 = vld [vmem:[%s226 + $0x152] sm:$0xff]
        %v1416 = vld [vmem:[%s226 + $0x162] sm:$0xff]
        %v1417 = vld [vmem:[%s226 + $0x172] sm:$0xff]
        %v1418 = vld [vmem:[%s226 + $0x182] sm:$0xff]
        %v1419 = vld [vmem:[%s226 + $0x192] sm:$0xff]
        %v1420 = vld [vmem:[%s226 + $0x1a2] sm:$0xff]
        %v1421 = vld [vmem:[%s226 + $0x1b2] sm:$0xff]
        %v1422 = vld [vmem:[%s226 + $0x1e2] sm:$0xff]
        %v1423 = vld [vmem:[%s226 + $0x1f2] sm:$0xff]
        %v1424 = vld [vmem:[%s226 + $0x202] sm:$0xff]
        %v1425 = vld [vmem:[%s226 + $0x212] sm:$0xff]
        %v1426 = vld [vmem:[%s226 + $0x222] sm:$0xff]
        %v1427 = vld [vmem:[%s226 + $0x232] sm:$0xff]
        %v1428 = vld [vmem:[%s226 + $0x242] sm:$0xff]
        %v1429 = vld [vmem:[%s226 + $0x252] sm:$0xff]
        %v1430 = vld [vmem:[%s226 + $0x282] sm:$0xff]
        %v1431 = vld [vmem:[%s226 + $0x292] sm:$0xff]
        %v1432 = vld [vmem:[%s226 + $0x2a2] sm:$0xff]
        %v1433 = vld [vmem:[%s226 + $0x2b2] sm:$0xff]
        %v1434 = vld [vmem:[%s226 + $0x2c2] sm:$0xff]
        %v1435 = vld [vmem:[%s226 + $0x2d2] sm:$0xff]
        %v1436 = vld [vmem:[%s226 + $0x2e2] sm:$0xff]
        %v1437 = vld [vmem:[%s226 + $0x2f2] sm:$0xff]
        %v1438 = vld [vmem:[%s226 + $0x322] sm:$0xff]
        %v1439 = vld [vmem:[%s226 + $0x332] sm:$0xff]
        %v1440 = vld [vmem:[%s226 + $0x342] sm:$0xff]
        %v1441 = vld [vmem:[%s226 + $0x352] sm:$0xff]
        %v1442 = vld [vmem:[%s226 + $0x362] sm:$0xff]
        %v1443 = vld [vmem:[%s226 + $0x372] sm:$0xff]
        %v1444 = vld [vmem:[%s226 + $0x382] sm:$0xff]
        %v1445 = vld [vmem:[%s226 + $0x392] sm:$0xff]
        %v1446 = vld [vmem:[%s226 + $0x3c2] sm:$0xff]
        %v1447 = vld [vmem:[%s226 + $0x3d2] sm:$0xff]
        %v1448 = vld [vmem:[%s226 + $0x3e2] sm:$0xff]
        %v1449 = vld [vmem:[%s226 + $0x3f2] sm:$0xff]
        %v1450 = vld [vmem:[%s226 + $0x402] sm:$0xff]
        %v1451 = vld [vmem:[%s226 + $0x412] sm:$0xff]
        %v1452 = vld [vmem:[%s226 + $0x422] sm:$0xff]
        %v1453 = vld [vmem:[%s226 + $0x432] sm:$0xff]
        %v1454 = vld [vmem:[%s226 + $0x462] sm:$0xff]
        %v1455 = vld [vmem:[%s226 + $0x472] sm:$0xff]
        %v1456 = vld [vmem:[%s226 + $0x482] sm:$0xff]
        %v1457 = vld [vmem:[%s226 + $0x492] sm:$0xff]
        %v1458 = vld [vmem:[%s226 + $0x4a2] sm:$0xff]
        %v1459 = vld [vmem:[%s226 + $0x4b2] sm:$0xff]
        %v1460 = vld [vmem:[%s226 + $0x4c2] sm:$0xff]
        %v1461 = vld [vmem:[%s226 + $0x4d2] sm:$0xff]
        %v1462 = vpack.c.bf16 %v1399, %v1398
        %v1463 = vpack.c.bf16 %v1401, %v1400
        %v1464 = vpack.c.bf16 %v1403, %v1402
        %v1465 = vpack.c.bf16 %v1405, %v1404
        %v1466 = vpack.c.bf16 %v1407, %v1406
        %v1467 = vpack.c.bf16 %v1409, %v1408
        %v1468 = vpack.c.bf16 %v1411, %v1410
        %v1469 = vpack.c.bf16 %v1413, %v1412
        %v1470 = vpack.c.bf16 %v1415, %v1414
        %v1471 = vpack.c.bf16 %v1417, %v1416
        %v1472 = vpack.c.bf16 %v1419, %v1418
        %v1473 = vpack.c.bf16 %v1421, %v1420
        %v1474 = vpack.c.bf16 %v1423, %v1422
        %v1475 = vpack.c.bf16 %v1425, %v1424
        %v1476 = vpack.c.bf16 %v1427, %v1426
        %v1477 = vpack.c.bf16 %v1429, %v1428
        %v1478 = vpack.c.bf16 %v1431, %v1430
        %v1479 = vpack.c.bf16 %v1433, %v1432
        %v1480 = vpack.c.bf16 %v1435, %v1434
        %v1481 = vpack.c.bf16 %v1437, %v1436
        %v1482 = vpack.c.bf16 %v1439, %v1438
        %v1483 = vpack.c.bf16 %v1441, %v1440
        %v1484 = vpack.c.bf16 %v1443, %v1442
        %v1485 = vpack.c.bf16 %v1445, %v1444
        %v1486 = vpack.c.bf16 %v1447, %v1446
        %v1487 = vpack.c.bf16 %v1449, %v1448
        %v1488 = vpack.c.bf16 %v1451, %v1450
        %v1489 = vpack.c.bf16 %v1453, %v1452
        %v1490 = vpack.c.bf16 %v1455, %v1454
        %v1491 = vpack.c.bf16 %v1457, %v1456
        %v1492 = vpack.c.bf16 %v1459, %v1458
        %v1493 = vpack.c.bf16 %v1461, %v1460
        %s1494 = scalar_lea.vmem %s1, 8
        %v1495 = vld [vmem:[%s1494] sm:$0xf]
        %v1497 = vsel %vm230, %v1462, 0
        %v1500 = vsel %vm230, %v1463, 0
        %v1503 = vsel %vm230, %v1464, 0
        %v1506 = vsel %vm230, %v1465, 0
        %v1509 = vsel %vm230, %v1466, 0
        %v1512 = vsel %vm230, %v1467, 0
        %v1515 = vsel %vm230, %v1468, 0
        %v1518 = vsel %vm230, %v1469, 0
        %v1521 = vsel %vm230, %v1470, 0
        %v1524 = vsel %vm230, %v1471, 0
        %v1527 = vsel %vm230, %v1472, 0
        %v1530 = vsel %vm230, %v1473, 0
        %v1533 = vsel %vm230, %v1474, 0
        %v1536 = vsel %vm230, %v1475, 0
        %v1539 = vsel %vm230, %v1476, 0
        %v1542 = vsel %vm230, %v1477, 0
        %v1545 = vsel %vm230, %v1478, 0
        %v1548 = vsel %vm230, %v1479, 0
        %v1551 = vsel %vm230, %v1480, 0
        %v1554 = vsel %vm230, %v1481, 0
        %v1557 = vsel %vm230, %v1482, 0
        %v1560 = vsel %vm230, %v1483, 0
        %v1563 = vsel %vm230, %v1484, 0
        %v1566 = vsel %vm230, %v1485, 0
        %v1569 = vsel %vm230, %v1486, 0
        %v1572 = vsel %vm230, %v1487, 0
        %v1575 = vsel %vm230, %v1488, 0
        %v1578 = vsel %vm230, %v1489, 0
        %v1581 = vsel %vm230, %v1490, 0
        %v1584 = vsel %vm230, %v1491, 0
        %v1587 = vsel %vm230, %v1492, 0
        %v1590 = vsel %vm230, %v1493, 0
        %v1593 = vsel %vm717, %v1495, 0
        %1595 = vmatprep.subr.bf16.mxu0 0
        %1596 = vmatpush1.bf16.msra.mxu0 0
        %1597 = vmatprep.subr.bf16.mxu0 0
        %1598 = vmatpush1.bf16.msra.mxu0 0
        %1599 = vmatprep.subr.bf16.mxu0 0
        %1600 = vmatpush1.bf16.msra.mxu0 0
        %1601 = vmatprep.subr.bf16.mxu0 0
        %1602 = vmatpush1.bf16.msra.mxu0 0
        %1603 = vmatprep.subr.bf16.mxu0 0
        %1604 = vmatpush1.bf16.msra.mxu0 0
        %1605 = vmatprep.subr.bf16.mxu0 0
        %1606 = vmatpush1.bf16.msra.mxu0 0
        %1607 = vmatprep.subr.bf16.mxu0 0
        %1608 = vmatpush1.bf16.msra.mxu0 0
        %1609 = vmatprep.subr.bf16.mxu0 0
        %1610 = vmatpush1.bf16.msra.mxu0 %v1593
        %1611 = vmatprep.subr.bf16.mxu0 0
        %1612 = vmatpush2.bf16.msra.mxu0 0
        %1613 = vmatprep.subr.bf16.mxu0 0
        %1614 = vmatpush2.bf16.msra.mxu0 0
        %1615 = vmatprep.subr.bf16.mxu0 0
        %1616 = vmatpush2.bf16.msra.mxu0 0
        %1617 = vmatprep.subr.bf16.mxu0 0
        %1618 = vmatpush2.bf16.msra.mxu0 0
        %1619 = vmatprep.subr.bf16.mxu0 0
        %1620 = vmatpush2.bf16.msra.mxu0 0
        %1621 = vmatprep.subr.bf16.mxu0 0
        %1622 = vmatpush2.bf16.msra.mxu0 0
        %1623 = vmatprep.subr.bf16.mxu0 0
        %1624 = vmatpush2.bf16.msra.mxu0 0
        %1625 = vmatprep.subr.bf16.mxu0 0
        %1626 = vmatpush2.bf16.msra.mxu0 0
        %1627 = vmatprep.mubr.bf16.mxu0 0
        %1628 = vmatmul.mubr.bf16.gmra.mxu0 %v1497
        %v1629 = vpop.f32.mrf.mxu0
        %v1630 = vadd.f32 0.0, %v1629
        %v1631 = vpop.f32.mrf.mxu0
        %v1632 = vpop.f32.mrf.mxu0
        %v1633 = vadd.f32 0.0, %v1632
        %v1634 = vpop.f32.mrf.mxu0
        %1635 = vmatprep.mubr.bf16.mxu0 0
        %1636 = vmatmul.mubr.bf16.gmra.mxu0 %v1500
        %v1637 = vpop.f32.mrf.mxu0
        %v1638 = vadd.f32 0.0, %v1637
        %v1639 = vpop.f32.mrf.mxu0
        %v1640 = vpop.f32.mrf.mxu0
        %v1641 = vadd.f32 0.0, %v1640
        %v1642 = vpop.f32.mrf.mxu0
        %1643 = vmatprep.mubr.bf16.mxu0 0
        %1644 = vmatmul.mubr.bf16.gmra.mxu0 %v1503
        %v1645 = vpop.f32.mrf.mxu0
        %v1646 = vadd.f32 0.0, %v1645
        %v1647 = vpop.f32.mrf.mxu0
        %v1648 = vpop.f32.mrf.mxu0
        %v1649 = vadd.f32 0.0, %v1648
        %v1650 = vpop.f32.mrf.mxu0
        %1651 = vmatprep.mubr.bf16.mxu0 0
        %1652 = vmatmul.mubr.bf16.gmra.mxu0 %v1506
        %v1653 = vpop.f32.mrf.mxu0
        %v1654 = vadd.f32 0.0, %v1653
        %v1655 = vpop.f32.mrf.mxu0
        %v1656 = vpop.f32.mrf.mxu0
        %v1657 = vadd.f32 0.0, %v1656
        %v1658 = vpop.f32.mrf.mxu0
        %1659 = vmatprep.mubr.bf16.mxu0 0
        %1660 = vmatmul.mubr.bf16.gmra.mxu0 %v1509
        %v1661 = vpop.f32.mrf.mxu0
        %v1662 = vadd.f32 0.0, %v1661
        %v1663 = vpop.f32.mrf.mxu0
        %v1664 = vpop.f32.mrf.mxu0
        %v1665 = vadd.f32 0.0, %v1664
        %v1666 = vpop.f32.mrf.mxu0
        %1667 = vmatprep.mubr.bf16.mxu0 0
        %1668 = vmatmul.mubr.bf16.gmra.mxu0 %v1512
        %v1669 = vpop.f32.mrf.mxu0
        %v1670 = vadd.f32 0.0, %v1669
        %v1671 = vpop.f32.mrf.mxu0
        %v1672 = vpop.f32.mrf.mxu0
        %v1673 = vadd.f32 0.0, %v1672
        %v1674 = vpop.f32.mrf.mxu0
        %1675 = vmatprep.mubr.bf16.mxu0 0
        %1676 = vmatmul.mubr.bf16.gmra.mxu0 %v1515
        %v1677 = vpop.f32.mrf.mxu0
        %v1678 = vadd.f32 0.0, %v1677
        %v1679 = vpop.f32.mrf.mxu0
        %v1680 = vpop.f32.mrf.mxu0
        %v1681 = vadd.f32 0.0, %v1680
        %v1682 = vpop.f32.mrf.mxu0
        %1683 = vmatprep.mubr.bf16.mxu0 0
        %1684 = vmatmul.mubr.bf16.gmra.mxu0 %v1518
        %v1685 = vpop.f32.mrf.mxu0
        %v1686 = vadd.f32 0.0, %v1685
        %v1687 = vpop.f32.mrf.mxu0
        %v1688 = vpop.f32.mrf.mxu0
        %v1689 = vadd.f32 0.0, %v1688
        %v1690 = vpop.f32.mrf.mxu0
        %1691 = vmatprep.mubr.bf16.mxu0 0
        %1692 = vmatmul.mubr.bf16.gmra.mxu0 %v1521
        %v1693 = vpop.f32.mrf.mxu0
        %v1694 = vadd.f32 0.0, %v1693
        %v1695 = vpop.f32.mrf.mxu0
        %v1696 = vpop.f32.mrf.mxu0
        %v1697 = vadd.f32 0.0, %v1696
        %v1698 = vpop.f32.mrf.mxu0
        %1699 = vmatprep.mubr.bf16.mxu0 0
        %1700 = vmatmul.mubr.bf16.gmra.mxu0 %v1524
        %v1701 = vpop.f32.mrf.mxu0
        %v1702 = vadd.f32 0.0, %v1701
        %v1703 = vpop.f32.mrf.mxu0
        %v1704 = vpop.f32.mrf.mxu0
        %v1705 = vadd.f32 0.0, %v1704
        %v1706 = vpop.f32.mrf.mxu0
        %1707 = vmatprep.mubr.bf16.mxu0 0
        %1708 = vmatmul.mubr.bf16.gmra.mxu0 %v1527
        %v1709 = vpop.f32.mrf.mxu0
        %v1710 = vadd.f32 0.0, %v1709
        %v1711 = vpop.f32.mrf.mxu0
        %v1712 = vpop.f32.mrf.mxu0
        %v1713 = vadd.f32 0.0, %v1712
        %v1714 = vpop.f32.mrf.mxu0
        %1715 = vmatprep.mubr.bf16.mxu0 0
        %1716 = vmatmul.mubr.bf16.gmra.mxu0 %v1530
        %v1717 = vpop.f32.mrf.mxu0
        %v1718 = vadd.f32 0.0, %v1717
        %v1719 = vpop.f32.mrf.mxu0
        %v1720 = vpop.f32.mrf.mxu0
        %v1721 = vadd.f32 0.0, %v1720
        %v1722 = vpop.f32.mrf.mxu0
        %1723 = vmatprep.mubr.bf16.mxu0 0
        %1724 = vmatmul.mubr.bf16.gmra.mxu0 %v1533
        %v1725 = vpop.f32.mrf.mxu0
        %v1726 = vadd.f32 0.0, %v1725
        %v1727 = vpop.f32.mrf.mxu0
        %v1728 = vpop.f32.mrf.mxu0
        %v1729 = vadd.f32 0.0, %v1728
        %v1730 = vpop.f32.mrf.mxu0
        %1731 = vmatprep.mubr.bf16.mxu0 0
        %1732 = vmatmul.mubr.bf16.gmra.mxu0 %v1536
        %v1733 = vpop.f32.mrf.mxu0
        %v1734 = vadd.f32 0.0, %v1733
        %v1735 = vpop.f32.mrf.mxu0
        %v1736 = vpop.f32.mrf.mxu0
        %v1737 = vadd.f32 0.0, %v1736
        %v1738 = vpop.f32.mrf.mxu0
        %1739 = vmatprep.mubr.bf16.mxu0 0
        %1740 = vmatmul.mubr.bf16.gmra.mxu0 %v1539
        %v1741 = vpop.f32.mrf.mxu0
        %v1742 = vadd.f32 0.0, %v1741
        %v1743 = vpop.f32.mrf.mxu0
        %v1744 = vpop.f32.mrf.mxu0
        %v1745 = vadd.f32 0.0, %v1744
        %v1746 = vpop.f32.mrf.mxu0
        %1747 = vmatprep.mubr.bf16.mxu0 0
        %1748 = vmatmul.mubr.bf16.gmra.mxu0 %v1542
        %v1749 = vpop.f32.mrf.mxu0
        %v1750 = vadd.f32 0.0, %v1749
        %v1751 = vpop.f32.mrf.mxu0
        %v1752 = vpop.f32.mrf.mxu0
        %v1753 = vadd.f32 0.0, %v1752
        %v1754 = vpop.f32.mrf.mxu0
        %1755 = vmatprep.mubr.bf16.mxu0 0
        %1756 = vmatmul.mubr.bf16.gmra.mxu0 %v1545
        %v1757 = vpop.f32.mrf.mxu0
        %v1758 = vadd.f32 0.0, %v1757
        %v1759 = vpop.f32.mrf.mxu0
        %v1760 = vpop.f32.mrf.mxu0
        %v1761 = vadd.f32 0.0, %v1760
        %v1762 = vpop.f32.mrf.mxu0
        %1763 = vmatprep.mubr.bf16.mxu0 0
        %1764 = vmatmul.mubr.bf16.gmra.mxu0 %v1548
        %v1765 = vpop.f32.mrf.mxu0
        %v1766 = vadd.f32 0.0, %v1765
        %v1767 = vpop.f32.mrf.mxu0
        %v1768 = vpop.f32.mrf.mxu0
        %v1769 = vadd.f32 0.0, %v1768
        %v1770 = vpop.f32.mrf.mxu0
        %1771 = vmatprep.mubr.bf16.mxu0 0
        %1772 = vmatmul.mubr.bf16.gmra.mxu0 %v1551
        %v1773 = vpop.f32.mrf.mxu0
        %v1774 = vadd.f32 0.0, %v1773
        %v1775 = vpop.f32.mrf.mxu0
        %v1776 = vpop.f32.mrf.mxu0
        %v1777 = vadd.f32 0.0, %v1776
        %v1778 = vpop.f32.mrf.mxu0
        %1779 = vmatprep.mubr.bf16.mxu0 0
        %1780 = vmatmul.mubr.bf16.gmra.mxu0 %v1554
        %v1781 = vpop.f32.mrf.mxu0
        %v1782 = vadd.f32 0.0, %v1781
        %v1783 = vpop.f32.mrf.mxu0
        %v1784 = vpop.f32.mrf.mxu0
        %v1785 = vadd.f32 0.0, %v1784
        %v1786 = vpop.f32.mrf.mxu0
        %1787 = vmatprep.mubr.bf16.mxu0 0
        %1788 = vmatmul.mubr.bf16.gmra.mxu0 %v1557
        %v1789 = vpop.f32.mrf.mxu0
        %v1790 = vadd.f32 0.0, %v1789
        %v1791 = vpop.f32.mrf.mxu0
        %v1792 = vpop.f32.mrf.mxu0
        %v1793 = vadd.f32 0.0, %v1792
        %v1794 = vpop.f32.mrf.mxu0
        %1795 = vmatprep.mubr.bf16.mxu0 0
        %1796 = vmatmul.mubr.bf16.gmra.mxu0 %v1560
        %v1797 = vpop.f32.mrf.mxu0
        %v1798 = vadd.f32 0.0, %v1797
        %v1799 = vpop.f32.mrf.mxu0
        %v1800 = vpop.f32.mrf.mxu0
        %v1801 = vadd.f32 0.0, %v1800
        %v1802 = vpop.f32.mrf.mxu0
        %1803 = vmatprep.mubr.bf16.mxu0 0
        %1804 = vmatmul.mubr.bf16.gmra.mxu0 %v1563
        %v1805 = vpop.f32.mrf.mxu0
        %v1806 = vadd.f32 0.0, %v1805
        %v1807 = vpop.f32.mrf.mxu0
        %v1808 = vpop.f32.mrf.mxu0
        %v1809 = vadd.f32 0.0, %v1808
        %v1810 = vpop.f32.mrf.mxu0
        %1811 = vmatprep.mubr.bf16.mxu0 0
        %1812 = vmatmul.mubr.bf16.gmra.mxu0 %v1566
        %v1813 = vpop.f32.mrf.mxu0
        %v1814 = vadd.f32 0.0, %v1813
        %v1815 = vpop.f32.mrf.mxu0
        %v1816 = vpop.f32.mrf.mxu0
        %v1817 = vadd.f32 0.0, %v1816
        %v1818 = vpop.f32.mrf.mxu0
        %1819 = vmatprep.mubr.bf16.mxu0 0
        %1820 = vmatmul.mubr.bf16.gmra.mxu0 %v1569
        %v1821 = vpop.f32.mrf.mxu0
        %v1822 = vadd.f32 0.0, %v1821
        %v1823 = vpop.f32.mrf.mxu0
        %v1824 = vpop.f32.mrf.mxu0
        %v1825 = vadd.f32 0.0, %v1824
        %v1826 = vpop.f32.mrf.mxu0
        %1827 = vmatprep.mubr.bf16.mxu0 0
        %1828 = vmatmul.mubr.bf16.gmra.mxu0 %v1572
        %v1829 = vpop.f32.mrf.mxu0
        %v1830 = vadd.f32 0.0, %v1829
        %v1831 = vpop.f32.mrf.mxu0
        %v1832 = vpop.f32.mrf.mxu0
        %v1833 = vadd.f32 0.0, %v1832
        %v1834 = vpop.f32.mrf.mxu0
        %1835 = vmatprep.mubr.bf16.mxu0 0
        %1836 = vmatmul.mubr.bf16.gmra.mxu0 %v1575
        %v1837 = vpop.f32.mrf.mxu0
        %v1838 = vadd.f32 0.0, %v1837
        %v1839 = vpop.f32.mrf.mxu0
        %v1840 = vpop.f32.mrf.mxu0
        %v1841 = vadd.f32 0.0, %v1840
        %v1842 = vpop.f32.mrf.mxu0
        %1843 = vmatprep.mubr.bf16.mxu0 0
        %1844 = vmatmul.mubr.bf16.gmra.mxu0 %v1578
        %v1845 = vpop.f32.mrf.mxu0
        %v1846 = vadd.f32 0.0, %v1845
        %v1847 = vpop.f32.mrf.mxu0
        %v1848 = vpop.f32.mrf.mxu0
        %v1849 = vadd.f32 0.0, %v1848
        %v1850 = vpop.f32.mrf.mxu0
        %1851 = vmatprep.mubr.bf16.mxu0 0
        %1852 = vmatmul.mubr.bf16.gmra.mxu0 %v1581
        %v1853 = vpop.f32.mrf.mxu0
        %v1854 = vadd.f32 0.0, %v1853
        %v1855 = vpop.f32.mrf.mxu0
        %v1856 = vpop.f32.mrf.mxu0
        %v1857 = vadd.f32 0.0, %v1856
        %v1858 = vpop.f32.mrf.mxu0
        %1859 = vmatprep.mubr.bf16.mxu0 0
        %1860 = vmatmul.mubr.bf16.gmra.mxu0 %v1584
        %v1861 = vpop.f32.mrf.mxu0
        %v1862 = vadd.f32 0.0, %v1861
        %v1863 = vpop.f32.mrf.mxu0
        %v1864 = vpop.f32.mrf.mxu0
        %v1865 = vadd.f32 0.0, %v1864
        %v1866 = vpop.f32.mrf.mxu0
        %1867 = vmatprep.mubr.bf16.mxu0 0
        %1868 = vmatmul.mubr.bf16.gmra.mxu0 %v1587
        %v1869 = vpop.f32.mrf.mxu0
        %v1870 = vadd.f32 0.0, %v1869
        %v1871 = vpop.f32.mrf.mxu0
        %v1872 = vpop.f32.mrf.mxu0
        %v1873 = vadd.f32 0.0, %v1872
        %v1874 = vpop.f32.mrf.mxu0
        %1875 = vmatprep.mubr.bf16.mxu0 0
        %1876 = vmatmul.mubr.bf16.gmra.mxu0 %v1590
        %v1877 = vpop.f32.mrf.mxu0
        %v1878 = vadd.f32 0.0, %v1877
        %v1879 = vpop.f32.mrf.mxu0
        %v1880 = vpop.f32.mrf.mxu0
        %v1881 = vadd.f32 0.0, %v1880
        %v1882 = vpop.f32.mrf.mxu0
        %1883 = vdwg.mxu0
        %v1884 = vadd.f32 %v1144, %v1630
        %v1885 = vadd.f32 %v1147, %v1633
        %v1886 = vadd.f32 %v1152, %v1638
        %v1887 = vadd.f32 %v1155, %v1641
        %v1888 = vadd.f32 %v1160, %v1646
        %v1889 = vadd.f32 %v1163, %v1649
        %v1890 = vadd.f32 %v1168, %v1654
        %v1891 = vadd.f32 %v1171, %v1657
        %v1892 = vadd.f32 %v1176, %v1662
        %v1893 = vadd.f32 %v1179, %v1665
        %v1894 = vadd.f32 %v1184, %v1670
        %v1895 = vadd.f32 %v1187, %v1673
        %v1896 = vadd.f32 %v1192, %v1678
        %v1897 = vadd.f32 %v1195, %v1681
        %v1898 = vadd.f32 %v1200, %v1686
        %v1899 = vadd.f32 %v1203, %v1689
        %v1900 = vadd.f32 %v1208, %v1694
        %v1901 = vadd.f32 %v1211, %v1697
        %v1902 = vadd.f32 %v1216, %v1702
        %v1903 = vadd.f32 %v1219, %v1705
        %v1904 = vadd.f32 %v1224, %v1710
        %v1905 = vadd.f32 %v1227, %v1713
        %v1906 = vadd.f32 %v1232, %v1718
        %v1907 = vadd.f32 %v1235, %v1721
        %v1908 = vadd.f32 %v1240, %v1726
        %v1909 = vadd.f32 %v1243, %v1729
        %v1910 = vadd.f32 %v1248, %v1734
        %v1911 = vadd.f32 %v1251, %v1737
        %v1912 = vadd.f32 %v1256, %v1742
        %v1913 = vadd.f32 %v1259, %v1745
        %v1914 = vadd.f32 %v1264, %v1750
        %v1915 = vadd.f32 %v1267, %v1753
        %v1916 = vadd.f32 %v1272, %v1758
        %v1917 = vadd.f32 %v1275, %v1761
        %v1918 = vadd.f32 %v1280, %v1766
        %v1919 = vadd.f32 %v1283, %v1769
        %v1920 = vadd.f32 %v1288, %v1774
        %v1921 = vadd.f32 %v1291, %v1777
        %v1922 = vadd.f32 %v1296, %v1782
        %v1923 = vadd.f32 %v1299, %v1785
        %v1924 = vadd.f32 %v1304, %v1790
        %v1925 = vadd.f32 %v1307, %v1793
        %v1926 = vadd.f32 %v1312, %v1798
        %v1927 = vadd.f32 %v1315, %v1801
        %v1928 = vadd.f32 %v1320, %v1806
        %v1929 = vadd.f32 %v1323, %v1809
        %v1930 = vadd.f32 %v1328, %v1814
        %v1931 = vadd.f32 %v1331, %v1817
        %v1932 = vadd.f32 %v1336, %v1822
        %v1933 = vadd.f32 %v1339, %v1825
        %v1934 = vadd.f32 %v1344, %v1830
        %v1935 = vadd.f32 %v1347, %v1833
        %v1936 = vadd.f32 %v1352, %v1838
        %v1937 = vadd.f32 %v1355, %v1841
        %v1938 = vadd.f32 %v1360, %v1846
        %v1939 = vadd.f32 %v1363, %v1849
        %v1940 = vadd.f32 %v1368, %v1854
        %v1941 = vadd.f32 %v1371, %v1857
        %v1942 = vadd.f32 %v1376, %v1862
        %v1943 = vadd.f32 %v1379, %v1865
        %v1944 = vadd.f32 %v1384, %v1870
        %v1945 = vadd.f32 %v1387, %v1873
        %v1946 = vadd.f32 %v1392, %v1878
        %v1947 = vadd.f32 %v1395, %v1881
        %s1948 = scalar_lea.vmem %s226, 16
        %v1949 = vld [vmem:[%s1948] sm:$0xff]
        %v1950 = vld [vmem:[%s1948 + $0x10] sm:$0xff]
        %v1951 = vld [vmem:[%s1948 + $0x20] sm:$0xff]
        %v1952 = vld [vmem:[%s1948 + $0x30] sm:$0xff]
        %v1953 = vld [vmem:[%s1948 + $0x40] sm:$0xff]
        %v1954 = vld [vmem:[%s1948 + $0x50] sm:$0xff]
        %v1955 = vld [vmem:[%s1948 + $0x60] sm:$0xff]
        %v1956 = vld [vmem:[%s1948 + $0x70] sm:$0xff]
        %v1957 = vld [vmem:[%s1948 + $0xa0] sm:$0xff]
        %v1958 = vld [vmem:[%s1948 + $0xb0] sm:$0xff]
        %v1959 = vld [vmem:[%s1948 + $0xc0] sm:$0xff]
        %v1960 = vld [vmem:[%s1948 + $0xd0] sm:$0xff]
        %v1961 = vld [vmem:[%s1948 + $0xe0] sm:$0xff]
        %v1962 = vld [vmem:[%s1948 + $0xf0] sm:$0xff]
        %v1963 = vld [vmem:[%s1948 + $0x100] sm:$0xff]
        %v1964 = vld [vmem:[%s1948 + $0x110] sm:$0xff]
        %v1965 = vld [vmem:[%s1948 + $0x140] sm:$0xff]
        %v1966 = vld [vmem:[%s1948 + $0x150] sm:$0xff]
        %v1967 = vld [vmem:[%s1948 + $0x160] sm:$0xff]
        %v1968 = vld [vmem:[%s1948 + $0x170] sm:$0xff]
        %v1969 = vld [vmem:[%s1948 + $0x180] sm:$0xff]
        %v1970 = vld [vmem:[%s1948 + $0x190] sm:$0xff]
        %v1971 = vld [vmem:[%s1948 + $0x1a0] sm:$0xff]
        %v1972 = vld [vmem:[%s1948 + $0x1b0] sm:$0xff]
        %v1973 = vld [vmem:[%s1948 + $0x1e0] sm:$0xff]
        %v1974 = vld [vmem:[%s1948 + $0x1f0] sm:$0xff]
        %v1975 = vld [vmem:[%s1948 + $0x200] sm:$0xff]
        %v1976 = vld [vmem:[%s1948 + $0x210] sm:$0xff]
        %v1977 = vld [vmem:[%s1948 + $0x220] sm:$0xff]
        %v1978 = vld [vmem:[%s1948 + $0x230] sm:$0xff]
        %v1979 = vld [vmem:[%s1948 + $0x240] sm:$0xff]
        %v1980 = vld [vmem:[%s1948 + $0x250] sm:$0xff]
        %v1981 = vld [vmem:[%s1948 + $0x280] sm:$0xff]
        %v1982 = vld [vmem:[%s1948 + $0x290] sm:$0xff]
        %v1983 = vld [vmem:[%s1948 + $0x2a0] sm:$0xff]
        %v1984 = vld [vmem:[%s1948 + $0x2b0] sm:$0xff]
        %v1985 = vld [vmem:[%s1948 + $0x2c0] sm:$0xff]
        %v1986 = vld [vmem:[%s1948 + $0x2d0] sm:$0xff]
        %v1987 = vld [vmem:[%s1948 + $0x2e0] sm:$0xff]
        %v1988 = vld [vmem:[%s1948 + $0x2f0] sm:$0xff]
        %v1989 = vld [vmem:[%s1948 + $0x320] sm:$0xff]
        %v1990 = vld [vmem:[%s1948 + $0x330] sm:$0xff]
        %v1991 = vld [vmem:[%s1948 + $0x340] sm:$0xff]
        %v1992 = vld [vmem:[%s1948 + $0x350] sm:$0xff]
        %v1993 = vld [vmem:[%s1948 + $0x360] sm:$0xff]
        %v1994 = vld [vmem:[%s1948 + $0x370] sm:$0xff]
        %v1995 = vld [vmem:[%s1948 + $0x380] sm:$0xff]
        %v1996 = vld [vmem:[%s1948 + $0x390] sm:$0xff]
        %v1997 = vld [vmem:[%s1948 + $0x3c0] sm:$0xff]
        %v1998 = vld [vmem:[%s1948 + $0x3d0] sm:$0xff]
        %v1999 = vld [vmem:[%s1948 + $0x3e0] sm:$0xff]
        %v2000 = vld [vmem:[%s1948 + $0x3f0] sm:$0xff]
        %v2001 = vld [vmem:[%s1948 + $0x400] sm:$0xff]
        %v2002 = vld [vmem:[%s1948 + $0x410] sm:$0xff]
        %v2003 = vld [vmem:[%s1948 + $0x420] sm:$0xff]
        %v2004 = vld [vmem:[%s1948 + $0x430] sm:$0xff]
        %v2005 = vld [vmem:[%s1948 + $0x460] sm:$0xff]
        %v2006 = vld [vmem:[%s1948 + $0x470] sm:$0xff]
        %v2007 = vld [vmem:[%s1948 + $0x480] sm:$0xff]
        %v2008 = vld [vmem:[%s1948 + $0x490] sm:$0xff]
        %v2009 = vld [vmem:[%s1948 + $0x4a0] sm:$0xff]
        %v2010 = vld [vmem:[%s1948 + $0x4b0] sm:$0xff]
        %v2011 = vld [vmem:[%s1948 + $0x4c0] sm:$0xff]
        %v2012 = vld [vmem:[%s1948 + $0x4d0] sm:$0xff]
        %v2013 = vpack.c.bf16 %v1950, %v1949
        %v2014 = vpack.c.bf16 %v1952, %v1951
        %v2015 = vpack.c.bf16 %v1954, %v1953
        %v2016 = vpack.c.bf16 %v1956, %v1955
        %v2017 = vpack.c.bf16 %v1958, %v1957
        %v2018 = vpack.c.bf16 %v1960, %v1959
        %v2019 = vpack.c.bf16 %v1962, %v1961
        %v2020 = vpack.c.bf16 %v1964, %v1963
        %v2021 = vpack.c.bf16 %v1966, %v1965
        %v2022 = vpack.c.bf16 %v1968, %v1967
        %v2023 = vpack.c.bf16 %v1970, %v1969
        %v2024 = vpack.c.bf16 %v1972, %v1971
        %v2025 = vpack.c.bf16 %v1974, %v1973
        %v2026 = vpack.c.bf16 %v1976, %v1975
        %v2027 = vpack.c.bf16 %v1978, %v1977
        %v2028 = vpack.c.bf16 %v1980, %v1979
        %v2029 = vpack.c.bf16 %v1982, %v1981
        %v2030 = vpack.c.bf16 %v1984, %v1983
        %v2031 = vpack.c.bf16 %v1986, %v1985
        %v2032 = vpack.c.bf16 %v1988, %v1987
        %v2033 = vpack.c.bf16 %v1990, %v1989
        %v2034 = vpack.c.bf16 %v1992, %v1991
        %v2035 = vpack.c.bf16 %v1994, %v1993
        %v2036 = vpack.c.bf16 %v1996, %v1995
        %v2037 = vpack.c.bf16 %v1998, %v1997
        %v2038 = vpack.c.bf16 %v2000, %v1999
        %v2039 = vpack.c.bf16 %v2002, %v2001
        %v2040 = vpack.c.bf16 %v2004, %v2003
        %v2041 = vpack.c.bf16 %v2006, %v2005
        %v2042 = vpack.c.bf16 %v2008, %v2007
        %v2043 = vpack.c.bf16 %v2010, %v2009
        %v2044 = vpack.c.bf16 %v2012, %v2011
        %s2045 = scalar_lea.vmem %s1, 12
        %v2046 = vld [vmem:[%s2045] sm:$0xf]
        %v2048 = vsel %vm230, %v2013, 0
        %v2051 = vsel %vm230, %v2014, 0
        %v2054 = vsel %vm230, %v2015, 0
        %v2057 = vsel %vm230, %v2016, 0
        %v2060 = vsel %vm230, %v2017, 0
        %v2063 = vsel %vm230, %v2018, 0
        %v2066 = vsel %vm230, %v2019, 0
        %v2069 = vsel %vm230, %v2020, 0
        %v2072 = vsel %vm230, %v2021, 0
        %v2075 = vsel %vm230, %v2022, 0
        %v2078 = vsel %vm230, %v2023, 0
        %v2081 = vsel %vm230, %v2024, 0
        %v2084 = vsel %vm230, %v2025, 0
        %v2087 = vsel %vm230, %v2026, 0
        %v2090 = vsel %vm230, %v2027, 0
        %v2093 = vsel %vm230, %v2028, 0
        %v2096 = vsel %vm230, %v2029, 0
        %v2099 = vsel %vm230, %v2030, 0
        %v2102 = vsel %vm230, %v2031, 0
        %v2105 = vsel %vm230, %v2032, 0
        %v2108 = vsel %vm230, %v2033, 0
        %v2111 = vsel %vm230, %v2034, 0
        %v2114 = vsel %vm230, %v2035, 0
        %v2117 = vsel %vm230, %v2036, 0
        %v2120 = vsel %vm230, %v2037, 0
        %v2123 = vsel %vm230, %v2038, 0
        %v2126 = vsel %vm230, %v2039, 0
        %v2129 = vsel %vm230, %v2040, 0
        %v2132 = vsel %vm230, %v2041, 0
        %v2135 = vsel %vm230, %v2042, 0
        %v2138 = vsel %vm230, %v2043, 0
        %v2141 = vsel %vm230, %v2044, 0
        %v2144 = vsel %vm717, %v2046, 0
        %2146 = vmatprep.subr.bf16.mxu0 0
        %2147 = vmatpush1.bf16.msra.mxu0 0
        %2148 = vmatprep.subr.bf16.mxu0 0
        %2149 = vmatpush1.bf16.msra.mxu0 0
        %2150 = vmatprep.subr.bf16.mxu0 0
        %2151 = vmatpush1.bf16.msra.mxu0 0
        %2152 = vmatprep.subr.bf16.mxu0 0
        %2153 = vmatpush1.bf16.msra.mxu0 0
        %2154 = vmatprep.subr.bf16.mxu0 0
        %2155 = vmatpush1.bf16.msra.mxu0 0
        %2156 = vmatprep.subr.bf16.mxu0 0
        %2157 = vmatpush1.bf16.msra.mxu0 0
        %2158 = vmatprep.subr.bf16.mxu0 0
        %2159 = vmatpush1.bf16.msra.mxu0 0
        %2160 = vmatprep.subr.bf16.mxu0 0
        %2161 = vmatpush1.bf16.msra.mxu0 %v2144
        %2162 = vmatprep.subr.bf16.mxu0 0
        %2163 = vmatpush2.bf16.msra.mxu0 0
        %2164 = vmatprep.subr.bf16.mxu0 0
        %2165 = vmatpush2.bf16.msra.mxu0 0
        %2166 = vmatprep.subr.bf16.mxu0 0
        %2167 = vmatpush2.bf16.msra.mxu0 0
        %2168 = vmatprep.subr.bf16.mxu0 0
        %2169 = vmatpush2.bf16.msra.mxu0 0
        %2170 = vmatprep.subr.bf16.mxu0 0
        %2171 = vmatpush2.bf16.msra.mxu0 0
        %2172 = vmatprep.subr.bf16.mxu0 0
        %2173 = vmatpush2.bf16.msra.mxu0 0
        %2174 = vmatprep.subr.bf16.mxu0 0
        %2175 = vmatpush2.bf16.msra.mxu0 0
        %2176 = vmatprep.subr.bf16.mxu0 0
        %2177 = vmatpush2.bf16.msra.mxu0 0
        %2178 = vmatprep.mubr.bf16.mxu0 0
        %2179 = vmatmul.mubr.bf16.gmra.mxu0 %v2048
        %v2180 = vpop.f32.mrf.mxu0
        %v2181 = vadd.f32 0.0, %v2180
        %v2182 = vpop.f32.mrf.mxu0
        %v2183 = vpop.f32.mrf.mxu0
        %v2184 = vadd.f32 0.0, %v2183
        %v2185 = vpop.f32.mrf.mxu0
        %2186 = vmatprep.mubr.bf16.mxu0 0
        %2187 = vmatmul.mubr.bf16.gmra.mxu0 %v2051
        %v2188 = vpop.f32.mrf.mxu0
        %v2189 = vadd.f32 0.0, %v2188
        %v2190 = vpop.f32.mrf.mxu0
        %v2191 = vpop.f32.mrf.mxu0
        %v2192 = vadd.f32 0.0, %v2191
        %v2193 = vpop.f32.mrf.mxu0
        %2194 = vmatprep.mubr.bf16.mxu0 0
        %2195 = vmatmul.mubr.bf16.gmra.mxu0 %v2054
        %v2196 = vpop.f32.mrf.mxu0
        %v2197 = vadd.f32 0.0, %v2196
        %v2198 = vpop.f32.mrf.mxu0
        %v2199 = vpop.f32.mrf.mxu0
        %v2200 = vadd.f32 0.0, %v2199
        %v2201 = vpop.f32.mrf.mxu0
        %2202 = vmatprep.mubr.bf16.mxu0 0
        %2203 = vmatmul.mubr.bf16.gmra.mxu0 %v2057
        %v2204 = vpop.f32.mrf.mxu0
        %v2205 = vadd.f32 0.0, %v2204
        %v2206 = vpop.f32.mrf.mxu0
        %v2207 = vpop.f32.mrf.mxu0
        %v2208 = vadd.f32 0.0, %v2207
        %v2209 = vpop.f32.mrf.mxu0
        %2210 = vmatprep.mubr.bf16.mxu0 0
        %2211 = vmatmul.mubr.bf16.gmra.mxu0 %v2060
        %v2212 = vpop.f32.mrf.mxu0
        %v2213 = vadd.f32 0.0, %v2212
        %v2214 = vpop.f32.mrf.mxu0
        %v2215 = vpop.f32.mrf.mxu0
        %v2216 = vadd.f32 0.0, %v2215
        %v2217 = vpop.f32.mrf.mxu0
        %2218 = vmatprep.mubr.bf16.mxu0 0
        %2219 = vmatmul.mubr.bf16.gmra.mxu0 %v2063
        %v2220 = vpop.f32.mrf.mxu0
        %v2221 = vadd.f32 0.0, %v2220
        %v2222 = vpop.f32.mrf.mxu0
        %v2223 = vpop.f32.mrf.mxu0
        %v2224 = vadd.f32 0.0, %v2223
        %v2225 = vpop.f32.mrf.mxu0
        %2226 = vmatprep.mubr.bf16.mxu0 0
        %2227 = vmatmul.mubr.bf16.gmra.mxu0 %v2066
        %v2228 = vpop.f32.mrf.mxu0
        %v2229 = vadd.f32 0.0, %v2228
        %v2230 = vpop.f32.mrf.mxu0
        %v2231 = vpop.f32.mrf.mxu0
        %v2232 = vadd.f32 0.0, %v2231
        %v2233 = vpop.f32.mrf.mxu0
        %2234 = vmatprep.mubr.bf16.mxu0 0
        %2235 = vmatmul.mubr.bf16.gmra.mxu0 %v2069
        %v2236 = vpop.f32.mrf.mxu0
        %v2237 = vadd.f32 0.0, %v2236
        %v2238 = vpop.f32.mrf.mxu0
        %v2239 = vpop.f32.mrf.mxu0
        %v2240 = vadd.f32 0.0, %v2239
        %v2241 = vpop.f32.mrf.mxu0
        %2242 = vmatprep.mubr.bf16.mxu0 0
        %2243 = vmatmul.mubr.bf16.gmra.mxu0 %v2072
        %v2244 = vpop.f32.mrf.mxu0
        %v2245 = vadd.f32 0.0, %v2244
        %v2246 = vpop.f32.mrf.mxu0
        %v2247 = vpop.f32.mrf.mxu0
        %v2248 = vadd.f32 0.0, %v2247
        %v2249 = vpop.f32.mrf.mxu0
        %2250 = vmatprep.mubr.bf16.mxu0 0
        %2251 = vmatmul.mubr.bf16.gmra.mxu0 %v2075
        %v2252 = vpop.f32.mrf.mxu0
        %v2253 = vadd.f32 0.0, %v2252
        %v2254 = vpop.f32.mrf.mxu0
        %v2255 = vpop.f32.mrf.mxu0
        %v2256 = vadd.f32 0.0, %v2255
        %v2257 = vpop.f32.mrf.mxu0
        %2258 = vmatprep.mubr.bf16.mxu0 0
        %2259 = vmatmul.mubr.bf16.gmra.mxu0 %v2078
        %v2260 = vpop.f32.mrf.mxu0
        %v2261 = vadd.f32 0.0, %v2260
        %v2262 = vpop.f32.mrf.mxu0
        %v2263 = vpop.f32.mrf.mxu0
        %v2264 = vadd.f32 0.0, %v2263
        %v2265 = vpop.f32.mrf.mxu0
        %2266 = vmatprep.mubr.bf16.mxu0 0
        %2267 = vmatmul.mubr.bf16.gmra.mxu0 %v2081
        %v2268 = vpop.f32.mrf.mxu0
        %v2269 = vadd.f32 0.0, %v2268
        %v2270 = vpop.f32.mrf.mxu0
        %v2271 = vpop.f32.mrf.mxu0
        %v2272 = vadd.f32 0.0, %v2271
        %v2273 = vpop.f32.mrf.mxu0
        %2274 = vmatprep.mubr.bf16.mxu0 0
        %2275 = vmatmul.mubr.bf16.gmra.mxu0 %v2084
        %v2276 = vpop.f32.mrf.mxu0
        %v2277 = vadd.f32 0.0, %v2276
        %v2278 = vpop.f32.mrf.mxu0
        %v2279 = vpop.f32.mrf.mxu0
        %v2280 = vadd.f32 0.0, %v2279
        %v2281 = vpop.f32.mrf.mxu0
        %2282 = vmatprep.mubr.bf16.mxu0 0
        %2283 = vmatmul.mubr.bf16.gmra.mxu0 %v2087
        %v2284 = vpop.f32.mrf.mxu0
        %v2285 = vadd.f32 0.0, %v2284
        %v2286 = vpop.f32.mrf.mxu0
        %v2287 = vpop.f32.mrf.mxu0
        %v2288 = vadd.f32 0.0, %v2287
        %v2289 = vpop.f32.mrf.mxu0
        %2290 = vmatprep.mubr.bf16.mxu0 0
        %2291 = vmatmul.mubr.bf16.gmra.mxu0 %v2090
        %v2292 = vpop.f32.mrf.mxu0
        %v2293 = vadd.f32 0.0, %v2292
        %v2294 = vpop.f32.mrf.mxu0
        %v2295 = vpop.f32.mrf.mxu0
        %v2296 = vadd.f32 0.0, %v2295
        %v2297 = vpop.f32.mrf.mxu0
        %2298 = vmatprep.mubr.bf16.mxu0 0
        %2299 = vmatmul.mubr.bf16.gmra.mxu0 %v2093
        %v2300 = vpop.f32.mrf.mxu0
        %v2301 = vadd.f32 0.0, %v2300
        %v2302 = vpop.f32.mrf.mxu0
        %v2303 = vpop.f32.mrf.mxu0
        %v2304 = vadd.f32 0.0, %v2303
        %v2305 = vpop.f32.mrf.mxu0
        %2306 = vmatprep.mubr.bf16.mxu0 0
        %2307 = vmatmul.mubr.bf16.gmra.mxu0 %v2096
        %v2308 = vpop.f32.mrf.mxu0
        %v2309 = vadd.f32 0.0, %v2308
        %v2310 = vpop.f32.mrf.mxu0
        %v2311 = vpop.f32.mrf.mxu0
        %v2312 = vadd.f32 0.0, %v2311
        %v2313 = vpop.f32.mrf.mxu0
        %2314 = vmatprep.mubr.bf16.mxu0 0
        %2315 = vmatmul.mubr.bf16.gmra.mxu0 %v2099
        %v2316 = vpop.f32.mrf.mxu0
        %v2317 = vadd.f32 0.0, %v2316
        %v2318 = vpop.f32.mrf.mxu0
        %v2319 = vpop.f32.mrf.mxu0
        %v2320 = vadd.f32 0.0, %v2319
        %v2321 = vpop.f32.mrf.mxu0
        %2322 = vmatprep.mubr.bf16.mxu0 0
        %2323 = vmatmul.mubr.bf16.gmra.mxu0 %v2102
        %v2324 = vpop.f32.mrf.mxu0
        %v2325 = vadd.f32 0.0, %v2324
        %v2326 = vpop.f32.mrf.mxu0
        %v2327 = vpop.f32.mrf.mxu0
        %v2328 = vadd.f32 0.0, %v2327
        %v2329 = vpop.f32.mrf.mxu0
        %2330 = vmatprep.mubr.bf16.mxu0 0
        %2331 = vmatmul.mubr.bf16.gmra.mxu0 %v2105
        %v2332 = vpop.f32.mrf.mxu0
        %v2333 = vadd.f32 0.0, %v2332
        %v2334 = vpop.f32.mrf.mxu0
        %v2335 = vpop.f32.mrf.mxu0
        %v2336 = vadd.f32 0.0, %v2335
        %v2337 = vpop.f32.mrf.mxu0
        %2338 = vmatprep.mubr.bf16.mxu0 0
        %2339 = vmatmul.mubr.bf16.gmra.mxu0 %v2108
        %v2340 = vpop.f32.mrf.mxu0
        %v2341 = vadd.f32 0.0, %v2340
        %v2342 = vpop.f32.mrf.mxu0
        %v2343 = vpop.f32.mrf.mxu0
        %v2344 = vadd.f32 0.0, %v2343
        %v2345 = vpop.f32.mrf.mxu0
        %2346 = vmatprep.mubr.bf16.mxu0 0
        %2347 = vmatmul.mubr.bf16.gmra.mxu0 %v2111
        %v2348 = vpop.f32.mrf.mxu0
        %v2349 = vadd.f32 0.0, %v2348
        %v2350 = vpop.f32.mrf.mxu0
        %v2351 = vpop.f32.mrf.mxu0
        %v2352 = vadd.f32 0.0, %v2351
        %v2353 = vpop.f32.mrf.mxu0
        %2354 = vmatprep.mubr.bf16.mxu0 0
        %2355 = vmatmul.mubr.bf16.gmra.mxu0 %v2114
        %v2356 = vpop.f32.mrf.mxu0
        %v2357 = vadd.f32 0.0, %v2356
        %v2358 = vpop.f32.mrf.mxu0
        %v2359 = vpop.f32.mrf.mxu0
        %v2360 = vadd.f32 0.0, %v2359
        %v2361 = vpop.f32.mrf.mxu0
        %2362 = vmatprep.mubr.bf16.mxu0 0
        %2363 = vmatmul.mubr.bf16.gmra.mxu0 %v2117
        %v2364 = vpop.f32.mrf.mxu0
        %v2365 = vadd.f32 0.0, %v2364
        %v2366 = vpop.f32.mrf.mxu0
        %v2367 = vpop.f32.mrf.mxu0
        %v2368 = vadd.f32 0.0, %v2367
        %v2369 = vpop.f32.mrf.mxu0
        %2370 = vmatprep.mubr.bf16.mxu0 0
        %2371 = vmatmul.mubr.bf16.gmra.mxu0 %v2120
        %v2372 = vpop.f32.mrf.mxu0
        %v2373 = vadd.f32 0.0, %v2372
        %v2374 = vpop.f32.mrf.mxu0
        %v2375 = vpop.f32.mrf.mxu0
        %v2376 = vadd.f32 0.0, %v2375
        %v2377 = vpop.f32.mrf.mxu0
        %2378 = vmatprep.mubr.bf16.mxu0 0
        %2379 = vmatmul.mubr.bf16.gmra.mxu0 %v2123
        %v2380 = vpop.f32.mrf.mxu0
        %v2381 = vadd.f32 0.0, %v2380
        %v2382 = vpop.f32.mrf.mxu0
        %v2383 = vpop.f32.mrf.mxu0
        %v2384 = vadd.f32 0.0, %v2383
        %v2385 = vpop.f32.mrf.mxu0
        %2386 = vmatprep.mubr.bf16.mxu0 0
        %2387 = vmatmul.mubr.bf16.gmra.mxu0 %v2126
        %v2388 = vpop.f32.mrf.mxu0
        %v2389 = vadd.f32 0.0, %v2388
        %v2390 = vpop.f32.mrf.mxu0
        %v2391 = vpop.f32.mrf.mxu0
        %v2392 = vadd.f32 0.0, %v2391
        %v2393 = vpop.f32.mrf.mxu0
        %2394 = vmatprep.mubr.bf16.mxu0 0
        %2395 = vmatmul.mubr.bf16.gmra.mxu0 %v2129
        %v2396 = vpop.f32.mrf.mxu0
        %v2397 = vadd.f32 0.0, %v2396
        %v2398 = vpop.f32.mrf.mxu0
        %v2399 = vpop.f32.mrf.mxu0
        %v2400 = vadd.f32 0.0, %v2399
        %v2401 = vpop.f32.mrf.mxu0
        %2402 = vmatprep.mubr.bf16.mxu0 0
        %2403 = vmatmul.mubr.bf16.gmra.mxu0 %v2132
        %v2404 = vpop.f32.mrf.mxu0
        %v2405 = vadd.f32 0.0, %v2404
        %v2406 = vpop.f32.mrf.mxu0
        %v2407 = vpop.f32.mrf.mxu0
        %v2408 = vadd.f32 0.0, %v2407
        %v2409 = vpop.f32.mrf.mxu0
        %2410 = vmatprep.mubr.bf16.mxu0 0
        %2411 = vmatmul.mubr.bf16.gmra.mxu0 %v2135
        %v2412 = vpop.f32.mrf.mxu0
        %v2413 = vadd.f32 0.0, %v2412
        %v2414 = vpop.f32.mrf.mxu0
        %v2415 = vpop.f32.mrf.mxu0
        %v2416 = vadd.f32 0.0, %v2415
        %v2417 = vpop.f32.mrf.mxu0
        %2418 = vmatprep.mubr.bf16.mxu0 0
        %2419 = vmatmul.mubr.bf16.gmra.mxu0 %v2138
        %v2420 = vpop.f32.mrf.mxu0
        %v2421 = vadd.f32 0.0, %v2420
        %v2422 = vpop.f32.mrf.mxu0
        %v2423 = vpop.f32.mrf.mxu0
        %v2424 = vadd.f32 0.0, %v2423
        %v2425 = vpop.f32.mrf.mxu0
        %2426 = vmatprep.mubr.bf16.mxu0 0
        %2427 = vmatmul.mubr.bf16.gmra.mxu0 %v2141
        %v2428 = vpop.f32.mrf.mxu0
        %v2429 = vadd.f32 0.0, %v2428
        %v2430 = vpop.f32.mrf.mxu0
        %v2431 = vpop.f32.mrf.mxu0
        %v2432 = vadd.f32 0.0, %v2431
        %v2433 = vpop.f32.mrf.mxu0
        %2434 = vdwg.mxu0
        %v2435 = vadd.f32 %v1884, %v2181
        %v2436 = vadd.f32 %v1885, %v2184
        %v2437 = vadd.f32 %v1886, %v2189
        %v2438 = vadd.f32 %v1887, %v2192
        %v2439 = vadd.f32 %v1888, %v2197
        %v2440 = vadd.f32 %v1889, %v2200
        %v2441 = vadd.f32 %v1890, %v2205
        %v2442 = vadd.f32 %v1891, %v2208
        %v2443 = vadd.f32 %v1892, %v2213
        %v2444 = vadd.f32 %v1893, %v2216
        %v2445 = vadd.f32 %v1894, %v2221
        %v2446 = vadd.f32 %v1895, %v2224
        %v2447 = vadd.f32 %v1896, %v2229
        %v2448 = vadd.f32 %v1897, %v2232
        %v2449 = vadd.f32 %v1898, %v2237
        %v2450 = vadd.f32 %v1899, %v2240
        %v2451 = vadd.f32 %v1900, %v2245
        %v2452 = vadd.f32 %v1901, %v2248
        %v2453 = vadd.f32 %v1902, %v2253
        %v2454 = vadd.f32 %v1903, %v2256
        %v2455 = vadd.f32 %v1904, %v2261
        %v2456 = vadd.f32 %v1905, %v2264
        %v2457 = vadd.f32 %v1906, %v2269
        %v2458 = vadd.f32 %v1907, %v2272
        %v2459 = vadd.f32 %v1908, %v2277
        %v2460 = vadd.f32 %v1909, %v2280
        %v2461 = vadd.f32 %v1910, %v2285
        %v2462 = vadd.f32 %v1911, %v2288
        %v2463 = vadd.f32 %v1912, %v2293
        %v2464 = vadd.f32 %v1913, %v2296
        %v2465 = vadd.f32 %v1914, %v2301
        %v2466 = vadd.f32 %v1915, %v2304
        %v2467 = vadd.f32 %v1916, %v2309
        %v2468 = vadd.f32 %v1917, %v2312
        %v2469 = vadd.f32 %v1918, %v2317
        %v2470 = vadd.f32 %v1919, %v2320
        %v2471 = vadd.f32 %v1920, %v2325
        %v2472 = vadd.f32 %v1921, %v2328
        %v2473 = vadd.f32 %v1922, %v2333
        %v2474 = vadd.f32 %v1923, %v2336
        %v2475 = vadd.f32 %v1924, %v2341
        %v2476 = vadd.f32 %v1925, %v2344
        %v2477 = vadd.f32 %v1926, %v2349
        %v2478 = vadd.f32 %v1927, %v2352
        %v2479 = vadd.f32 %v1928, %v2357
        %v2480 = vadd.f32 %v1929, %v2360
        %v2481 = vadd.f32 %v1930, %v2365
        %v2482 = vadd.f32 %v1931, %v2368
        %v2483 = vadd.f32 %v1932, %v2373
        %v2484 = vadd.f32 %v1933, %v2376
        %v2485 = vadd.f32 %v1934, %v2381
        %v2486 = vadd.f32 %v1935, %v2384
        %v2487 = vadd.f32 %v1936, %v2389
        %v2488 = vadd.f32 %v1937, %v2392
        %v2489 = vadd.f32 %v1938, %v2397
        %v2490 = vadd.f32 %v1939, %v2400
        %v2491 = vadd.f32 %v1940, %v2405
        %v2492 = vadd.f32 %v1941, %v2408
        %v2493 = vadd.f32 %v1942, %v2413
        %v2494 = vadd.f32 %v1943, %v2416
        %v2495 = vadd.f32 %v1944, %v2421
        %v2496 = vadd.f32 %v1945, %v2424
        %v2497 = vadd.f32 %v1946, %v2429
        %v2498 = vadd.f32 %v1947, %v2432
        %v2499 = vld [vmem:[%s1948 + $0x1] sm:$0xff]
        %v2500 = vld [vmem:[%s1948 + $0x11] sm:$0xff]
        %v2501 = vld [vmem:[%s1948 + $0x21] sm:$0xff]
        %v2502 = vld [vmem:[%s1948 + $0x31] sm:$0xff]
        %v2503 = vld [vmem:[%s1948 + $0x41] sm:$0xff]
        %v2504 = vld [vmem:[%s1948 + $0x51] sm:$0xff]
        %v2505 = vld [vmem:[%s1948 + $0x61] sm:$0xff]
        %v2506 = vld [vmem:[%s1948 + $0x71] sm:$0xff]
        %v2507 = vld [vmem:[%s1948 + $0xa1] sm:$0xff]
        %v2508 = vld [vmem:[%s1948 + $0xb1] sm:$0xff]
        %v2509 = vld [vmem:[%s1948 + $0xc1] sm:$0xff]
        %v2510 = vld [vmem:[%s1948 + $0xd1] sm:$0xff]
        %v2511 = vld [vmem:[%s1948 + $0xe1] sm:$0xff]
        %v2512 = vld [vmem:[%s1948 + $0xf1] sm:$0xff]
        %v2513 = vld [vmem:[%s1948 + $0x101] sm:$0xff]
        %v2514 = vld [vmem:[%s1948 + $0x111] sm:$0xff]
        %v2515 = vld [vmem:[%s1948 + $0x141] sm:$0xff]
        %v2516 = vld [vmem:[%s1948 + $0x151] sm:$0xff]
        %v2517 = vld [vmem:[%s1948 + $0x161] sm:$0xff]
        %v2518 = vld [vmem:[%s1948 + $0x171] sm:$0xff]
        %v2519 = vld [vmem:[%s1948 + $0x181] sm:$0xff]
        %v2520 = vld [vmem:[%s1948 + $0x191] sm:$0xff]
        %v2521 = vld [vmem:[%s1948 + $0x1a1] sm:$0xff]
        %v2522 = vld [vmem:[%s1948 + $0x1b1] sm:$0xff]
        %v2523 = vld [vmem:[%s1948 + $0x1e1] sm:$0xff]
        %v2524 = vld [vmem:[%s1948 + $0x1f1] sm:$0xff]
        %v2525 = vld [vmem:[%s1948 + $0x201] sm:$0xff]
        %v2526 = vld [vmem:[%s1948 + $0x211] sm:$0xff]
        %v2527 = vld [vmem:[%s1948 + $0x221] sm:$0xff]
        %v2528 = vld [vmem:[%s1948 + $0x231] sm:$0xff]
        %v2529 = vld [vmem:[%s1948 + $0x241] sm:$0xff]
        %v2530 = vld [vmem:[%s1948 + $0x251] sm:$0xff]
        %v2531 = vld [vmem:[%s1948 + $0x281] sm:$0xff]
        %v2532 = vld [vmem:[%s1948 + $0x291] sm:$0xff]
        %v2533 = vld [vmem:[%s1948 + $0x2a1] sm:$0xff]
        %v2534 = vld [vmem:[%s1948 + $0x2b1] sm:$0xff]
        %v2535 = vld [vmem:[%s1948 + $0x2c1] sm:$0xff]
        %v2536 = vld [vmem:[%s1948 + $0x2d1] sm:$0xff]
        %v2537 = vld [vmem:[%s1948 + $0x2e1] sm:$0xff]
        %v2538 = vld [vmem:[%s1948 + $0x2f1] sm:$0xff]
        %v2539 = vld [vmem:[%s1948 + $0x321] sm:$0xff]
        %v2540 = vld [vmem:[%s1948 + $0x331] sm:$0xff]
        %v2541 = vld [vmem:[%s1948 + $0x341] sm:$0xff]
        %v2542 = vld [vmem:[%s1948 + $0x351] sm:$0xff]
        %v2543 = vld [vmem:[%s1948 + $0x361] sm:$0xff]
        %v2544 = vld [vmem:[%s1948 + $0x371] sm:$0xff]
        %v2545 = vld [vmem:[%s1948 + $0x381] sm:$0xff]
        %v2546 = vld [vmem:[%s1948 + $0x391] sm:$0xff]
        %v2547 = vld [vmem:[%s1948 + $0x3c1] sm:$0xff]
        %v2548 = vld [vmem:[%s1948 + $0x3d1] sm:$0xff]
        %v2549 = vld [vmem:[%s1948 + $0x3e1] sm:$0xff]
        %v2550 = vld [vmem:[%s1948 + $0x3f1] sm:$0xff]
        %v2551 = vld [vmem:[%s1948 + $0x401] sm:$0xff]
        %v2552 = vld [vmem:[%s1948 + $0x411] sm:$0xff]
        %v2553 = vld [vmem:[%s1948 + $0x421] sm:$0xff]
        %v2554 = vld [vmem:[%s1948 + $0x431] sm:$0xff]
        %v2555 = vld [vmem:[%s1948 + $0x461] sm:$0xff]
        %v2556 = vld [vmem:[%s1948 + $0x471] sm:$0xff]
        %v2557 = vld [vmem:[%s1948 + $0x481] sm:$0xff]
        %v2558 = vld [vmem:[%s1948 + $0x491] sm:$0xff]
        %v2559 = vld [vmem:[%s1948 + $0x4a1] sm:$0xff]
        %v2560 = vld [vmem:[%s1948 + $0x4b1] sm:$0xff]
        %v2561 = vld [vmem:[%s1948 + $0x4c1] sm:$0xff]
        %v2562 = vld [vmem:[%s1948 + $0x4d1] sm:$0xff]
        %v2563 = vpack.c.bf16 %v2500, %v2499
        %v2564 = vpack.c.bf16 %v2502, %v2501
        %v2565 = vpack.c.bf16 %v2504, %v2503
        %v2566 = vpack.c.bf16 %v2506, %v2505
        %v2567 = vpack.c.bf16 %v2508, %v2507
        %v2568 = vpack.c.bf16 %v2510, %v2509
        %v2569 = vpack.c.bf16 %v2512, %v2511
        %v2570 = vpack.c.bf16 %v2514, %v2513
        %v2571 = vpack.c.bf16 %v2516, %v2515
        %v2572 = vpack.c.bf16 %v2518, %v2517
        %v2573 = vpack.c.bf16 %v2520, %v2519
        %v2574 = vpack.c.bf16 %v2522, %v2521
        %v2575 = vpack.c.bf16 %v2524, %v2523
        %v2576 = vpack.c.bf16 %v2526, %v2525
        %v2577 = vpack.c.bf16 %v2528, %v2527
        %v2578 = vpack.c.bf16 %v2530, %v2529
        %v2579 = vpack.c.bf16 %v2532, %v2531
        %v2580 = vpack.c.bf16 %v2534, %v2533
        %v2581 = vpack.c.bf16 %v2536, %v2535
        %v2582 = vpack.c.bf16 %v2538, %v2537
        %v2583 = vpack.c.bf16 %v2540, %v2539
        %v2584 = vpack.c.bf16 %v2542, %v2541
        %v2585 = vpack.c.bf16 %v2544, %v2543
        %v2586 = vpack.c.bf16 %v2546, %v2545
        %v2587 = vpack.c.bf16 %v2548, %v2547
        %v2588 = vpack.c.bf16 %v2550, %v2549
        %v2589 = vpack.c.bf16 %v2552, %v2551
        %v2590 = vpack.c.bf16 %v2554, %v2553
        %v2591 = vpack.c.bf16 %v2556, %v2555
        %v2592 = vpack.c.bf16 %v2558, %v2557
        %v2593 = vpack.c.bf16 %v2560, %v2559
        %v2594 = vpack.c.bf16 %v2562, %v2561
        %s2595 = scalar_lea.vmem %s1, 16
        %v2596 = vld [vmem:[%s2595] sm:$0xf]
        %v2598 = vsel %vm230, %v2563, 0
        %v2601 = vsel %vm230, %v2564, 0
        %v2604 = vsel %vm230, %v2565, 0
        %v2607 = vsel %vm230, %v2566, 0
        %v2610 = vsel %vm230, %v2567, 0
        %v2613 = vsel %vm230, %v2568, 0
        %v2616 = vsel %vm230, %v2569, 0
        %v2619 = vsel %vm230, %v2570, 0
        %v2622 = vsel %vm230, %v2571, 0
        %v2625 = vsel %vm230, %v2572, 0
        %v2628 = vsel %vm230, %v2573, 0
        %v2631 = vsel %vm230, %v2574, 0
        %v2634 = vsel %vm230, %v2575, 0
        %v2637 = vsel %vm230, %v2576, 0
        %v2640 = vsel %vm230, %v2577, 0
        %v2643 = vsel %vm230, %v2578, 0
        %v2646 = vsel %vm230, %v2579, 0
        %v2649 = vsel %vm230, %v2580, 0
        %v2652 = vsel %vm230, %v2581, 0
        %v2655 = vsel %vm230, %v2582, 0
        %v2658 = vsel %vm230, %v2583, 0
        %v2661 = vsel %vm230, %v2584, 0
        %v2664 = vsel %vm230, %v2585, 0
        %v2667 = vsel %vm230, %v2586, 0
        %v2670 = vsel %vm230, %v2587, 0
        %v2673 = vsel %vm230, %v2588, 0
        %v2676 = vsel %vm230, %v2589, 0
        %v2679 = vsel %vm230, %v2590, 0
        %v2682 = vsel %vm230, %v2591, 0
        %v2685 = vsel %vm230, %v2592, 0
        %v2688 = vsel %vm230, %v2593, 0
        %v2691 = vsel %vm230, %v2594, 0
        %v2694 = vsel %vm717, %v2596, 0
        %2696 = vmatprep.subr.bf16.mxu0 0
        %2697 = vmatpush1.bf16.msra.mxu0 0
        %2698 = vmatprep.subr.bf16.mxu0 0
        %2699 = vmatpush1.bf16.msra.mxu0 0
        %2700 = vmatprep.subr.bf16.mxu0 0
        %2701 = vmatpush1.bf16.msra.mxu0 0
        %2702 = vmatprep.subr.bf16.mxu0 0
        %2703 = vmatpush1.bf16.msra.mxu0 0
        %2704 = vmatprep.subr.bf16.mxu0 0
        %2705 = vmatpush1.bf16.msra.mxu0 0
        %2706 = vmatprep.subr.bf16.mxu0 0
        %2707 = vmatpush1.bf16.msra.mxu0 0
        %2708 = vmatprep.subr.bf16.mxu0 0
        %2709 = vmatpush1.bf16.msra.mxu0 0
        %2710 = vmatprep.subr.bf16.mxu0 0
        %2711 = vmatpush1.bf16.msra.mxu0 %v2694
        %2712 = vmatprep.subr.bf16.mxu0 0
        %2713 = vmatpush2.bf16.msra.mxu0 0
        %2714 = vmatprep.subr.bf16.mxu0 0
        %2715 = vmatpush2.bf16.msra.mxu0 0
        %2716 = vmatprep.subr.bf16.mxu0 0
        %2717 = vmatpush2.bf16.msra.mxu0 0
        %2718 = vmatprep.subr.bf16.mxu0 0
        %2719 = vmatpush2.bf16.msra.mxu0 0
        %2720 = vmatprep.subr.bf16.mxu0 0
        %2721 = vmatpush2.bf16.msra.mxu0 0
        %2722 = vmatprep.subr.bf16.mxu0 0
        %2723 = vmatpush2.bf16.msra.mxu0 0
        %2724 = vmatprep.subr.bf16.mxu0 0
        %2725 = vmatpush2.bf16.msra.mxu0 0
        %2726 = vmatprep.subr.bf16.mxu0 0
        %2727 = vmatpush2.bf16.msra.mxu0 0
        %2728 = vmatprep.mubr.bf16.mxu0 0
        %2729 = vmatmul.mubr.bf16.gmra.mxu0 %v2598
        %v2730 = vpop.f32.mrf.mxu0
        %v2731 = vadd.f32 0.0, %v2730
        %v2732 = vpop.f32.mrf.mxu0
        %v2733 = vpop.f32.mrf.mxu0
        %v2734 = vadd.f32 0.0, %v2733
        %v2735 = vpop.f32.mrf.mxu0
        %2736 = vmatprep.mubr.bf16.mxu0 0
        %2737 = vmatmul.mubr.bf16.gmra.mxu0 %v2601
        %v2738 = vpop.f32.mrf.mxu0
        %v2739 = vadd.f32 0.0, %v2738
        %v2740 = vpop.f32.mrf.mxu0
        %v2741 = vpop.f32.mrf.mxu0
        %v2742 = vadd.f32 0.0, %v2741
        %v2743 = vpop.f32.mrf.mxu0
        %2744 = vmatprep.mubr.bf16.mxu0 0
        %2745 = vmatmul.mubr.bf16.gmra.mxu0 %v2604
        %v2746 = vpop.f32.mrf.mxu0
        %v2747 = vadd.f32 0.0, %v2746
        %v2748 = vpop.f32.mrf.mxu0
        %v2749 = vpop.f32.mrf.mxu0
        %v2750 = vadd.f32 0.0, %v2749
        %v2751 = vpop.f32.mrf.mxu0
        %2752 = vmatprep.mubr.bf16.mxu0 0
        %2753 = vmatmul.mubr.bf16.gmra.mxu0 %v2607
        %v2754 = vpop.f32.mrf.mxu0
        %v2755 = vadd.f32 0.0, %v2754
        %v2756 = vpop.f32.mrf.mxu0
        %v2757 = vpop.f32.mrf.mxu0
        %v2758 = vadd.f32 0.0, %v2757
        %v2759 = vpop.f32.mrf.mxu0
        %2760 = vmatprep.mubr.bf16.mxu0 0
        %2761 = vmatmul.mubr.bf16.gmra.mxu0 %v2610
        %v2762 = vpop.f32.mrf.mxu0
        %v2763 = vadd.f32 0.0, %v2762
        %v2764 = vpop.f32.mrf.mxu0
        %v2765 = vpop.f32.mrf.mxu0
        %v2766 = vadd.f32 0.0, %v2765
        %v2767 = vpop.f32.mrf.mxu0
        %2768 = vmatprep.mubr.bf16.mxu0 0
        %2769 = vmatmul.mubr.bf16.gmra.mxu0 %v2613
        %v2770 = vpop.f32.mrf.mxu0
        %v2771 = vadd.f32 0.0, %v2770
        %v2772 = vpop.f32.mrf.mxu0
        %v2773 = vpop.f32.mrf.mxu0
        %v2774 = vadd.f32 0.0, %v2773
        %v2775 = vpop.f32.mrf.mxu0
        %2776 = vmatprep.mubr.bf16.mxu0 0
        %2777 = vmatmul.mubr.bf16.gmra.mxu0 %v2616
        %v2778 = vpop.f32.mrf.mxu0
        %v2779 = vadd.f32 0.0, %v2778
        %v2780 = vpop.f32.mrf.mxu0
        %v2781 = vpop.f32.mrf.mxu0
        %v2782 = vadd.f32 0.0, %v2781
        %v2783 = vpop.f32.mrf.mxu0
        %2784 = vmatprep.mubr.bf16.mxu0 0
        %2785 = vmatmul.mubr.bf16.gmra.mxu0 %v2619
        %v2786 = vpop.f32.mrf.mxu0
        %v2787 = vadd.f32 0.0, %v2786
        %v2788 = vpop.f32.mrf.mxu0
        %v2789 = vpop.f32.mrf.mxu0
        %v2790 = vadd.f32 0.0, %v2789
        %v2791 = vpop.f32.mrf.mxu0
        %2792 = vmatprep.mubr.bf16.mxu0 0
        %2793 = vmatmul.mubr.bf16.gmra.mxu0 %v2622
        %v2794 = vpop.f32.mrf.mxu0
        %v2795 = vadd.f32 0.0, %v2794
        %v2796 = vpop.f32.mrf.mxu0
        %v2797 = vpop.f32.mrf.mxu0
        %v2798 = vadd.f32 0.0, %v2797
        %v2799 = vpop.f32.mrf.mxu0
        %2800 = vmatprep.mubr.bf16.mxu0 0
        %2801 = vmatmul.mubr.bf16.gmra.mxu0 %v2625
        %v2802 = vpop.f32.mrf.mxu0
        %v2803 = vadd.f32 0.0, %v2802
        %v2804 = vpop.f32.mrf.mxu0
        %v2805 = vpop.f32.mrf.mxu0
        %v2806 = vadd.f32 0.0, %v2805
        %v2807 = vpop.f32.mrf.mxu0
        %2808 = vmatprep.mubr.bf16.mxu0 0
        %2809 = vmatmul.mubr.bf16.gmra.mxu0 %v2628
        %v2810 = vpop.f32.mrf.mxu0
        %v2811 = vadd.f32 0.0, %v2810
        %v2812 = vpop.f32.mrf.mxu0
        %v2813 = vpop.f32.mrf.mxu0
        %v2814 = vadd.f32 0.0, %v2813
        %v2815 = vpop.f32.mrf.mxu0
        %2816 = vmatprep.mubr.bf16.mxu0 0
        %2817 = vmatmul.mubr.bf16.gmra.mxu0 %v2631
        %v2818 = vpop.f32.mrf.mxu0
        %v2819 = vadd.f32 0.0, %v2818
        %v2820 = vpop.f32.mrf.mxu0
        %v2821 = vpop.f32.mrf.mxu0
        %v2822 = vadd.f32 0.0, %v2821
        %v2823 = vpop.f32.mrf.mxu0
        %2824 = vmatprep.mubr.bf16.mxu0 0
        %2825 = vmatmul.mubr.bf16.gmra.mxu0 %v2634
        %v2826 = vpop.f32.mrf.mxu0
        %v2827 = vadd.f32 0.0, %v2826
        %v2828 = vpop.f32.mrf.mxu0
        %v2829 = vpop.f32.mrf.mxu0
        %v2830 = vadd.f32 0.0, %v2829
        %v2831 = vpop.f32.mrf.mxu0
        %2832 = vmatprep.mubr.bf16.mxu0 0
        %2833 = vmatmul.mubr.bf16.gmra.mxu0 %v2637
        %v2834 = vpop.f32.mrf.mxu0
        %v2835 = vadd.f32 0.0, %v2834
        %v2836 = vpop.f32.mrf.mxu0
        %v2837 = vpop.f32.mrf.mxu0
        %v2838 = vadd.f32 0.0, %v2837
        %v2839 = vpop.f32.mrf.mxu0
        %2840 = vmatprep.mubr.bf16.mxu0 0
        %2841 = vmatmul.mubr.bf16.gmra.mxu0 %v2640
        %v2842 = vpop.f32.mrf.mxu0
        %v2843 = vadd.f32 0.0, %v2842
        %v2844 = vpop.f32.mrf.mxu0
        %v2845 = vpop.f32.mrf.mxu0
        %v2846 = vadd.f32 0.0, %v2845
        %v2847 = vpop.f32.mrf.mxu0
        %2848 = vmatprep.mubr.bf16.mxu0 0
        %2849 = vmatmul.mubr.bf16.gmra.mxu0 %v2643
        %v2850 = vpop.f32.mrf.mxu0
        %v2851 = vadd.f32 0.0, %v2850
        %v2852 = vpop.f32.mrf.mxu0
        %v2853 = vpop.f32.mrf.mxu0
        %v2854 = vadd.f32 0.0, %v2853
        %v2855 = vpop.f32.mrf.mxu0
        %2856 = vmatprep.mubr.bf16.mxu0 0
        %2857 = vmatmul.mubr.bf16.gmra.mxu0 %v2646
        %v2858 = vpop.f32.mrf.mxu0
        %v2859 = vadd.f32 0.0, %v2858
        %v2860 = vpop.f32.mrf.mxu0
        %v2861 = vpop.f32.mrf.mxu0
        %v2862 = vadd.f32 0.0, %v2861
        %v2863 = vpop.f32.mrf.mxu0
        %2864 = vmatprep.mubr.bf16.mxu0 0
        %2865 = vmatmul.mubr.bf16.gmra.mxu0 %v2649
        %v2866 = vpop.f32.mrf.mxu0
        %v2867 = vadd.f32 0.0, %v2866
        %v2868 = vpop.f32.mrf.mxu0
        %v2869 = vpop.f32.mrf.mxu0
        %v2870 = vadd.f32 0.0, %v2869
        %v2871 = vpop.f32.mrf.mxu0
        %2872 = vmatprep.mubr.bf16.mxu0 0
        %2873 = vmatmul.mubr.bf16.gmra.mxu0 %v2652
        %v2874 = vpop.f32.mrf.mxu0
        %v2875 = vadd.f32 0.0, %v2874
        %v2876 = vpop.f32.mrf.mxu0
        %v2877 = vpop.f32.mrf.mxu0
        %v2878 = vadd.f32 0.0, %v2877
        %v2879 = vpop.f32.mrf.mxu0
        %2880 = vmatprep.mubr.bf16.mxu0 0
        %2881 = vmatmul.mubr.bf16.gmra.mxu0 %v2655
        %v2882 = vpop.f32.mrf.mxu0
        %v2883 = vadd.f32 0.0, %v2882
        %v2884 = vpop.f32.mrf.mxu0
        %v2885 = vpop.f32.mrf.mxu0
        %v2886 = vadd.f32 0.0, %v2885
        %v2887 = vpop.f32.mrf.mxu0
        %2888 = vmatprep.mubr.bf16.mxu0 0
        %2889 = vmatmul.mubr.bf16.gmra.mxu0 %v2658
        %v2890 = vpop.f32.mrf.mxu0
        %v2891 = vadd.f32 0.0, %v2890
        %v2892 = vpop.f32.mrf.mxu0
        %v2893 = vpop.f32.mrf.mxu0
        %v2894 = vadd.f32 0.0, %v2893
        %v2895 = vpop.f32.mrf.mxu0
        %2896 = vmatprep.mubr.bf16.mxu0 0
        %2897 = vmatmul.mubr.bf16.gmra.mxu0 %v2661
        %v2898 = vpop.f32.mrf.mxu0
        %v2899 = vadd.f32 0.0, %v2898
        %v2900 = vpop.f32.mrf.mxu0
        %v2901 = vpop.f32.mrf.mxu0
        %v2902 = vadd.f32 0.0, %v2901
        %v2903 = vpop.f32.mrf.mxu0
        %2904 = vmatprep.mubr.bf16.mxu0 0
        %2905 = vmatmul.mubr.bf16.gmra.mxu0 %v2664
        %v2906 = vpop.f32.mrf.mxu0
        %v2907 = vadd.f32 0.0, %v2906
        %v2908 = vpop.f32.mrf.mxu0
        %v2909 = vpop.f32.mrf.mxu0
        %v2910 = vadd.f32 0.0, %v2909
        %v2911 = vpop.f32.mrf.mxu0
        %2912 = vmatprep.mubr.bf16.mxu0 0
        %2913 = vmatmul.mubr.bf16.gmra.mxu0 %v2667
        %v2914 = vpop.f32.mrf.mxu0
        %v2915 = vadd.f32 0.0, %v2914
        %v2916 = vpop.f32.mrf.mxu0
        %v2917 = vpop.f32.mrf.mxu0
        %v2918 = vadd.f32 0.0, %v2917
        %v2919 = vpop.f32.mrf.mxu0
        %2920 = vmatprep.mubr.bf16.mxu0 0
        %2921 = vmatmul.mubr.bf16.gmra.mxu0 %v2670
        %v2922 = vpop.f32.mrf.mxu0
        %v2923 = vadd.f32 0.0, %v2922
        %v2924 = vpop.f32.mrf.mxu0
        %v2925 = vpop.f32.mrf.mxu0
        %v2926 = vadd.f32 0.0, %v2925
        %v2927 = vpop.f32.mrf.mxu0
        %2928 = vmatprep.mubr.bf16.mxu0 0
        %2929 = vmatmul.mubr.bf16.gmra.mxu0 %v2673
        %v2930 = vpop.f32.mrf.mxu0
        %v2931 = vadd.f32 0.0, %v2930
        %v2932 = vpop.f32.mrf.mxu0
        %v2933 = vpop.f32.mrf.mxu0
        %v2934 = vadd.f32 0.0, %v2933
        %v2935 = vpop.f32.mrf.mxu0
        %2936 = vmatprep.mubr.bf16.mxu0 0
        %2937 = vmatmul.mubr.bf16.gmra.mxu0 %v2676
        %v2938 = vpop.f32.mrf.mxu0
        %v2939 = vadd.f32 0.0, %v2938
        %v2940 = vpop.f32.mrf.mxu0
        %v2941 = vpop.f32.mrf.mxu0
        %v2942 = vadd.f32 0.0, %v2941
        %v2943 = vpop.f32.mrf.mxu0
        %2944 = vmatprep.mubr.bf16.mxu0 0
        %2945 = vmatmul.mubr.bf16.gmra.mxu0 %v2679
        %v2946 = vpop.f32.mrf.mxu0
        %v2947 = vadd.f32 0.0, %v2946
        %v2948 = vpop.f32.mrf.mxu0
        %v2949 = vpop.f32.mrf.mxu0
        %v2950 = vadd.f32 0.0, %v2949
        %v2951 = vpop.f32.mrf.mxu0
        %2952 = vmatprep.mubr.bf16.mxu0 0
        %2953 = vmatmul.mubr.bf16.gmra.mxu0 %v2682
        %v2954 = vpop.f32.mrf.mxu0
        %v2955 = vadd.f32 0.0, %v2954
        %v2956 = vpop.f32.mrf.mxu0
        %v2957 = vpop.f32.mrf.mxu0
        %v2958 = vadd.f32 0.0, %v2957
        %v2959 = vpop.f32.mrf.mxu0
        %2960 = vmatprep.mubr.bf16.mxu0 0
        %2961 = vmatmul.mubr.bf16.gmra.mxu0 %v2685
        %v2962 = vpop.f32.mrf.mxu0
        %v2963 = vadd.f32 0.0, %v2962
        %v2964 = vpop.f32.mrf.mxu0
        %v2965 = vpop.f32.mrf.mxu0
        %v2966 = vadd.f32 0.0, %v2965
        %v2967 = vpop.f32.mrf.mxu0
        %2968 = vmatprep.mubr.bf16.mxu0 0
        %2969 = vmatmul.mubr.bf16.gmra.mxu0 %v2688
        %v2970 = vpop.f32.mrf.mxu0
        %v2971 = vadd.f32 0.0, %v2970
        %v2972 = vpop.f32.mrf.mxu0
        %v2973 = vpop.f32.mrf.mxu0
        %v2974 = vadd.f32 0.0, %v2973
        %v2975 = vpop.f32.mrf.mxu0
        %2976 = vmatprep.mubr.bf16.mxu0 0
        %2977 = vmatmul.mubr.bf16.gmra.mxu0 %v2691
        %v2978 = vpop.f32.mrf.mxu0
        %v2979 = vadd.f32 0.0, %v2978
        %v2980 = vpop.f32.mrf.mxu0
        %v2981 = vpop.f32.mrf.mxu0
        %v2982 = vadd.f32 0.0, %v2981
        %v2983 = vpop.f32.mrf.mxu0
        %2984 = vdwg.mxu0
        %v2985 = vadd.f32 %v2435, %v2731
        %v2986 = vadd.f32 %v2436, %v2734
        %v2987 = vadd.f32 %v2437, %v2739
        %v2988 = vadd.f32 %v2438, %v2742
        %v2989 = vadd.f32 %v2439, %v2747
        %v2990 = vadd.f32 %v2440, %v2750
        %v2991 = vadd.f32 %v2441, %v2755
        %v2992 = vadd.f32 %v2442, %v2758
        %v2993 = vadd.f32 %v2443, %v2763
        %v2994 = vadd.f32 %v2444, %v2766
        %v2995 = vadd.f32 %v2445, %v2771
        %v2996 = vadd.f32 %v2446, %v2774
        %v2997 = vadd.f32 %v2447, %v2779
        %v2998 = vadd.f32 %v2448, %v2782
        %v2999 = vadd.f32 %v2449, %v2787
        %v3000 = vadd.f32 %v2450, %v2790
        %v3001 = vadd.f32 %v2451, %v2795
        %v3002 = vadd.f32 %v2452, %v2798
        %v3003 = vadd.f32 %v2453, %v2803
        %v3004 = vadd.f32 %v2454, %v2806
        %v3005 = vadd.f32 %v2455, %v2811
        %v3006 = vadd.f32 %v2456, %v2814
        %v3007 = vadd.f32 %v2457, %v2819
        %v3008 = vadd.f32 %v2458, %v2822
        %v3009 = vadd.f32 %v2459, %v2827
        %v3010 = vadd.f32 %v2460, %v2830
        %v3011 = vadd.f32 %v2461, %v2835
        %v3012 = vadd.f32 %v2462, %v2838
        %v3013 = vadd.f32 %v2463, %v2843
        %v3014 = vadd.f32 %v2464, %v2846
        %v3015 = vadd.f32 %v2465, %v2851
        %v3016 = vadd.f32 %v2466, %v2854
        %v3017 = vadd.f32 %v2467, %v2859
        %v3018 = vadd.f32 %v2468, %v2862
        %v3019 = vadd.f32 %v2469, %v2867
        %v3020 = vadd.f32 %v2470, %v2870
        %v3021 = vadd.f32 %v2471, %v2875
        %v3022 = vadd.f32 %v2472, %v2878
        %v3023 = vadd.f32 %v2473, %v2883
        %v3024 = vadd.f32 %v2474, %v2886
        %v3025 = vadd.f32 %v2475, %v2891
        %v3026 = vadd.f32 %v2476, %v2894
        %v3027 = vadd.f32 %v2477, %v2899
        %v3028 = vadd.f32 %v2478, %v2902
        %v3029 = vadd.f32 %v2479, %v2907
        %v3030 = vadd.f32 %v2480, %v2910
        %v3031 = vadd.f32 %v2481, %v2915
        %v3032 = vadd.f32 %v2482, %v2918
        %v3033 = vadd.f32 %v2483, %v2923
        %v3034 = vadd.f32 %v2484, %v2926
        %v3035 = vadd.f32 %v2485, %v2931
        %v3036 = vadd.f32 %v2486, %v2934
        %v3037 = vadd.f32 %v2487, %v2939
        %v3038 = vadd.f32 %v2488, %v2942
        %v3039 = vadd.f32 %v2489, %v2947
        %v3040 = vadd.f32 %v2490, %v2950
        %v3041 = vadd.f32 %v2491, %v2955
        %v3042 = vadd.f32 %v2492, %v2958
        %v3043 = vadd.f32 %v2493, %v2963
        %v3044 = vadd.f32 %v2494, %v2966
        %v3045 = vadd.f32 %v2495, %v2971
        %v3046 = vadd.f32 %v2496, %v2974
        %v3047 = vadd.f32 %v2497, %v2979
        %v3048 = vadd.f32 %v2498, %v2982
        %v3049 = vld [vmem:[%s1948 + $0x2] sm:$0xff]
        %v3050 = vld [vmem:[%s1948 + $0x12] sm:$0xff]
        %v3051 = vld [vmem:[%s1948 + $0x22] sm:$0xff]
        %v3052 = vld [vmem:[%s1948 + $0x32] sm:$0xff]
        %v3053 = vld [vmem:[%s1948 + $0x42] sm:$0xff]
        %v3054 = vld [vmem:[%s1948 + $0x52] sm:$0xff]
        %v3055 = vld [vmem:[%s1948 + $0x62] sm:$0xff]
        %v3056 = vld [vmem:[%s1948 + $0x72] sm:$0xff]
        %v3057 = vld [vmem:[%s1948 + $0xa2] sm:$0xff]
        %v3058 = vld [vmem:[%s1948 + $0xb2] sm:$0xff]
        %v3059 = vld [vmem:[%s1948 + $0xc2] sm:$0xff]
        %v3060 = vld [vmem:[%s1948 + $0xd2] sm:$0xff]
        %v3061 = vld [vmem:[%s1948 + $0xe2] sm:$0xff]
        %v3062 = vld [vmem:[%s1948 + $0xf2] sm:$0xff]
        %v3063 = vld [vmem:[%s1948 + $0x102] sm:$0xff]
        %v3064 = vld [vmem:[%s1948 + $0x112] sm:$0xff]
        %v3065 = vld [vmem:[%s1948 + $0x142] sm:$0xff]
        %v3066 = vld [vmem:[%s1948 + $0x152] sm:$0xff]
        %v3067 = vld [vmem:[%s1948 + $0x162] sm:$0xff]
        %v3068 = vld [vmem:[%s1948 + $0x172] sm:$0xff]
        %v3069 = vld [vmem:[%s1948 + $0x182] sm:$0xff]
        %v3070 = vld [vmem:[%s1948 + $0x192] sm:$0xff]
        %v3071 = vld [vmem:[%s1948 + $0x1a2] sm:$0xff]
        %v3072 = vld [vmem:[%s1948 + $0x1b2] sm:$0xff]
        %v3073 = vld [vmem:[%s1948 + $0x1e2] sm:$0xff]
        %v3074 = vld [vmem:[%s1948 + $0x1f2] sm:$0xff]
        %v3075 = vld [vmem:[%s1948 + $0x202] sm:$0xff]
        %v3076 = vld [vmem:[%s1948 + $0x212] sm:$0xff]
        %v3077 = vld [vmem:[%s1948 + $0x222] sm:$0xff]
        %v3078 = vld [vmem:[%s1948 + $0x232] sm:$0xff]
        %v3079 = vld [vmem:[%s1948 + $0x242] sm:$0xff]
        %v3080 = vld [vmem:[%s1948 + $0x252] sm:$0xff]
        %v3081 = vld [vmem:[%s1948 + $0x282] sm:$0xff]
        %v3082 = vld [vmem:[%s1948 + $0x292] sm:$0xff]
        %v3083 = vld [vmem:[%s1948 + $0x2a2] sm:$0xff]
        %v3084 = vld [vmem:[%s1948 + $0x2b2] sm:$0xff]
        %v3085 = vld [vmem:[%s1948 + $0x2c2] sm:$0xff]
        %v3086 = vld [vmem:[%s1948 + $0x2d2] sm:$0xff]
        %v3087 = vld [vmem:[%s1948 + $0x2e2] sm:$0xff]
        %v3088 = vld [vmem:[%s1948 + $0x2f2] sm:$0xff]
        %v3089 = vld [vmem:[%s1948 + $0x322] sm:$0xff]
        %v3090 = vld [vmem:[%s1948 + $0x332] sm:$0xff]
        %v3091 = vld [vmem:[%s1948 + $0x342] sm:$0xff]
        %v3092 = vld [vmem:[%s1948 + $0x352] sm:$0xff]
        %v3093 = vld [vmem:[%s1948 + $0x362] sm:$0xff]
        %v3094 = vld [vmem:[%s1948 + $0x372] sm:$0xff]
        %v3095 = vld [vmem:[%s1948 + $0x382] sm:$0xff]
        %v3096 = vld [vmem:[%s1948 + $0x392] sm:$0xff]
        %v3097 = vld [vmem:[%s1948 + $0x3c2] sm:$0xff]
        %v3098 = vld [vmem:[%s1948 + $0x3d2] sm:$0xff]
        %v3099 = vld [vmem:[%s1948 + $0x3e2] sm:$0xff]
        %v3100 = vld [vmem:[%s1948 + $0x3f2] sm:$0xff]
        %v3101 = vld [vmem:[%s1948 + $0x402] sm:$0xff]
        %v3102 = vld [vmem:[%s1948 + $0x412] sm:$0xff]
        %v3103 = vld [vmem:[%s1948 + $0x422] sm:$0xff]
        %v3104 = vld [vmem:[%s1948 + $0x432] sm:$0xff]
        %v3105 = vld [vmem:[%s1948 + $0x462] sm:$0xff]
        %v3106 = vld [vmem:[%s1948 + $0x472] sm:$0xff]
        %v3107 = vld [vmem:[%s1948 + $0x482] sm:$0xff]
        %v3108 = vld [vmem:[%s1948 + $0x492] sm:$0xff]
        %v3109 = vld [vmem:[%s1948 + $0x4a2] sm:$0xff]
        %v3110 = vld [vmem:[%s1948 + $0x4b2] sm:$0xff]
        %v3111 = vld [vmem:[%s1948 + $0x4c2] sm:$0xff]
        %v3112 = vld [vmem:[%s1948 + $0x4d2] sm:$0xff]
        %v3113 = vpack.c.bf16 %v3050, %v3049
        %v3114 = vpack.c.bf16 %v3052, %v3051
        %v3115 = vpack.c.bf16 %v3054, %v3053
        %v3116 = vpack.c.bf16 %v3056, %v3055
        %v3117 = vpack.c.bf16 %v3058, %v3057
        %v3118 = vpack.c.bf16 %v3060, %v3059
        %v3119 = vpack.c.bf16 %v3062, %v3061
        %v3120 = vpack.c.bf16 %v3064, %v3063
        %v3121 = vpack.c.bf16 %v3066, %v3065
        %v3122 = vpack.c.bf16 %v3068, %v3067
        %v3123 = vpack.c.bf16 %v3070, %v3069
        %v3124 = vpack.c.bf16 %v3072, %v3071
        %v3125 = vpack.c.bf16 %v3074, %v3073
        %v3126 = vpack.c.bf16 %v3076, %v3075
        %v3127 = vpack.c.bf16 %v3078, %v3077
        %v3128 = vpack.c.bf16 %v3080, %v3079
        %v3129 = vpack.c.bf16 %v3082, %v3081
        %v3130 = vpack.c.bf16 %v3084, %v3083
        %v3131 = vpack.c.bf16 %v3086, %v3085
        %v3132 = vpack.c.bf16 %v3088, %v3087
        %v3133 = vpack.c.bf16 %v3090, %v3089
        %v3134 = vpack.c.bf16 %v3092, %v3091
        %v3135 = vpack.c.bf16 %v3094, %v3093
        %v3136 = vpack.c.bf16 %v3096, %v3095
        %v3137 = vpack.c.bf16 %v3098, %v3097
        %v3138 = vpack.c.bf16 %v3100, %v3099
        %v3139 = vpack.c.bf16 %v3102, %v3101
        %v3140 = vpack.c.bf16 %v3104, %v3103
        %v3141 = vpack.c.bf16 %v3106, %v3105
        %v3142 = vpack.c.bf16 %v3108, %v3107
        %v3143 = vpack.c.bf16 %v3110, %v3109
        %v3144 = vpack.c.bf16 %v3112, %v3111
        %s3145 = scalar_lea.vmem %s1, 20
        %v3146 = vld [vmem:[%s3145] sm:$0xf]
        %v3148 = vsel %vm230, %v3113, 0
        %v3151 = vsel %vm230, %v3114, 0
        %v3154 = vsel %vm230, %v3115, 0
        %v3157 = vsel %vm230, %v3116, 0
        %v3160 = vsel %vm230, %v3117, 0
        %v3163 = vsel %vm230, %v3118, 0
        %v3166 = vsel %vm230, %v3119, 0
        %v3169 = vsel %vm230, %v3120, 0
        %v3172 = vsel %vm230, %v3121, 0
        %v3175 = vsel %vm230, %v3122, 0
        %v3178 = vsel %vm230, %v3123, 0
        %v3181 = vsel %vm230, %v3124, 0
        %v3184 = vsel %vm230, %v3125, 0
        %v3187 = vsel %vm230, %v3126, 0
        %v3190 = vsel %vm230, %v3127, 0
        %v3193 = vsel %vm230, %v3128, 0
        %v3196 = vsel %vm230, %v3129, 0
        %v3199 = vsel %vm230, %v3130, 0
        %v3202 = vsel %vm230, %v3131, 0
        %v3205 = vsel %vm230, %v3132, 0
        %v3208 = vsel %vm230, %v3133, 0
        %v3211 = vsel %vm230, %v3134, 0
        %v3214 = vsel %vm230, %v3135, 0
        %v3217 = vsel %vm230, %v3136, 0
        %v3220 = vsel %vm230, %v3137, 0
        %v3223 = vsel %vm230, %v3138, 0
        %v3226 = vsel %vm230, %v3139, 0
        %v3229 = vsel %vm230, %v3140, 0
        %v3232 = vsel %vm230, %v3141, 0
        %v3235 = vsel %vm230, %v3142, 0
        %v3238 = vsel %vm230, %v3143, 0
        %v3241 = vsel %vm230, %v3144, 0
        %v3244 = vsel %vm717, %v3146, 0
        %3246 = vmatprep.subr.bf16.mxu0 0
        %3247 = vmatpush1.bf16.msra.mxu0 0
        %3248 = vmatprep.subr.bf16.mxu0 0
        %3249 = vmatpush1.bf16.msra.mxu0 0
        %3250 = vmatprep.subr.bf16.mxu0 0
        %3251 = vmatpush1.bf16.msra.mxu0 0
        %3252 = vmatprep.subr.bf16.mxu0 0
        %3253 = vmatpush1.bf16.msra.mxu0 0
        %3254 = vmatprep.subr.bf16.mxu0 0
        %3255 = vmatpush1.bf16.msra.mxu0 0
        %3256 = vmatprep.subr.bf16.mxu0 0
        %3257 = vmatpush1.bf16.msra.mxu0 0
        %3258 = vmatprep.subr.bf16.mxu0 0
        %3259 = vmatpush1.bf16.msra.mxu0 0
        %3260 = vmatprep.subr.bf16.mxu0 0
        %3261 = vmatpush1.bf16.msra.mxu0 %v3244
        %3262 = vmatprep.subr.bf16.mxu0 0
        %3263 = vmatpush2.bf16.msra.mxu0 0
        %3264 = vmatprep.subr.bf16.mxu0 0
        %3265 = vmatpush2.bf16.msra.mxu0 0
        %3266 = vmatprep.subr.bf16.mxu0 0
        %3267 = vmatpush2.bf16.msra.mxu0 0
        %3268 = vmatprep.subr.bf16.mxu0 0
        %3269 = vmatpush2.bf16.msra.mxu0 0
        %3270 = vmatprep.subr.bf16.mxu0 0
        %3271 = vmatpush2.bf16.msra.mxu0 0
        %3272 = vmatprep.subr.bf16.mxu0 0
        %3273 = vmatpush2.bf16.msra.mxu0 0
        %3274 = vmatprep.subr.bf16.mxu0 0
        %3275 = vmatpush2.bf16.msra.mxu0 0
        %3276 = vmatprep.subr.bf16.mxu0 0
        %3277 = vmatpush2.bf16.msra.mxu0 0
        %3278 = vmatprep.mubr.bf16.mxu0 0
        %3279 = vmatmul.mubr.bf16.gmra.mxu0 %v3148
        %v3280 = vpop.f32.mrf.mxu0
        %v3281 = vadd.f32 0.0, %v3280
        %v3282 = vpop.f32.mrf.mxu0
        %v3283 = vpop.f32.mrf.mxu0
        %v3284 = vadd.f32 0.0, %v3283
        %v3285 = vpop.f32.mrf.mxu0
        %3286 = vmatprep.mubr.bf16.mxu0 0
        %3287 = vmatmul.mubr.bf16.gmra.mxu0 %v3151
        %v3288 = vpop.f32.mrf.mxu0
        %v3289 = vadd.f32 0.0, %v3288
        %v3290 = vpop.f32.mrf.mxu0
        %v3291 = vpop.f32.mrf.mxu0
        %v3292 = vadd.f32 0.0, %v3291
        %v3293 = vpop.f32.mrf.mxu0
        %3294 = vmatprep.mubr.bf16.mxu0 0
        %3295 = vmatmul.mubr.bf16.gmra.mxu0 %v3154
        %v3296 = vpop.f32.mrf.mxu0
        %v3297 = vadd.f32 0.0, %v3296
        %v3298 = vpop.f32.mrf.mxu0
        %v3299 = vpop.f32.mrf.mxu0
        %v3300 = vadd.f32 0.0, %v3299
        %v3301 = vpop.f32.mrf.mxu0
        %3302 = vmatprep.mubr.bf16.mxu0 0
        %3303 = vmatmul.mubr.bf16.gmra.mxu0 %v3157
        %v3304 = vpop.f32.mrf.mxu0
        %v3305 = vadd.f32 0.0, %v3304
        %v3306 = vpop.f32.mrf.mxu0
        %v3307 = vpop.f32.mrf.mxu0
        %v3308 = vadd.f32 0.0, %v3307
        %v3309 = vpop.f32.mrf.mxu0
        %3310 = vmatprep.mubr.bf16.mxu0 0
        %3311 = vmatmul.mubr.bf16.gmra.mxu0 %v3160
        %v3312 = vpop.f32.mrf.mxu0
        %v3313 = vadd.f32 0.0, %v3312
        %v3314 = vpop.f32.mrf.mxu0
        %v3315 = vpop.f32.mrf.mxu0
        %v3316 = vadd.f32 0.0, %v3315
        %v3317 = vpop.f32.mrf.mxu0
        %3318 = vmatprep.mubr.bf16.mxu0 0
        %3319 = vmatmul.mubr.bf16.gmra.mxu0 %v3163
        %v3320 = vpop.f32.mrf.mxu0
        %v3321 = vadd.f32 0.0, %v3320
        %v3322 = vpop.f32.mrf.mxu0
        %v3323 = vpop.f32.mrf.mxu0
        %v3324 = vadd.f32 0.0, %v3323
        %v3325 = vpop.f32.mrf.mxu0
        %3326 = vmatprep.mubr.bf16.mxu0 0
        %3327 = vmatmul.mubr.bf16.gmra.mxu0 %v3166
        %v3328 = vpop.f32.mrf.mxu0
        %v3329 = vadd.f32 0.0, %v3328
        %v3330 = vpop.f32.mrf.mxu0
        %v3331 = vpop.f32.mrf.mxu0
        %v3332 = vadd.f32 0.0, %v3331
        %v3333 = vpop.f32.mrf.mxu0
        %3334 = vmatprep.mubr.bf16.mxu0 0
        %3335 = vmatmul.mubr.bf16.gmra.mxu0 %v3169
        %v3336 = vpop.f32.mrf.mxu0
        %v3337 = vadd.f32 0.0, %v3336
        %v3338 = vpop.f32.mrf.mxu0
        %v3339 = vpop.f32.mrf.mxu0
        %v3340 = vadd.f32 0.0, %v3339
        %v3341 = vpop.f32.mrf.mxu0
        %3342 = vmatprep.mubr.bf16.mxu0 0
        %3343 = vmatmul.mubr.bf16.gmra.mxu0 %v3172
        %v3344 = vpop.f32.mrf.mxu0
        %v3345 = vadd.f32 0.0, %v3344
        %v3346 = vpop.f32.mrf.mxu0
        %v3347 = vpop.f32.mrf.mxu0
        %v3348 = vadd.f32 0.0, %v3347
        %v3349 = vpop.f32.mrf.mxu0
        %3350 = vmatprep.mubr.bf16.mxu0 0
        %3351 = vmatmul.mubr.bf16.gmra.mxu0 %v3175
        %v3352 = vpop.f32.mrf.mxu0
        %v3353 = vadd.f32 0.0, %v3352
        %v3354 = vpop.f32.mrf.mxu0
        %v3355 = vpop.f32.mrf.mxu0
        %v3356 = vadd.f32 0.0, %v3355
        %v3357 = vpop.f32.mrf.mxu0
        %3358 = vmatprep.mubr.bf16.mxu0 0
        %3359 = vmatmul.mubr.bf16.gmra.mxu0 %v3178
        %v3360 = vpop.f32.mrf.mxu0
        %v3361 = vadd.f32 0.0, %v3360
        %v3362 = vpop.f32.mrf.mxu0
        %v3363 = vpop.f32.mrf.mxu0
        %v3364 = vadd.f32 0.0, %v3363
        %v3365 = vpop.f32.mrf.mxu0
        %3366 = vmatprep.mubr.bf16.mxu0 0
        %3367 = vmatmul.mubr.bf16.gmra.mxu0 %v3181
        %v3368 = vpop.f32.mrf.mxu0
        %v3369 = vadd.f32 0.0, %v3368
        %v3370 = vpop.f32.mrf.mxu0
        %v3371 = vpop.f32.mrf.mxu0
        %v3372 = vadd.f32 0.0, %v3371
        %v3373 = vpop.f32.mrf.mxu0
        %3374 = vmatprep.mubr.bf16.mxu0 0
        %3375 = vmatmul.mubr.bf16.gmra.mxu0 %v3184
        %v3376 = vpop.f32.mrf.mxu0
        %v3377 = vadd.f32 0.0, %v3376
        %v3378 = vpop.f32.mrf.mxu0
        %v3379 = vpop.f32.mrf.mxu0
        %v3380 = vadd.f32 0.0, %v3379
        %v3381 = vpop.f32.mrf.mxu0
        %3382 = vmatprep.mubr.bf16.mxu0 0
        %3383 = vmatmul.mubr.bf16.gmra.mxu0 %v3187
        %v3384 = vpop.f32.mrf.mxu0
        %v3385 = vadd.f32 0.0, %v3384
        %v3386 = vpop.f32.mrf.mxu0
        %v3387 = vpop.f32.mrf.mxu0
        %v3388 = vadd.f32 0.0, %v3387
        %v3389 = vpop.f32.mrf.mxu0
        %3390 = vmatprep.mubr.bf16.mxu0 0
        %3391 = vmatmul.mubr.bf16.gmra.mxu0 %v3190
        %v3392 = vpop.f32.mrf.mxu0
        %v3393 = vadd.f32 0.0, %v3392
        %v3394 = vpop.f32.mrf.mxu0
        %v3395 = vpop.f32.mrf.mxu0
        %v3396 = vadd.f32 0.0, %v3395
        %v3397 = vpop.f32.mrf.mxu0
        %3398 = vmatprep.mubr.bf16.mxu0 0
        %3399 = vmatmul.mubr.bf16.gmra.mxu0 %v3193
        %v3400 = vpop.f32.mrf.mxu0
        %v3401 = vadd.f32 0.0, %v3400
        %v3402 = vpop.f32.mrf.mxu0
        %v3403 = vpop.f32.mrf.mxu0
        %v3404 = vadd.f32 0.0, %v3403
        %v3405 = vpop.f32.mrf.mxu0
        %3406 = vmatprep.mubr.bf16.mxu0 0
        %3407 = vmatmul.mubr.bf16.gmra.mxu0 %v3196
        %v3408 = vpop.f32.mrf.mxu0
        %v3409 = vadd.f32 0.0, %v3408
        %v3410 = vpop.f32.mrf.mxu0
        %v3411 = vpop.f32.mrf.mxu0
        %v3412 = vadd.f32 0.0, %v3411
        %v3413 = vpop.f32.mrf.mxu0
        %3414 = vmatprep.mubr.bf16.mxu0 0
        %3415 = vmatmul.mubr.bf16.gmra.mxu0 %v3199
        %v3416 = vpop.f32.mrf.mxu0
        %v3417 = vadd.f32 0.0, %v3416
        %v3418 = vpop.f32.mrf.mxu0
        %v3419 = vpop.f32.mrf.mxu0
        %v3420 = vadd.f32 0.0, %v3419
        %v3421 = vpop.f32.mrf.mxu0
        %3422 = vmatprep.mubr.bf16.mxu0 0
        %3423 = vmatmul.mubr.bf16.gmra.mxu0 %v3202
        %v3424 = vpop.f32.mrf.mxu0
        %v3425 = vadd.f32 0.0, %v3424
        %v3426 = vpop.f32.mrf.mxu0
        %v3427 = vpop.f32.mrf.mxu0
        %v3428 = vadd.f32 0.0, %v3427
        %v3429 = vpop.f32.mrf.mxu0
        %3430 = vmatprep.mubr.bf16.mxu0 0
        %3431 = vmatmul.mubr.bf16.gmra.mxu0 %v3205
        %v3432 = vpop.f32.mrf.mxu0
        %v3433 = vadd.f32 0.0, %v3432
        %v3434 = vpop.f32.mrf.mxu0
        %v3435 = vpop.f32.mrf.mxu0
        %v3436 = vadd.f32 0.0, %v3435
        %v3437 = vpop.f32.mrf.mxu0
        %3438 = vmatprep.mubr.bf16.mxu0 0
        %3439 = vmatmul.mubr.bf16.gmra.mxu0 %v3208
        %v3440 = vpop.f32.mrf.mxu0
        %v3441 = vadd.f32 0.0, %v3440
        %v3442 = vpop.f32.mrf.mxu0
        %v3443 = vpop.f32.mrf.mxu0
        %v3444 = vadd.f32 0.0, %v3443
        %v3445 = vpop.f32.mrf.mxu0
        %3446 = vmatprep.mubr.bf16.mxu0 0
        %3447 = vmatmul.mubr.bf16.gmra.mxu0 %v3211
        %v3448 = vpop.f32.mrf.mxu0
        %v3449 = vadd.f32 0.0, %v3448
        %v3450 = vpop.f32.mrf.mxu0
        %v3451 = vpop.f32.mrf.mxu0
        %v3452 = vadd.f32 0.0, %v3451
        %v3453 = vpop.f32.mrf.mxu0
        %3454 = vmatprep.mubr.bf16.mxu0 0
        %3455 = vmatmul.mubr.bf16.gmra.mxu0 %v3214
        %v3456 = vpop.f32.mrf.mxu0
        %v3457 = vadd.f32 0.0, %v3456
        %v3458 = vpop.f32.mrf.mxu0
        %v3459 = vpop.f32.mrf.mxu0
        %v3460 = vadd.f32 0.0, %v3459
        %v3461 = vpop.f32.mrf.mxu0
        %3462 = vmatprep.mubr.bf16.mxu0 0
        %3463 = vmatmul.mubr.bf16.gmra.mxu0 %v3217
        %v3464 = vpop.f32.mrf.mxu0
        %v3465 = vadd.f32 0.0, %v3464
        %v3466 = vpop.f32.mrf.mxu0
        %v3467 = vpop.f32.mrf.mxu0
        %v3468 = vadd.f32 0.0, %v3467
        %v3469 = vpop.f32.mrf.mxu0
        %3470 = vmatprep.mubr.bf16.mxu0 0
        %3471 = vmatmul.mubr.bf16.gmra.mxu0 %v3220
        %v3472 = vpop.f32.mrf.mxu0
        %v3473 = vadd.f32 0.0, %v3472
        %v3474 = vpop.f32.mrf.mxu0
        %v3475 = vpop.f32.mrf.mxu0
        %v3476 = vadd.f32 0.0, %v3475
        %v3477 = vpop.f32.mrf.mxu0
        %3478 = vmatprep.mubr.bf16.mxu0 0
        %3479 = vmatmul.mubr.bf16.gmra.mxu0 %v3223
        %v3480 = vpop.f32.mrf.mxu0
        %v3481 = vadd.f32 0.0, %v3480
        %v3482 = vpop.f32.mrf.mxu0
        %v3483 = vpop.f32.mrf.mxu0
        %v3484 = vadd.f32 0.0, %v3483
        %v3485 = vpop.f32.mrf.mxu0
        %3486 = vmatprep.mubr.bf16.mxu0 0
        %3487 = vmatmul.mubr.bf16.gmra.mxu0 %v3226
        %v3488 = vpop.f32.mrf.mxu0
        %v3489 = vadd.f32 0.0, %v3488
        %v3490 = vpop.f32.mrf.mxu0
        %v3491 = vpop.f32.mrf.mxu0
        %v3492 = vadd.f32 0.0, %v3491
        %v3493 = vpop.f32.mrf.mxu0
        %3494 = vmatprep.mubr.bf16.mxu0 0
        %3495 = vmatmul.mubr.bf16.gmra.mxu0 %v3229
        %v3496 = vpop.f32.mrf.mxu0
        %v3497 = vadd.f32 0.0, %v3496
        %v3498 = vpop.f32.mrf.mxu0
        %v3499 = vpop.f32.mrf.mxu0
        %v3500 = vadd.f32 0.0, %v3499
        %v3501 = vpop.f32.mrf.mxu0
        %3502 = vmatprep.mubr.bf16.mxu0 0
        %3503 = vmatmul.mubr.bf16.gmra.mxu0 %v3232
        %v3504 = vpop.f32.mrf.mxu0
        %v3505 = vadd.f32 0.0, %v3504
        %v3506 = vpop.f32.mrf.mxu0
        %v3507 = vpop.f32.mrf.mxu0
        %v3508 = vadd.f32 0.0, %v3507
        %v3509 = vpop.f32.mrf.mxu0
        %3510 = vmatprep.mubr.bf16.mxu0 0
        %3511 = vmatmul.mubr.bf16.gmra.mxu0 %v3235
        %v3512 = vpop.f32.mrf.mxu0
        %v3513 = vadd.f32 0.0, %v3512
        %v3514 = vpop.f32.mrf.mxu0
        %v3515 = vpop.f32.mrf.mxu0
        %v3516 = vadd.f32 0.0, %v3515
        %v3517 = vpop.f32.mrf.mxu0
        %3518 = vmatprep.mubr.bf16.mxu0 0
        %3519 = vmatmul.mubr.bf16.gmra.mxu0 %v3238
        %v3520 = vpop.f32.mrf.mxu0
        %v3521 = vadd.f32 0.0, %v3520
        %v3522 = vpop.f32.mrf.mxu0
        %v3523 = vpop.f32.mrf.mxu0
        %v3524 = vadd.f32 0.0, %v3523
        %v3525 = vpop.f32.mrf.mxu0
        %3526 = vmatprep.mubr.bf16.mxu0 0
        %3527 = vmatmul.mubr.bf16.gmra.mxu0 %v3241
        %v3528 = vpop.f32.mrf.mxu0
        %v3529 = vadd.f32 0.0, %v3528
        %v3530 = vpop.f32.mrf.mxu0
        %v3531 = vpop.f32.mrf.mxu0
        %v3532 = vadd.f32 0.0, %v3531
        %v3533 = vpop.f32.mrf.mxu0
        %3534 = vdwg.mxu0
        %v3535 = vadd.f32 %v2985, %v3281
        %v3536 = vadd.f32 %v2986, %v3284
        %v3537 = vadd.f32 %v2987, %v3289
        %v3538 = vadd.f32 %v2988, %v3292
        %v3539 = vadd.f32 %v2989, %v3297
        %v3540 = vadd.f32 %v2990, %v3300
        %v3541 = vadd.f32 %v2991, %v3305
        %v3542 = vadd.f32 %v2992, %v3308
        %v3543 = vadd.f32 %v2993, %v3313
        %v3544 = vadd.f32 %v2994, %v3316
        %v3545 = vadd.f32 %v2995, %v3321
        %v3546 = vadd.f32 %v2996, %v3324
        %v3547 = vadd.f32 %v2997, %v3329
        %v3548 = vadd.f32 %v2998, %v3332
        %v3549 = vadd.f32 %v2999, %v3337
        %v3550 = vadd.f32 %v3000, %v3340
        %v3551 = vadd.f32 %v3001, %v3345
        %v3552 = vadd.f32 %v3002, %v3348
        %v3553 = vadd.f32 %v3003, %v3353
        %v3554 = vadd.f32 %v3004, %v3356
        %v3555 = vadd.f32 %v3005, %v3361
        %v3556 = vadd.f32 %v3006, %v3364
        %v3557 = vadd.f32 %v3007, %v3369
        %v3558 = vadd.f32 %v3008, %v3372
        %v3559 = vadd.f32 %v3009, %v3377
        %v3560 = vadd.f32 %v3010, %v3380
        %v3561 = vadd.f32 %v3011, %v3385
        %v3562 = vadd.f32 %v3012, %v3388
        %v3563 = vadd.f32 %v3013, %v3393
        %v3564 = vadd.f32 %v3014, %v3396
        %v3565 = vadd.f32 %v3015, %v3401
        %v3566 = vadd.f32 %v3016, %v3404
        %v3567 = vadd.f32 %v3017, %v3409
        %v3568 = vadd.f32 %v3018, %v3412
        %v3569 = vadd.f32 %v3019, %v3417
        %v3570 = vadd.f32 %v3020, %v3420
        %v3571 = vadd.f32 %v3021, %v3425
        %v3572 = vadd.f32 %v3022, %v3428
        %v3573 = vadd.f32 %v3023, %v3433
        %v3574 = vadd.f32 %v3024, %v3436
        %v3575 = vadd.f32 %v3025, %v3441
        %v3576 = vadd.f32 %v3026, %v3444
        %v3577 = vadd.f32 %v3027, %v3449
        %v3578 = vadd.f32 %v3028, %v3452
        %v3579 = vadd.f32 %v3029, %v3457
        %v3580 = vadd.f32 %v3030, %v3460
        %v3581 = vadd.f32 %v3031, %v3465
        %v3582 = vadd.f32 %v3032, %v3468
        %v3583 = vadd.f32 %v3033, %v3473
        %v3584 = vadd.f32 %v3034, %v3476
        %v3585 = vadd.f32 %v3035, %v3481
        %v3586 = vadd.f32 %v3036, %v3484
        %v3587 = vadd.f32 %v3037, %v3489
        %v3588 = vadd.f32 %v3038, %v3492
        %v3589 = vadd.f32 %v3039, %v3497
        %v3590 = vadd.f32 %v3040, %v3500
        %v3591 = vadd.f32 %v3041, %v3505
        %v3592 = vadd.f32 %v3042, %v3508
        %v3593 = vadd.f32 %v3043, %v3513
        %v3594 = vadd.f32 %v3044, %v3516
        %v3595 = vadd.f32 %v3045, %v3521
        %v3596 = vadd.f32 %v3046, %v3524
        %v3597 = vadd.f32 %v3047, %v3529
        %v3598 = vadd.f32 %v3048, %v3532
        %s3599 = scalar_lea.vmem %s226, 32
        %v3600 = vld [vmem:[%s3599] sm:$0xff]
        %v3601 = vld [vmem:[%s3599 + $0x10] sm:$0xff]
        %v3602 = vld [vmem:[%s3599 + $0x20] sm:$0xff]
        %v3603 = vld [vmem:[%s3599 + $0x30] sm:$0xff]
        %v3604 = vld [vmem:[%s3599 + $0x40] sm:$0xff]
        %v3605 = vld [vmem:[%s3599 + $0x50] sm:$0xff]
        %v3606 = vld [vmem:[%s3599 + $0x60] sm:$0xff]
        %v3607 = vld [vmem:[%s3599 + $0x70] sm:$0xff]
        %v3608 = vld [vmem:[%s3599 + $0xa0] sm:$0xff]
        %v3609 = vld [vmem:[%s3599 + $0xb0] sm:$0xff]
        %v3610 = vld [vmem:[%s3599 + $0xc0] sm:$0xff]
        %v3611 = vld [vmem:[%s3599 + $0xd0] sm:$0xff]
        %v3612 = vld [vmem:[%s3599 + $0xe0] sm:$0xff]
        %v3613 = vld [vmem:[%s3599 + $0xf0] sm:$0xff]
        %v3614 = vld [vmem:[%s3599 + $0x100] sm:$0xff]
        %v3615 = vld [vmem:[%s3599 + $0x110] sm:$0xff]
        %v3616 = vld [vmem:[%s3599 + $0x140] sm:$0xff]
        %v3617 = vld [vmem:[%s3599 + $0x150] sm:$0xff]
        %v3618 = vld [vmem:[%s3599 + $0x160] sm:$0xff]
        %v3619 = vld [vmem:[%s3599 + $0x170] sm:$0xff]
        %v3620 = vld [vmem:[%s3599 + $0x180] sm:$0xff]
        %v3621 = vld [vmem:[%s3599 + $0x190] sm:$0xff]
        %v3622 = vld [vmem:[%s3599 + $0x1a0] sm:$0xff]
        %v3623 = vld [vmem:[%s3599 + $0x1b0] sm:$0xff]
        %v3624 = vld [vmem:[%s3599 + $0x1e0] sm:$0xff]
        %v3625 = vld [vmem:[%s3599 + $0x1f0] sm:$0xff]
        %v3626 = vld [vmem:[%s3599 + $0x200] sm:$0xff]
        %v3627 = vld [vmem:[%s3599 + $0x210] sm:$0xff]
        %v3628 = vld [vmem:[%s3599 + $0x220] sm:$0xff]
        %v3629 = vld [vmem:[%s3599 + $0x230] sm:$0xff]
        %v3630 = vld [vmem:[%s3599 + $0x240] sm:$0xff]
        %v3631 = vld [vmem:[%s3599 + $0x250] sm:$0xff]
        %v3632 = vld [vmem:[%s3599 + $0x280] sm:$0xff]
        %v3633 = vld [vmem:[%s3599 + $0x290] sm:$0xff]
        %v3634 = vld [vmem:[%s3599 + $0x2a0] sm:$0xff]
        %v3635 = vld [vmem:[%s3599 + $0x2b0] sm:$0xff]
        %v3636 = vld [vmem:[%s3599 + $0x2c0] sm:$0xff]
        %v3637 = vld [vmem:[%s3599 + $0x2d0] sm:$0xff]
        %v3638 = vld [vmem:[%s3599 + $0x2e0] sm:$0xff]
        %v3639 = vld [vmem:[%s3599 + $0x2f0] sm:$0xff]
        %v3640 = vld [vmem:[%s3599 + $0x320] sm:$0xff]
        %v3641 = vld [vmem:[%s3599 + $0x330] sm:$0xff]
        %v3642 = vld [vmem:[%s3599 + $0x340] sm:$0xff]
        %v3643 = vld [vmem:[%s3599 + $0x350] sm:$0xff]
        %v3644 = vld [vmem:[%s3599 + $0x360] sm:$0xff]
        %v3645 = vld [vmem:[%s3599 + $0x370] sm:$0xff]
        %v3646 = vld [vmem:[%s3599 + $0x380] sm:$0xff]
        %v3647 = vld [vmem:[%s3599 + $0x390] sm:$0xff]
        %v3648 = vld [vmem:[%s3599 + $0x3c0] sm:$0xff]
        %v3649 = vld [vmem:[%s3599 + $0x3d0] sm:$0xff]
        %v3650 = vld [vmem:[%s3599 + $0x3e0] sm:$0xff]
        %v3651 = vld [vmem:[%s3599 + $0x3f0] sm:$0xff]
        %v3652 = vld [vmem:[%s3599 + $0x400] sm:$0xff]
        %v3653 = vld [vmem:[%s3599 + $0x410] sm:$0xff]
        %v3654 = vld [vmem:[%s3599 + $0x420] sm:$0xff]
        %v3655 = vld [vmem:[%s3599 + $0x430] sm:$0xff]
        %v3656 = vld [vmem:[%s3599 + $0x460] sm:$0xff]
        %v3657 = vld [vmem:[%s3599 + $0x470] sm:$0xff]
        %v3658 = vld [vmem:[%s3599 + $0x480] sm:$0xff]
        %v3659 = vld [vmem:[%s3599 + $0x490] sm:$0xff]
        %v3660 = vld [vmem:[%s3599 + $0x4a0] sm:$0xff]
        %v3661 = vld [vmem:[%s3599 + $0x4b0] sm:$0xff]
        %v3662 = vld [vmem:[%s3599 + $0x4c0] sm:$0xff]
        %v3663 = vld [vmem:[%s3599 + $0x4d0] sm:$0xff]
        %v3664 = vpack.c.bf16 %v3601, %v3600
        %v3665 = vpack.c.bf16 %v3603, %v3602
        %v3666 = vpack.c.bf16 %v3605, %v3604
        %v3667 = vpack.c.bf16 %v3607, %v3606
        %v3668 = vpack.c.bf16 %v3609, %v3608
        %v3669 = vpack.c.bf16 %v3611, %v3610
        %v3670 = vpack.c.bf16 %v3613, %v3612
        %v3671 = vpack.c.bf16 %v3615, %v3614
        %v3672 = vpack.c.bf16 %v3617, %v3616
        %v3673 = vpack.c.bf16 %v3619, %v3618
        %v3674 = vpack.c.bf16 %v3621, %v3620
        %v3675 = vpack.c.bf16 %v3623, %v3622
        %v3676 = vpack.c.bf16 %v3625, %v3624
        %v3677 = vpack.c.bf16 %v3627, %v3626
        %v3678 = vpack.c.bf16 %v3629, %v3628
        %v3679 = vpack.c.bf16 %v3631, %v3630
        %v3680 = vpack.c.bf16 %v3633, %v3632
        %v3681 = vpack.c.bf16 %v3635, %v3634
        %v3682 = vpack.c.bf16 %v3637, %v3636
        %v3683 = vpack.c.bf16 %v3639, %v3638
        %v3684 = vpack.c.bf16 %v3641, %v3640
        %v3685 = vpack.c.bf16 %v3643, %v3642
        %v3686 = vpack.c.bf16 %v3645, %v3644
        %v3687 = vpack.c.bf16 %v3647, %v3646
        %v3688 = vpack.c.bf16 %v3649, %v3648
        %v3689 = vpack.c.bf16 %v3651, %v3650
        %v3690 = vpack.c.bf16 %v3653, %v3652
        %v3691 = vpack.c.bf16 %v3655, %v3654
        %v3692 = vpack.c.bf16 %v3657, %v3656
        %v3693 = vpack.c.bf16 %v3659, %v3658
        %v3694 = vpack.c.bf16 %v3661, %v3660
        %v3695 = vpack.c.bf16 %v3663, %v3662
        %s3696 = scalar_lea.vmem %s1, 24
        %v3697 = vld [vmem:[%s3696] sm:$0xf]
        %v3699 = vsel %vm230, %v3664, 0
        %v3702 = vsel %vm230, %v3665, 0
        %v3705 = vsel %vm230, %v3666, 0
        %v3708 = vsel %vm230, %v3667, 0
        %v3711 = vsel %vm230, %v3668, 0
        %v3714 = vsel %vm230, %v3669, 0
        %v3717 = vsel %vm230, %v3670, 0
        %v3720 = vsel %vm230, %v3671, 0
        %v3723 = vsel %vm230, %v3672, 0
        %v3726 = vsel %vm230, %v3673, 0
        %v3729 = vsel %vm230, %v3674, 0
        %v3732 = vsel %vm230, %v3675, 0
        %v3735 = vsel %vm230, %v3676, 0
        %v3738 = vsel %vm230, %v3677, 0
        %v3741 = vsel %vm230, %v3678, 0
        %v3744 = vsel %vm230, %v3679, 0
        %v3747 = vsel %vm230, %v3680, 0
        %v3750 = vsel %vm230, %v3681, 0
        %v3753 = vsel %vm230, %v3682, 0
        %v3756 = vsel %vm230, %v3683, 0
        %v3759 = vsel %vm230, %v3684, 0
        %v3762 = vsel %vm230, %v3685, 0
        %v3765 = vsel %vm230, %v3686, 0
        %v3768 = vsel %vm230, %v3687, 0
        %v3771 = vsel %vm230, %v3688, 0
        %v3774 = vsel %vm230, %v3689, 0
        %v3777 = vsel %vm230, %v3690, 0
        %v3780 = vsel %vm230, %v3691, 0
        %v3783 = vsel %vm230, %v3692, 0
        %v3786 = vsel %vm230, %v3693, 0
        %v3789 = vsel %vm230, %v3694, 0
        %v3792 = vsel %vm230, %v3695, 0
        %v3795 = vsel %vm717, %v3697, 0
        %3797 = vmatprep.subr.bf16.mxu0 0
        %3798 = vmatpush1.bf16.msra.mxu0 0
        %3799 = vmatprep.subr.bf16.mxu0 0
        %3800 = vmatpush1.bf16.msra.mxu0 0
        %3801 = vmatprep.subr.bf16.mxu0 0
        %3802 = vmatpush1.bf16.msra.mxu0 0
        %3803 = vmatprep.subr.bf16.mxu0 0
        %3804 = vmatpush1.bf16.msra.mxu0 0
        %3805 = vmatprep.subr.bf16.mxu0 0
        %3806 = vmatpush1.bf16.msra.mxu0 0
        %3807 = vmatprep.subr.bf16.mxu0 0
        %3808 = vmatpush1.bf16.msra.mxu0 0
        %3809 = vmatprep.subr.bf16.mxu0 0
        %3810 = vmatpush1.bf16.msra.mxu0 0
        %3811 = vmatprep.subr.bf16.mxu0 0
        %3812 = vmatpush1.bf16.msra.mxu0 %v3795
        %3813 = vmatprep.subr.bf16.mxu0 0
        %3814 = vmatpush2.bf16.msra.mxu0 0
        %3815 = vmatprep.subr.bf16.mxu0 0
        %3816 = vmatpush2.bf16.msra.mxu0 0
        %3817 = vmatprep.subr.bf16.mxu0 0
        %3818 = vmatpush2.bf16.msra.mxu0 0
        %3819 = vmatprep.subr.bf16.mxu0 0
        %3820 = vmatpush2.bf16.msra.mxu0 0
        %3821 = vmatprep.subr.bf16.mxu0 0
        %3822 = vmatpush2.bf16.msra.mxu0 0
        %3823 = vmatprep.subr.bf16.mxu0 0
        %3824 = vmatpush2.bf16.msra.mxu0 0
        %3825 = vmatprep.subr.bf16.mxu0 0
        %3826 = vmatpush2.bf16.msra.mxu0 0
        %3827 = vmatprep.subr.bf16.mxu0 0
        %3828 = vmatpush2.bf16.msra.mxu0 0
        %3829 = vmatprep.mubr.bf16.mxu0 0
        %3830 = vmatmul.mubr.bf16.gmra.mxu0 %v3699
        %v3831 = vpop.f32.mrf.mxu0
        %v3832 = vadd.f32 0.0, %v3831
        %v3833 = vpop.f32.mrf.mxu0
        %v3834 = vpop.f32.mrf.mxu0
        %v3835 = vadd.f32 0.0, %v3834
        %v3836 = vpop.f32.mrf.mxu0
        %3837 = vmatprep.mubr.bf16.mxu0 0
        %3838 = vmatmul.mubr.bf16.gmra.mxu0 %v3702
        %v3839 = vpop.f32.mrf.mxu0
        %v3840 = vadd.f32 0.0, %v3839
        %v3841 = vpop.f32.mrf.mxu0
        %v3842 = vpop.f32.mrf.mxu0
        %v3843 = vadd.f32 0.0, %v3842
        %v3844 = vpop.f32.mrf.mxu0
        %3845 = vmatprep.mubr.bf16.mxu0 0
        %3846 = vmatmul.mubr.bf16.gmra.mxu0 %v3705
        %v3847 = vpop.f32.mrf.mxu0
        %v3848 = vadd.f32 0.0, %v3847
        %v3849 = vpop.f32.mrf.mxu0
        %v3850 = vpop.f32.mrf.mxu0
        %v3851 = vadd.f32 0.0, %v3850
        %v3852 = vpop.f32.mrf.mxu0
        %3853 = vmatprep.mubr.bf16.mxu0 0
        %3854 = vmatmul.mubr.bf16.gmra.mxu0 %v3708
        %v3855 = vpop.f32.mrf.mxu0
        %v3856 = vadd.f32 0.0, %v3855
        %v3857 = vpop.f32.mrf.mxu0
        %v3858 = vpop.f32.mrf.mxu0
        %v3859 = vadd.f32 0.0, %v3858
        %v3860 = vpop.f32.mrf.mxu0
        %3861 = vmatprep.mubr.bf16.mxu0 0
        %3862 = vmatmul.mubr.bf16.gmra.mxu0 %v3711
        %v3863 = vpop.f32.mrf.mxu0
        %v3864 = vadd.f32 0.0, %v3863
        %v3865 = vpop.f32.mrf.mxu0
        %v3866 = vpop.f32.mrf.mxu0
        %v3867 = vadd.f32 0.0, %v3866
        %v3868 = vpop.f32.mrf.mxu0
        %3869 = vmatprep.mubr.bf16.mxu0 0
        %3870 = vmatmul.mubr.bf16.gmra.mxu0 %v3714
        %v3871 = vpop.f32.mrf.mxu0
        %v3872 = vadd.f32 0.0, %v3871
        %v3873 = vpop.f32.mrf.mxu0
        %v3874 = vpop.f32.mrf.mxu0
        %v3875 = vadd.f32 0.0, %v3874
        %v3876 = vpop.f32.mrf.mxu0
        %3877 = vmatprep.mubr.bf16.mxu0 0
        %3878 = vmatmul.mubr.bf16.gmra.mxu0 %v3717
        %v3879 = vpop.f32.mrf.mxu0
        %v3880 = vadd.f32 0.0, %v3879
        %v3881 = vpop.f32.mrf.mxu0
        %v3882 = vpop.f32.mrf.mxu0
        %v3883 = vadd.f32 0.0, %v3882
        %v3884 = vpop.f32.mrf.mxu0
        %3885 = vmatprep.mubr.bf16.mxu0 0
        %3886 = vmatmul.mubr.bf16.gmra.mxu0 %v3720
        %v3887 = vpop.f32.mrf.mxu0
        %v3888 = vadd.f32 0.0, %v3887
        %v3889 = vpop.f32.mrf.mxu0
        %v3890 = vpop.f32.mrf.mxu0
        %v3891 = vadd.f32 0.0, %v3890
        %v3892 = vpop.f32.mrf.mxu0
        %3893 = vmatprep.mubr.bf16.mxu0 0
        %3894 = vmatmul.mubr.bf16.gmra.mxu0 %v3723
        %v3895 = vpop.f32.mrf.mxu0
        %v3896 = vadd.f32 0.0, %v3895
        %v3897 = vpop.f32.mrf.mxu0
        %v3898 = vpop.f32.mrf.mxu0
        %v3899 = vadd.f32 0.0, %v3898
        %v3900 = vpop.f32.mrf.mxu0
        %3901 = vmatprep.mubr.bf16.mxu0 0
        %3902 = vmatmul.mubr.bf16.gmra.mxu0 %v3726
        %v3903 = vpop.f32.mrf.mxu0
        %v3904 = vadd.f32 0.0, %v3903
        %v3905 = vpop.f32.mrf.mxu0
        %v3906 = vpop.f32.mrf.mxu0
        %v3907 = vadd.f32 0.0, %v3906
        %v3908 = vpop.f32.mrf.mxu0
        %3909 = vmatprep.mubr.bf16.mxu0 0
        %3910 = vmatmul.mubr.bf16.gmra.mxu0 %v3729
        %v3911 = vpop.f32.mrf.mxu0
        %v3912 = vadd.f32 0.0, %v3911
        %v3913 = vpop.f32.mrf.mxu0
        %v3914 = vpop.f32.mrf.mxu0
        %v3915 = vadd.f32 0.0, %v3914
        %v3916 = vpop.f32.mrf.mxu0
        %3917 = vmatprep.mubr.bf16.mxu0 0
        %3918 = vmatmul.mubr.bf16.gmra.mxu0 %v3732
        %v3919 = vpop.f32.mrf.mxu0
        %v3920 = vadd.f32 0.0, %v3919
        %v3921 = vpop.f32.mrf.mxu0
        %v3922 = vpop.f32.mrf.mxu0
        %v3923 = vadd.f32 0.0, %v3922
        %v3924 = vpop.f32.mrf.mxu0
        %3925 = vmatprep.mubr.bf16.mxu0 0
        %3926 = vmatmul.mubr.bf16.gmra.mxu0 %v3735
        %v3927 = vpop.f32.mrf.mxu0
        %v3928 = vadd.f32 0.0, %v3927
        %v3929 = vpop.f32.mrf.mxu0
        %v3930 = vpop.f32.mrf.mxu0
        %v3931 = vadd.f32 0.0, %v3930
        %v3932 = vpop.f32.mrf.mxu0
        %3933 = vmatprep.mubr.bf16.mxu0 0
        %3934 = vmatmul.mubr.bf16.gmra.mxu0 %v3738
        %v3935 = vpop.f32.mrf.mxu0
        %v3936 = vadd.f32 0.0, %v3935
        %v3937 = vpop.f32.mrf.mxu0
        %v3938 = vpop.f32.mrf.mxu0
        %v3939 = vadd.f32 0.0, %v3938
        %v3940 = vpop.f32.mrf.mxu0
        %3941 = vmatprep.mubr.bf16.mxu0 0
        %3942 = vmatmul.mubr.bf16.gmra.mxu0 %v3741
        %v3943 = vpop.f32.mrf.mxu0
        %v3944 = vadd.f32 0.0, %v3943
        %v3945 = vpop.f32.mrf.mxu0
        %v3946 = vpop.f32.mrf.mxu0
        %v3947 = vadd.f32 0.0, %v3946
        %v3948 = vpop.f32.mrf.mxu0
        %3949 = vmatprep.mubr.bf16.mxu0 0
        %3950 = vmatmul.mubr.bf16.gmra.mxu0 %v3744
        %v3951 = vpop.f32.mrf.mxu0
        %v3952 = vadd.f32 0.0, %v3951
        %v3953 = vpop.f32.mrf.mxu0
        %v3954 = vpop.f32.mrf.mxu0
        %v3955 = vadd.f32 0.0, %v3954
        %v3956 = vpop.f32.mrf.mxu0
        %3957 = vmatprep.mubr.bf16.mxu0 0
        %3958 = vmatmul.mubr.bf16.gmra.mxu0 %v3747
        %v3959 = vpop.f32.mrf.mxu0
        %v3960 = vadd.f32 0.0, %v3959
        %v3961 = vpop.f32.mrf.mxu0
        %v3962 = vpop.f32.mrf.mxu0
        %v3963 = vadd.f32 0.0, %v3962
        %v3964 = vpop.f32.mrf.mxu0
        %3965 = vmatprep.mubr.bf16.mxu0 0
        %3966 = vmatmul.mubr.bf16.gmra.mxu0 %v3750
        %v3967 = vpop.f32.mrf.mxu0
        %v3968 = vadd.f32 0.0, %v3967
        %v3969 = vpop.f32.mrf.mxu0
        %v3970 = vpop.f32.mrf.mxu0
        %v3971 = vadd.f32 0.0, %v3970
        %v3972 = vpop.f32.mrf.mxu0
        %3973 = vmatprep.mubr.bf16.mxu0 0
        %3974 = vmatmul.mubr.bf16.gmra.mxu0 %v3753
        %v3975 = vpop.f32.mrf.mxu0
        %v3976 = vadd.f32 0.0, %v3975
        %v3977 = vpop.f32.mrf.mxu0
        %v3978 = vpop.f32.mrf.mxu0
        %v3979 = vadd.f32 0.0, %v3978
        %v3980 = vpop.f32.mrf.mxu0
        %3981 = vmatprep.mubr.bf16.mxu0 0
        %3982 = vmatmul.mubr.bf16.gmra.mxu0 %v3756
        %v3983 = vpop.f32.mrf.mxu0
        %v3984 = vadd.f32 0.0, %v3983
        %v3985 = vpop.f32.mrf.mxu0
        %v3986 = vpop.f32.mrf.mxu0
        %v3987 = vadd.f32 0.0, %v3986
        %v3988 = vpop.f32.mrf.mxu0
        %3989 = vmatprep.mubr.bf16.mxu0 0
        %3990 = vmatmul.mubr.bf16.gmra.mxu0 %v3759
        %v3991 = vpop.f32.mrf.mxu0
        %v3992 = vadd.f32 0.0, %v3991
        %v3993 = vpop.f32.mrf.mxu0
        %v3994 = vpop.f32.mrf.mxu0
        %v3995 = vadd.f32 0.0, %v3994
        %v3996 = vpop.f32.mrf.mxu0
        %3997 = vmatprep.mubr.bf16.mxu0 0
        %3998 = vmatmul.mubr.bf16.gmra.mxu0 %v3762
        %v3999 = vpop.f32.mrf.mxu0
        %v4000 = vadd.f32 0.0, %v3999
        %v4001 = vpop.f32.mrf.mxu0
        %v4002 = vpop.f32.mrf.mxu0
        %v4003 = vadd.f32 0.0, %v4002
        %v4004 = vpop.f32.mrf.mxu0
        %4005 = vmatprep.mubr.bf16.mxu0 0
        %4006 = vmatmul.mubr.bf16.gmra.mxu0 %v3765
        %v4007 = vpop.f32.mrf.mxu0
        %v4008 = vadd.f32 0.0, %v4007
        %v4009 = vpop.f32.mrf.mxu0
        %v4010 = vpop.f32.mrf.mxu0
        %v4011 = vadd.f32 0.0, %v4010
        %v4012 = vpop.f32.mrf.mxu0
        %4013 = vmatprep.mubr.bf16.mxu0 0
        %4014 = vmatmul.mubr.bf16.gmra.mxu0 %v3768
        %v4015 = vpop.f32.mrf.mxu0
        %v4016 = vadd.f32 0.0, %v4015
        %v4017 = vpop.f32.mrf.mxu0
        %v4018 = vpop.f32.mrf.mxu0
        %v4019 = vadd.f32 0.0, %v4018
        %v4020 = vpop.f32.mrf.mxu0
        %4021 = vmatprep.mubr.bf16.mxu0 0
        %4022 = vmatmul.mubr.bf16.gmra.mxu0 %v3771
        %v4023 = vpop.f32.mrf.mxu0
        %v4024 = vadd.f32 0.0, %v4023
        %v4025 = vpop.f32.mrf.mxu0
        %v4026 = vpop.f32.mrf.mxu0
        %v4027 = vadd.f32 0.0, %v4026
        %v4028 = vpop.f32.mrf.mxu0
        %4029 = vmatprep.mubr.bf16.mxu0 0
        %4030 = vmatmul.mubr.bf16.gmra.mxu0 %v3774
        %v4031 = vpop.f32.mrf.mxu0
        %v4032 = vadd.f32 0.0, %v4031
        %v4033 = vpop.f32.mrf.mxu0
        %v4034 = vpop.f32.mrf.mxu0
        %v4035 = vadd.f32 0.0, %v4034
        %v4036 = vpop.f32.mrf.mxu0
        %4037 = vmatprep.mubr.bf16.mxu0 0
        %4038 = vmatmul.mubr.bf16.gmra.mxu0 %v3777
        %v4039 = vpop.f32.mrf.mxu0
        %v4040 = vadd.f32 0.0, %v4039
        %v4041 = vpop.f32.mrf.mxu0
        %v4042 = vpop.f32.mrf.mxu0
        %v4043 = vadd.f32 0.0, %v4042
        %v4044 = vpop.f32.mrf.mxu0
        %4045 = vmatprep.mubr.bf16.mxu0 0
        %4046 = vmatmul.mubr.bf16.gmra.mxu0 %v3780
        %v4047 = vpop.f32.mrf.mxu0
        %v4048 = vadd.f32 0.0, %v4047
        %v4049 = vpop.f32.mrf.mxu0
        %v4050 = vpop.f32.mrf.mxu0
        %v4051 = vadd.f32 0.0, %v4050
        %v4052 = vpop.f32.mrf.mxu0
        %4053 = vmatprep.mubr.bf16.mxu0 0
        %4054 = vmatmul.mubr.bf16.gmra.mxu0 %v3783
        %v4055 = vpop.f32.mrf.mxu0
        %v4056 = vadd.f32 0.0, %v4055
        %v4057 = vpop.f32.mrf.mxu0
        %v4058 = vpop.f32.mrf.mxu0
        %v4059 = vadd.f32 0.0, %v4058
        %v4060 = vpop.f32.mrf.mxu0
        %4061 = vmatprep.mubr.bf16.mxu0 0
        %4062 = vmatmul.mubr.bf16.gmra.mxu0 %v3786
        %v4063 = vpop.f32.mrf.mxu0
        %v4064 = vadd.f32 0.0, %v4063
        %v4065 = vpop.f32.mrf.mxu0
        %v4066 = vpop.f32.mrf.mxu0
        %v4067 = vadd.f32 0.0, %v4066
        %v4068 = vpop.f32.mrf.mxu0
        %4069 = vmatprep.mubr.bf16.mxu0 0
        %4070 = vmatmul.mubr.bf16.gmra.mxu0 %v3789
        %v4071 = vpop.f32.mrf.mxu0
        %v4072 = vadd.f32 0.0, %v4071
        %v4073 = vpop.f32.mrf.mxu0
        %v4074 = vpop.f32.mrf.mxu0
        %v4075 = vadd.f32 0.0, %v4074
        %v4076 = vpop.f32.mrf.mxu0
        %4077 = vmatprep.mubr.bf16.mxu0 0
        %4078 = vmatmul.mubr.bf16.gmra.mxu0 %v3792
        %v4079 = vpop.f32.mrf.mxu0
        %v4080 = vadd.f32 0.0, %v4079
        %v4081 = vpop.f32.mrf.mxu0
        %v4082 = vpop.f32.mrf.mxu0
        %v4083 = vadd.f32 0.0, %v4082
        %v4084 = vpop.f32.mrf.mxu0
        %4085 = vdwg.mxu0
        %v4086 = vadd.f32 %v3535, %v3832
        %v4087 = vadd.f32 %v3536, %v3835
        %v4088 = vadd.f32 %v3537, %v3840
        %v4089 = vadd.f32 %v3538, %v3843
        %v4090 = vadd.f32 %v3539, %v3848
        %v4091 = vadd.f32 %v3540, %v3851
        %v4092 = vadd.f32 %v3541, %v3856
        %v4093 = vadd.f32 %v3542, %v3859
        %v4094 = vadd.f32 %v3543, %v3864
        %v4095 = vadd.f32 %v3544, %v3867
        %v4096 = vadd.f32 %v3545, %v3872
        %v4097 = vadd.f32 %v3546, %v3875
        %v4098 = vadd.f32 %v3547, %v3880
        %v4099 = vadd.f32 %v3548, %v3883
        %v4100 = vadd.f32 %v3549, %v3888
        %v4101 = vadd.f32 %v3550, %v3891
        %v4102 = vadd.f32 %v3551, %v3896
        %v4103 = vadd.f32 %v3552, %v3899
        %v4104 = vadd.f32 %v3553, %v3904
        %v4105 = vadd.f32 %v3554, %v3907
        %v4106 = vadd.f32 %v3555, %v3912
        %v4107 = vadd.f32 %v3556, %v3915
        %v4108 = vadd.f32 %v3557, %v3920
        %v4109 = vadd.f32 %v3558, %v3923
        %v4110 = vadd.f32 %v3559, %v3928
        %v4111 = vadd.f32 %v3560, %v3931
        %v4112 = vadd.f32 %v3561, %v3936
        %v4113 = vadd.f32 %v3562, %v3939
        %v4114 = vadd.f32 %v3563, %v3944
        %v4115 = vadd.f32 %v3564, %v3947
        %v4116 = vadd.f32 %v3565, %v3952
        %v4117 = vadd.f32 %v3566, %v3955
        %v4118 = vadd.f32 %v3567, %v3960
        %v4119 = vadd.f32 %v3568, %v3963
        %v4120 = vadd.f32 %v3569, %v3968
        %v4121 = vadd.f32 %v3570, %v3971
        %v4122 = vadd.f32 %v3571, %v3976
        %v4123 = vadd.f32 %v3572, %v3979
        %v4124 = vadd.f32 %v3573, %v3984
        %v4125 = vadd.f32 %v3574, %v3987
        %v4126 = vadd.f32 %v3575, %v3992
        %v4127 = vadd.f32 %v3576, %v3995
        %v4128 = vadd.f32 %v3577, %v4000
        %v4129 = vadd.f32 %v3578, %v4003
        %v4130 = vadd.f32 %v3579, %v4008
        %v4131 = vadd.f32 %v3580, %v4011
        %v4132 = vadd.f32 %v3581, %v4016
        %v4133 = vadd.f32 %v3582, %v4019
        %v4134 = vadd.f32 %v3583, %v4024
        %v4135 = vadd.f32 %v3584, %v4027
        %v4136 = vadd.f32 %v3585, %v4032
        %v4137 = vadd.f32 %v3586, %v4035
        %v4138 = vadd.f32 %v3587, %v4040
        %v4139 = vadd.f32 %v3588, %v4043
        %v4140 = vadd.f32 %v3589, %v4048
        %v4141 = vadd.f32 %v3590, %v4051
        %v4142 = vadd.f32 %v3591, %v4056
        %v4143 = vadd.f32 %v3592, %v4059
        %v4144 = vadd.f32 %v3593, %v4064
        %v4145 = vadd.f32 %v3594, %v4067
        %v4146 = vadd.f32 %v3595, %v4072
        %v4147 = vadd.f32 %v3596, %v4075
        %v4148 = vadd.f32 %v3597, %v4080
        %v4149 = vadd.f32 %v3598, %v4083
        %v4150 = vld [vmem:[%s3599 + $0x1] sm:$0xff]
        %v4151 = vld [vmem:[%s3599 + $0x11] sm:$0xff]
        %v4152 = vld [vmem:[%s3599 + $0x21] sm:$0xff]
        %v4153 = vld [vmem:[%s3599 + $0x31] sm:$0xff]
        %v4154 = vld [vmem:[%s3599 + $0x41] sm:$0xff]
        %v4155 = vld [vmem:[%s3599 + $0x51] sm:$0xff]
        %v4156 = vld [vmem:[%s3599 + $0x61] sm:$0xff]
        %v4157 = vld [vmem:[%s3599 + $0x71] sm:$0xff]
        %v4158 = vld [vmem:[%s3599 + $0xa1] sm:$0xff]
        %v4159 = vld [vmem:[%s3599 + $0xb1] sm:$0xff]
        %v4160 = vld [vmem:[%s3599 + $0xc1] sm:$0xff]
        %v4161 = vld [vmem:[%s3599 + $0xd1] sm:$0xff]
        %v4162 = vld [vmem:[%s3599 + $0xe1] sm:$0xff]
        %v4163 = vld [vmem:[%s3599 + $0xf1] sm:$0xff]
        %v4164 = vld [vmem:[%s3599 + $0x101] sm:$0xff]
        %v4165 = vld [vmem:[%s3599 + $0x111] sm:$0xff]
        %v4166 = vld [vmem:[%s3599 + $0x141] sm:$0xff]
        %v4167 = vld [vmem:[%s3599 + $0x151] sm:$0xff]
        %v4168 = vld [vmem:[%s3599 + $0x161] sm:$0xff]
        %v4169 = vld [vmem:[%s3599 + $0x171] sm:$0xff]
        %v4170 = vld [vmem:[%s3599 + $0x181] sm:$0xff]
        %v4171 = vld [vmem:[%s3599 + $0x191] sm:$0xff]
        %v4172 = vld [vmem:[%s3599 + $0x1a1] sm:$0xff]
        %v4173 = vld [vmem:[%s3599 + $0x1b1] sm:$0xff]
        %v4174 = vld [vmem:[%s3599 + $0x1e1] sm:$0xff]
        %v4175 = vld [vmem:[%s3599 + $0x1f1] sm:$0xff]
        %v4176 = vld [vmem:[%s3599 + $0x201] sm:$0xff]
        %v4177 = vld [vmem:[%s3599 + $0x211] sm:$0xff]
        %v4178 = vld [vmem:[%s3599 + $0x221] sm:$0xff]
        %v4179 = vld [vmem:[%s3599 + $0x231] sm:$0xff]
        %v4180 = vld [vmem:[%s3599 + $0x241] sm:$0xff]
        %v4181 = vld [vmem:[%s3599 + $0x251] sm:$0xff]
        %v4182 = vld [vmem:[%s3599 + $0x281] sm:$0xff]
        %v4183 = vld [vmem:[%s3599 + $0x291] sm:$0xff]
        %v4184 = vld [vmem:[%s3599 + $0x2a1] sm:$0xff]
        %v4185 = vld [vmem:[%s3599 + $0x2b1] sm:$0xff]
        %v4186 = vld [vmem:[%s3599 + $0x2c1] sm:$0xff]
        %v4187 = vld [vmem:[%s3599 + $0x2d1] sm:$0xff]
        %v4188 = vld [vmem:[%s3599 + $0x2e1] sm:$0xff]
        %v4189 = vld [vmem:[%s3599 + $0x2f1] sm:$0xff]
        %v4190 = vld [vmem:[%s3599 + $0x321] sm:$0xff]
        %v4191 = vld [vmem:[%s3599 + $0x331] sm:$0xff]
        %v4192 = vld [vmem:[%s3599 + $0x341] sm:$0xff]
        %v4193 = vld [vmem:[%s3599 + $0x351] sm:$0xff]
        %v4194 = vld [vmem:[%s3599 + $0x361] sm:$0xff]
        %v4195 = vld [vmem:[%s3599 + $0x371] sm:$0xff]
        %v4196 = vld [vmem:[%s3599 + $0x381] sm:$0xff]
        %v4197 = vld [vmem:[%s3599 + $0x391] sm:$0xff]
        %v4198 = vld [vmem:[%s3599 + $0x3c1] sm:$0xff]
        %v4199 = vld [vmem:[%s3599 + $0x3d1] sm:$0xff]
        %v4200 = vld [vmem:[%s3599 + $0x3e1] sm:$0xff]
        %v4201 = vld [vmem:[%s3599 + $0x3f1] sm:$0xff]
        %v4202 = vld [vmem:[%s3599 + $0x401] sm:$0xff]
        %v4203 = vld [vmem:[%s3599 + $0x411] sm:$0xff]
        %v4204 = vld [vmem:[%s3599 + $0x421] sm:$0xff]
        %v4205 = vld [vmem:[%s3599 + $0x431] sm:$0xff]
        %v4206 = vld [vmem:[%s3599 + $0x461] sm:$0xff]
        %v4207 = vld [vmem:[%s3599 + $0x471] sm:$0xff]
        %v4208 = vld [vmem:[%s3599 + $0x481] sm:$0xff]
        %v4209 = vld [vmem:[%s3599 + $0x491] sm:$0xff]
        %v4210 = vld [vmem:[%s3599 + $0x4a1] sm:$0xff]
        %v4211 = vld [vmem:[%s3599 + $0x4b1] sm:$0xff]
        %v4212 = vld [vmem:[%s3599 + $0x4c1] sm:$0xff]
        %v4213 = vld [vmem:[%s3599 + $0x4d1] sm:$0xff]
        %v4214 = vpack.c.bf16 %v4151, %v4150
        %v4215 = vpack.c.bf16 %v4153, %v4152
        %v4216 = vpack.c.bf16 %v4155, %v4154
        %v4217 = vpack.c.bf16 %v4157, %v4156
        %v4218 = vpack.c.bf16 %v4159, %v4158
        %v4219 = vpack.c.bf16 %v4161, %v4160
        %v4220 = vpack.c.bf16 %v4163, %v4162
        %v4221 = vpack.c.bf16 %v4165, %v4164
        %v4222 = vpack.c.bf16 %v4167, %v4166
        %v4223 = vpack.c.bf16 %v4169, %v4168
        %v4224 = vpack.c.bf16 %v4171, %v4170
        %v4225 = vpack.c.bf16 %v4173, %v4172
        %v4226 = vpack.c.bf16 %v4175, %v4174
        %v4227 = vpack.c.bf16 %v4177, %v4176
        %v4228 = vpack.c.bf16 %v4179, %v4178
        %v4229 = vpack.c.bf16 %v4181, %v4180
        %v4230 = vpack.c.bf16 %v4183, %v4182
        %v4231 = vpack.c.bf16 %v4185, %v4184
        %v4232 = vpack.c.bf16 %v4187, %v4186
        %v4233 = vpack.c.bf16 %v4189, %v4188
        %v4234 = vpack.c.bf16 %v4191, %v4190
        %v4235 = vpack.c.bf16 %v4193, %v4192
        %v4236 = vpack.c.bf16 %v4195, %v4194
        %v4237 = vpack.c.bf16 %v4197, %v4196
        %v4238 = vpack.c.bf16 %v4199, %v4198
        %v4239 = vpack.c.bf16 %v4201, %v4200
        %v4240 = vpack.c.bf16 %v4203, %v4202
        %v4241 = vpack.c.bf16 %v4205, %v4204
        %v4242 = vpack.c.bf16 %v4207, %v4206
        %v4243 = vpack.c.bf16 %v4209, %v4208
        %v4244 = vpack.c.bf16 %v4211, %v4210
        %v4245 = vpack.c.bf16 %v4213, %v4212
        %s4246 = scalar_lea.vmem %s1, 28
        %v4247 = vld [vmem:[%s4246] sm:$0xf]
        %v4249 = vsel %vm230, %v4214, 0
        %v4252 = vsel %vm230, %v4215, 0
        %v4255 = vsel %vm230, %v4216, 0
        %v4258 = vsel %vm230, %v4217, 0
        %v4261 = vsel %vm230, %v4218, 0
        %v4264 = vsel %vm230, %v4219, 0
        %v4267 = vsel %vm230, %v4220, 0
        %v4270 = vsel %vm230, %v4221, 0
        %v4273 = vsel %vm230, %v4222, 0
        %v4276 = vsel %vm230, %v4223, 0
        %v4279 = vsel %vm230, %v4224, 0
        %v4282 = vsel %vm230, %v4225, 0
        %v4285 = vsel %vm230, %v4226, 0
        %v4288 = vsel %vm230, %v4227, 0
        %v4291 = vsel %vm230, %v4228, 0
        %v4294 = vsel %vm230, %v4229, 0
        %v4297 = vsel %vm230, %v4230, 0
        %v4300 = vsel %vm230, %v4231, 0
        %v4303 = vsel %vm230, %v4232, 0
        %v4306 = vsel %vm230, %v4233, 0
        %v4309 = vsel %vm230, %v4234, 0
        %v4312 = vsel %vm230, %v4235, 0
        %v4315 = vsel %vm230, %v4236, 0
        %v4318 = vsel %vm230, %v4237, 0
        %v4321 = vsel %vm230, %v4238, 0
        %v4324 = vsel %vm230, %v4239, 0
        %v4327 = vsel %vm230, %v4240, 0
        %v4330 = vsel %vm230, %v4241, 0
        %v4333 = vsel %vm230, %v4242, 0
        %v4336 = vsel %vm230, %v4243, 0
        %v4339 = vsel %vm230, %v4244, 0
        %v4342 = vsel %vm230, %v4245, 0
        %v4345 = vsel %vm717, %v4247, 0
        %4347 = vmatprep.subr.bf16.mxu0 0
        %4348 = vmatpush1.bf16.msra.mxu0 0
        %4349 = vmatprep.subr.bf16.mxu0 0
        %4350 = vmatpush1.bf16.msra.mxu0 0
        %4351 = vmatprep.subr.bf16.mxu0 0
        %4352 = vmatpush1.bf16.msra.mxu0 0
        %4353 = vmatprep.subr.bf16.mxu0 0
        %4354 = vmatpush1.bf16.msra.mxu0 0
        %4355 = vmatprep.subr.bf16.mxu0 0
        %4356 = vmatpush1.bf16.msra.mxu0 0
        %4357 = vmatprep.subr.bf16.mxu0 0
        %4358 = vmatpush1.bf16.msra.mxu0 0
        %4359 = vmatprep.subr.bf16.mxu0 0
        %4360 = vmatpush1.bf16.msra.mxu0 0
        %4361 = vmatprep.subr.bf16.mxu0 0
        %4362 = vmatpush1.bf16.msra.mxu0 %v4345
        %4363 = vmatprep.subr.bf16.mxu0 0
        %4364 = vmatpush2.bf16.msra.mxu0 0
        %4365 = vmatprep.subr.bf16.mxu0 0
        %4366 = vmatpush2.bf16.msra.mxu0 0
        %4367 = vmatprep.subr.bf16.mxu0 0
        %4368 = vmatpush2.bf16.msra.mxu0 0
        %4369 = vmatprep.subr.bf16.mxu0 0
        %4370 = vmatpush2.bf16.msra.mxu0 0
        %4371 = vmatprep.subr.bf16.mxu0 0
        %4372 = vmatpush2.bf16.msra.mxu0 0
        %4373 = vmatprep.subr.bf16.mxu0 0
        %4374 = vmatpush2.bf16.msra.mxu0 0
        %4375 = vmatprep.subr.bf16.mxu0 0
        %4376 = vmatpush2.bf16.msra.mxu0 0
        %4377 = vmatprep.subr.bf16.mxu0 0
        %4378 = vmatpush2.bf16.msra.mxu0 0
        %4379 = vmatprep.mubr.bf16.mxu0 0
        %4380 = vmatmul.mubr.bf16.gmra.mxu0 %v4249
        %v4381 = vpop.f32.mrf.mxu0
        %v4382 = vadd.f32 0.0, %v4381
        %v4383 = vpop.f32.mrf.mxu0
        %v4384 = vpop.f32.mrf.mxu0
        %v4385 = vadd.f32 0.0, %v4384
        %v4386 = vpop.f32.mrf.mxu0
        %4387 = vmatprep.mubr.bf16.mxu0 0
        %4388 = vmatmul.mubr.bf16.gmra.mxu0 %v4252
        %v4389 = vpop.f32.mrf.mxu0
        %v4390 = vadd.f32 0.0, %v4389
        %v4391 = vpop.f32.mrf.mxu0
        %v4392 = vpop.f32.mrf.mxu0
        %v4393 = vadd.f32 0.0, %v4392
        %v4394 = vpop.f32.mrf.mxu0
        %4395 = vmatprep.mubr.bf16.mxu0 0
        %4396 = vmatmul.mubr.bf16.gmra.mxu0 %v4255
        %v4397 = vpop.f32.mrf.mxu0
        %v4398 = vadd.f32 0.0, %v4397
        %v4399 = vpop.f32.mrf.mxu0
        %v4400 = vpop.f32.mrf.mxu0
        %v4401 = vadd.f32 0.0, %v4400
        %v4402 = vpop.f32.mrf.mxu0
        %4403 = vmatprep.mubr.bf16.mxu0 0
        %4404 = vmatmul.mubr.bf16.gmra.mxu0 %v4258
        %v4405 = vpop.f32.mrf.mxu0
        %v4406 = vadd.f32 0.0, %v4405
        %v4407 = vpop.f32.mrf.mxu0
        %v4408 = vpop.f32.mrf.mxu0
        %v4409 = vadd.f32 0.0, %v4408
        %v4410 = vpop.f32.mrf.mxu0
        %4411 = vmatprep.mubr.bf16.mxu0 0
        %4412 = vmatmul.mubr.bf16.gmra.mxu0 %v4261
        %v4413 = vpop.f32.mrf.mxu0
        %v4414 = vadd.f32 0.0, %v4413
        %v4415 = vpop.f32.mrf.mxu0
        %v4416 = vpop.f32.mrf.mxu0
        %v4417 = vadd.f32 0.0, %v4416
        %v4418 = vpop.f32.mrf.mxu0
        %4419 = vmatprep.mubr.bf16.mxu0 0
        %4420 = vmatmul.mubr.bf16.gmra.mxu0 %v4264
        %v4421 = vpop.f32.mrf.mxu0
        %v4422 = vadd.f32 0.0, %v4421
        %v4423 = vpop.f32.mrf.mxu0
        %v4424 = vpop.f32.mrf.mxu0
        %v4425 = vadd.f32 0.0, %v4424
        %v4426 = vpop.f32.mrf.mxu0
        %4427 = vmatprep.mubr.bf16.mxu0 0
        %4428 = vmatmul.mubr.bf16.gmra.mxu0 %v4267
        %v4429 = vpop.f32.mrf.mxu0
        %v4430 = vadd.f32 0.0, %v4429
        %v4431 = vpop.f32.mrf.mxu0
        %v4432 = vpop.f32.mrf.mxu0
        %v4433 = vadd.f32 0.0, %v4432
        %v4434 = vpop.f32.mrf.mxu0
        %4435 = vmatprep.mubr.bf16.mxu0 0
        %4436 = vmatmul.mubr.bf16.gmra.mxu0 %v4270
        %v4437 = vpop.f32.mrf.mxu0
        %v4438 = vadd.f32 0.0, %v4437
        %v4439 = vpop.f32.mrf.mxu0
        %v4440 = vpop.f32.mrf.mxu0
        %v4441 = vadd.f32 0.0, %v4440
        %v4442 = vpop.f32.mrf.mxu0
        %4443 = vmatprep.mubr.bf16.mxu0 0
        %4444 = vmatmul.mubr.bf16.gmra.mxu0 %v4273
        %v4445 = vpop.f32.mrf.mxu0
        %v4446 = vadd.f32 0.0, %v4445
        %v4447 = vpop.f32.mrf.mxu0
        %v4448 = vpop.f32.mrf.mxu0
        %v4449 = vadd.f32 0.0, %v4448
        %v4450 = vpop.f32.mrf.mxu0
        %4451 = vmatprep.mubr.bf16.mxu0 0
        %4452 = vmatmul.mubr.bf16.gmra.mxu0 %v4276
        %v4453 = vpop.f32.mrf.mxu0
        %v4454 = vadd.f32 0.0, %v4453
        %v4455 = vpop.f32.mrf.mxu0
        %v4456 = vpop.f32.mrf.mxu0
        %v4457 = vadd.f32 0.0, %v4456
        %v4458 = vpop.f32.mrf.mxu0
        %4459 = vmatprep.mubr.bf16.mxu0 0
        %4460 = vmatmul.mubr.bf16.gmra.mxu0 %v4279
        %v4461 = vpop.f32.mrf.mxu0
        %v4462 = vadd.f32 0.0, %v4461
        %v4463 = vpop.f32.mrf.mxu0
        %v4464 = vpop.f32.mrf.mxu0
        %v4465 = vadd.f32 0.0, %v4464
        %v4466 = vpop.f32.mrf.mxu0
        %4467 = vmatprep.mubr.bf16.mxu0 0
        %4468 = vmatmul.mubr.bf16.gmra.mxu0 %v4282
        %v4469 = vpop.f32.mrf.mxu0
        %v4470 = vadd.f32 0.0, %v4469
        %v4471 = vpop.f32.mrf.mxu0
        %v4472 = vpop.f32.mrf.mxu0
        %v4473 = vadd.f32 0.0, %v4472
        %v4474 = vpop.f32.mrf.mxu0
        %4475 = vmatprep.mubr.bf16.mxu0 0
        %4476 = vmatmul.mubr.bf16.gmra.mxu0 %v4285
        %v4477 = vpop.f32.mrf.mxu0
        %v4478 = vadd.f32 0.0, %v4477
        %v4479 = vpop.f32.mrf.mxu0
        %v4480 = vpop.f32.mrf.mxu0
        %v4481 = vadd.f32 0.0, %v4480
        %v4482 = vpop.f32.mrf.mxu0
        %4483 = vmatprep.mubr.bf16.mxu0 0
        %4484 = vmatmul.mubr.bf16.gmra.mxu0 %v4288
        %v4485 = vpop.f32.mrf.mxu0
        %v4486 = vadd.f32 0.0, %v4485
        %v4487 = vpop.f32.mrf.mxu0
        %v4488 = vpop.f32.mrf.mxu0
        %v4489 = vadd.f32 0.0, %v4488
        %v4490 = vpop.f32.mrf.mxu0
        %4491 = vmatprep.mubr.bf16.mxu0 0
        %4492 = vmatmul.mubr.bf16.gmra.mxu0 %v4291
        %v4493 = vpop.f32.mrf.mxu0
        %v4494 = vadd.f32 0.0, %v4493
        %v4495 = vpop.f32.mrf.mxu0
        %v4496 = vpop.f32.mrf.mxu0
        %v4497 = vadd.f32 0.0, %v4496
        %v4498 = vpop.f32.mrf.mxu0
        %4499 = vmatprep.mubr.bf16.mxu0 0
        %4500 = vmatmul.mubr.bf16.gmra.mxu0 %v4294
        %v4501 = vpop.f32.mrf.mxu0
        %v4502 = vadd.f32 0.0, %v4501
        %v4503 = vpop.f32.mrf.mxu0
        %v4504 = vpop.f32.mrf.mxu0
        %v4505 = vadd.f32 0.0, %v4504
        %v4506 = vpop.f32.mrf.mxu0
        %4507 = vmatprep.mubr.bf16.mxu0 0
        %4508 = vmatmul.mubr.bf16.gmra.mxu0 %v4297
        %v4509 = vpop.f32.mrf.mxu0
        %v4510 = vadd.f32 0.0, %v4509
        %v4511 = vpop.f32.mrf.mxu0
        %v4512 = vpop.f32.mrf.mxu0
        %v4513 = vadd.f32 0.0, %v4512
        %v4514 = vpop.f32.mrf.mxu0
        %4515 = vmatprep.mubr.bf16.mxu0 0
        %4516 = vmatmul.mubr.bf16.gmra.mxu0 %v4300
        %v4517 = vpop.f32.mrf.mxu0
        %v4518 = vadd.f32 0.0, %v4517
        %v4519 = vpop.f32.mrf.mxu0
        %v4520 = vpop.f32.mrf.mxu0
        %v4521 = vadd.f32 0.0, %v4520
        %v4522 = vpop.f32.mrf.mxu0
        %4523 = vmatprep.mubr.bf16.mxu0 0
        %4524 = vmatmul.mubr.bf16.gmra.mxu0 %v4303
        %v4525 = vpop.f32.mrf.mxu0
        %v4526 = vadd.f32 0.0, %v4525
        %v4527 = vpop.f32.mrf.mxu0
        %v4528 = vpop.f32.mrf.mxu0
        %v4529 = vadd.f32 0.0, %v4528
        %v4530 = vpop.f32.mrf.mxu0
        %4531 = vmatprep.mubr.bf16.mxu0 0
        %4532 = vmatmul.mubr.bf16.gmra.mxu0 %v4306
        %v4533 = vpop.f32.mrf.mxu0
        %v4534 = vadd.f32 0.0, %v4533
        %v4535 = vpop.f32.mrf.mxu0
        %v4536 = vpop.f32.mrf.mxu0
        %v4537 = vadd.f32 0.0, %v4536
        %v4538 = vpop.f32.mrf.mxu0
        %4539 = vmatprep.mubr.bf16.mxu0 0
        %4540 = vmatmul.mubr.bf16.gmra.mxu0 %v4309
        %v4541 = vpop.f32.mrf.mxu0
        %v4542 = vadd.f32 0.0, %v4541
        %v4543 = vpop.f32.mrf.mxu0
        %v4544 = vpop.f32.mrf.mxu0
        %v4545 = vadd.f32 0.0, %v4544
        %v4546 = vpop.f32.mrf.mxu0
        %4547 = vmatprep.mubr.bf16.mxu0 0
        %4548 = vmatmul.mubr.bf16.gmra.mxu0 %v4312
        %v4549 = vpop.f32.mrf.mxu0
        %v4550 = vadd.f32 0.0, %v4549
        %v4551 = vpop.f32.mrf.mxu0
        %v4552 = vpop.f32.mrf.mxu0
        %v4553 = vadd.f32 0.0, %v4552
        %v4554 = vpop.f32.mrf.mxu0
        %4555 = vmatprep.mubr.bf16.mxu0 0
        %4556 = vmatmul.mubr.bf16.gmra.mxu0 %v4315
        %v4557 = vpop.f32.mrf.mxu0
        %v4558 = vadd.f32 0.0, %v4557
        %v4559 = vpop.f32.mrf.mxu0
        %v4560 = vpop.f32.mrf.mxu0
        %v4561 = vadd.f32 0.0, %v4560
        %v4562 = vpop.f32.mrf.mxu0
        %4563 = vmatprep.mubr.bf16.mxu0 0
        %4564 = vmatmul.mubr.bf16.gmra.mxu0 %v4318
        %v4565 = vpop.f32.mrf.mxu0
        %v4566 = vadd.f32 0.0, %v4565
        %v4567 = vpop.f32.mrf.mxu0
        %v4568 = vpop.f32.mrf.mxu0
        %v4569 = vadd.f32 0.0, %v4568
        %v4570 = vpop.f32.mrf.mxu0
        %4571 = vmatprep.mubr.bf16.mxu0 0
        %4572 = vmatmul.mubr.bf16.gmra.mxu0 %v4321
        %v4573 = vpop.f32.mrf.mxu0
        %v4574 = vadd.f32 0.0, %v4573
        %v4575 = vpop.f32.mrf.mxu0
        %v4576 = vpop.f32.mrf.mxu0
        %v4577 = vadd.f32 0.0, %v4576
        %v4578 = vpop.f32.mrf.mxu0
        %4579 = vmatprep.mubr.bf16.mxu0 0
        %4580 = vmatmul.mubr.bf16.gmra.mxu0 %v4324
        %v4581 = vpop.f32.mrf.mxu0
        %v4582 = vadd.f32 0.0, %v4581
        %v4583 = vpop.f32.mrf.mxu0
        %v4584 = vpop.f32.mrf.mxu0
        %v4585 = vadd.f32 0.0, %v4584
        %v4586 = vpop.f32.mrf.mxu0
        %4587 = vmatprep.mubr.bf16.mxu0 0
        %4588 = vmatmul.mubr.bf16.gmra.mxu0 %v4327
        %v4589 = vpop.f32.mrf.mxu0
        %v4590 = vadd.f32 0.0, %v4589
        %v4591 = vpop.f32.mrf.mxu0
        %v4592 = vpop.f32.mrf.mxu0
        %v4593 = vadd.f32 0.0, %v4592
        %v4594 = vpop.f32.mrf.mxu0
        %4595 = vmatprep.mubr.bf16.mxu0 0
        %4596 = vmatmul.mubr.bf16.gmra.mxu0 %v4330
        %v4597 = vpop.f32.mrf.mxu0
        %v4598 = vadd.f32 0.0, %v4597
        %v4599 = vpop.f32.mrf.mxu0
        %v4600 = vpop.f32.mrf.mxu0
        %v4601 = vadd.f32 0.0, %v4600
        %v4602 = vpop.f32.mrf.mxu0
        %4603 = vmatprep.mubr.bf16.mxu0 0
        %4604 = vmatmul.mubr.bf16.gmra.mxu0 %v4333
        %v4605 = vpop.f32.mrf.mxu0
        %v4606 = vadd.f32 0.0, %v4605
        %v4607 = vpop.f32.mrf.mxu0
        %v4608 = vpop.f32.mrf.mxu0
        %v4609 = vadd.f32 0.0, %v4608
        %v4610 = vpop.f32.mrf.mxu0
        %4611 = vmatprep.mubr.bf16.mxu0 0
        %4612 = vmatmul.mubr.bf16.gmra.mxu0 %v4336
        %v4613 = vpop.f32.mrf.mxu0
        %v4614 = vadd.f32 0.0, %v4613
        %v4615 = vpop.f32.mrf.mxu0
        %v4616 = vpop.f32.mrf.mxu0
        %v4617 = vadd.f32 0.0, %v4616
        %v4618 = vpop.f32.mrf.mxu0
        %4619 = vmatprep.mubr.bf16.mxu0 0
        %4620 = vmatmul.mubr.bf16.gmra.mxu0 %v4339
        %v4621 = vpop.f32.mrf.mxu0
        %v4622 = vadd.f32 0.0, %v4621
        %v4623 = vpop.f32.mrf.mxu0
        %v4624 = vpop.f32.mrf.mxu0
        %v4625 = vadd.f32 0.0, %v4624
        %v4626 = vpop.f32.mrf.mxu0
        %4627 = vmatprep.mubr.bf16.mxu0 0
        %4628 = vmatmul.mubr.bf16.gmra.mxu0 %v4342
        %v4629 = vpop.f32.mrf.mxu0
        %v4630 = vadd.f32 0.0, %v4629
        %v4631 = vpop.f32.mrf.mxu0
        %v4632 = vpop.f32.mrf.mxu0
        %v4633 = vadd.f32 0.0, %v4632
        %v4634 = vpop.f32.mrf.mxu0
        %4635 = vdwg.mxu0
        %v4636 = vadd.f32 %v4086, %v4382
        %v4637 = vadd.f32 %v4087, %v4385
        %v4638 = vadd.f32 %v4088, %v4390
        %v4639 = vadd.f32 %v4089, %v4393
        %v4640 = vadd.f32 %v4090, %v4398
        %v4641 = vadd.f32 %v4091, %v4401
        %v4642 = vadd.f32 %v4092, %v4406
        %v4643 = vadd.f32 %v4093, %v4409
        %v4644 = vadd.f32 %v4094, %v4414
        %v4645 = vadd.f32 %v4095, %v4417
        %v4646 = vadd.f32 %v4096, %v4422
        %v4647 = vadd.f32 %v4097, %v4425
        %v4648 = vadd.f32 %v4098, %v4430
        %v4649 = vadd.f32 %v4099, %v4433
        %v4650 = vadd.f32 %v4100, %v4438
        %v4651 = vadd.f32 %v4101, %v4441
        %v4652 = vadd.f32 %v4102, %v4446
        %v4653 = vadd.f32 %v4103, %v4449
        %v4654 = vadd.f32 %v4104, %v4454
        %v4655 = vadd.f32 %v4105, %v4457
        %v4656 = vadd.f32 %v4106, %v4462
        %v4657 = vadd.f32 %v4107, %v4465
        %v4658 = vadd.f32 %v4108, %v4470
        %v4659 = vadd.f32 %v4109, %v4473
        %v4660 = vadd.f32 %v4110, %v4478
        %v4661 = vadd.f32 %v4111, %v4481
        %v4662 = vadd.f32 %v4112, %v4486
        %v4663 = vadd.f32 %v4113, %v4489
        %v4664 = vadd.f32 %v4114, %v4494
        %v4665 = vadd.f32 %v4115, %v4497
        %v4666 = vadd.f32 %v4116, %v4502
        %v4667 = vadd.f32 %v4117, %v4505
        %v4668 = vadd.f32 %v4118, %v4510
        %v4669 = vadd.f32 %v4119, %v4513
        %v4670 = vadd.f32 %v4120, %v4518
        %v4671 = vadd.f32 %v4121, %v4521
        %v4672 = vadd.f32 %v4122, %v4526
        %v4673 = vadd.f32 %v4123, %v4529
        %v4674 = vadd.f32 %v4124, %v4534
        %v4675 = vadd.f32 %v4125, %v4537
        %v4676 = vadd.f32 %v4126, %v4542
        %v4677 = vadd.f32 %v4127, %v4545
        %v4678 = vadd.f32 %v4128, %v4550
        %v4679 = vadd.f32 %v4129, %v4553
        %v4680 = vadd.f32 %v4130, %v4558
        %v4681 = vadd.f32 %v4131, %v4561
        %v4682 = vadd.f32 %v4132, %v4566
        %v4683 = vadd.f32 %v4133, %v4569
        %v4684 = vadd.f32 %v4134, %v4574
        %v4685 = vadd.f32 %v4135, %v4577
        %v4686 = vadd.f32 %v4136, %v4582
        %v4687 = vadd.f32 %v4137, %v4585
        %v4688 = vadd.f32 %v4138, %v4590
        %v4689 = vadd.f32 %v4139, %v4593
        %v4690 = vadd.f32 %v4140, %v4598
        %v4691 = vadd.f32 %v4141, %v4601
        %v4692 = vadd.f32 %v4142, %v4606
        %v4693 = vadd.f32 %v4143, %v4609
        %v4694 = vadd.f32 %v4144, %v4614
        %v4695 = vadd.f32 %v4145, %v4617
        %v4696 = vadd.f32 %v4146, %v4622
        %v4697 = vadd.f32 %v4147, %v4625
        %v4698 = vadd.f32 %v4148, %v4630
        %v4699 = vadd.f32 %v4149, %v4633
        %v4700 = vld [vmem:[%s3599 + $0x2] sm:$0xff]
        %v4701 = vld [vmem:[%s3599 + $0x12] sm:$0xff]
        %v4702 = vld [vmem:[%s3599 + $0x22] sm:$0xff]
        %v4703 = vld [vmem:[%s3599 + $0x32] sm:$0xff]
        %v4704 = vld [vmem:[%s3599 + $0x42] sm:$0xff]
        %v4705 = vld [vmem:[%s3599 + $0x52] sm:$0xff]
        %v4706 = vld [vmem:[%s3599 + $0x62] sm:$0xff]
        %v4707 = vld [vmem:[%s3599 + $0x72] sm:$0xff]
        %v4708 = vld [vmem:[%s3599 + $0xa2] sm:$0xff]
        %v4709 = vld [vmem:[%s3599 + $0xb2] sm:$0xff]
        %v4710 = vld [vmem:[%s3599 + $0xc2] sm:$0xff]
        %v4711 = vld [vmem:[%s3599 + $0xd2] sm:$0xff]
        %v4712 = vld [vmem:[%s3599 + $0xe2] sm:$0xff]
        %v4713 = vld [vmem:[%s3599 + $0xf2] sm:$0xff]
        %v4714 = vld [vmem:[%s3599 + $0x102] sm:$0xff]
        %v4715 = vld [vmem:[%s3599 + $0x112] sm:$0xff]
        %v4716 = vld [vmem:[%s3599 + $0x142] sm:$0xff]
        %v4717 = vld [vmem:[%s3599 + $0x152] sm:$0xff]
        %v4718 = vld [vmem:[%s3599 + $0x162] sm:$0xff]
        %v4719 = vld [vmem:[%s3599 + $0x172] sm:$0xff]
        %v4720 = vld [vmem:[%s3599 + $0x182] sm:$0xff]
        %v4721 = vld [vmem:[%s3599 + $0x192] sm:$0xff]
        %v4722 = vld [vmem:[%s3599 + $0x1a2] sm:$0xff]
        %v4723 = vld [vmem:[%s3599 + $0x1b2] sm:$0xff]
        %v4724 = vld [vmem:[%s3599 + $0x1e2] sm:$0xff]
        %v4725 = vld [vmem:[%s3599 + $0x1f2] sm:$0xff]
        %v4726 = vld [vmem:[%s3599 + $0x202] sm:$0xff]
        %v4727 = vld [vmem:[%s3599 + $0x212] sm:$0xff]
        %v4728 = vld [vmem:[%s3599 + $0x222] sm:$0xff]
        %v4729 = vld [vmem:[%s3599 + $0x232] sm:$0xff]
        %v4730 = vld [vmem:[%s3599 + $0x242] sm:$0xff]
        %v4731 = vld [vmem:[%s3599 + $0x252] sm:$0xff]
        %v4732 = vld [vmem:[%s3599 + $0x282] sm:$0xff]
        %v4733 = vld [vmem:[%s3599 + $0x292] sm:$0xff]
        %v4734 = vld [vmem:[%s3599 + $0x2a2] sm:$0xff]
        %v4735 = vld [vmem:[%s3599 + $0x2b2] sm:$0xff]
        %v4736 = vld [vmem:[%s3599 + $0x2c2] sm:$0xff]
        %v4737 = vld [vmem:[%s3599 + $0x2d2] sm:$0xff]
        %v4738 = vld [vmem:[%s3599 + $0x2e2] sm:$0xff]
        %v4739 = vld [vmem:[%s3599 + $0x2f2] sm:$0xff]
        %v4740 = vld [vmem:[%s3599 + $0x322] sm:$0xff]
        %v4741 = vld [vmem:[%s3599 + $0x332] sm:$0xff]
        %v4742 = vld [vmem:[%s3599 + $0x342] sm:$0xff]
        %v4743 = vld [vmem:[%s3599 + $0x352] sm:$0xff]
        %v4744 = vld [vmem:[%s3599 + $0x362] sm:$0xff]
        %v4745 = vld [vmem:[%s3599 + $0x372] sm:$0xff]
        %v4746 = vld [vmem:[%s3599 + $0x382] sm:$0xff]
        %v4747 = vld [vmem:[%s3599 + $0x392] sm:$0xff]
        %v4748 = vld [vmem:[%s3599 + $0x3c2] sm:$0xff]
        %v4749 = vld [vmem:[%s3599 + $0x3d2] sm:$0xff]
        %v4750 = vld [vmem:[%s3599 + $0x3e2] sm:$0xff]
        %v4751 = vld [vmem:[%s3599 + $0x3f2] sm:$0xff]
        %v4752 = vld [vmem:[%s3599 + $0x402] sm:$0xff]
        %v4753 = vld [vmem:[%s3599 + $0x412] sm:$0xff]
        %v4754 = vld [vmem:[%s3599 + $0x422] sm:$0xff]
        %v4755 = vld [vmem:[%s3599 + $0x432] sm:$0xff]
        %v4756 = vld [vmem:[%s3599 + $0x462] sm:$0xff]
        %v4757 = vld [vmem:[%s3599 + $0x472] sm:$0xff]
        %v4758 = vld [vmem:[%s3599 + $0x482] sm:$0xff]
        %v4759 = vld [vmem:[%s3599 + $0x492] sm:$0xff]
        %v4760 = vld [vmem:[%s3599 + $0x4a2] sm:$0xff]
        %v4761 = vld [vmem:[%s3599 + $0x4b2] sm:$0xff]
        %v4762 = vld [vmem:[%s3599 + $0x4c2] sm:$0xff]
        %v4763 = vld [vmem:[%s3599 + $0x4d2] sm:$0xff]
        %v4764 = vpack.c.bf16 %v4701, %v4700
        %v4765 = vpack.c.bf16 %v4703, %v4702
        %v4766 = vpack.c.bf16 %v4705, %v4704
        %v4767 = vpack.c.bf16 %v4707, %v4706
        %v4768 = vpack.c.bf16 %v4709, %v4708
        %v4769 = vpack.c.bf16 %v4711, %v4710
        %v4770 = vpack.c.bf16 %v4713, %v4712
        %v4771 = vpack.c.bf16 %v4715, %v4714
        %v4772 = vpack.c.bf16 %v4717, %v4716
        %v4773 = vpack.c.bf16 %v4719, %v4718
        %v4774 = vpack.c.bf16 %v4721, %v4720
        %v4775 = vpack.c.bf16 %v4723, %v4722
        %v4776 = vpack.c.bf16 %v4725, %v4724
        %v4777 = vpack.c.bf16 %v4727, %v4726
        %v4778 = vpack.c.bf16 %v4729, %v4728
        %v4779 = vpack.c.bf16 %v4731, %v4730
        %v4780 = vpack.c.bf16 %v4733, %v4732
        %v4781 = vpack.c.bf16 %v4735, %v4734
        %v4782 = vpack.c.bf16 %v4737, %v4736
        %v4783 = vpack.c.bf16 %v4739, %v4738
        %v4784 = vpack.c.bf16 %v4741, %v4740
        %v4785 = vpack.c.bf16 %v4743, %v4742
        %v4786 = vpack.c.bf16 %v4745, %v4744
        %v4787 = vpack.c.bf16 %v4747, %v4746
        %v4788 = vpack.c.bf16 %v4749, %v4748
        %v4789 = vpack.c.bf16 %v4751, %v4750
        %v4790 = vpack.c.bf16 %v4753, %v4752
        %v4791 = vpack.c.bf16 %v4755, %v4754
        %v4792 = vpack.c.bf16 %v4757, %v4756
        %v4793 = vpack.c.bf16 %v4759, %v4758
        %v4794 = vpack.c.bf16 %v4761, %v4760
        %v4795 = vpack.c.bf16 %v4763, %v4762
        %s4796 = scalar_lea.vmem %s1, 32
        %v4797 = vld [vmem:[%s4796] sm:$0xf]
        %v4799 = vsel %vm230, %v4764, 0
        %v4802 = vsel %vm230, %v4765, 0
        %v4805 = vsel %vm230, %v4766, 0
        %v4808 = vsel %vm230, %v4767, 0
        %v4811 = vsel %vm230, %v4768, 0
        %v4814 = vsel %vm230, %v4769, 0
        %v4817 = vsel %vm230, %v4770, 0
        %v4820 = vsel %vm230, %v4771, 0
        %v4823 = vsel %vm230, %v4772, 0
        %v4826 = vsel %vm230, %v4773, 0
        %v4829 = vsel %vm230, %v4774, 0
        %v4832 = vsel %vm230, %v4775, 0
        %v4835 = vsel %vm230, %v4776, 0
        %v4838 = vsel %vm230, %v4777, 0
        %v4841 = vsel %vm230, %v4778, 0
        %v4844 = vsel %vm230, %v4779, 0
        %v4847 = vsel %vm230, %v4780, 0
        %v4850 = vsel %vm230, %v4781, 0
        %v4853 = vsel %vm230, %v4782, 0
        %v4856 = vsel %vm230, %v4783, 0
        %v4859 = vsel %vm230, %v4784, 0
        %v4862 = vsel %vm230, %v4785, 0
        %v4865 = vsel %vm230, %v4786, 0
        %v4868 = vsel %vm230, %v4787, 0
        %v4871 = vsel %vm230, %v4788, 0
        %v4874 = vsel %vm230, %v4789, 0
        %v4877 = vsel %vm230, %v4790, 0
        %v4880 = vsel %vm230, %v4791, 0
        %v4883 = vsel %vm230, %v4792, 0
        %v4886 = vsel %vm230, %v4793, 0
        %v4889 = vsel %vm230, %v4794, 0
        %v4892 = vsel %vm230, %v4795, 0
        %v4895 = vsel %vm717, %v4797, 0
        %4897 = vmatprep.subr.bf16.mxu0 0
        %4898 = vmatpush1.bf16.msra.mxu0 0
        %4899 = vmatprep.subr.bf16.mxu0 0
        %4900 = vmatpush1.bf16.msra.mxu0 0
        %4901 = vmatprep.subr.bf16.mxu0 0
        %4902 = vmatpush1.bf16.msra.mxu0 0
        %4903 = vmatprep.subr.bf16.mxu0 0
        %4904 = vmatpush1.bf16.msra.mxu0 0
        %4905 = vmatprep.subr.bf16.mxu0 0
        %4906 = vmatpush1.bf16.msra.mxu0 0
        %4907 = vmatprep.subr.bf16.mxu0 0
        %4908 = vmatpush1.bf16.msra.mxu0 0
        %4909 = vmatprep.subr.bf16.mxu0 0
        %4910 = vmatpush1.bf16.msra.mxu0 0
        %4911 = vmatprep.subr.bf16.mxu0 0
        %4912 = vmatpush1.bf16.msra.mxu0 %v4895
        %4913 = vmatprep.subr.bf16.mxu0 0
        %4914 = vmatpush2.bf16.msra.mxu0 0
        %4915 = vmatprep.subr.bf16.mxu0 0
        %4916 = vmatpush2.bf16.msra.mxu0 0
        %4917 = vmatprep.subr.bf16.mxu0 0
        %4918 = vmatpush2.bf16.msra.mxu0 0
        %4919 = vmatprep.subr.bf16.mxu0 0
        %4920 = vmatpush2.bf16.msra.mxu0 0
        %4921 = vmatprep.subr.bf16.mxu0 0
        %4922 = vmatpush2.bf16.msra.mxu0 0
        %4923 = vmatprep.subr.bf16.mxu0 0
        %4924 = vmatpush2.bf16.msra.mxu0 0
        %4925 = vmatprep.subr.bf16.mxu0 0
        %4926 = vmatpush2.bf16.msra.mxu0 0
        %4927 = vmatprep.subr.bf16.mxu0 0
        %4928 = vmatpush2.bf16.msra.mxu0 0
        %4929 = vmatprep.mubr.bf16.mxu0 0
        %4930 = vmatmul.mubr.bf16.gmra.mxu0 %v4799
        %v4931 = vpop.f32.mrf.mxu0
        %v4932 = vadd.f32 0.0, %v4931
        %v4933 = vpop.f32.mrf.mxu0
        %v4934 = vpop.f32.mrf.mxu0
        %v4935 = vadd.f32 0.0, %v4934
        %v4936 = vpop.f32.mrf.mxu0
        %4937 = vmatprep.mubr.bf16.mxu0 0
        %4938 = vmatmul.mubr.bf16.gmra.mxu0 %v4802
        %v4939 = vpop.f32.mrf.mxu0
        %v4940 = vadd.f32 0.0, %v4939
        %v4941 = vpop.f32.mrf.mxu0
        %v4942 = vpop.f32.mrf.mxu0
        %v4943 = vadd.f32 0.0, %v4942
        %v4944 = vpop.f32.mrf.mxu0
        %4945 = vmatprep.mubr.bf16.mxu0 0
        %4946 = vmatmul.mubr.bf16.gmra.mxu0 %v4805
        %v4947 = vpop.f32.mrf.mxu0
        %v4948 = vadd.f32 0.0, %v4947
        %v4949 = vpop.f32.mrf.mxu0
        %v4950 = vpop.f32.mrf.mxu0
        %v4951 = vadd.f32 0.0, %v4950
        %v4952 = vpop.f32.mrf.mxu0
        %4953 = vmatprep.mubr.bf16.mxu0 0
        %4954 = vmatmul.mubr.bf16.gmra.mxu0 %v4808
        %v4955 = vpop.f32.mrf.mxu0
        %v4956 = vadd.f32 0.0, %v4955
        %v4957 = vpop.f32.mrf.mxu0
        %v4958 = vpop.f32.mrf.mxu0
        %v4959 = vadd.f32 0.0, %v4958
        %v4960 = vpop.f32.mrf.mxu0
        %4961 = vmatprep.mubr.bf16.mxu0 0
        %4962 = vmatmul.mubr.bf16.gmra.mxu0 %v4811
        %v4963 = vpop.f32.mrf.mxu0
        %v4964 = vadd.f32 0.0, %v4963
        %v4965 = vpop.f32.mrf.mxu0
        %v4966 = vpop.f32.mrf.mxu0
        %v4967 = vadd.f32 0.0, %v4966
        %v4968 = vpop.f32.mrf.mxu0
        %4969 = vmatprep.mubr.bf16.mxu0 0
        %4970 = vmatmul.mubr.bf16.gmra.mxu0 %v4814
        %v4971 = vpop.f32.mrf.mxu0
        %v4972 = vadd.f32 0.0, %v4971
        %v4973 = vpop.f32.mrf.mxu0
        %v4974 = vpop.f32.mrf.mxu0
        %v4975 = vadd.f32 0.0, %v4974
        %v4976 = vpop.f32.mrf.mxu0
        %4977 = vmatprep.mubr.bf16.mxu0 0
        %4978 = vmatmul.mubr.bf16.gmra.mxu0 %v4817
        %v4979 = vpop.f32.mrf.mxu0
        %v4980 = vadd.f32 0.0, %v4979
        %v4981 = vpop.f32.mrf.mxu0
        %v4982 = vpop.f32.mrf.mxu0
        %v4983 = vadd.f32 0.0, %v4982
        %v4984 = vpop.f32.mrf.mxu0
        %4985 = vmatprep.mubr.bf16.mxu0 0
        %4986 = vmatmul.mubr.bf16.gmra.mxu0 %v4820
        %v4987 = vpop.f32.mrf.mxu0
        %v4988 = vadd.f32 0.0, %v4987
        %v4989 = vpop.f32.mrf.mxu0
        %v4990 = vpop.f32.mrf.mxu0
        %v4991 = vadd.f32 0.0, %v4990
        %v4992 = vpop.f32.mrf.mxu0
        %4993 = vmatprep.mubr.bf16.mxu0 0
        %4994 = vmatmul.mubr.bf16.gmra.mxu0 %v4823
        %v4995 = vpop.f32.mrf.mxu0
        %v4996 = vadd.f32 0.0, %v4995
        %v4997 = vpop.f32.mrf.mxu0
        %v4998 = vpop.f32.mrf.mxu0
        %v4999 = vadd.f32 0.0, %v4998
        %v5000 = vpop.f32.mrf.mxu0
        %5001 = vmatprep.mubr.bf16.mxu0 0
        %5002 = vmatmul.mubr.bf16.gmra.mxu0 %v4826
        %v5003 = vpop.f32.mrf.mxu0
        %v5004 = vadd.f32 0.0, %v5003
        %v5005 = vpop.f32.mrf.mxu0
        %v5006 = vpop.f32.mrf.mxu0
        %v5007 = vadd.f32 0.0, %v5006
        %v5008 = vpop.f32.mrf.mxu0
        %5009 = vmatprep.mubr.bf16.mxu0 0
        %5010 = vmatmul.mubr.bf16.gmra.mxu0 %v4829
        %v5011 = vpop.f32.mrf.mxu0
        %v5012 = vadd.f32 0.0, %v5011
        %v5013 = vpop.f32.mrf.mxu0
        %v5014 = vpop.f32.mrf.mxu0
        %v5015 = vadd.f32 0.0, %v5014
        %v5016 = vpop.f32.mrf.mxu0
        %5017 = vmatprep.mubr.bf16.mxu0 0
        %5018 = vmatmul.mubr.bf16.gmra.mxu0 %v4832
        %v5019 = vpop.f32.mrf.mxu0
        %v5020 = vadd.f32 0.0, %v5019
        %v5021 = vpop.f32.mrf.mxu0
        %v5022 = vpop.f32.mrf.mxu0
        %v5023 = vadd.f32 0.0, %v5022
        %v5024 = vpop.f32.mrf.mxu0
        %5025 = vmatprep.mubr.bf16.mxu0 0
        %5026 = vmatmul.mubr.bf16.gmra.mxu0 %v4835
        %v5027 = vpop.f32.mrf.mxu0
        %v5028 = vadd.f32 0.0, %v5027
        %v5029 = vpop.f32.mrf.mxu0
        %v5030 = vpop.f32.mrf.mxu0
        %v5031 = vadd.f32 0.0, %v5030
        %v5032 = vpop.f32.mrf.mxu0
        %5033 = vmatprep.mubr.bf16.mxu0 0
        %5034 = vmatmul.mubr.bf16.gmra.mxu0 %v4838
        %v5035 = vpop.f32.mrf.mxu0
        %v5036 = vadd.f32 0.0, %v5035
        %v5037 = vpop.f32.mrf.mxu0
        %v5038 = vpop.f32.mrf.mxu0
        %v5039 = vadd.f32 0.0, %v5038
        %v5040 = vpop.f32.mrf.mxu0
        %5041 = vmatprep.mubr.bf16.mxu0 0
        %5042 = vmatmul.mubr.bf16.gmra.mxu0 %v4841
        %v5043 = vpop.f32.mrf.mxu0
        %v5044 = vadd.f32 0.0, %v5043
        %v5045 = vpop.f32.mrf.mxu0
        %v5046 = vpop.f32.mrf.mxu0
        %v5047 = vadd.f32 0.0, %v5046
        %v5048 = vpop.f32.mrf.mxu0
        %5049 = vmatprep.mubr.bf16.mxu0 0
        %5050 = vmatmul.mubr.bf16.gmra.mxu0 %v4844
        %v5051 = vpop.f32.mrf.mxu0
        %v5052 = vadd.f32 0.0, %v5051
        %v5053 = vpop.f32.mrf.mxu0
        %v5054 = vpop.f32.mrf.mxu0
        %v5055 = vadd.f32 0.0, %v5054
        %v5056 = vpop.f32.mrf.mxu0
        %5057 = vmatprep.mubr.bf16.mxu0 0
        %5058 = vmatmul.mubr.bf16.gmra.mxu0 %v4847
        %v5059 = vpop.f32.mrf.mxu0
        %v5060 = vadd.f32 0.0, %v5059
        %v5061 = vpop.f32.mrf.mxu0
        %v5062 = vpop.f32.mrf.mxu0
        %v5063 = vadd.f32 0.0, %v5062
        %v5064 = vpop.f32.mrf.mxu0
        %5065 = vmatprep.mubr.bf16.mxu0 0
        %5066 = vmatmul.mubr.bf16.gmra.mxu0 %v4850
        %v5067 = vpop.f32.mrf.mxu0
        %v5068 = vadd.f32 0.0, %v5067
        %v5069 = vpop.f32.mrf.mxu0
        %v5070 = vpop.f32.mrf.mxu0
        %v5071 = vadd.f32 0.0, %v5070
        %v5072 = vpop.f32.mrf.mxu0
        %5073 = vmatprep.mubr.bf16.mxu0 0
        %5074 = vmatmul.mubr.bf16.gmra.mxu0 %v4853
        %v5075 = vpop.f32.mrf.mxu0
        %v5076 = vadd.f32 0.0, %v5075
        %v5077 = vpop.f32.mrf.mxu0
        %v5078 = vpop.f32.mrf.mxu0
        %v5079 = vadd.f32 0.0, %v5078
        %v5080 = vpop.f32.mrf.mxu0
        %5081 = vmatprep.mubr.bf16.mxu0 0
        %5082 = vmatmul.mubr.bf16.gmra.mxu0 %v4856
        %v5083 = vpop.f32.mrf.mxu0
        %v5084 = vadd.f32 0.0, %v5083
        %v5085 = vpop.f32.mrf.mxu0
        %v5086 = vpop.f32.mrf.mxu0
        %v5087 = vadd.f32 0.0, %v5086
        %v5088 = vpop.f32.mrf.mxu0
        %5089 = vmatprep.mubr.bf16.mxu0 0
        %5090 = vmatmul.mubr.bf16.gmra.mxu0 %v4859
        %v5091 = vpop.f32.mrf.mxu0
        %v5092 = vadd.f32 0.0, %v5091
        %v5093 = vpop.f32.mrf.mxu0
        %v5094 = vpop.f32.mrf.mxu0
        %v5095 = vadd.f32 0.0, %v5094
        %v5096 = vpop.f32.mrf.mxu0
        %5097 = vmatprep.mubr.bf16.mxu0 0
        %5098 = vmatmul.mubr.bf16.gmra.mxu0 %v4862
        %v5099 = vpop.f32.mrf.mxu0
        %v5100 = vadd.f32 0.0, %v5099
        %v5101 = vpop.f32.mrf.mxu0
        %v5102 = vpop.f32.mrf.mxu0
        %v5103 = vadd.f32 0.0, %v5102
        %v5104 = vpop.f32.mrf.mxu0
        %5105 = vmatprep.mubr.bf16.mxu0 0
        %5106 = vmatmul.mubr.bf16.gmra.mxu0 %v4865
        %v5107 = vpop.f32.mrf.mxu0
        %v5108 = vadd.f32 0.0, %v5107
        %v5109 = vpop.f32.mrf.mxu0
        %v5110 = vpop.f32.mrf.mxu0
        %v5111 = vadd.f32 0.0, %v5110
        %v5112 = vpop.f32.mrf.mxu0
        %5113 = vmatprep.mubr.bf16.mxu0 0
        %5114 = vmatmul.mubr.bf16.gmra.mxu0 %v4868
        %v5115 = vpop.f32.mrf.mxu0
        %v5116 = vadd.f32 0.0, %v5115
        %v5117 = vpop.f32.mrf.mxu0
        %v5118 = vpop.f32.mrf.mxu0
        %v5119 = vadd.f32 0.0, %v5118
        %v5120 = vpop.f32.mrf.mxu0
        %5121 = vmatprep.mubr.bf16.mxu0 0
        %5122 = vmatmul.mubr.bf16.gmra.mxu0 %v4871
        %v5123 = vpop.f32.mrf.mxu0
        %v5124 = vadd.f32 0.0, %v5123
        %v5125 = vpop.f32.mrf.mxu0
        %v5126 = vpop.f32.mrf.mxu0
        %v5127 = vadd.f32 0.0, %v5126
        %v5128 = vpop.f32.mrf.mxu0
        %5129 = vmatprep.mubr.bf16.mxu0 0
        %5130 = vmatmul.mubr.bf16.gmra.mxu0 %v4874
        %v5131 = vpop.f32.mrf.mxu0
        %v5132 = vadd.f32 0.0, %v5131
        %v5133 = vpop.f32.mrf.mxu0
        %v5134 = vpop.f32.mrf.mxu0
        %v5135 = vadd.f32 0.0, %v5134
        %v5136 = vpop.f32.mrf.mxu0
        %5137 = vmatprep.mubr.bf16.mxu0 0
        %5138 = vmatmul.mubr.bf16.gmra.mxu0 %v4877
        %v5139 = vpop.f32.mrf.mxu0
        %v5140 = vadd.f32 0.0, %v5139
        %v5141 = vpop.f32.mrf.mxu0
        %v5142 = vpop.f32.mrf.mxu0
        %v5143 = vadd.f32 0.0, %v5142
        %v5144 = vpop.f32.mrf.mxu0
        %5145 = vmatprep.mubr.bf16.mxu0 0
        %5146 = vmatmul.mubr.bf16.gmra.mxu0 %v4880
        %v5147 = vpop.f32.mrf.mxu0
        %v5148 = vadd.f32 0.0, %v5147
        %v5149 = vpop.f32.mrf.mxu0
        %v5150 = vpop.f32.mrf.mxu0
        %v5151 = vadd.f32 0.0, %v5150
        %v5152 = vpop.f32.mrf.mxu0
        %5153 = vmatprep.mubr.bf16.mxu0 0
        %5154 = vmatmul.mubr.bf16.gmra.mxu0 %v4883
        %v5155 = vpop.f32.mrf.mxu0
        %v5156 = vadd.f32 0.0, %v5155
        %v5157 = vpop.f32.mrf.mxu0
        %v5158 = vpop.f32.mrf.mxu0
        %v5159 = vadd.f32 0.0, %v5158
        %v5160 = vpop.f32.mrf.mxu0
        %5161 = vmatprep.mubr.bf16.mxu0 0
        %5162 = vmatmul.mubr.bf16.gmra.mxu0 %v4886
        %v5163 = vpop.f32.mrf.mxu0
        %v5164 = vadd.f32 0.0, %v5163
        %v5165 = vpop.f32.mrf.mxu0
        %v5166 = vpop.f32.mrf.mxu0
        %v5167 = vadd.f32 0.0, %v5166
        %v5168 = vpop.f32.mrf.mxu0
        %5169 = vmatprep.mubr.bf16.mxu0 0
        %5170 = vmatmul.mubr.bf16.gmra.mxu0 %v4889
        %v5171 = vpop.f32.mrf.mxu0
        %v5172 = vadd.f32 0.0, %v5171
        %v5173 = vpop.f32.mrf.mxu0
        %v5174 = vpop.f32.mrf.mxu0
        %v5175 = vadd.f32 0.0, %v5174
        %v5176 = vpop.f32.mrf.mxu0
        %5177 = vmatprep.mubr.bf16.mxu0 0
        %5178 = vmatmul.mubr.bf16.gmra.mxu0 %v4892
        %v5179 = vpop.f32.mrf.mxu0
        %v5180 = vadd.f32 0.0, %v5179
        %v5181 = vpop.f32.mrf.mxu0
        %v5182 = vpop.f32.mrf.mxu0
        %v5183 = vadd.f32 0.0, %v5182
        %v5184 = vpop.f32.mrf.mxu0
        %5185 = vdwg.mxu0
        %v5186 = vadd.f32 %v4636, %v4932
        %v5187 = vadd.f32 %v4637, %v4935
        %v5188 = vadd.f32 %v4638, %v4940
        %v5189 = vadd.f32 %v4639, %v4943
        %v5190 = vadd.f32 %v4640, %v4948
        %v5191 = vadd.f32 %v4641, %v4951
        %v5192 = vadd.f32 %v4642, %v4956
        %v5193 = vadd.f32 %v4643, %v4959
        %v5194 = vadd.f32 %v4644, %v4964
        %v5195 = vadd.f32 %v4645, %v4967
        %v5196 = vadd.f32 %v4646, %v4972
        %v5197 = vadd.f32 %v4647, %v4975
        %v5198 = vadd.f32 %v4648, %v4980
        %v5199 = vadd.f32 %v4649, %v4983
        %v5200 = vadd.f32 %v4650, %v4988
        %v5201 = vadd.f32 %v4651, %v4991
        %v5202 = vadd.f32 %v4652, %v4996
        %v5203 = vadd.f32 %v4653, %v4999
        %v5204 = vadd.f32 %v4654, %v5004
        %v5205 = vadd.f32 %v4655, %v5007
        %v5206 = vadd.f32 %v4656, %v5012
        %v5207 = vadd.f32 %v4657, %v5015
        %v5208 = vadd.f32 %v4658, %v5020
        %v5209 = vadd.f32 %v4659, %v5023
        %v5210 = vadd.f32 %v4660, %v5028
        %v5211 = vadd.f32 %v4661, %v5031
        %v5212 = vadd.f32 %v4662, %v5036
        %v5213 = vadd.f32 %v4663, %v5039
        %v5214 = vadd.f32 %v4664, %v5044
        %v5215 = vadd.f32 %v4665, %v5047
        %v5216 = vadd.f32 %v4666, %v5052
        %v5217 = vadd.f32 %v4667, %v5055
        %v5218 = vadd.f32 %v4668, %v5060
        %v5219 = vadd.f32 %v4669, %v5063
        %v5220 = vadd.f32 %v4670, %v5068
        %v5221 = vadd.f32 %v4671, %v5071
        %v5222 = vadd.f32 %v4672, %v5076
        %v5223 = vadd.f32 %v4673, %v5079
        %v5224 = vadd.f32 %v4674, %v5084
        %v5225 = vadd.f32 %v4675, %v5087
        %v5226 = vadd.f32 %v4676, %v5092
        %v5227 = vadd.f32 %v4677, %v5095
        %v5228 = vadd.f32 %v4678, %v5100
        %v5229 = vadd.f32 %v4679, %v5103
        %v5230 = vadd.f32 %v4680, %v5108
        %v5231 = vadd.f32 %v4681, %v5111
        %v5232 = vadd.f32 %v4682, %v5116
        %v5233 = vadd.f32 %v4683, %v5119
        %v5234 = vadd.f32 %v4684, %v5124
        %v5235 = vadd.f32 %v4685, %v5127
        %v5236 = vadd.f32 %v4686, %v5132
        %v5237 = vadd.f32 %v4687, %v5135
        %v5238 = vadd.f32 %v4688, %v5140
        %v5239 = vadd.f32 %v4689, %v5143
        %v5240 = vadd.f32 %v4690, %v5148
        %v5241 = vadd.f32 %v4691, %v5151
        %v5242 = vadd.f32 %v4692, %v5156
        %v5243 = vadd.f32 %v4693, %v5159
        %v5244 = vadd.f32 %v4694, %v5164
        %v5245 = vadd.f32 %v4695, %v5167
        %v5246 = vadd.f32 %v4696, %v5172
        %v5247 = vadd.f32 %v4697, %v5175
        %v5248 = vadd.f32 %v4698, %v5180
        %v5249 = vadd.f32 %v4699, %v5183
        %v5250 = vld [vmem:[%s2] sm:$0x1]
        %v5252 = vlaneseq
        %v5253 = vshrl.u32 %v5252, 7
        %v5254 = vsub.s32 0, %v5253
        %v5255 = vrot.slane %v5250, %v5254
        %v5257 = vadd.f32 %v5186, %v5255
        %v5258 = vadd.f32 %v5187, %v5255
        %v5259 = vadd.f32 %v5188, %v5255
        %v5260 = vadd.f32 %v5189, %v5255
        %v5261 = vadd.f32 %v5190, %v5255
        %v5262 = vadd.f32 %v5191, %v5255
        %v5263 = vadd.f32 %v5192, %v5255
        %v5264 = vadd.f32 %v5193, %v5255
        %v5265 = vadd.f32 %v5194, %v5255
        %v5266 = vadd.f32 %v5195, %v5255
        %v5267 = vadd.f32 %v5196, %v5255
        %v5268 = vadd.f32 %v5197, %v5255
        %v5269 = vadd.f32 %v5198, %v5255
        %v5270 = vadd.f32 %v5199, %v5255
        %v5271 = vadd.f32 %v5200, %v5255
        %v5272 = vadd.f32 %v5201, %v5255
        %v5273 = vadd.f32 %v5202, %v5255
        %v5274 = vadd.f32 %v5203, %v5255
        %v5275 = vadd.f32 %v5204, %v5255
        %v5276 = vadd.f32 %v5205, %v5255
        %v5277 = vadd.f32 %v5206, %v5255
        %v5278 = vadd.f32 %v5207, %v5255
        %v5279 = vadd.f32 %v5208, %v5255
        %v5280 = vadd.f32 %v5209, %v5255
        %v5281 = vadd.f32 %v5210, %v5255
        %v5282 = vadd.f32 %v5211, %v5255
        %v5283 = vadd.f32 %v5212, %v5255
        %v5284 = vadd.f32 %v5213, %v5255
        %v5285 = vadd.f32 %v5214, %v5255
        %v5286 = vadd.f32 %v5215, %v5255
        %v5287 = vadd.f32 %v5216, %v5255
        %v5288 = vadd.f32 %v5217, %v5255
        %v5289 = vadd.f32 %v5218, %v5255
        %v5290 = vadd.f32 %v5219, %v5255
        %v5291 = vadd.f32 %v5220, %v5255
        %v5292 = vadd.f32 %v5221, %v5255
        %v5293 = vadd.f32 %v5222, %v5255
        %v5294 = vadd.f32 %v5223, %v5255
        %v5295 = vadd.f32 %v5224, %v5255
        %v5296 = vadd.f32 %v5225, %v5255
        %v5297 = vadd.f32 %v5226, %v5255
        %v5298 = vadd.f32 %v5227, %v5255
        %v5299 = vadd.f32 %v5228, %v5255
        %v5300 = vadd.f32 %v5229, %v5255
        %v5301 = vadd.f32 %v5230, %v5255
        %v5302 = vadd.f32 %v5231, %v5255
        %v5303 = vadd.f32 %v5232, %v5255
        %v5304 = vadd.f32 %v5233, %v5255
        %v5305 = vadd.f32 %v5234, %v5255
        %v5306 = vadd.f32 %v5235, %v5255
        %v5307 = vadd.f32 %v5236, %v5255
        %v5308 = vadd.f32 %v5237, %v5255
        %v5309 = vadd.f32 %v5238, %v5255
        %v5310 = vadd.f32 %v5239, %v5255
        %v5311 = vadd.f32 %v5240, %v5255
        %v5312 = vadd.f32 %v5241, %v5255
        %v5313 = vadd.f32 %v5242, %v5255
        %v5314 = vadd.f32 %v5243, %v5255
        %v5315 = vadd.f32 %v5244, %v5255
        %v5316 = vadd.f32 %v5245, %v5255
        %v5317 = vadd.f32 %v5246, %v5255
        %v5318 = vadd.f32 %v5247, %v5255
        %v5319 = vadd.f32 %v5248, %v5255
        %v5320 = vadd.f32 %v5249, %v5255
        %v5321 = vmax.f32 %v5257, 0.0
        %v5322 = vmax.f32 %v5258, 0.0
        %v5323 = vmax.f32 %v5259, 0.0
        %v5324 = vmax.f32 %v5260, 0.0
        %v5325 = vmax.f32 %v5261, 0.0
        %v5326 = vmax.f32 %v5262, 0.0
        %v5327 = vmax.f32 %v5263, 0.0
        %v5328 = vmax.f32 %v5264, 0.0
        %v5329 = vmax.f32 %v5265, 0.0
        %v5330 = vmax.f32 %v5266, 0.0
        %v5331 = vmax.f32 %v5267, 0.0
        %v5332 = vmax.f32 %v5268, 0.0
        %v5333 = vmax.f32 %v5269, 0.0
        %v5334 = vmax.f32 %v5270, 0.0
        %v5335 = vmax.f32 %v5271, 0.0
        %v5336 = vmax.f32 %v5272, 0.0
        %v5337 = vmax.f32 %v5273, 0.0
        %v5338 = vmax.f32 %v5274, 0.0
        %v5339 = vmax.f32 %v5275, 0.0
        %v5340 = vmax.f32 %v5276, 0.0
        %v5341 = vmax.f32 %v5277, 0.0
        %v5342 = vmax.f32 %v5278, 0.0
        %v5343 = vmax.f32 %v5279, 0.0
        %v5344 = vmax.f32 %v5280, 0.0
        %v5345 = vmax.f32 %v5281, 0.0
        %v5346 = vmax.f32 %v5282, 0.0
        %v5347 = vmax.f32 %v5283, 0.0
        %v5348 = vmax.f32 %v5284, 0.0
        %v5349 = vmax.f32 %v5285, 0.0
        %v5350 = vmax.f32 %v5286, 0.0
        %v5351 = vmax.f32 %v5287, 0.0
        %v5352 = vmax.f32 %v5288, 0.0
        %v5353 = vmax.f32 %v5289, 0.0
        %v5354 = vmax.f32 %v5290, 0.0
        %v5355 = vmax.f32 %v5291, 0.0
        %v5356 = vmax.f32 %v5292, 0.0
        %v5357 = vmax.f32 %v5293, 0.0
        %v5358 = vmax.f32 %v5294, 0.0
        %v5359 = vmax.f32 %v5295, 0.0
        %v5360 = vmax.f32 %v5296, 0.0
        %v5361 = vmax.f32 %v5297, 0.0
        %v5362 = vmax.f32 %v5298, 0.0
        %v5363 = vmax.f32 %v5299, 0.0
        %v5364 = vmax.f32 %v5300, 0.0
        %v5365 = vmax.f32 %v5301, 0.0
        %v5366 = vmax.f32 %v5302, 0.0
        %v5367 = vmax.f32 %v5303, 0.0
        %v5368 = vmax.f32 %v5304, 0.0
        %v5369 = vmax.f32 %v5305, 0.0
        %v5370 = vmax.f32 %v5306, 0.0
        %v5371 = vmax.f32 %v5307, 0.0
        %v5372 = vmax.f32 %v5308, 0.0
        %v5373 = vmax.f32 %v5309, 0.0
        %v5374 = vmax.f32 %v5310, 0.0
        %v5375 = vmax.f32 %v5311, 0.0
        %v5376 = vmax.f32 %v5312, 0.0
        %v5377 = vmax.f32 %v5313, 0.0
        %v5378 = vmax.f32 %v5314, 0.0
        %v5379 = vmax.f32 %v5315, 0.0
        %v5380 = vmax.f32 %v5316, 0.0
        %v5381 = vmax.f32 %v5317, 0.0
        %v5382 = vmax.f32 %v5318, 0.0
        %v5383 = vmax.f32 %v5319, 0.0
        %v5384 = vmax.f32 %v5320, 0.0
        %s5385 = scalar_lea.vmem [#allocation2], 16
        %5386 = vst.msk [vmem:[%s5385 + $0x1] sm:$0xff] %vm230, %v5321
        %5387 = vst.msk [vmem:[%s5385 + $0x11] sm:$0xff] %vm230, %v5322
        %5388 = vst.msk [vmem:[%s5385 + $0x21] sm:$0xff] %vm230, %v5323
        %5389 = vst.msk [vmem:[%s5385 + $0x31] sm:$0xff] %vm230, %v5324
        %5390 = vst.msk [vmem:[%s5385 + $0x41] sm:$0xff] %vm230, %v5325
        %5391 = vst.msk [vmem:[%s5385 + $0x51] sm:$0xff] %vm230, %v5326
        %5392 = vst.msk [vmem:[%s5385 + $0x61] sm:$0xff] %vm230, %v5327
        %5393 = vst.msk [vmem:[%s5385 + $0x71] sm:$0xff] %vm230, %v5328
        %5394 = vst.msk [vmem:[%s5385 + $0xa1] sm:$0xff] %vm230, %v5329
        %5395 = vst.msk [vmem:[%s5385 + $0xb1] sm:$0xff] %vm230, %v5330
        %5396 = vst.msk [vmem:[%s5385 + $0xc1] sm:$0xff] %vm230, %v5331
        %5397 = vst.msk [vmem:[%s5385 + $0xd1] sm:$0xff] %vm230, %v5332
        %5398 = vst.msk [vmem:[%s5385 + $0xe1] sm:$0xff] %vm230, %v5333
        %5399 = vst.msk [vmem:[%s5385 + $0xf1] sm:$0xff] %vm230, %v5334
        %5400 = vst.msk [vmem:[%s5385 + $0x101] sm:$0xff] %vm230, %v5335
        %5401 = vst.msk [vmem:[%s5385 + $0x111] sm:$0xff] %vm230, %v5336
        %5402 = vst.msk [vmem:[%s5385 + $0x141] sm:$0xff] %vm230, %v5337
        %5403 = vst.msk [vmem:[%s5385 + $0x151] sm:$0xff] %vm230, %v5338
        %5404 = vst.msk [vmem:[%s5385 + $0x161] sm:$0xff] %vm230, %v5339
        %5405 = vst.msk [vmem:[%s5385 + $0x171] sm:$0xff] %vm230, %v5340
        %5406 = vst.msk [vmem:[%s5385 + $0x181] sm:$0xff] %vm230, %v5341
        %5407 = vst.msk [vmem:[%s5385 + $0x191] sm:$0xff] %vm230, %v5342
        %5408 = vst.msk [vmem:[%s5385 + $0x1a1] sm:$0xff] %vm230, %v5343
        %5409 = vst.msk [vmem:[%s5385 + $0x1b1] sm:$0xff] %vm230, %v5344
        %5410 = vst.msk [vmem:[%s5385 + $0x1e1] sm:$0xff] %vm230, %v5345
        %5411 = vst.msk [vmem:[%s5385 + $0x1f1] sm:$0xff] %vm230, %v5346
        %5412 = vst.msk [vmem:[%s5385 + $0x201] sm:$0xff] %vm230, %v5347
        %5413 = vst.msk [vmem:[%s5385 + $0x211] sm:$0xff] %vm230, %v5348
        %5414 = vst.msk [vmem:[%s5385 + $0x221] sm:$0xff] %vm230, %v5349
        %5415 = vst.msk [vmem:[%s5385 + $0x231] sm:$0xff] %vm230, %v5350
        %5416 = vst.msk [vmem:[%s5385 + $0x241] sm:$0xff] %vm230, %v5351
        %5417 = vst.msk [vmem:[%s5385 + $0x251] sm:$0xff] %vm230, %v5352
        %5418 = vst.msk [vmem:[%s5385 + $0x281] sm:$0xff] %vm230, %v5353
        %5419 = vst.msk [vmem:[%s5385 + $0x291] sm:$0xff] %vm230, %v5354
        %5420 = vst.msk [vmem:[%s5385 + $0x2a1] sm:$0xff] %vm230, %v5355
        %5421 = vst.msk [vmem:[%s5385 + $0x2b1] sm:$0xff] %vm230, %v5356
        %5422 = vst.msk [vmem:[%s5385 + $0x2c1] sm:$0xff] %vm230, %v5357
        %5423 = vst.msk [vmem:[%s5385 + $0x2d1] sm:$0xff] %vm230, %v5358
        %5424 = vst.msk [vmem:[%s5385 + $0x2e1] sm:$0xff] %vm230, %v5359
        %5425 = vst.msk [vmem:[%s5385 + $0x2f1] sm:$0xff] %vm230, %v5360
        %5426 = vst.msk [vmem:[%s5385 + $0x321] sm:$0xff] %vm230, %v5361
        %5427 = vst.msk [vmem:[%s5385 + $0x331] sm:$0xff] %vm230, %v5362
        %5428 = vst.msk [vmem:[%s5385 + $0x341] sm:$0xff] %vm230, %v5363
        %5429 = vst.msk [vmem:[%s5385 + $0x351] sm:$0xff] %vm230, %v5364
        %5430 = vst.msk [vmem:[%s5385 + $0x361] sm:$0xff] %vm230, %v5365
        %5431 = vst.msk [vmem:[%s5385 + $0x371] sm:$0xff] %vm230, %v5366
        %5432 = vst.msk [vmem:[%s5385 + $0x381] sm:$0xff] %vm230, %v5367
        %5433 = vst.msk [vmem:[%s5385 + $0x391] sm:$0xff] %vm230, %v5368
        %5434 = vst.msk [vmem:[%s5385 + $0x3c1] sm:$0xff] %vm230, %v5369
        %5435 = vst.msk [vmem:[%s5385 + $0x3d1] sm:$0xff] %vm230, %v5370
        %5436 = vst.msk [vmem:[%s5385 + $0x3e1] sm:$0xff] %vm230, %v5371
        %5437 = vst.msk [vmem:[%s5385 + $0x3f1] sm:$0xff] %vm230, %v5372
        %5438 = vst.msk [vmem:[%s5385 + $0x401] sm:$0xff] %vm230, %v5373
        %5439 = vst.msk [vmem:[%s5385 + $0x411] sm:$0xff] %vm230, %v5374
        %5440 = vst.msk [vmem:[%s5385 + $0x421] sm:$0xff] %vm230, %v5375
        %5441 = vst.msk [vmem:[%s5385 + $0x431] sm:$0xff] %vm230, %v5376
        %5442 = vst.msk [vmem:[%s5385 + $0x461] sm:$0xff] %vm230, %v5377
        %5443 = vst.msk [vmem:[%s5385 + $0x471] sm:$0xff] %vm230, %v5378
        %5444 = vst.msk [vmem:[%s5385 + $0x481] sm:$0xff] %vm230, %v5379
        %5445 = vst.msk [vmem:[%s5385 + $0x491] sm:$0xff] %vm230, %v5380
        %5446 = vst.msk [vmem:[%s5385 + $0x4a1] sm:$0xff] %vm230, %v5381
        %5447 = vst.msk [vmem:[%s5385 + $0x4b1] sm:$0xff] %vm230, %v5382
        %5448 = vst.msk [vmem:[%s5385 + $0x4c1] sm:$0xff] %vm230, %v5383
        %5449 = vst.msk [vmem:[%s5385 + $0x4d1] sm:$0xff] %vm230, %v5384
        %v5450 = vld [vmem:[#allocation2] sm:$0xff]
        %v5451 = vld [vmem:[#allocation2 + $0x10] sm:$0xff]
        %v5452 = vld [vmem:[#allocation2 + $0x20] sm:$0xff]
        %v5453 = vld [vmem:[#allocation2 + $0x30] sm:$0xff]
        %v5454 = vld [vmem:[#allocation2 + $0x40] sm:$0xff]
        %v5455 = vld [vmem:[#allocation2 + $0x50] sm:$0xff]
        %v5456 = vld [vmem:[#allocation2 + $0x60] sm:$0xff]
        %v5457 = vld [vmem:[#allocation2 + $0x70] sm:$0xff]
        %v5458 = vld [vmem:[#allocation2 + $0xa0] sm:$0xff]
        %v5459 = vld [vmem:[#allocation2 + $0xb0] sm:$0xff]
        %v5460 = vld [vmem:[#allocation2 + $0xc0] sm:$0xff]
        %v5461 = vld [vmem:[#allocation2 + $0xd0] sm:$0xff]
        %v5462 = vld [vmem:[#allocation2 + $0xe0] sm:$0xff]
        %v5463 = vld [vmem:[#allocation2 + $0xf0] sm:$0xff]
        %v5464 = vld [vmem:[#allocation2 + $0x100] sm:$0xff]
        %v5465 = vld [vmem:[#allocation2 + $0x110] sm:$0xff]
        %v5466 = vld [vmem:[#allocation2 + $0x140] sm:$0xff]
        %v5467 = vld [vmem:[#allocation2 + $0x150] sm:$0xff]
        %v5468 = vld [vmem:[#allocation2 + $0x160] sm:$0xff]
        %v5469 = vld [vmem:[#allocation2 + $0x170] sm:$0xff]
        %v5470 = vld [vmem:[#allocation2 + $0x180] sm:$0xff]
        %v5471 = vld [vmem:[#allocation2 + $0x190] sm:$0xff]
        %v5472 = vld [vmem:[#allocation2 + $0x1a0] sm:$0xff]
        %v5473 = vld [vmem:[#allocation2 + $0x1b0] sm:$0xff]
        %v5474 = vld [vmem:[#allocation2 + $0x1e0] sm:$0xff]
        %v5475 = vld [vmem:[#allocation2 + $0x1f0] sm:$0xff]
        %v5476 = vld [vmem:[#allocation2 + $0x200] sm:$0xff]
        %v5477 = vld [vmem:[#allocation2 + $0x210] sm:$0xff]
        %v5478 = vld [vmem:[#allocation2 + $0x220] sm:$0xff]
        %v5479 = vld [vmem:[#allocation2 + $0x230] sm:$0xff]
        %v5480 = vld [vmem:[#allocation2 + $0x240] sm:$0xff]
        %v5481 = vld [vmem:[#allocation2 + $0x250] sm:$0xff]
        %v5482 = vld [vmem:[#allocation2 + $0x280] sm:$0xff]
        %v5483 = vld [vmem:[#allocation2 + $0x290] sm:$0xff]
        %v5484 = vld [vmem:[#allocation2 + $0x2a0] sm:$0xff]
        %v5485 = vld [vmem:[#allocation2 + $0x2b0] sm:$0xff]
        %v5486 = vld [vmem:[#allocation2 + $0x2c0] sm:$0xff]
        %v5487 = vld [vmem:[#allocation2 + $0x2d0] sm:$0xff]
        %v5488 = vld [vmem:[#allocation2 + $0x2e0] sm:$0xff]
        %v5489 = vld [vmem:[#allocation2 + $0x2f0] sm:$0xff]
        %v5490 = vld [vmem:[#allocation2 + $0x320] sm:$0xff]
        %v5491 = vld [vmem:[#allocation2 + $0x330] sm:$0xff]
        %v5492 = vld [vmem:[#allocation2 + $0x340] sm:$0xff]
        %v5493 = vld [vmem:[#allocation2 + $0x350] sm:$0xff]
        %v5494 = vld [vmem:[#allocation2 + $0x360] sm:$0xff]
        %v5495 = vld [vmem:[#allocation2 + $0x370] sm:$0xff]
        %v5496 = vld [vmem:[#allocation2 + $0x380] sm:$0xff]
        %v5497 = vld [vmem:[#allocation2 + $0x390] sm:$0xff]
        %v5498 = vld [vmem:[#allocation2 + $0x3c0] sm:$0xff]
        %v5499 = vld [vmem:[#allocation2 + $0x3d0] sm:$0xff]
        %v5500 = vld [vmem:[#allocation2 + $0x3e0] sm:$0xff]
        %v5501 = vld [vmem:[#allocation2 + $0x3f0] sm:$0xff]
        %v5502 = vld [vmem:[#allocation2 + $0x400] sm:$0xff]
        %v5503 = vld [vmem:[#allocation2 + $0x410] sm:$0xff]
        %v5504 = vld [vmem:[#allocation2 + $0x420] sm:$0xff]
        %v5505 = vld [vmem:[#allocation2 + $0x430] sm:$0xff]
        %v5506 = vld [vmem:[#allocation2 + $0x460] sm:$0xff]
        %v5507 = vld [vmem:[#allocation2 + $0x470] sm:$0xff]
        %v5508 = vld [vmem:[#allocation2 + $0x480] sm:$0xff]
        %v5509 = vld [vmem:[#allocation2 + $0x490] sm:$0xff]
        %v5510 = vld [vmem:[#allocation2 + $0x4a0] sm:$0xff]
        %v5511 = vld [vmem:[#allocation2 + $0x4b0] sm:$0xff]
        %v5512 = vld [vmem:[#allocation2 + $0x4c0] sm:$0xff]
        %v5513 = vld [vmem:[#allocation2 + $0x4d0] sm:$0xff]
        %v5514 = vpack.c.bf16 %v5451, %v5450
        %v5515 = vpack.c.bf16 %v5453, %v5452
        %v5516 = vpack.c.bf16 %v5455, %v5454
        %v5517 = vpack.c.bf16 %v5457, %v5456
        %v5518 = vpack.c.bf16 %v5459, %v5458
        %v5519 = vpack.c.bf16 %v5461, %v5460
        %v5520 = vpack.c.bf16 %v5463, %v5462
        %v5521 = vpack.c.bf16 %v5465, %v5464
        %v5522 = vpack.c.bf16 %v5467, %v5466
        %v5523 = vpack.c.bf16 %v5469, %v5468
        %v5524 = vpack.c.bf16 %v5471, %v5470
        %v5525 = vpack.c.bf16 %v5473, %v5472
        %v5526 = vpack.c.bf16 %v5475, %v5474
        %v5527 = vpack.c.bf16 %v5477, %v5476
        %v5528 = vpack.c.bf16 %v5479, %v5478
        %v5529 = vpack.c.bf16 %v5481, %v5480
        %v5530 = vpack.c.bf16 %v5483, %v5482
        %v5531 = vpack.c.bf16 %v5485, %v5484
        %v5532 = vpack.c.bf16 %v5487, %v5486
        %v5533 = vpack.c.bf16 %v5489, %v5488
        %v5534 = vpack.c.bf16 %v5491, %v5490
        %v5535 = vpack.c.bf16 %v5493, %v5492
        %v5536 = vpack.c.bf16 %v5495, %v5494
        %v5537 = vpack.c.bf16 %v5497, %v5496
        %v5538 = vpack.c.bf16 %v5499, %v5498
        %v5539 = vpack.c.bf16 %v5501, %v5500
        %v5540 = vpack.c.bf16 %v5503, %v5502
        %v5541 = vpack.c.bf16 %v5505, %v5504
        %v5542 = vpack.c.bf16 %v5507, %v5506
        %v5543 = vpack.c.bf16 %v5509, %v5508
        %v5544 = vpack.c.bf16 %v5511, %v5510
        %v5545 = vpack.c.bf16 %v5513, %v5512
        %v5546 = vld [vmem:[%s3] sm:$0xf]
        %v5547 = vld [vmem:[#allocation2 + $0x1] sm:$0xff]
        %v5548 = vld [vmem:[#allocation2 + $0x11] sm:$0xff]
        %v5549 = vld [vmem:[#allocation2 + $0x21] sm:$0xff]
        %v5550 = vld [vmem:[#allocation2 + $0x31] sm:$0xff]
        %v5551 = vld [vmem:[#allocation2 + $0x41] sm:$0xff]
        %v5552 = vld [vmem:[#allocation2 + $0x51] sm:$0xff]
        %v5553 = vld [vmem:[#allocation2 + $0x61] sm:$0xff]
        %v5554 = vld [vmem:[#allocation2 + $0x71] sm:$0xff]
        %v5555 = vld [vmem:[#allocation2 + $0xa1] sm:$0xff]
        %v5556 = vld [vmem:[#allocation2 + $0xb1] sm:$0xff]
        %v5557 = vld [vmem:[#allocation2 + $0xc1] sm:$0xff]
        %v5558 = vld [vmem:[#allocation2 + $0xd1] sm:$0xff]
        %v5559 = vld [vmem:[#allocation2 + $0xe1] sm:$0xff]
        %v5560 = vld [vmem:[#allocation2 + $0xf1] sm:$0xff]
        %v5561 = vld [vmem:[#allocation2 + $0x101] sm:$0xff]
        %v5562 = vld [vmem:[#allocation2 + $0x111] sm:$0xff]
        %v5563 = vld [vmem:[#allocation2 + $0x141] sm:$0xff]
        %v5564 = vld [vmem:[#allocation2 + $0x151] sm:$0xff]
        %v5565 = vld [vmem:[#allocation2 + $0x161] sm:$0xff]
        %v5566 = vld [vmem:[#allocation2 + $0x171] sm:$0xff]
        %v5567 = vld [vmem:[#allocation2 + $0x181] sm:$0xff]
        %v5568 = vld [vmem:[#allocation2 + $0x191] sm:$0xff]
        %v5569 = vld [vmem:[#allocation2 + $0x1a1] sm:$0xff]
        %v5570 = vld [vmem:[#allocation2 + $0x1b1] sm:$0xff]
        %v5571 = vld [vmem:[#allocation2 + $0x1e1] sm:$0xff]
        %v5572 = vld [vmem:[#allocation2 + $0x1f1] sm:$0xff]
        %v5573 = vld [vmem:[#allocation2 + $0x201] sm:$0xff]
        %v5574 = vld [vmem:[#allocation2 + $0x211] sm:$0xff]
        %v5575 = vld [vmem:[#allocation2 + $0x221] sm:$0xff]
        %v5576 = vld [vmem:[#allocation2 + $0x231] sm:$0xff]
        %v5577 = vld [vmem:[#allocation2 + $0x241] sm:$0xff]
        %v5578 = vld [vmem:[#allocation2 + $0x251] sm:$0xff]
        %v5579 = vld [vmem:[#allocation2 + $0x281] sm:$0xff]
        %v5580 = vld [vmem:[#allocation2 + $0x291] sm:$0xff]
        %v5581 = vld [vmem:[#allocation2 + $0x2a1] sm:$0xff]
        %v5582 = vld [vmem:[#allocation2 + $0x2b1] sm:$0xff]
        %v5583 = vld [vmem:[#allocation2 + $0x2c1] sm:$0xff]
        %v5584 = vld [vmem:[#allocation2 + $0x2d1] sm:$0xff]
        %v5585 = vld [vmem:[#allocation2 + $0x2e1] sm:$0xff]
        %v5586 = vld [vmem:[#allocation2 + $0x2f1] sm:$0xff]
        %v5587 = vld [vmem:[#allocation2 + $0x321] sm:$0xff]
        %v5588 = vld [vmem:[#allocation2 + $0x331] sm:$0xff]
        %v5589 = vld [vmem:[#allocation2 + $0x341] sm:$0xff]
        %v5590 = vld [vmem:[#allocation2 + $0x351] sm:$0xff]
        %v5591 = vld [vmem:[#allocation2 + $0x361] sm:$0xff]
        %v5592 = vld [vmem:[#allocation2 + $0x371] sm:$0xff]
        %v5593 = vld [vmem:[#allocation2 + $0x381] sm:$0xff]
        %v5594 = vld [vmem:[#allocation2 + $0x391] sm:$0xff]
        %v5595 = vld [vmem:[#allocation2 + $0x3c1] sm:$0xff]
        %v5596 = vld [vmem:[#allocation2 + $0x3d1] sm:$0xff]
        %v5597 = vld [vmem:[#allocation2 + $0x3e1] sm:$0xff]
        %v5598 = vld [vmem:[#allocation2 + $0x3f1] sm:$0xff]
        %v5599 = vld [vmem:[#allocation2 + $0x401] sm:$0xff]
        %v5600 = vld [vmem:[#allocation2 + $0x411] sm:$0xff]
        %v5601 = vld [vmem:[#allocation2 + $0x421] sm:$0xff]
        %v5602 = vld [vmem:[#allocation2 + $0x431] sm:$0xff]
        %v5603 = vld [vmem:[#allocation2 + $0x461] sm:$0xff]
        %v5604 = vld [vmem:[#allocation2 + $0x471] sm:$0xff]
        %v5605 = vld [vmem:[#allocation2 + $0x481] sm:$0xff]
        %v5606 = vld [vmem:[#allocation2 + $0x491] sm:$0xff]
        %v5607 = vld [vmem:[#allocation2 + $0x4a1] sm:$0xff]
        %v5608 = vld [vmem:[#allocation2 + $0x4b1] sm:$0xff]
        %v5609 = vld [vmem:[#allocation2 + $0x4c1] sm:$0xff]
        %v5610 = vld [vmem:[#allocation2 + $0x4d1] sm:$0xff]
        %v5611 = vpack.c.bf16 %v5548, %v5547
        %v5612 = vpack.c.bf16 %v5550, %v5549
        %v5613 = vpack.c.bf16 %v5552, %v5551
        %v5614 = vpack.c.bf16 %v5554, %v5553
        %v5615 = vpack.c.bf16 %v5556, %v5555
        %v5616 = vpack.c.bf16 %v5558, %v5557
        %v5617 = vpack.c.bf16 %v5560, %v5559
        %v5618 = vpack.c.bf16 %v5562, %v5561
        %v5619 = vpack.c.bf16 %v5564, %v5563
        %v5620 = vpack.c.bf16 %v5566, %v5565
        %v5621 = vpack.c.bf16 %v5568, %v5567
        %v5622 = vpack.c.bf16 %v5570, %v5569
        %v5623 = vpack.c.bf16 %v5572, %v5571
        %v5624 = vpack.c.bf16 %v5574, %v5573
        %v5625 = vpack.c.bf16 %v5576, %v5575
        %v5626 = vpack.c.bf16 %v5578, %v5577
        %v5627 = vpack.c.bf16 %v5580, %v5579
        %v5628 = vpack.c.bf16 %v5582, %v5581
        %v5629 = vpack.c.bf16 %v5584, %v5583
        %v5630 = vpack.c.bf16 %v5586, %v5585
        %v5631 = vpack.c.bf16 %v5588, %v5587
        %v5632 = vpack.c.bf16 %v5590, %v5589
        %v5633 = vpack.c.bf16 %v5592, %v5591
        %v5634 = vpack.c.bf16 %v5594, %v5593
        %v5635 = vpack.c.bf16 %v5596, %v5595
        %v5636 = vpack.c.bf16 %v5598, %v5597
        %v5637 = vpack.c.bf16 %v5600, %v5599
        %v5638 = vpack.c.bf16 %v5602, %v5601
        %v5639 = vpack.c.bf16 %v5604, %v5603
        %v5640 = vpack.c.bf16 %v5606, %v5605
        %v5641 = vpack.c.bf16 %v5608, %v5607
        %v5642 = vpack.c.bf16 %v5610, %v5609
        %s5643 = scalar_lea.vmem %s3, 4
        %v5644 = vld [vmem:[%s5643] sm:$0xf]
        %v5646 = vsel %vm230, %v5611, 0
        %v5649 = vsel %vm230, %v5612, 0
        %v5652 = vsel %vm230, %v5613, 0
        %v5655 = vsel %vm230, %v5614, 0
        %v5658 = vsel %vm230, %v5615, 0
        %v5661 = vsel %vm230, %v5616, 0
        %v5664 = vsel %vm230, %v5617, 0
        %v5667 = vsel %vm230, %v5618, 0
        %v5670 = vsel %vm230, %v5619, 0
        %v5673 = vsel %vm230, %v5620, 0
        %v5676 = vsel %vm230, %v5621, 0
        %v5679 = vsel %vm230, %v5622, 0
        %v5682 = vsel %vm230, %v5623, 0
        %v5685 = vsel %vm230, %v5624, 0
        %v5688 = vsel %vm230, %v5625, 0
        %v5691 = vsel %vm230, %v5626, 0
        %v5694 = vsel %vm230, %v5627, 0
        %v5697 = vsel %vm230, %v5628, 0
        %v5700 = vsel %vm230, %v5629, 0
        %v5703 = vsel %vm230, %v5630, 0
        %v5706 = vsel %vm230, %v5631, 0
        %v5709 = vsel %vm230, %v5632, 0
        %v5712 = vsel %vm230, %v5633, 0
        %v5715 = vsel %vm230, %v5634, 0
        %v5718 = vsel %vm230, %v5635, 0
        %v5721 = vsel %vm230, %v5636, 0
        %v5724 = vsel %vm230, %v5637, 0
        %v5727 = vsel %vm230, %v5638, 0
        %v5730 = vsel %vm230, %v5639, 0
        %v5733 = vsel %vm230, %v5640, 0
        %v5736 = vsel %vm230, %v5641, 0
        %v5739 = vsel %vm230, %v5642, 0
        %v5742 = vsel %vm717, %v5644, 0
        %5744 = vmatprep.subr.bf16.mxu0 0
        %5745 = vmatpush1.bf16.msra.mxu0 0
        %5746 = vmatprep.subr.bf16.mxu0 0
        %5747 = vmatpush1.bf16.msra.mxu0 0
        %5748 = vmatprep.subr.bf16.mxu0 0
        %5749 = vmatpush1.bf16.msra.mxu0 0
        %5750 = vmatprep.subr.bf16.mxu0 0
        %5751 = vmatpush1.bf16.msra.mxu0 0
        %5752 = vmatprep.subr.bf16.mxu0 0
        %5753 = vmatpush1.bf16.msra.mxu0 0
        %5754 = vmatprep.subr.bf16.mxu0 0
        %5755 = vmatpush1.bf16.msra.mxu0 0
        %5756 = vmatprep.subr.bf16.mxu0 0
        %5757 = vmatpush1.bf16.msra.mxu0 0
        %5758 = vmatprep.subr.bf16.mxu0 0
        %5759 = vmatpush1.bf16.msra.mxu0 %v5742
        %5760 = vmatprep.subr.bf16.mxu0 0
        %5761 = vmatpush2.bf16.msra.mxu0 0
        %5762 = vmatprep.subr.bf16.mxu0 0
        %5763 = vmatpush2.bf16.msra.mxu0 0
        %5764 = vmatprep.subr.bf16.mxu0 0
        %5765 = vmatpush2.bf16.msra.mxu0 0
        %5766 = vmatprep.subr.bf16.mxu0 0
        %5767 = vmatpush2.bf16.msra.mxu0 0
        %5768 = vmatprep.subr.bf16.mxu0 0
        %5769 = vmatpush2.bf16.msra.mxu0 0
        %5770 = vmatprep.subr.bf16.mxu0 0
        %5771 = vmatpush2.bf16.msra.mxu0 0
        %5772 = vmatprep.subr.bf16.mxu0 0
        %5773 = vmatpush2.bf16.msra.mxu0 0
        %5774 = vmatprep.subr.bf16.mxu0 0
        %5775 = vmatpush2.bf16.msra.mxu0 0
        %5776 = vmatprep.mubr.bf16.mxu0 0
        %5777 = vmatmul.mubr.bf16.gmra.mxu0 %v5646
        %v5778 = vpop.f32.mrf.mxu0
        %v5779 = vadd.f32 0.0, %v5778
        %v5780 = vpop.f32.mrf.mxu0
        %v5781 = vpop.f32.mrf.mxu0
        %v5782 = vadd.f32 0.0, %v5781
        %v5783 = vpop.f32.mrf.mxu0
        %5784 = vmatprep.mubr.bf16.mxu0 0
        %5785 = vmatmul.mubr.bf16.gmra.mxu0 %v5649
        %v5786 = vpop.f32.mrf.mxu0
        %v5787 = vadd.f32 0.0, %v5786
        %v5788 = vpop.f32.mrf.mxu0
        %v5789 = vpop.f32.mrf.mxu0
        %v5790 = vadd.f32 0.0, %v5789
        %v5791 = vpop.f32.mrf.mxu0
        %5792 = vmatprep.mubr.bf16.mxu0 0
        %5793 = vmatmul.mubr.bf16.gmra.mxu0 %v5652
        %v5794 = vpop.f32.mrf.mxu0
        %v5795 = vadd.f32 0.0, %v5794
        %v5796 = vpop.f32.mrf.mxu0
        %v5797 = vpop.f32.mrf.mxu0
        %v5798 = vadd.f32 0.0, %v5797
        %v5799 = vpop.f32.mrf.mxu0
        %5800 = vmatprep.mubr.bf16.mxu0 0
        %5801 = vmatmul.mubr.bf16.gmra.mxu0 %v5655
        %v5802 = vpop.f32.mrf.mxu0
        %v5803 = vadd.f32 0.0, %v5802
        %v5804 = vpop.f32.mrf.mxu0
        %v5805 = vpop.f32.mrf.mxu0
        %v5806 = vadd.f32 0.0, %v5805
        %v5807 = vpop.f32.mrf.mxu0
        %5808 = vmatprep.mubr.bf16.mxu0 0
        %5809 = vmatmul.mubr.bf16.gmra.mxu0 %v5658
        %v5810 = vpop.f32.mrf.mxu0
        %v5811 = vadd.f32 0.0, %v5810
        %v5812 = vpop.f32.mrf.mxu0
        %v5813 = vpop.f32.mrf.mxu0
        %v5814 = vadd.f32 0.0, %v5813
        %v5815 = vpop.f32.mrf.mxu0
        %5816 = vmatprep.mubr.bf16.mxu0 0
        %5817 = vmatmul.mubr.bf16.gmra.mxu0 %v5661
        %v5818 = vpop.f32.mrf.mxu0
        %v5819 = vadd.f32 0.0, %v5818
        %v5820 = vpop.f32.mrf.mxu0
        %v5821 = vpop.f32.mrf.mxu0
        %v5822 = vadd.f32 0.0, %v5821
        %v5823 = vpop.f32.mrf.mxu0
        %5824 = vmatprep.mubr.bf16.mxu0 0
        %5825 = vmatmul.mubr.bf16.gmra.mxu0 %v5664
        %v5826 = vpop.f32.mrf.mxu0
        %v5827 = vadd.f32 0.0, %v5826
        %v5828 = vpop.f32.mrf.mxu0
        %v5829 = vpop.f32.mrf.mxu0
        %v5830 = vadd.f32 0.0, %v5829
        %v5831 = vpop.f32.mrf.mxu0
        %5832 = vmatprep.mubr.bf16.mxu0 0
        %5833 = vmatmul.mubr.bf16.gmra.mxu0 %v5667
        %v5834 = vpop.f32.mrf.mxu0
        %v5835 = vadd.f32 0.0, %v5834
        %v5836 = vpop.f32.mrf.mxu0
        %v5837 = vpop.f32.mrf.mxu0
        %v5838 = vadd.f32 0.0, %v5837
        %v5839 = vpop.f32.mrf.mxu0
        %5840 = vmatprep.mubr.bf16.mxu0 0
        %5841 = vmatmul.mubr.bf16.gmra.mxu0 %v5670
        %v5842 = vpop.f32.mrf.mxu0
        %v5843 = vadd.f32 0.0, %v5842
        %v5844 = vpop.f32.mrf.mxu0
        %v5845 = vpop.f32.mrf.mxu0
        %v5846 = vadd.f32 0.0, %v5845
        %v5847 = vpop.f32.mrf.mxu0
        %5848 = vmatprep.mubr.bf16.mxu0 0
        %5849 = vmatmul.mubr.bf16.gmra.mxu0 %v5673
        %v5850 = vpop.f32.mrf.mxu0
        %v5851 = vadd.f32 0.0, %v5850
        %v5852 = vpop.f32.mrf.mxu0
        %v5853 = vpop.f32.mrf.mxu0
        %v5854 = vadd.f32 0.0, %v5853
        %v5855 = vpop.f32.mrf.mxu0
        %5856 = vmatprep.mubr.bf16.mxu0 0
        %5857 = vmatmul.mubr.bf16.gmra.mxu0 %v5676
        %v5858 = vpop.f32.mrf.mxu0
        %v5859 = vadd.f32 0.0, %v5858
        %v5860 = vpop.f32.mrf.mxu0
        %v5861 = vpop.f32.mrf.mxu0
        %v5862 = vadd.f32 0.0, %v5861
        %v5863 = vpop.f32.mrf.mxu0
        %5864 = vmatprep.mubr.bf16.mxu0 0
        %5865 = vmatmul.mubr.bf16.gmra.mxu0 %v5679
        %v5866 = vpop.f32.mrf.mxu0
        %v5867 = vadd.f32 0.0, %v5866
        %v5868 = vpop.f32.mrf.mxu0
        %v5869 = vpop.f32.mrf.mxu0
        %v5870 = vadd.f32 0.0, %v5869
        %v5871 = vpop.f32.mrf.mxu0
        %5872 = vmatprep.mubr.bf16.mxu0 0
        %5873 = vmatmul.mubr.bf16.gmra.mxu0 %v5682
        %v5874 = vpop.f32.mrf.mxu0
        %v5875 = vadd.f32 0.0, %v5874
        %v5876 = vpop.f32.mrf.mxu0
        %v5877 = vpop.f32.mrf.mxu0
        %v5878 = vadd.f32 0.0, %v5877
        %v5879 = vpop.f32.mrf.mxu0
        %5880 = vmatprep.mubr.bf16.mxu0 0
        %5881 = vmatmul.mubr.bf16.gmra.mxu0 %v5685
        %v5882 = vpop.f32.mrf.mxu0
        %v5883 = vadd.f32 0.0, %v5882
        %v5884 = vpop.f32.mrf.mxu0
        %v5885 = vpop.f32.mrf.mxu0
        %v5886 = vadd.f32 0.0, %v5885
        %v5887 = vpop.f32.mrf.mxu0
        %5888 = vmatprep.mubr.bf16.mxu0 0
        %5889 = vmatmul.mubr.bf16.gmra.mxu0 %v5688
        %v5890 = vpop.f32.mrf.mxu0
        %v5891 = vadd.f32 0.0, %v5890
        %v5892 = vpop.f32.mrf.mxu0
        %v5893 = vpop.f32.mrf.mxu0
        %v5894 = vadd.f32 0.0, %v5893
        %v5895 = vpop.f32.mrf.mxu0
        %5896 = vmatprep.mubr.bf16.mxu0 0
        %5897 = vmatmul.mubr.bf16.gmra.mxu0 %v5691
        %v5898 = vpop.f32.mrf.mxu0
        %v5899 = vadd.f32 0.0, %v5898
        %v5900 = vpop.f32.mrf.mxu0
        %v5901 = vpop.f32.mrf.mxu0
        %v5902 = vadd.f32 0.0, %v5901
        %v5903 = vpop.f32.mrf.mxu0
        %5904 = vmatprep.mubr.bf16.mxu0 0
        %5905 = vmatmul.mubr.bf16.gmra.mxu0 %v5694
        %v5906 = vpop.f32.mrf.mxu0
        %v5907 = vadd.f32 0.0, %v5906
        %v5908 = vpop.f32.mrf.mxu0
        %v5909 = vpop.f32.mrf.mxu0
        %v5910 = vadd.f32 0.0, %v5909
        %v5911 = vpop.f32.mrf.mxu0
        %5912 = vmatprep.mubr.bf16.mxu0 0
        %5913 = vmatmul.mubr.bf16.gmra.mxu0 %v5697
        %v5914 = vpop.f32.mrf.mxu0
        %v5915 = vadd.f32 0.0, %v5914
        %v5916 = vpop.f32.mrf.mxu0
        %v5917 = vpop.f32.mrf.mxu0
        %v5918 = vadd.f32 0.0, %v5917
        %v5919 = vpop.f32.mrf.mxu0
        %5920 = vmatprep.mubr.bf16.mxu0 0
        %5921 = vmatmul.mubr.bf16.gmra.mxu0 %v5700
        %v5922 = vpop.f32.mrf.mxu0
        %v5923 = vadd.f32 0.0, %v5922
        %v5924 = vpop.f32.mrf.mxu0
        %v5925 = vpop.f32.mrf.mxu0
        %v5926 = vadd.f32 0.0, %v5925
        %v5927 = vpop.f32.mrf.mxu0
        %5928 = vmatprep.mubr.bf16.mxu0 0
        %5929 = vmatmul.mubr.bf16.gmra.mxu0 %v5703
        %v5930 = vpop.f32.mrf.mxu0
        %v5931 = vadd.f32 0.0, %v5930
        %v5932 = vpop.f32.mrf.mxu0
        %v5933 = vpop.f32.mrf.mxu0
        %v5934 = vadd.f32 0.0, %v5933
        %v5935 = vpop.f32.mrf.mxu0
        %5936 = vmatprep.mubr.bf16.mxu0 0
        %5937 = vmatmul.mubr.bf16.gmra.mxu0 %v5706
        %v5938 = vpop.f32.mrf.mxu0
        %v5939 = vadd.f32 0.0, %v5938
        %v5940 = vpop.f32.mrf.mxu0
        %v5941 = vpop.f32.mrf.mxu0
        %v5942 = vadd.f32 0.0, %v5941
        %v5943 = vpop.f32.mrf.mxu0
        %5944 = vmatprep.mubr.bf16.mxu0 0
        %5945 = vmatmul.mubr.bf16.gmra.mxu0 %v5709
        %v5946 = vpop.f32.mrf.mxu0
        %v5947 = vadd.f32 0.0, %v5946
        %v5948 = vpop.f32.mrf.mxu0
        %v5949 = vpop.f32.mrf.mxu0
        %v5950 = vadd.f32 0.0, %v5949
        %v5951 = vpop.f32.mrf.mxu0
        %5952 = vmatprep.mubr.bf16.mxu0 0
        %5953 = vmatmul.mubr.bf16.gmra.mxu0 %v5712
        %v5954 = vpop.f32.mrf.mxu0
        %v5955 = vadd.f32 0.0, %v5954
        %v5956 = vpop.f32.mrf.mxu0
        %v5957 = vpop.f32.mrf.mxu0
        %v5958 = vadd.f32 0.0, %v5957
        %v5959 = vpop.f32.mrf.mxu0
        %5960 = vmatprep.mubr.bf16.mxu0 0
        %5961 = vmatmul.mubr.bf16.gmra.mxu0 %v5715
        %v5962 = vpop.f32.mrf.mxu0
        %v5963 = vadd.f32 0.0, %v5962
        %v5964 = vpop.f32.mrf.mxu0
        %v5965 = vpop.f32.mrf.mxu0
        %v5966 = vadd.f32 0.0, %v5965
        %v5967 = vpop.f32.mrf.mxu0
        %5968 = vmatprep.mubr.bf16.mxu0 0
        %5969 = vmatmul.mubr.bf16.gmra.mxu0 %v5718
        %v5970 = vpop.f32.mrf.mxu0
        %v5971 = vadd.f32 0.0, %v5970
        %v5972 = vpop.f32.mrf.mxu0
        %v5973 = vpop.f32.mrf.mxu0
        %v5974 = vadd.f32 0.0, %v5973
        %v5975 = vpop.f32.mrf.mxu0
        %5976 = vmatprep.mubr.bf16.mxu0 0
        %5977 = vmatmul.mubr.bf16.gmra.mxu0 %v5721
        %v5978 = vpop.f32.mrf.mxu0
        %v5979 = vadd.f32 0.0, %v5978
        %v5980 = vpop.f32.mrf.mxu0
        %v5981 = vpop.f32.mrf.mxu0
        %v5982 = vadd.f32 0.0, %v5981
        %v5983 = vpop.f32.mrf.mxu0
        %5984 = vmatprep.mubr.bf16.mxu0 0
        %5985 = vmatmul.mubr.bf16.gmra.mxu0 %v5724
        %v5986 = vpop.f32.mrf.mxu0
        %v5987 = vadd.f32 0.0, %v5986
        %v5988 = vpop.f32.mrf.mxu0
        %v5989 = vpop.f32.mrf.mxu0
        %v5990 = vadd.f32 0.0, %v5989
        %v5991 = vpop.f32.mrf.mxu0
        %5992 = vmatprep.mubr.bf16.mxu0 0
        %5993 = vmatmul.mubr.bf16.gmra.mxu0 %v5727
        %v5994 = vpop.f32.mrf.mxu0
        %v5995 = vadd.f32 0.0, %v5994
        %v5996 = vpop.f32.mrf.mxu0
        %v5997 = vpop.f32.mrf.mxu0
        %v5998 = vadd.f32 0.0, %v5997
        %v5999 = vpop.f32.mrf.mxu0
        %6000 = vmatprep.mubr.bf16.mxu0 0
        %6001 = vmatmul.mubr.bf16.gmra.mxu0 %v5730
        %v6002 = vpop.f32.mrf.mxu0
        %v6003 = vadd.f32 0.0, %v6002
        %v6004 = vpop.f32.mrf.mxu0
        %v6005 = vpop.f32.mrf.mxu0
        %v6006 = vadd.f32 0.0, %v6005
        %v6007 = vpop.f32.mrf.mxu0
        %6008 = vmatprep.mubr.bf16.mxu0 0
        %6009 = vmatmul.mubr.bf16.gmra.mxu0 %v5733
        %v6010 = vpop.f32.mrf.mxu0
        %v6011 = vadd.f32 0.0, %v6010
        %v6012 = vpop.f32.mrf.mxu0
        %v6013 = vpop.f32.mrf.mxu0
        %v6014 = vadd.f32 0.0, %v6013
        %v6015 = vpop.f32.mrf.mxu0
        %6016 = vmatprep.mubr.bf16.mxu0 0
        %6017 = vmatmul.mubr.bf16.gmra.mxu0 %v5736
        %v6018 = vpop.f32.mrf.mxu0
        %v6019 = vadd.f32 0.0, %v6018
        %v6020 = vpop.f32.mrf.mxu0
        %v6021 = vpop.f32.mrf.mxu0
        %v6022 = vadd.f32 0.0, %v6021
        %v6023 = vpop.f32.mrf.mxu0
        %6024 = vmatprep.mubr.bf16.mxu0 0
        %6025 = vmatmul.mubr.bf16.gmra.mxu0 %v5739
        %v6026 = vpop.f32.mrf.mxu0
        %v6027 = vadd.f32 0.0, %v6026
        %v6028 = vpop.f32.mrf.mxu0
        %v6029 = vpop.f32.mrf.mxu0
        %v6030 = vadd.f32 0.0, %v6029
        %v6031 = vpop.f32.mrf.mxu0
        %6032 = vdwg.mxu0
        %v6034 = vsel %vm230, %v5514, 0
        %v6037 = vsel %vm230, %v5515, 0
        %v6040 = vsel %vm230, %v5516, 0
        %v6043 = vsel %vm230, %v5517, 0
        %v6046 = vsel %vm230, %v5518, 0
        %v6049 = vsel %vm230, %v5519, 0
        %v6052 = vsel %vm230, %v5520, 0
        %v6055 = vsel %vm230, %v5521, 0
        %v6058 = vsel %vm230, %v5522, 0
        %v6061 = vsel %vm230, %v5523, 0
        %v6064 = vsel %vm230, %v5524, 0
        %v6067 = vsel %vm230, %v5525, 0
        %v6070 = vsel %vm230, %v5526, 0
        %v6073 = vsel %vm230, %v5527, 0
        %v6076 = vsel %vm230, %v5528, 0
        %v6079 = vsel %vm230, %v5529, 0
        %v6082 = vsel %vm230, %v5530, 0
        %v6085 = vsel %vm230, %v5531, 0
        %v6088 = vsel %vm230, %v5532, 0
        %v6091 = vsel %vm230, %v5533, 0
        %v6094 = vsel %vm230, %v5534, 0
        %v6097 = vsel %vm230, %v5535, 0
        %v6100 = vsel %vm230, %v5536, 0
        %v6103 = vsel %vm230, %v5537, 0
        %v6106 = vsel %vm230, %v5538, 0
        %v6109 = vsel %vm230, %v5539, 0
        %v6112 = vsel %vm230, %v5540, 0
        %v6115 = vsel %vm230, %v5541, 0
        %v6118 = vsel %vm230, %v5542, 0
        %v6121 = vsel %vm230, %v5543, 0
        %v6124 = vsel %vm230, %v5544, 0
        %v6127 = vsel %vm230, %v5545, 0
        %v6130 = vsel %vm717, %v5546, 0
        %6132 = vmatprep.subr.bf16.mxu0 0
        %6133 = vmatpush1.bf16.msra.mxu0 0
        %6134 = vmatprep.subr.bf16.mxu0 0
        %6135 = vmatpush1.bf16.msra.mxu0 0
        %6136 = vmatprep.subr.bf16.mxu0 0
        %6137 = vmatpush1.bf16.msra.mxu0 0
        %6138 = vmatprep.subr.bf16.mxu0 0
        %6139 = vmatpush1.bf16.msra.mxu0 0
        %6140 = vmatprep.subr.bf16.mxu0 0
        %6141 = vmatpush1.bf16.msra.mxu0 0
        %6142 = vmatprep.subr.bf16.mxu0 0
        %6143 = vmatpush1.bf16.msra.mxu0 0
        %6144 = vmatprep.subr.bf16.mxu0 0
        %6145 = vmatpush1.bf16.msra.mxu0 0
        %6146 = vmatprep.subr.bf16.mxu0 0
        %6147 = vmatpush1.bf16.msra.mxu0 %v6130
        %6148 = vmatprep.subr.bf16.mxu0 0
        %6149 = vmatpush2.bf16.msra.mxu0 0
        %6150 = vmatprep.subr.bf16.mxu0 0
        %6151 = vmatpush2.bf16.msra.mxu0 0
        %6152 = vmatprep.subr.bf16.mxu0 0
        %6153 = vmatpush2.bf16.msra.mxu0 0
        %6154 = vmatprep.subr.bf16.mxu0 0
        %6155 = vmatpush2.bf16.msra.mxu0 0
        %6156 = vmatprep.subr.bf16.mxu0 0
        %6157 = vmatpush2.bf16.msra.mxu0 0
        %6158 = vmatprep.subr.bf16.mxu0 0
        %6159 = vmatpush2.bf16.msra.mxu0 0
        %6160 = vmatprep.subr.bf16.mxu0 0
        %6161 = vmatpush2.bf16.msra.mxu0 0
        %6162 = vmatprep.subr.bf16.mxu0 0
        %6163 = vmatpush2.bf16.msra.mxu0 0
        %6164 = vmatprep.mubr.bf16.mxu0 0
        %6165 = vmatmul.mubr.bf16.gmra.mxu0 %v6034
        %v6166 = vpop.f32.mrf.mxu0
        %v6167 = vadd.f32 %v5779, %v6166
        %v6168 = vpop.f32.mrf.mxu0
        %v6169 = vpop.f32.mrf.mxu0
        %v6170 = vadd.f32 %v5782, %v6169
        %v6171 = vpop.f32.mrf.mxu0
        %6172 = vmatprep.mubr.bf16.mxu0 0
        %6173 = vmatmul.mubr.bf16.gmra.mxu0 %v6037
        %v6174 = vpop.f32.mrf.mxu0
        %v6175 = vadd.f32 %v5787, %v6174
        %v6176 = vpop.f32.mrf.mxu0
        %v6177 = vpop.f32.mrf.mxu0
        %v6178 = vadd.f32 %v5790, %v6177
        %v6179 = vpop.f32.mrf.mxu0
        %6180 = vmatprep.mubr.bf16.mxu0 0
        %6181 = vmatmul.mubr.bf16.gmra.mxu0 %v6040
        %v6182 = vpop.f32.mrf.mxu0
        %v6183 = vadd.f32 %v5795, %v6182
        %v6184 = vpop.f32.mrf.mxu0
        %v6185 = vpop.f32.mrf.mxu0
        %v6186 = vadd.f32 %v5798, %v6185
        %v6187 = vpop.f32.mrf.mxu0
        %6188 = vmatprep.mubr.bf16.mxu0 0
        %6189 = vmatmul.mubr.bf16.gmra.mxu0 %v6043
        %v6190 = vpop.f32.mrf.mxu0
        %v6191 = vadd.f32 %v5803, %v6190
        %v6192 = vpop.f32.mrf.mxu0
        %v6193 = vpop.f32.mrf.mxu0
        %v6194 = vadd.f32 %v5806, %v6193
        %v6195 = vpop.f32.mrf.mxu0
        %6196 = vmatprep.mubr.bf16.mxu0 0
        %6197 = vmatmul.mubr.bf16.gmra.mxu0 %v6046
        %v6198 = vpop.f32.mrf.mxu0
        %v6199 = vadd.f32 %v5811, %v6198
        %v6200 = vpop.f32.mrf.mxu0
        %v6201 = vpop.f32.mrf.mxu0
        %v6202 = vadd.f32 %v5814, %v6201
        %v6203 = vpop.f32.mrf.mxu0
        %6204 = vmatprep.mubr.bf16.mxu0 0
        %6205 = vmatmul.mubr.bf16.gmra.mxu0 %v6049
        %v6206 = vpop.f32.mrf.mxu0
        %v6207 = vadd.f32 %v5819, %v6206
        %v6208 = vpop.f32.mrf.mxu0
        %v6209 = vpop.f32.mrf.mxu0
        %v6210 = vadd.f32 %v5822, %v6209
        %v6211 = vpop.f32.mrf.mxu0
        %6212 = vmatprep.mubr.bf16.mxu0 0
        %6213 = vmatmul.mubr.bf16.gmra.mxu0 %v6052
        %v6214 = vpop.f32.mrf.mxu0
        %v6215 = vadd.f32 %v5827, %v6214
        %v6216 = vpop.f32.mrf.mxu0
        %v6217 = vpop.f32.mrf.mxu0
        %v6218 = vadd.f32 %v5830, %v6217
        %v6219 = vpop.f32.mrf.mxu0
        %6220 = vmatprep.mubr.bf16.mxu0 0
        %6221 = vmatmul.mubr.bf16.gmra.mxu0 %v6055
        %v6222 = vpop.f32.mrf.mxu0
        %v6223 = vadd.f32 %v5835, %v6222
        %v6224 = vpop.f32.mrf.mxu0
        %v6225 = vpop.f32.mrf.mxu0
        %v6226 = vadd.f32 %v5838, %v6225
        %v6227 = vpop.f32.mrf.mxu0
        %6228 = vmatprep.mubr.bf16.mxu0 0
        %6229 = vmatmul.mubr.bf16.gmra.mxu0 %v6058
        %v6230 = vpop.f32.mrf.mxu0
        %v6231 = vadd.f32 %v5843, %v6230
        %v6232 = vpop.f32.mrf.mxu0
        %v6233 = vpop.f32.mrf.mxu0
        %v6234 = vadd.f32 %v5846, %v6233
        %v6235 = vpop.f32.mrf.mxu0
        %6236 = vmatprep.mubr.bf16.mxu0 0
        %6237 = vmatmul.mubr.bf16.gmra.mxu0 %v6061
        %v6238 = vpop.f32.mrf.mxu0
        %v6239 = vadd.f32 %v5851, %v6238
        %v6240 = vpop.f32.mrf.mxu0
        %v6241 = vpop.f32.mrf.mxu0
        %v6242 = vadd.f32 %v5854, %v6241
        %v6243 = vpop.f32.mrf.mxu0
        %6244 = vmatprep.mubr.bf16.mxu0 0
        %6245 = vmatmul.mubr.bf16.gmra.mxu0 %v6064
        %v6246 = vpop.f32.mrf.mxu0
        %v6247 = vadd.f32 %v5859, %v6246
        %v6248 = vpop.f32.mrf.mxu0
        %v6249 = vpop.f32.mrf.mxu0
        %v6250 = vadd.f32 %v5862, %v6249
        %v6251 = vpop.f32.mrf.mxu0
        %6252 = vmatprep.mubr.bf16.mxu0 0
        %6253 = vmatmul.mubr.bf16.gmra.mxu0 %v6067
        %v6254 = vpop.f32.mrf.mxu0
        %v6255 = vadd.f32 %v5867, %v6254
        %v6256 = vpop.f32.mrf.mxu0
        %v6257 = vpop.f32.mrf.mxu0
        %v6258 = vadd.f32 %v5870, %v6257
        %v6259 = vpop.f32.mrf.mxu0
        %6260 = vmatprep.mubr.bf16.mxu0 0
        %6261 = vmatmul.mubr.bf16.gmra.mxu0 %v6070
        %v6262 = vpop.f32.mrf.mxu0
        %v6263 = vadd.f32 %v5875, %v6262
        %v6264 = vpop.f32.mrf.mxu0
        %v6265 = vpop.f32.mrf.mxu0
        %v6266 = vadd.f32 %v5878, %v6265
        %v6267 = vpop.f32.mrf.mxu0
        %6268 = vmatprep.mubr.bf16.mxu0 0
        %6269 = vmatmul.mubr.bf16.gmra.mxu0 %v6073
        %v6270 = vpop.f32.mrf.mxu0
        %v6271 = vadd.f32 %v5883, %v6270
        %v6272 = vpop.f32.mrf.mxu0
        %v6273 = vpop.f32.mrf.mxu0
        %v6274 = vadd.f32 %v5886, %v6273
        %v6275 = vpop.f32.mrf.mxu0
        %6276 = vmatprep.mubr.bf16.mxu0 0
        %6277 = vmatmul.mubr.bf16.gmra.mxu0 %v6076
        %v6278 = vpop.f32.mrf.mxu0
        %v6279 = vadd.f32 %v5891, %v6278
        %v6280 = vpop.f32.mrf.mxu0
        %v6281 = vpop.f32.mrf.mxu0
        %v6282 = vadd.f32 %v5894, %v6281
        %v6283 = vpop.f32.mrf.mxu0
        %6284 = vmatprep.mubr.bf16.mxu0 0
        %6285 = vmatmul.mubr.bf16.gmra.mxu0 %v6079
        %v6286 = vpop.f32.mrf.mxu0
        %v6287 = vadd.f32 %v5899, %v6286
        %v6288 = vpop.f32.mrf.mxu0
        %v6289 = vpop.f32.mrf.mxu0
        %v6290 = vadd.f32 %v5902, %v6289
        %v6291 = vpop.f32.mrf.mxu0
        %6292 = vmatprep.mubr.bf16.mxu0 0
        %6293 = vmatmul.mubr.bf16.gmra.mxu0 %v6082
        %v6294 = vpop.f32.mrf.mxu0
        %v6295 = vadd.f32 %v5907, %v6294
        %v6296 = vpop.f32.mrf.mxu0
        %v6297 = vpop.f32.mrf.mxu0
        %v6298 = vadd.f32 %v5910, %v6297
        %v6299 = vpop.f32.mrf.mxu0
        %6300 = vmatprep.mubr.bf16.mxu0 0
        %6301 = vmatmul.mubr.bf16.gmra.mxu0 %v6085
        %v6302 = vpop.f32.mrf.mxu0
        %v6303 = vadd.f32 %v5915, %v6302
        %v6304 = vpop.f32.mrf.mxu0
        %v6305 = vpop.f32.mrf.mxu0
        %v6306 = vadd.f32 %v5918, %v6305
        %v6307 = vpop.f32.mrf.mxu0
        %6308 = vmatprep.mubr.bf16.mxu0 0
        %6309 = vmatmul.mubr.bf16.gmra.mxu0 %v6088
        %v6310 = vpop.f32.mrf.mxu0
        %v6311 = vadd.f32 %v5923, %v6310
        %v6312 = vpop.f32.mrf.mxu0
        %v6313 = vpop.f32.mrf.mxu0
        %v6314 = vadd.f32 %v5926, %v6313
        %v6315 = vpop.f32.mrf.mxu0
        %6316 = vmatprep.mubr.bf16.mxu0 0
        %6317 = vmatmul.mubr.bf16.gmra.mxu0 %v6091
        %v6318 = vpop.f32.mrf.mxu0
        %v6319 = vadd.f32 %v5931, %v6318
        %v6320 = vpop.f32.mrf.mxu0
        %v6321 = vpop.f32.mrf.mxu0
        %v6322 = vadd.f32 %v5934, %v6321
        %v6323 = vpop.f32.mrf.mxu0
        %6324 = vmatprep.mubr.bf16.mxu0 0
        %6325 = vmatmul.mubr.bf16.gmra.mxu0 %v6094
        %v6326 = vpop.f32.mrf.mxu0
        %v6327 = vadd.f32 %v5939, %v6326
        %v6328 = vpop.f32.mrf.mxu0
        %v6329 = vpop.f32.mrf.mxu0
        %v6330 = vadd.f32 %v5942, %v6329
        %v6331 = vpop.f32.mrf.mxu0
        %6332 = vmatprep.mubr.bf16.mxu0 0
        %6333 = vmatmul.mubr.bf16.gmra.mxu0 %v6097
        %v6334 = vpop.f32.mrf.mxu0
        %v6335 = vadd.f32 %v5947, %v6334
        %v6336 = vpop.f32.mrf.mxu0
        %v6337 = vpop.f32.mrf.mxu0
        %v6338 = vadd.f32 %v5950, %v6337
        %v6339 = vpop.f32.mrf.mxu0
        %6340 = vmatprep.mubr.bf16.mxu0 0
        %6341 = vmatmul.mubr.bf16.gmra.mxu0 %v6100
        %v6342 = vpop.f32.mrf.mxu0
        %v6343 = vadd.f32 %v5955, %v6342
        %v6344 = vpop.f32.mrf.mxu0
        %v6345 = vpop.f32.mrf.mxu0
        %v6346 = vadd.f32 %v5958, %v6345
        %v6347 = vpop.f32.mrf.mxu0
        %6348 = vmatprep.mubr.bf16.mxu0 0
        %6349 = vmatmul.mubr.bf16.gmra.mxu0 %v6103
        %v6350 = vpop.f32.mrf.mxu0
        %v6351 = vadd.f32 %v5963, %v6350
        %v6352 = vpop.f32.mrf.mxu0
        %v6353 = vpop.f32.mrf.mxu0
        %v6354 = vadd.f32 %v5966, %v6353
        %v6355 = vpop.f32.mrf.mxu0
        %6356 = vmatprep.mubr.bf16.mxu0 0
        %6357 = vmatmul.mubr.bf16.gmra.mxu0 %v6106
        %v6358 = vpop.f32.mrf.mxu0
        %v6359 = vadd.f32 %v5971, %v6358
        %v6360 = vpop.f32.mrf.mxu0
        %v6361 = vpop.f32.mrf.mxu0
        %v6362 = vadd.f32 %v5974, %v6361
        %v6363 = vpop.f32.mrf.mxu0
        %6364 = vmatprep.mubr.bf16.mxu0 0
        %6365 = vmatmul.mubr.bf16.gmra.mxu0 %v6109
        %v6366 = vpop.f32.mrf.mxu0
        %v6367 = vadd.f32 %v5979, %v6366
        %v6368 = vpop.f32.mrf.mxu0
        %v6369 = vpop.f32.mrf.mxu0
        %v6370 = vadd.f32 %v5982, %v6369
        %v6371 = vpop.f32.mrf.mxu0
        %6372 = vmatprep.mubr.bf16.mxu0 0
        %6373 = vmatmul.mubr.bf16.gmra.mxu0 %v6112
        %v6374 = vpop.f32.mrf.mxu0
        %v6375 = vadd.f32 %v5987, %v6374
        %v6376 = vpop.f32.mrf.mxu0
        %v6377 = vpop.f32.mrf.mxu0
        %v6378 = vadd.f32 %v5990, %v6377
        %v6379 = vpop.f32.mrf.mxu0
        %6380 = vmatprep.mubr.bf16.mxu0 0
        %6381 = vmatmul.mubr.bf16.gmra.mxu0 %v6115
        %v6382 = vpop.f32.mrf.mxu0
        %v6383 = vadd.f32 %v5995, %v6382
        %v6384 = vpop.f32.mrf.mxu0
        %v6385 = vpop.f32.mrf.mxu0
        %v6386 = vadd.f32 %v5998, %v6385
        %v6387 = vpop.f32.mrf.mxu0
        %6388 = vmatprep.mubr.bf16.mxu0 0
        %6389 = vmatmul.mubr.bf16.gmra.mxu0 %v6118
        %v6390 = vpop.f32.mrf.mxu0
        %v6391 = vadd.f32 %v6003, %v6390
        %v6392 = vpop.f32.mrf.mxu0
        %v6393 = vpop.f32.mrf.mxu0
        %v6394 = vadd.f32 %v6006, %v6393
        %v6395 = vpop.f32.mrf.mxu0
        %6396 = vmatprep.mubr.bf16.mxu0 0
        %6397 = vmatmul.mubr.bf16.gmra.mxu0 %v6121
        %v6398 = vpop.f32.mrf.mxu0
        %v6399 = vadd.f32 %v6011, %v6398
        %v6400 = vpop.f32.mrf.mxu0
        %v6401 = vpop.f32.mrf.mxu0
        %v6402 = vadd.f32 %v6014, %v6401
        %v6403 = vpop.f32.mrf.mxu0
        %6404 = vmatprep.mubr.bf16.mxu0 0
        %6405 = vmatmul.mubr.bf16.gmra.mxu0 %v6124
        %v6406 = vpop.f32.mrf.mxu0
        %v6407 = vadd.f32 %v6019, %v6406
        %v6408 = vpop.f32.mrf.mxu0
        %v6409 = vpop.f32.mrf.mxu0
        %v6410 = vadd.f32 %v6022, %v6409
        %v6411 = vpop.f32.mrf.mxu0
        %6412 = vmatprep.mubr.bf16.mxu0 0
        %6413 = vmatmul.mubr.bf16.gmra.mxu0 %v6127
        %v6414 = vpop.f32.mrf.mxu0
        %v6415 = vadd.f32 %v6027, %v6414
        %v6416 = vpop.f32.mrf.mxu0
        %v6417 = vpop.f32.mrf.mxu0
        %v6418 = vadd.f32 %v6030, %v6417
        %v6419 = vpop.f32.mrf.mxu0
        %6420 = vdwg.mxu0
        %v6421 = vld [vmem:[#allocation2 + $0x2] sm:$0xff]
        %v6422 = vld [vmem:[#allocation2 + $0x12] sm:$0xff]
        %v6423 = vld [vmem:[#allocation2 + $0x22] sm:$0xff]
        %v6424 = vld [vmem:[#allocation2 + $0x32] sm:$0xff]
        %v6425 = vld [vmem:[#allocation2 + $0x42] sm:$0xff]
        %v6426 = vld [vmem:[#allocation2 + $0x52] sm:$0xff]
        %v6427 = vld [vmem:[#allocation2 + $0x62] sm:$0xff]
        %v6428 = vld [vmem:[#allocation2 + $0x72] sm:$0xff]
        %v6429 = vld [vmem:[#allocation2 + $0xa2] sm:$0xff]
        %v6430 = vld [vmem:[#allocation2 + $0xb2] sm:$0xff]
        %v6431 = vld [vmem:[#allocation2 + $0xc2] sm:$0xff]
        %v6432 = vld [vmem:[#allocation2 + $0xd2] sm:$0xff]
        %v6433 = vld [vmem:[#allocation2 + $0xe2] sm:$0xff]
        %v6434 = vld [vmem:[#allocation2 + $0xf2] sm:$0xff]
        %v6435 = vld [vmem:[#allocation2 + $0x102] sm:$0xff]
        %v6436 = vld [vmem:[#allocation2 + $0x112] sm:$0xff]
        %v6437 = vld [vmem:[#allocation2 + $0x142] sm:$0xff]
        %v6438 = vld [vmem:[#allocation2 + $0x152] sm:$0xff]
        %v6439 = vld [vmem:[#allocation2 + $0x162] sm:$0xff]
        %v6440 = vld [vmem:[#allocation2 + $0x172] sm:$0xff]
        %v6441 = vld [vmem:[#allocation2 + $0x182] sm:$0xff]
        %v6442 = vld [vmem:[#allocation2 + $0x192] sm:$0xff]
        %v6443 = vld [vmem:[#allocation2 + $0x1a2] sm:$0xff]
        %v6444 = vld [vmem:[#allocation2 + $0x1b2] sm:$0xff]
        %v6445 = vld [vmem:[#allocation2 + $0x1e2] sm:$0xff]
        %v6446 = vld [vmem:[#allocation2 + $0x1f2] sm:$0xff]
        %v6447 = vld [vmem:[#allocation2 + $0x202] sm:$0xff]
        %v6448 = vld [vmem:[#allocation2 + $0x212] sm:$0xff]
        %v6449 = vld [vmem:[#allocation2 + $0x222] sm:$0xff]
        %v6450 = vld [vmem:[#allocation2 + $0x232] sm:$0xff]
        %v6451 = vld [vmem:[#allocation2 + $0x242] sm:$0xff]
        %v6452 = vld [vmem:[#allocation2 + $0x252] sm:$0xff]
        %v6453 = vld [vmem:[#allocation2 + $0x282] sm:$0xff]
        %v6454 = vld [vmem:[#allocation2 + $0x292] sm:$0xff]
        %v6455 = vld [vmem:[#allocation2 + $0x2a2] sm:$0xff]
        %v6456 = vld [vmem:[#allocation2 + $0x2b2] sm:$0xff]
        %v6457 = vld [vmem:[#allocation2 + $0x2c2] sm:$0xff]
        %v6458 = vld [vmem:[#allocation2 + $0x2d2] sm:$0xff]
        %v6459 = vld [vmem:[#allocation2 + $0x2e2] sm:$0xff]
        %v6460 = vld [vmem:[#allocation2 + $0x2f2] sm:$0xff]
        %v6461 = vld [vmem:[#allocation2 + $0x322] sm:$0xff]
        %v6462 = vld [vmem:[#allocation2 + $0x332] sm:$0xff]
        %v6463 = vld [vmem:[#allocation2 + $0x342] sm:$0xff]
        %v6464 = vld [vmem:[#allocation2 + $0x352] sm:$0xff]
        %v6465 = vld [vmem:[#allocation2 + $0x362] sm:$0xff]
        %v6466 = vld [vmem:[#allocation2 + $0x372] sm:$0xff]
        %v6467 = vld [vmem:[#allocation2 + $0x382] sm:$0xff]
        %v6468 = vld [vmem:[#allocation2 + $0x392] sm:$0xff]
        %v6469 = vld [vmem:[#allocation2 + $0x3c2] sm:$0xff]
        %v6470 = vld [vmem:[#allocation2 + $0x3d2] sm:$0xff]
        %v6471 = vld [vmem:[#allocation2 + $0x3e2] sm:$0xff]
        %v6472 = vld [vmem:[#allocation2 + $0x3f2] sm:$0xff]
        %v6473 = vld [vmem:[#allocation2 + $0x402] sm:$0xff]
        %v6474 = vld [vmem:[#allocation2 + $0x412] sm:$0xff]
        %v6475 = vld [vmem:[#allocation2 + $0x422] sm:$0xff]
        %v6476 = vld [vmem:[#allocation2 + $0x432] sm:$0xff]
        %v6477 = vld [vmem:[#allocation2 + $0x462] sm:$0xff]
        %v6478 = vld [vmem:[#allocation2 + $0x472] sm:$0xff]
        %v6479 = vld [vmem:[#allocation2 + $0x482] sm:$0xff]
        %v6480 = vld [vmem:[#allocation2 + $0x492] sm:$0xff]
        %v6481 = vld [vmem:[#allocation2 + $0x4a2] sm:$0xff]
        %v6482 = vld [vmem:[#allocation2 + $0x4b2] sm:$0xff]
        %v6483 = vld [vmem:[#allocation2 + $0x4c2] sm:$0xff]
        %v6484 = vld [vmem:[#allocation2 + $0x4d2] sm:$0xff]
        %v6485 = vpack.c.bf16 %v6422, %v6421
        %v6486 = vpack.c.bf16 %v6424, %v6423
        %v6487 = vpack.c.bf16 %v6426, %v6425
        %v6488 = vpack.c.bf16 %v6428, %v6427
        %v6489 = vpack.c.bf16 %v6430, %v6429
        %v6490 = vpack.c.bf16 %v6432, %v6431
        %v6491 = vpack.c.bf16 %v6434, %v6433
        %v6492 = vpack.c.bf16 %v6436, %v6435
        %v6493 = vpack.c.bf16 %v6438, %v6437
        %v6494 = vpack.c.bf16 %v6440, %v6439
        %v6495 = vpack.c.bf16 %v6442, %v6441
        %v6496 = vpack.c.bf16 %v6444, %v6443
        %v6497 = vpack.c.bf16 %v6446, %v6445
        %v6498 = vpack.c.bf16 %v6448, %v6447
        %v6499 = vpack.c.bf16 %v6450, %v6449
        %v6500 = vpack.c.bf16 %v6452, %v6451
        %v6501 = vpack.c.bf16 %v6454, %v6453
        %v6502 = vpack.c.bf16 %v6456, %v6455
        %v6503 = vpack.c.bf16 %v6458, %v6457
        %v6504 = vpack.c.bf16 %v6460, %v6459
        %v6505 = vpack.c.bf16 %v6462, %v6461
        %v6506 = vpack.c.bf16 %v6464, %v6463
        %v6507 = vpack.c.bf16 %v6466, %v6465
        %v6508 = vpack.c.bf16 %v6468, %v6467
        %v6509 = vpack.c.bf16 %v6470, %v6469
        %v6510 = vpack.c.bf16 %v6472, %v6471
        %v6511 = vpack.c.bf16 %v6474, %v6473
        %v6512 = vpack.c.bf16 %v6476, %v6475
        %v6513 = vpack.c.bf16 %v6478, %v6477
        %v6514 = vpack.c.bf16 %v6480, %v6479
        %v6515 = vpack.c.bf16 %v6482, %v6481
        %v6516 = vpack.c.bf16 %v6484, %v6483
        %s6517 = scalar_lea.vmem %s3, 8
        %v6518 = vld [vmem:[%s6517] sm:$0xf]
        %v6520 = vsel %vm230, %v6485, 0
        %v6523 = vsel %vm230, %v6486, 0
        %v6526 = vsel %vm230, %v6487, 0
        %v6529 = vsel %vm230, %v6488, 0
        %v6532 = vsel %vm230, %v6489, 0
        %v6535 = vsel %vm230, %v6490, 0
        %v6538 = vsel %vm230, %v6491, 0
        %v6541 = vsel %vm230, %v6492, 0
        %v6544 = vsel %vm230, %v6493, 0
        %v6547 = vsel %vm230, %v6494, 0
        %v6550 = vsel %vm230, %v6495, 0
        %v6553 = vsel %vm230, %v6496, 0
        %v6556 = vsel %vm230, %v6497, 0
        %v6559 = vsel %vm230, %v6498, 0
        %v6562 = vsel %vm230, %v6499, 0
        %v6565 = vsel %vm230, %v6500, 0
        %v6568 = vsel %vm230, %v6501, 0
        %v6571 = vsel %vm230, %v6502, 0
        %v6574 = vsel %vm230, %v6503, 0
        %v6577 = vsel %vm230, %v6504, 0
        %v6580 = vsel %vm230, %v6505, 0
        %v6583 = vsel %vm230, %v6506, 0
        %v6586 = vsel %vm230, %v6507, 0
        %v6589 = vsel %vm230, %v6508, 0
        %v6592 = vsel %vm230, %v6509, 0
        %v6595 = vsel %vm230, %v6510, 0
        %v6598 = vsel %vm230, %v6511, 0
        %v6601 = vsel %vm230, %v6512, 0
        %v6604 = vsel %vm230, %v6513, 0
        %v6607 = vsel %vm230, %v6514, 0
        %v6610 = vsel %vm230, %v6515, 0
        %v6613 = vsel %vm230, %v6516, 0
        %v6616 = vsel %vm717, %v6518, 0
        %6618 = vmatprep.subr.bf16.mxu0 0
        %6619 = vmatpush1.bf16.msra.mxu0 0
        %6620 = vmatprep.subr.bf16.mxu0 0
        %6621 = vmatpush1.bf16.msra.mxu0 0
        %6622 = vmatprep.subr.bf16.mxu0 0
        %6623 = vmatpush1.bf16.msra.mxu0 0
        %6624 = vmatprep.subr.bf16.mxu0 0
        %6625 = vmatpush1.bf16.msra.mxu0 0
        %6626 = vmatprep.subr.bf16.mxu0 0
        %6627 = vmatpush1.bf16.msra.mxu0 0
        %6628 = vmatprep.subr.bf16.mxu0 0
        %6629 = vmatpush1.bf16.msra.mxu0 0
        %6630 = vmatprep.subr.bf16.mxu0 0
        %6631 = vmatpush1.bf16.msra.mxu0 0
        %6632 = vmatprep.subr.bf16.mxu0 0
        %6633 = vmatpush1.bf16.msra.mxu0 %v6616
        %6634 = vmatprep.subr.bf16.mxu0 0
        %6635 = vmatpush2.bf16.msra.mxu0 0
        %6636 = vmatprep.subr.bf16.mxu0 0
        %6637 = vmatpush2.bf16.msra.mxu0 0
        %6638 = vmatprep.subr.bf16.mxu0 0
        %6639 = vmatpush2.bf16.msra.mxu0 0
        %6640 = vmatprep.subr.bf16.mxu0 0
        %6641 = vmatpush2.bf16.msra.mxu0 0
        %6642 = vmatprep.subr.bf16.mxu0 0
        %6643 = vmatpush2.bf16.msra.mxu0 0
        %6644 = vmatprep.subr.bf16.mxu0 0
        %6645 = vmatpush2.bf16.msra.mxu0 0
        %6646 = vmatprep.subr.bf16.mxu0 0
        %6647 = vmatpush2.bf16.msra.mxu0 0
        %6648 = vmatprep.subr.bf16.mxu0 0
        %6649 = vmatpush2.bf16.msra.mxu0 0
        %6650 = vmatprep.mubr.bf16.mxu0 0
        %6651 = vmatmul.mubr.bf16.gmra.mxu0 %v6520
        %v6652 = vpop.f32.mrf.mxu0
        %v6653 = vadd.f32 0.0, %v6652
        %v6654 = vpop.f32.mrf.mxu0
        %v6655 = vpop.f32.mrf.mxu0
        %v6656 = vadd.f32 0.0, %v6655
        %v6657 = vpop.f32.mrf.mxu0
        %6658 = vmatprep.mubr.bf16.mxu0 0
        %6659 = vmatmul.mubr.bf16.gmra.mxu0 %v6523
        %v6660 = vpop.f32.mrf.mxu0
        %v6661 = vadd.f32 0.0, %v6660
        %v6662 = vpop.f32.mrf.mxu0
        %v6663 = vpop.f32.mrf.mxu0
        %v6664 = vadd.f32 0.0, %v6663
        %v6665 = vpop.f32.mrf.mxu0
        %6666 = vmatprep.mubr.bf16.mxu0 0
        %6667 = vmatmul.mubr.bf16.gmra.mxu0 %v6526
        %v6668 = vpop.f32.mrf.mxu0
        %v6669 = vadd.f32 0.0, %v6668
        %v6670 = vpop.f32.mrf.mxu0
        %v6671 = vpop.f32.mrf.mxu0
        %v6672 = vadd.f32 0.0, %v6671
        %v6673 = vpop.f32.mrf.mxu0
        %6674 = vmatprep.mubr.bf16.mxu0 0
        %6675 = vmatmul.mubr.bf16.gmra.mxu0 %v6529
        %v6676 = vpop.f32.mrf.mxu0
        %v6677 = vadd.f32 0.0, %v6676
        %v6678 = vpop.f32.mrf.mxu0
        %v6679 = vpop.f32.mrf.mxu0
        %v6680 = vadd.f32 0.0, %v6679
        %v6681 = vpop.f32.mrf.mxu0
        %6682 = vmatprep.mubr.bf16.mxu0 0
        %6683 = vmatmul.mubr.bf16.gmra.mxu0 %v6532
        %v6684 = vpop.f32.mrf.mxu0
        %v6685 = vadd.f32 0.0, %v6684
        %v6686 = vpop.f32.mrf.mxu0
        %v6687 = vpop.f32.mrf.mxu0
        %v6688 = vadd.f32 0.0, %v6687
        %v6689 = vpop.f32.mrf.mxu0
        %6690 = vmatprep.mubr.bf16.mxu0 0
        %6691 = vmatmul.mubr.bf16.gmra.mxu0 %v6535
        %v6692 = vpop.f32.mrf.mxu0
        %v6693 = vadd.f32 0.0, %v6692
        %v6694 = vpop.f32.mrf.mxu0
        %v6695 = vpop.f32.mrf.mxu0
        %v6696 = vadd.f32 0.0, %v6695
        %v6697 = vpop.f32.mrf.mxu0
        %6698 = vmatprep.mubr.bf16.mxu0 0
        %6699 = vmatmul.mubr.bf16.gmra.mxu0 %v6538
        %v6700 = vpop.f32.mrf.mxu0
        %v6701 = vadd.f32 0.0, %v6700
        %v6702 = vpop.f32.mrf.mxu0
        %v6703 = vpop.f32.mrf.mxu0
        %v6704 = vadd.f32 0.0, %v6703
        %v6705 = vpop.f32.mrf.mxu0
        %6706 = vmatprep.mubr.bf16.mxu0 0
        %6707 = vmatmul.mubr.bf16.gmra.mxu0 %v6541
        %v6708 = vpop.f32.mrf.mxu0
        %v6709 = vadd.f32 0.0, %v6708
        %v6710 = vpop.f32.mrf.mxu0
        %v6711 = vpop.f32.mrf.mxu0
        %v6712 = vadd.f32 0.0, %v6711
        %v6713 = vpop.f32.mrf.mxu0
        %6714 = vmatprep.mubr.bf16.mxu0 0
        %6715 = vmatmul.mubr.bf16.gmra.mxu0 %v6544
        %v6716 = vpop.f32.mrf.mxu0
        %v6717 = vadd.f32 0.0, %v6716
        %v6718 = vpop.f32.mrf.mxu0
        %v6719 = vpop.f32.mrf.mxu0
        %v6720 = vadd.f32 0.0, %v6719
        %v6721 = vpop.f32.mrf.mxu0
        %6722 = vmatprep.mubr.bf16.mxu0 0
        %6723 = vmatmul.mubr.bf16.gmra.mxu0 %v6547
        %v6724 = vpop.f32.mrf.mxu0
        %v6725 = vadd.f32 0.0, %v6724
        %v6726 = vpop.f32.mrf.mxu0
        %v6727 = vpop.f32.mrf.mxu0
        %v6728 = vadd.f32 0.0, %v6727
        %v6729 = vpop.f32.mrf.mxu0
        %6730 = vmatprep.mubr.bf16.mxu0 0
        %6731 = vmatmul.mubr.bf16.gmra.mxu0 %v6550
        %v6732 = vpop.f32.mrf.mxu0
        %v6733 = vadd.f32 0.0, %v6732
        %v6734 = vpop.f32.mrf.mxu0
        %v6735 = vpop.f32.mrf.mxu0
        %v6736 = vadd.f32 0.0, %v6735
        %v6737 = vpop.f32.mrf.mxu0
        %6738 = vmatprep.mubr.bf16.mxu0 0
        %6739 = vmatmul.mubr.bf16.gmra.mxu0 %v6553
        %v6740 = vpop.f32.mrf.mxu0
        %v6741 = vadd.f32 0.0, %v6740
        %v6742 = vpop.f32.mrf.mxu0
        %v6743 = vpop.f32.mrf.mxu0
        %v6744 = vadd.f32 0.0, %v6743
        %v6745 = vpop.f32.mrf.mxu0
        %6746 = vmatprep.mubr.bf16.mxu0 0
        %6747 = vmatmul.mubr.bf16.gmra.mxu0 %v6556
        %v6748 = vpop.f32.mrf.mxu0
        %v6749 = vadd.f32 0.0, %v6748
        %v6750 = vpop.f32.mrf.mxu0
        %v6751 = vpop.f32.mrf.mxu0
        %v6752 = vadd.f32 0.0, %v6751
        %v6753 = vpop.f32.mrf.mxu0
        %6754 = vmatprep.mubr.bf16.mxu0 0
        %6755 = vmatmul.mubr.bf16.gmra.mxu0 %v6559
        %v6756 = vpop.f32.mrf.mxu0
        %v6757 = vadd.f32 0.0, %v6756
        %v6758 = vpop.f32.mrf.mxu0
        %v6759 = vpop.f32.mrf.mxu0
        %v6760 = vadd.f32 0.0, %v6759
        %v6761 = vpop.f32.mrf.mxu0
        %6762 = vmatprep.mubr.bf16.mxu0 0
        %6763 = vmatmul.mubr.bf16.gmra.mxu0 %v6562
        %v6764 = vpop.f32.mrf.mxu0
        %v6765 = vadd.f32 0.0, %v6764
        %v6766 = vpop.f32.mrf.mxu0
        %v6767 = vpop.f32.mrf.mxu0
        %v6768 = vadd.f32 0.0, %v6767
        %v6769 = vpop.f32.mrf.mxu0
        %6770 = vmatprep.mubr.bf16.mxu0 0
        %6771 = vmatmul.mubr.bf16.gmra.mxu0 %v6565
        %v6772 = vpop.f32.mrf.mxu0
        %v6773 = vadd.f32 0.0, %v6772
        %v6774 = vpop.f32.mrf.mxu0
        %v6775 = vpop.f32.mrf.mxu0
        %v6776 = vadd.f32 0.0, %v6775
        %v6777 = vpop.f32.mrf.mxu0
        %6778 = vmatprep.mubr.bf16.mxu0 0
        %6779 = vmatmul.mubr.bf16.gmra.mxu0 %v6568
        %v6780 = vpop.f32.mrf.mxu0
        %v6781 = vadd.f32 0.0, %v6780
        %v6782 = vpop.f32.mrf.mxu0
        %v6783 = vpop.f32.mrf.mxu0
        %v6784 = vadd.f32 0.0, %v6783
        %v6785 = vpop.f32.mrf.mxu0
        %6786 = vmatprep.mubr.bf16.mxu0 0
        %6787 = vmatmul.mubr.bf16.gmra.mxu0 %v6571
        %v6788 = vpop.f32.mrf.mxu0
        %v6789 = vadd.f32 0.0, %v6788
        %v6790 = vpop.f32.mrf.mxu0
        %v6791 = vpop.f32.mrf.mxu0
        %v6792 = vadd.f32 0.0, %v6791
        %v6793 = vpop.f32.mrf.mxu0
        %6794 = vmatprep.mubr.bf16.mxu0 0
        %6795 = vmatmul.mubr.bf16.gmra.mxu0 %v6574
        %v6796 = vpop.f32.mrf.mxu0
        %v6797 = vadd.f32 0.0, %v6796
        %v6798 = vpop.f32.mrf.mxu0
        %v6799 = vpop.f32.mrf.mxu0
        %v6800 = vadd.f32 0.0, %v6799
        %v6801 = vpop.f32.mrf.mxu0
        %6802 = vmatprep.mubr.bf16.mxu0 0
        %6803 = vmatmul.mubr.bf16.gmra.mxu0 %v6577
        %v6804 = vpop.f32.mrf.mxu0
        %v6805 = vadd.f32 0.0, %v6804
        %v6806 = vpop.f32.mrf.mxu0
        %v6807 = vpop.f32.mrf.mxu0
        %v6808 = vadd.f32 0.0, %v6807
        %v6809 = vpop.f32.mrf.mxu0
        %6810 = vmatprep.mubr.bf16.mxu0 0
        %6811 = vmatmul.mubr.bf16.gmra.mxu0 %v6580
        %v6812 = vpop.f32.mrf.mxu0
        %v6813 = vadd.f32 0.0, %v6812
        %v6814 = vpop.f32.mrf.mxu0
        %v6815 = vpop.f32.mrf.mxu0
        %v6816 = vadd.f32 0.0, %v6815
        %v6817 = vpop.f32.mrf.mxu0
        %6818 = vmatprep.mubr.bf16.mxu0 0
        %6819 = vmatmul.mubr.bf16.gmra.mxu0 %v6583
        %v6820 = vpop.f32.mrf.mxu0
        %v6821 = vadd.f32 0.0, %v6820
        %v6822 = vpop.f32.mrf.mxu0
        %v6823 = vpop.f32.mrf.mxu0
        %v6824 = vadd.f32 0.0, %v6823
        %v6825 = vpop.f32.mrf.mxu0
        %6826 = vmatprep.mubr.bf16.mxu0 0
        %6827 = vmatmul.mubr.bf16.gmra.mxu0 %v6586
        %v6828 = vpop.f32.mrf.mxu0
        %v6829 = vadd.f32 0.0, %v6828
        %v6830 = vpop.f32.mrf.mxu0
        %v6831 = vpop.f32.mrf.mxu0
        %v6832 = vadd.f32 0.0, %v6831
        %v6833 = vpop.f32.mrf.mxu0
        %6834 = vmatprep.mubr.bf16.mxu0 0
        %6835 = vmatmul.mubr.bf16.gmra.mxu0 %v6589
        %v6836 = vpop.f32.mrf.mxu0
        %v6837 = vadd.f32 0.0, %v6836
        %v6838 = vpop.f32.mrf.mxu0
        %v6839 = vpop.f32.mrf.mxu0
        %v6840 = vadd.f32 0.0, %v6839
        %v6841 = vpop.f32.mrf.mxu0
        %6842 = vmatprep.mubr.bf16.mxu0 0
        %6843 = vmatmul.mubr.bf16.gmra.mxu0 %v6592
        %v6844 = vpop.f32.mrf.mxu0
        %v6845 = vadd.f32 0.0, %v6844
        %v6846 = vpop.f32.mrf.mxu0
        %v6847 = vpop.f32.mrf.mxu0
        %v6848 = vadd.f32 0.0, %v6847
        %v6849 = vpop.f32.mrf.mxu0
        %6850 = vmatprep.mubr.bf16.mxu0 0
        %6851 = vmatmul.mubr.bf16.gmra.mxu0 %v6595
        %v6852 = vpop.f32.mrf.mxu0
        %v6853 = vadd.f32 0.0, %v6852
        %v6854 = vpop.f32.mrf.mxu0
        %v6855 = vpop.f32.mrf.mxu0
        %v6856 = vadd.f32 0.0, %v6855
        %v6857 = vpop.f32.mrf.mxu0
        %6858 = vmatprep.mubr.bf16.mxu0 0
        %6859 = vmatmul.mubr.bf16.gmra.mxu0 %v6598
        %v6860 = vpop.f32.mrf.mxu0
        %v6861 = vadd.f32 0.0, %v6860
        %v6862 = vpop.f32.mrf.mxu0
        %v6863 = vpop.f32.mrf.mxu0
        %v6864 = vadd.f32 0.0, %v6863
        %v6865 = vpop.f32.mrf.mxu0
        %6866 = vmatprep.mubr.bf16.mxu0 0
        %6867 = vmatmul.mubr.bf16.gmra.mxu0 %v6601
        %v6868 = vpop.f32.mrf.mxu0
        %v6869 = vadd.f32 0.0, %v6868
        %v6870 = vpop.f32.mrf.mxu0
        %v6871 = vpop.f32.mrf.mxu0
        %v6872 = vadd.f32 0.0, %v6871
        %v6873 = vpop.f32.mrf.mxu0
        %6874 = vmatprep.mubr.bf16.mxu0 0
        %6875 = vmatmul.mubr.bf16.gmra.mxu0 %v6604
        %v6876 = vpop.f32.mrf.mxu0
        %v6877 = vadd.f32 0.0, %v6876
        %v6878 = vpop.f32.mrf.mxu0
        %v6879 = vpop.f32.mrf.mxu0
        %v6880 = vadd.f32 0.0, %v6879
        %v6881 = vpop.f32.mrf.mxu0
        %6882 = vmatprep.mubr.bf16.mxu0 0
        %6883 = vmatmul.mubr.bf16.gmra.mxu0 %v6607
        %v6884 = vpop.f32.mrf.mxu0
        %v6885 = vadd.f32 0.0, %v6884
        %v6886 = vpop.f32.mrf.mxu0
        %v6887 = vpop.f32.mrf.mxu0
        %v6888 = vadd.f32 0.0, %v6887
        %v6889 = vpop.f32.mrf.mxu0
        %6890 = vmatprep.mubr.bf16.mxu0 0
        %6891 = vmatmul.mubr.bf16.gmra.mxu0 %v6610
        %v6892 = vpop.f32.mrf.mxu0
        %v6893 = vadd.f32 0.0, %v6892
        %v6894 = vpop.f32.mrf.mxu0
        %v6895 = vpop.f32.mrf.mxu0
        %v6896 = vadd.f32 0.0, %v6895
        %v6897 = vpop.f32.mrf.mxu0
        %6898 = vmatprep.mubr.bf16.mxu0 0
        %6899 = vmatmul.mubr.bf16.gmra.mxu0 %v6613
        %v6900 = vpop.f32.mrf.mxu0
        %v6901 = vadd.f32 0.0, %v6900
        %v6902 = vpop.f32.mrf.mxu0
        %v6903 = vpop.f32.mrf.mxu0
        %v6904 = vadd.f32 0.0, %v6903
        %v6905 = vpop.f32.mrf.mxu0
        %6906 = vdwg.mxu0
        %v6907 = vadd.f32 %v6167, %v6653
        %v6908 = vadd.f32 %v6170, %v6656
        %v6909 = vadd.f32 %v6175, %v6661
        %v6910 = vadd.f32 %v6178, %v6664
        %v6911 = vadd.f32 %v6183, %v6669
        %v6912 = vadd.f32 %v6186, %v6672
        %v6913 = vadd.f32 %v6191, %v6677
        %v6914 = vadd.f32 %v6194, %v6680
        %v6915 = vadd.f32 %v6199, %v6685
        %v6916 = vadd.f32 %v6202, %v6688
        %v6917 = vadd.f32 %v6207, %v6693
        %v6918 = vadd.f32 %v6210, %v6696
        %v6919 = vadd.f32 %v6215, %v6701
        %v6920 = vadd.f32 %v6218, %v6704
        %v6921 = vadd.f32 %v6223, %v6709
        %v6922 = vadd.f32 %v6226, %v6712
        %v6923 = vadd.f32 %v6231, %v6717
        %v6924 = vadd.f32 %v6234, %v6720
        %v6925 = vadd.f32 %v6239, %v6725
        %v6926 = vadd.f32 %v6242, %v6728
        %v6927 = vadd.f32 %v6247, %v6733
        %v6928 = vadd.f32 %v6250, %v6736
        %v6929 = vadd.f32 %v6255, %v6741
        %v6930 = vadd.f32 %v6258, %v6744
        %v6931 = vadd.f32 %v6263, %v6749
        %v6932 = vadd.f32 %v6266, %v6752
        %v6933 = vadd.f32 %v6271, %v6757
        %v6934 = vadd.f32 %v6274, %v6760
        %v6935 = vadd.f32 %v6279, %v6765
        %v6936 = vadd.f32 %v6282, %v6768
        %v6937 = vadd.f32 %v6287, %v6773
        %v6938 = vadd.f32 %v6290, %v6776
        %v6939 = vadd.f32 %v6295, %v6781
        %v6940 = vadd.f32 %v6298, %v6784
        %v6941 = vadd.f32 %v6303, %v6789
        %v6942 = vadd.f32 %v6306, %v6792
        %v6943 = vadd.f32 %v6311, %v6797
        %v6944 = vadd.f32 %v6314, %v6800
        %v6945 = vadd.f32 %v6319, %v6805
        %v6946 = vadd.f32 %v6322, %v6808
        %v6947 = vadd.f32 %v6327, %v6813
        %v6948 = vadd.f32 %v6330, %v6816
        %v6949 = vadd.f32 %v6335, %v6821
        %v6950 = vadd.f32 %v6338, %v6824
        %v6951 = vadd.f32 %v6343, %v6829
        %v6952 = vadd.f32 %v6346, %v6832
        %v6953 = vadd.f32 %v6351, %v6837
        %v6954 = vadd.f32 %v6354, %v6840
        %v6955 = vadd.f32 %v6359, %v6845
        %v6956 = vadd.f32 %v6362, %v6848
        %v6957 = vadd.f32 %v6367, %v6853
        %v6958 = vadd.f32 %v6370, %v6856
        %v6959 = vadd.f32 %v6375, %v6861
        %v6960 = vadd.f32 %v6378, %v6864
        %v6961 = vadd.f32 %v6383, %v6869
        %v6962 = vadd.f32 %v6386, %v6872
        %v6963 = vadd.f32 %v6391, %v6877
        %v6964 = vadd.f32 %v6394, %v6880
        %v6965 = vadd.f32 %v6399, %v6885
        %v6966 = vadd.f32 %v6402, %v6888
        %v6967 = vadd.f32 %v6407, %v6893
        %v6968 = vadd.f32 %v6410, %v6896
        %v6969 = vadd.f32 %v6415, %v6901
        %v6970 = vadd.f32 %v6418, %v6904
        %v6971 = vld [vmem:[%s5385] sm:$0xff]
        %v6972 = vld [vmem:[%s5385 + $0x10] sm:$0xff]
        %v6973 = vld [vmem:[%s5385 + $0x20] sm:$0xff]
        %v6974 = vld [vmem:[%s5385 + $0x30] sm:$0xff]
        %v6975 = vld [vmem:[%s5385 + $0x40] sm:$0xff]
        %v6976 = vld [vmem:[%s5385 + $0x50] sm:$0xff]
        %v6977 = vld [vmem:[%s5385 + $0x60] sm:$0xff]
        %v6978 = vld [vmem:[%s5385 + $0x70] sm:$0xff]
        %v6979 = vld [vmem:[%s5385 + $0xa0] sm:$0xff]
        %v6980 = vld [vmem:[%s5385 + $0xb0] sm:$0xff]
        %v6981 = vld [vmem:[%s5385 + $0xc0] sm:$0xff]
        %v6982 = vld [vmem:[%s5385 + $0xd0] sm:$0xff]
        %v6983 = vld [vmem:[%s5385 + $0xe0] sm:$0xff]
        %v6984 = vld [vmem:[%s5385 + $0xf0] sm:$0xff]
        %v6985 = vld [vmem:[%s5385 + $0x100] sm:$0xff]
        %v6986 = vld [vmem:[%s5385 + $0x110] sm:$0xff]
        %v6987 = vld [vmem:[%s5385 + $0x140] sm:$0xff]
        %v6988 = vld [vmem:[%s5385 + $0x150] sm:$0xff]
        %v6989 = vld [vmem:[%s5385 + $0x160] sm:$0xff]
        %v6990 = vld [vmem:[%s5385 + $0x170] sm:$0xff]
        %v6991 = vld [vmem:[%s5385 + $0x180] sm:$0xff]
        %v6992 = vld [vmem:[%s5385 + $0x190] sm:$0xff]
        %v6993 = vld [vmem:[%s5385 + $0x1a0] sm:$0xff]
        %v6994 = vld [vmem:[%s5385 + $0x1b0] sm:$0xff]
        %v6995 = vld [vmem:[%s5385 + $0x1e0] sm:$0xff]
        %v6996 = vld [vmem:[%s5385 + $0x1f0] sm:$0xff]
        %v6997 = vld [vmem:[%s5385 + $0x200] sm:$0xff]
        %v6998 = vld [vmem:[%s5385 + $0x210] sm:$0xff]
        %v6999 = vld [vmem:[%s5385 + $0x220] sm:$0xff]
        %v7000 = vld [vmem:[%s5385 + $0x230] sm:$0xff]
        %v7001 = vld [vmem:[%s5385 + $0x240] sm:$0xff]
        %v7002 = vld [vmem:[%s5385 + $0x250] sm:$0xff]
        %v7003 = vld [vmem:[%s5385 + $0x280] sm:$0xff]
        %v7004 = vld [vmem:[%s5385 + $0x290] sm:$0xff]
        %v7005 = vld [vmem:[%s5385 + $0x2a0] sm:$0xff]
        %v7006 = vld [vmem:[%s5385 + $0x2b0] sm:$0xff]
        %v7007 = vld [vmem:[%s5385 + $0x2c0] sm:$0xff]
        %v7008 = vld [vmem:[%s5385 + $0x2d0] sm:$0xff]
        %v7009 = vld [vmem:[%s5385 + $0x2e0] sm:$0xff]
        %v7010 = vld [vmem:[%s5385 + $0x2f0] sm:$0xff]
        %v7011 = vld [vmem:[%s5385 + $0x320] sm:$0xff]
        %v7012 = vld [vmem:[%s5385 + $0x330] sm:$0xff]
        %v7013 = vld [vmem:[%s5385 + $0x340] sm:$0xff]
        %v7014 = vld [vmem:[%s5385 + $0x350] sm:$0xff]
        %v7015 = vld [vmem:[%s5385 + $0x360] sm:$0xff]
        %v7016 = vld [vmem:[%s5385 + $0x370] sm:$0xff]
        %v7017 = vld [vmem:[%s5385 + $0x380] sm:$0xff]
        %v7018 = vld [vmem:[%s5385 + $0x390] sm:$0xff]
        %v7019 = vld [vmem:[%s5385 + $0x3c0] sm:$0xff]
        %v7020 = vld [vmem:[%s5385 + $0x3d0] sm:$0xff]
        %v7021 = vld [vmem:[%s5385 + $0x3e0] sm:$0xff]
        %v7022 = vld [vmem:[%s5385 + $0x3f0] sm:$0xff]
        %v7023 = vld [vmem:[%s5385 + $0x400] sm:$0xff]
        %v7024 = vld [vmem:[%s5385 + $0x410] sm:$0xff]
        %v7025 = vld [vmem:[%s5385 + $0x420] sm:$0xff]
        %v7026 = vld [vmem:[%s5385 + $0x430] sm:$0xff]
        %v7027 = vld [vmem:[%s5385 + $0x460] sm:$0xff]
        %v7028 = vld [vmem:[%s5385 + $0x470] sm:$0xff]
        %v7029 = vld [vmem:[%s5385 + $0x480] sm:$0xff]
        %v7030 = vld [vmem:[%s5385 + $0x490] sm:$0xff]
        %v7031 = vld [vmem:[%s5385 + $0x4a0] sm:$0xff]
        %v7032 = vld [vmem:[%s5385 + $0x4b0] sm:$0xff]
        %v7033 = vld [vmem:[%s5385 + $0x4c0] sm:$0xff]
        %v7034 = vld [vmem:[%s5385 + $0x4d0] sm:$0xff]
        %v7035 = vpack.c.bf16 %v6972, %v6971
        %v7036 = vpack.c.bf16 %v6974, %v6973
        %v7037 = vpack.c.bf16 %v6976, %v6975
        %v7038 = vpack.c.bf16 %v6978, %v6977
        %v7039 = vpack.c.bf16 %v6980, %v6979
        %v7040 = vpack.c.bf16 %v6982, %v6981
        %v7041 = vpack.c.bf16 %v6984, %v6983
        %v7042 = vpack.c.bf16 %v6986, %v6985
        %v7043 = vpack.c.bf16 %v6988, %v6987
        %v7044 = vpack.c.bf16 %v6990, %v6989
        %v7045 = vpack.c.bf16 %v6992, %v6991
        %v7046 = vpack.c.bf16 %v6994, %v6993
        %v7047 = vpack.c.bf16 %v6996, %v6995
        %v7048 = vpack.c.bf16 %v6998, %v6997
        %v7049 = vpack.c.bf16 %v7000, %v6999
        %v7050 = vpack.c.bf16 %v7002, %v7001
        %v7051 = vpack.c.bf16 %v7004, %v7003
        %v7052 = vpack.c.bf16 %v7006, %v7005
        %v7053 = vpack.c.bf16 %v7008, %v7007
        %v7054 = vpack.c.bf16 %v7010, %v7009
        %v7055 = vpack.c.bf16 %v7012, %v7011
        %v7056 = vpack.c.bf16 %v7014, %v7013
        %v7057 = vpack.c.bf16 %v7016, %v7015
        %v7058 = vpack.c.bf16 %v7018, %v7017
        %v7059 = vpack.c.bf16 %v7020, %v7019
        %v7060 = vpack.c.bf16 %v7022, %v7021
        %v7061 = vpack.c.bf16 %v7024, %v7023
        %v7062 = vpack.c.bf16 %v7026, %v7025
        %v7063 = vpack.c.bf16 %v7028, %v7027
        %v7064 = vpack.c.bf16 %v7030, %v7029
        %v7065 = vpack.c.bf16 %v7032, %v7031
        %v7066 = vpack.c.bf16 %v7034, %v7033
        %s7067 = scalar_lea.vmem %s3, 12
        %v7068 = vld [vmem:[%s7067] sm:$0xf]
        %v7070 = vsel %vm230, %v7035, 0
        %v7073 = vsel %vm230, %v7036, 0
        %v7076 = vsel %vm230, %v7037, 0
        %v7079 = vsel %vm230, %v7038, 0
        %v7082 = vsel %vm230, %v7039, 0
        %v7085 = vsel %vm230, %v7040, 0
        %v7088 = vsel %vm230, %v7041, 0
        %v7091 = vsel %vm230, %v7042, 0
        %v7094 = vsel %vm230, %v7043, 0
        %v7097 = vsel %vm230, %v7044, 0
        %v7100 = vsel %vm230, %v7045, 0
        %v7103 = vsel %vm230, %v7046, 0
        %v7106 = vsel %vm230, %v7047, 0
        %v7109 = vsel %vm230, %v7048, 0
        %v7112 = vsel %vm230, %v7049, 0
        %v7115 = vsel %vm230, %v7050, 0
        %v7118 = vsel %vm230, %v7051, 0
        %v7121 = vsel %vm230, %v7052, 0
        %v7124 = vsel %vm230, %v7053, 0
        %v7127 = vsel %vm230, %v7054, 0
        %v7130 = vsel %vm230, %v7055, 0
        %v7133 = vsel %vm230, %v7056, 0
        %v7136 = vsel %vm230, %v7057, 0
        %v7139 = vsel %vm230, %v7058, 0
        %v7142 = vsel %vm230, %v7059, 0
        %v7145 = vsel %vm230, %v7060, 0
        %v7148 = vsel %vm230, %v7061, 0
        %v7151 = vsel %vm230, %v7062, 0
        %v7154 = vsel %vm230, %v7063, 0
        %v7157 = vsel %vm230, %v7064, 0
        %v7160 = vsel %vm230, %v7065, 0
        %v7163 = vsel %vm230, %v7066, 0
        %v7166 = vsel %vm717, %v7068, 0
        %7168 = vmatprep.subr.bf16.mxu0 0
        %7169 = vmatpush1.bf16.msra.mxu0 0
        %7170 = vmatprep.subr.bf16.mxu0 0
        %7171 = vmatpush1.bf16.msra.mxu0 0
        %7172 = vmatprep.subr.bf16.mxu0 0
        %7173 = vmatpush1.bf16.msra.mxu0 0
        %7174 = vmatprep.subr.bf16.mxu0 0
        %7175 = vmatpush1.bf16.msra.mxu0 0
        %7176 = vmatprep.subr.bf16.mxu0 0
        %7177 = vmatpush1.bf16.msra.mxu0 0
        %7178 = vmatprep.subr.bf16.mxu0 0
        %7179 = vmatpush1.bf16.msra.mxu0 0
        %7180 = vmatprep.subr.bf16.mxu0 0
        %7181 = vmatpush1.bf16.msra.mxu0 0
        %7182 = vmatprep.subr.bf16.mxu0 0
        %7183 = vmatpush1.bf16.msra.mxu0 %v7166
        %7184 = vmatprep.subr.bf16.mxu0 0
        %7185 = vmatpush2.bf16.msra.mxu0 0
        %7186 = vmatprep.subr.bf16.mxu0 0
        %7187 = vmatpush2.bf16.msra.mxu0 0
        %7188 = vmatprep.subr.bf16.mxu0 0
        %7189 = vmatpush2.bf16.msra.mxu0 0
        %7190 = vmatprep.subr.bf16.mxu0 0
        %7191 = vmatpush2.bf16.msra.mxu0 0
        %7192 = vmatprep.subr.bf16.mxu0 0
        %7193 = vmatpush2.bf16.msra.mxu0 0
        %7194 = vmatprep.subr.bf16.mxu0 0
        %7195 = vmatpush2.bf16.msra.mxu0 0
        %7196 = vmatprep.subr.bf16.mxu0 0
        %7197 = vmatpush2.bf16.msra.mxu0 0
        %7198 = vmatprep.subr.bf16.mxu0 0
        %7199 = vmatpush2.bf16.msra.mxu0 0
        %7200 = vmatprep.mubr.bf16.mxu0 0
        %7201 = vmatmul.mubr.bf16.gmra.mxu0 %v7070
        %v7202 = vpop.f32.mrf.mxu0
        %v7203 = vadd.f32 0.0, %v7202
        %v7204 = vpop.f32.mrf.mxu0
        %v7205 = vpop.f32.mrf.mxu0
        %v7206 = vadd.f32 0.0, %v7205
        %v7207 = vpop.f32.mrf.mxu0
        %7208 = vmatprep.mubr.bf16.mxu0 0
        %7209 = vmatmul.mubr.bf16.gmra.mxu0 %v7073
        %v7210 = vpop.f32.mrf.mxu0
        %v7211 = vadd.f32 0.0, %v7210
        %v7212 = vpop.f32.mrf.mxu0
        %v7213 = vpop.f32.mrf.mxu0
        %v7214 = vadd.f32 0.0, %v7213
        %v7215 = vpop.f32.mrf.mxu0
        %7216 = vmatprep.mubr.bf16.mxu0 0
        %7217 = vmatmul.mubr.bf16.gmra.mxu0 %v7076
        %v7218 = vpop.f32.mrf.mxu0
        %v7219 = vadd.f32 0.0, %v7218
        %v7220 = vpop.f32.mrf.mxu0
        %v7221 = vpop.f32.mrf.mxu0
        %v7222 = vadd.f32 0.0, %v7221
        %v7223 = vpop.f32.mrf.mxu0
        %7224 = vmatprep.mubr.bf16.mxu0 0
        %7225 = vmatmul.mubr.bf16.gmra.mxu0 %v7079
        %v7226 = vpop.f32.mrf.mxu0
        %v7227 = vadd.f32 0.0, %v7226
        %v7228 = vpop.f32.mrf.mxu0
        %v7229 = vpop.f32.mrf.mxu0
        %v7230 = vadd.f32 0.0, %v7229
        %v7231 = vpop.f32.mrf.mxu0
        %7232 = vmatprep.mubr.bf16.mxu0 0
        %7233 = vmatmul.mubr.bf16.gmra.mxu0 %v7082
        %v7234 = vpop.f32.mrf.mxu0
        %v7235 = vadd.f32 0.0, %v7234
        %v7236 = vpop.f32.mrf.mxu0
        %v7237 = vpop.f32.mrf.mxu0
        %v7238 = vadd.f32 0.0, %v7237
        %v7239 = vpop.f32.mrf.mxu0
        %7240 = vmatprep.mubr.bf16.mxu0 0
        %7241 = vmatmul.mubr.bf16.gmra.mxu0 %v7085
        %v7242 = vpop.f32.mrf.mxu0
        %v7243 = vadd.f32 0.0, %v7242
        %v7244 = vpop.f32.mrf.mxu0
        %v7245 = vpop.f32.mrf.mxu0
        %v7246 = vadd.f32 0.0, %v7245
        %v7247 = vpop.f32.mrf.mxu0
        %7248 = vmatprep.mubr.bf16.mxu0 0
        %7249 = vmatmul.mubr.bf16.gmra.mxu0 %v7088
        %v7250 = vpop.f32.mrf.mxu0
        %v7251 = vadd.f32 0.0, %v7250
        %v7252 = vpop.f32.mrf.mxu0
        %v7253 = vpop.f32.mrf.mxu0
        %v7254 = vadd.f32 0.0, %v7253
        %v7255 = vpop.f32.mrf.mxu0
        %7256 = vmatprep.mubr.bf16.mxu0 0
        %7257 = vmatmul.mubr.bf16.gmra.mxu0 %v7091
        %v7258 = vpop.f32.mrf.mxu0
        %v7259 = vadd.f32 0.0, %v7258
        %v7260 = vpop.f32.mrf.mxu0
        %v7261 = vpop.f32.mrf.mxu0
        %v7262 = vadd.f32 0.0, %v7261
        %v7263 = vpop.f32.mrf.mxu0
        %7264 = vmatprep.mubr.bf16.mxu0 0
        %7265 = vmatmul.mubr.bf16.gmra.mxu0 %v7094
        %v7266 = vpop.f32.mrf.mxu0
        %v7267 = vadd.f32 0.0, %v7266
        %v7268 = vpop.f32.mrf.mxu0
        %v7269 = vpop.f32.mrf.mxu0
        %v7270 = vadd.f32 0.0, %v7269
        %v7271 = vpop.f32.mrf.mxu0
        %7272 = vmatprep.mubr.bf16.mxu0 0
        %7273 = vmatmul.mubr.bf16.gmra.mxu0 %v7097
        %v7274 = vpop.f32.mrf.mxu0
        %v7275 = vadd.f32 0.0, %v7274
        %v7276 = vpop.f32.mrf.mxu0
        %v7277 = vpop.f32.mrf.mxu0
        %v7278 = vadd.f32 0.0, %v7277
        %v7279 = vpop.f32.mrf.mxu0
        %7280 = vmatprep.mubr.bf16.mxu0 0
        %7281 = vmatmul.mubr.bf16.gmra.mxu0 %v7100
        %v7282 = vpop.f32.mrf.mxu0
        %v7283 = vadd.f32 0.0, %v7282
        %v7284 = vpop.f32.mrf.mxu0
        %v7285 = vpop.f32.mrf.mxu0
        %v7286 = vadd.f32 0.0, %v7285
        %v7287 = vpop.f32.mrf.mxu0
        %7288 = vmatprep.mubr.bf16.mxu0 0
        %7289 = vmatmul.mubr.bf16.gmra.mxu0 %v7103
        %v7290 = vpop.f32.mrf.mxu0
        %v7291 = vadd.f32 0.0, %v7290
        %v7292 = vpop.f32.mrf.mxu0
        %v7293 = vpop.f32.mrf.mxu0
        %v7294 = vadd.f32 0.0, %v7293
        %v7295 = vpop.f32.mrf.mxu0
        %7296 = vmatprep.mubr.bf16.mxu0 0
        %7297 = vmatmul.mubr.bf16.gmra.mxu0 %v7106
        %v7298 = vpop.f32.mrf.mxu0
        %v7299 = vadd.f32 0.0, %v7298
        %v7300 = vpop.f32.mrf.mxu0
        %v7301 = vpop.f32.mrf.mxu0
        %v7302 = vadd.f32 0.0, %v7301
        %v7303 = vpop.f32.mrf.mxu0
        %7304 = vmatprep.mubr.bf16.mxu0 0
        %7305 = vmatmul.mubr.bf16.gmra.mxu0 %v7109
        %v7306 = vpop.f32.mrf.mxu0
        %v7307 = vadd.f32 0.0, %v7306
        %v7308 = vpop.f32.mrf.mxu0
        %v7309 = vpop.f32.mrf.mxu0
        %v7310 = vadd.f32 0.0, %v7309
        %v7311 = vpop.f32.mrf.mxu0
        %7312 = vmatprep.mubr.bf16.mxu0 0
        %7313 = vmatmul.mubr.bf16.gmra.mxu0 %v7112
        %v7314 = vpop.f32.mrf.mxu0
        %v7315 = vadd.f32 0.0, %v7314
        %v7316 = vpop.f32.mrf.mxu0
        %v7317 = vpop.f32.mrf.mxu0
        %v7318 = vadd.f32 0.0, %v7317
        %v7319 = vpop.f32.mrf.mxu0
        %7320 = vmatprep.mubr.bf16.mxu0 0
        %7321 = vmatmul.mubr.bf16.gmra.mxu0 %v7115
        %v7322 = vpop.f32.mrf.mxu0
        %v7323 = vadd.f32 0.0, %v7322
        %v7324 = vpop.f32.mrf.mxu0
        %v7325 = vpop.f32.mrf.mxu0
        %v7326 = vadd.f32 0.0, %v7325
        %v7327 = vpop.f32.mrf.mxu0
        %7328 = vmatprep.mubr.bf16.mxu0 0
        %7329 = vmatmul.mubr.bf16.gmra.mxu0 %v7118
        %v7330 = vpop.f32.mrf.mxu0
        %v7331 = vadd.f32 0.0, %v7330
        %v7332 = vpop.f32.mrf.mxu0
        %v7333 = vpop.f32.mrf.mxu0
        %v7334 = vadd.f32 0.0, %v7333
        %v7335 = vpop.f32.mrf.mxu0
        %7336 = vmatprep.mubr.bf16.mxu0 0
        %7337 = vmatmul.mubr.bf16.gmra.mxu0 %v7121
        %v7338 = vpop.f32.mrf.mxu0
        %v7339 = vadd.f32 0.0, %v7338
        %v7340 = vpop.f32.mrf.mxu0
        %v7341 = vpop.f32.mrf.mxu0
        %v7342 = vadd.f32 0.0, %v7341
        %v7343 = vpop.f32.mrf.mxu0
        %7344 = vmatprep.mubr.bf16.mxu0 0
        %7345 = vmatmul.mubr.bf16.gmra.mxu0 %v7124
        %v7346 = vpop.f32.mrf.mxu0
        %v7347 = vadd.f32 0.0, %v7346
        %v7348 = vpop.f32.mrf.mxu0
        %v7349 = vpop.f32.mrf.mxu0
        %v7350 = vadd.f32 0.0, %v7349
        %v7351 = vpop.f32.mrf.mxu0
        %7352 = vmatprep.mubr.bf16.mxu0 0
        %7353 = vmatmul.mubr.bf16.gmra.mxu0 %v7127
        %v7354 = vpop.f32.mrf.mxu0
        %v7355 = vadd.f32 0.0, %v7354
        %v7356 = vpop.f32.mrf.mxu0
        %v7357 = vpop.f32.mrf.mxu0
        %v7358 = vadd.f32 0.0, %v7357
        %v7359 = vpop.f32.mrf.mxu0
        %7360 = vmatprep.mubr.bf16.mxu0 0
        %7361 = vmatmul.mubr.bf16.gmra.mxu0 %v7130
        %v7362 = vpop.f32.mrf.mxu0
        %v7363 = vadd.f32 0.0, %v7362
        %v7364 = vpop.f32.mrf.mxu0
        %v7365 = vpop.f32.mrf.mxu0
        %v7366 = vadd.f32 0.0, %v7365
        %v7367 = vpop.f32.mrf.mxu0
        %7368 = vmatprep.mubr.bf16.mxu0 0
        %7369 = vmatmul.mubr.bf16.gmra.mxu0 %v7133
        %v7370 = vpop.f32.mrf.mxu0
        %v7371 = vadd.f32 0.0, %v7370
        %v7372 = vpop.f32.mrf.mxu0
        %v7373 = vpop.f32.mrf.mxu0
        %v7374 = vadd.f32 0.0, %v7373
        %v7375 = vpop.f32.mrf.mxu0
        %7376 = vmatprep.mubr.bf16.mxu0 0
        %7377 = vmatmul.mubr.bf16.gmra.mxu0 %v7136
        %v7378 = vpop.f32.mrf.mxu0
        %v7379 = vadd.f32 0.0, %v7378
        %v7380 = vpop.f32.mrf.mxu0
        %v7381 = vpop.f32.mrf.mxu0
        %v7382 = vadd.f32 0.0, %v7381
        %v7383 = vpop.f32.mrf.mxu0
        %7384 = vmatprep.mubr.bf16.mxu0 0
        %7385 = vmatmul.mubr.bf16.gmra.mxu0 %v7139
        %v7386 = vpop.f32.mrf.mxu0
        %v7387 = vadd.f32 0.0, %v7386
        %v7388 = vpop.f32.mrf.mxu0
        %v7389 = vpop.f32.mrf.mxu0
        %v7390 = vadd.f32 0.0, %v7389
        %v7391 = vpop.f32.mrf.mxu0
        %7392 = vmatprep.mubr.bf16.mxu0 0
        %7393 = vmatmul.mubr.bf16.gmra.mxu0 %v7142
        %v7394 = vpop.f32.mrf.mxu0
        %v7395 = vadd.f32 0.0, %v7394
        %v7396 = vpop.f32.mrf.mxu0
        %v7397 = vpop.f32.mrf.mxu0
        %v7398 = vadd.f32 0.0, %v7397
        %v7399 = vpop.f32.mrf.mxu0
        %7400 = vmatprep.mubr.bf16.mxu0 0
        %7401 = vmatmul.mubr.bf16.gmra.mxu0 %v7145
        %v7402 = vpop.f32.mrf.mxu0
        %v7403 = vadd.f32 0.0, %v7402
        %v7404 = vpop.f32.mrf.mxu0
        %v7405 = vpop.f32.mrf.mxu0
        %v7406 = vadd.f32 0.0, %v7405
        %v7407 = vpop.f32.mrf.mxu0
        %7408 = vmatprep.mubr.bf16.mxu0 0
        %7409 = vmatmul.mubr.bf16.gmra.mxu0 %v7148
        %v7410 = vpop.f32.mrf.mxu0
        %v7411 = vadd.f32 0.0, %v7410
        %v7412 = vpop.f32.mrf.mxu0
        %v7413 = vpop.f32.mrf.mxu0
        %v7414 = vadd.f32 0.0, %v7413
        %v7415 = vpop.f32.mrf.mxu0
        %7416 = vmatprep.mubr.bf16.mxu0 0
        %7417 = vmatmul.mubr.bf16.gmra.mxu0 %v7151
        %v7418 = vpop.f32.mrf.mxu0
        %v7419 = vadd.f32 0.0, %v7418
        %v7420 = vpop.f32.mrf.mxu0
        %v7421 = vpop.f32.mrf.mxu0
        %v7422 = vadd.f32 0.0, %v7421
        %v7423 = vpop.f32.mrf.mxu0
        %7424 = vmatprep.mubr.bf16.mxu0 0
        %7425 = vmatmul.mubr.bf16.gmra.mxu0 %v7154
        %v7426 = vpop.f32.mrf.mxu0
        %v7427 = vadd.f32 0.0, %v7426
        %v7428 = vpop.f32.mrf.mxu0
        %v7429 = vpop.f32.mrf.mxu0
        %v7430 = vadd.f32 0.0, %v7429
        %v7431 = vpop.f32.mrf.mxu0
        %7432 = vmatprep.mubr.bf16.mxu0 0
        %7433 = vmatmul.mubr.bf16.gmra.mxu0 %v7157
        %v7434 = vpop.f32.mrf.mxu0
        %v7435 = vadd.f32 0.0, %v7434
        %v7436 = vpop.f32.mrf.mxu0
        %v7437 = vpop.f32.mrf.mxu0
        %v7438 = vadd.f32 0.0, %v7437
        %v7439 = vpop.f32.mrf.mxu0
        %7440 = vmatprep.mubr.bf16.mxu0 0
        %7441 = vmatmul.mubr.bf16.gmra.mxu0 %v7160
        %v7442 = vpop.f32.mrf.mxu0
        %v7443 = vadd.f32 0.0, %v7442
        %v7444 = vpop.f32.mrf.mxu0
        %v7445 = vpop.f32.mrf.mxu0
        %v7446 = vadd.f32 0.0, %v7445
        %v7447 = vpop.f32.mrf.mxu0
        %7448 = vmatprep.mubr.bf16.mxu0 0
        %7449 = vmatmul.mubr.bf16.gmra.mxu0 %v7163
        %v7450 = vpop.f32.mrf.mxu0
        %v7451 = vadd.f32 0.0, %v7450
        %v7452 = vpop.f32.mrf.mxu0
        %v7453 = vpop.f32.mrf.mxu0
        %v7454 = vadd.f32 0.0, %v7453
        %v7455 = vpop.f32.mrf.mxu0
        %7456 = vdwg.mxu0
        %v7457 = vadd.f32 %v6907, %v7203
        %v7458 = vadd.f32 %v6908, %v7206
        %v7459 = vadd.f32 %v6909, %v7211
        %v7460 = vadd.f32 %v6910, %v7214
        %v7461 = vadd.f32 %v6911, %v7219
        %v7462 = vadd.f32 %v6912, %v7222
        %v7463 = vadd.f32 %v6913, %v7227
        %v7464 = vadd.f32 %v6914, %v7230
        %v7465 = vadd.f32 %v6915, %v7235
        %v7466 = vadd.f32 %v6916, %v7238
        %v7467 = vadd.f32 %v6917, %v7243
        %v7468 = vadd.f32 %v6918, %v7246
        %v7469 = vadd.f32 %v6919, %v7251
        %v7470 = vadd.f32 %v6920, %v7254
        %v7471 = vadd.f32 %v6921, %v7259
        %v7472 = vadd.f32 %v6922, %v7262
        %v7473 = vadd.f32 %v6923, %v7267
        %v7474 = vadd.f32 %v6924, %v7270
        %v7475 = vadd.f32 %v6925, %v7275
        %v7476 = vadd.f32 %v6926, %v7278
        %v7477 = vadd.f32 %v6927, %v7283
        %v7478 = vadd.f32 %v6928, %v7286
        %v7479 = vadd.f32 %v6929, %v7291
        %v7480 = vadd.f32 %v6930, %v7294
        %v7481 = vadd.f32 %v6931, %v7299
        %v7482 = vadd.f32 %v6932, %v7302
        %v7483 = vadd.f32 %v6933, %v7307
        %v7484 = vadd.f32 %v6934, %v7310
        %v7485 = vadd.f32 %v6935, %v7315
        %v7486 = vadd.f32 %v6936, %v7318
        %v7487 = vadd.f32 %v6937, %v7323
        %v7488 = vadd.f32 %v6938, %v7326
        %v7489 = vadd.f32 %v6939, %v7331
        %v7490 = vadd.f32 %v6940, %v7334
        %v7491 = vadd.f32 %v6941, %v7339
        %v7492 = vadd.f32 %v6942, %v7342
        %v7493 = vadd.f32 %v6943, %v7347
        %v7494 = vadd.f32 %v6944, %v7350
        %v7495 = vadd.f32 %v6945, %v7355
        %v7496 = vadd.f32 %v6946, %v7358
        %v7497 = vadd.f32 %v6947, %v7363
        %v7498 = vadd.f32 %v6948, %v7366
        %v7499 = vadd.f32 %v6949, %v7371
        %v7500 = vadd.f32 %v6950, %v7374
        %v7501 = vadd.f32 %v6951, %v7379
        %v7502 = vadd.f32 %v6952, %v7382
        %v7503 = vadd.f32 %v6953, %v7387
        %v7504 = vadd.f32 %v6954, %v7390
        %v7505 = vadd.f32 %v6955, %v7395
        %v7506 = vadd.f32 %v6956, %v7398
        %v7507 = vadd.f32 %v6957, %v7403
        %v7508 = vadd.f32 %v6958, %v7406
        %v7509 = vadd.f32 %v6959, %v7411
        %v7510 = vadd.f32 %v6960, %v7414
        %v7511 = vadd.f32 %v6961, %v7419
        %v7512 = vadd.f32 %v6962, %v7422
        %v7513 = vadd.f32 %v6963, %v7427
        %v7514 = vadd.f32 %v6964, %v7430
        %v7515 = vadd.f32 %v6965, %v7435
        %v7516 = vadd.f32 %v6966, %v7438
        %v7517 = vadd.f32 %v6967, %v7443
        %v7518 = vadd.f32 %v6968, %v7446
        %v7519 = vadd.f32 %v6969, %v7451
        %v7520 = vadd.f32 %v6970, %v7454
        %v7521 = vld [vmem:[%s5385 + $0x1] sm:$0xff]
        %v7522 = vld [vmem:[%s5385 + $0x11] sm:$0xff]
        %v7523 = vld [vmem:[%s5385 + $0x21] sm:$0xff]
        %v7524 = vld [vmem:[%s5385 + $0x31] sm:$0xff]
        %v7525 = vld [vmem:[%s5385 + $0x41] sm:$0xff]
        %v7526 = vld [vmem:[%s5385 + $0x51] sm:$0xff]
        %v7527 = vld [vmem:[%s5385 + $0x61] sm:$0xff]
        %v7528 = vld [vmem:[%s5385 + $0x71] sm:$0xff]
        %v7529 = vld [vmem:[%s5385 + $0xa1] sm:$0xff]
        %v7530 = vld [vmem:[%s5385 + $0xb1] sm:$0xff]
        %v7531 = vld [vmem:[%s5385 + $0xc1] sm:$0xff]
        %v7532 = vld [vmem:[%s5385 + $0xd1] sm:$0xff]
        %v7533 = vld [vmem:[%s5385 + $0xe1] sm:$0xff]
        %v7534 = vld [vmem:[%s5385 + $0xf1] sm:$0xff]
        %v7535 = vld [vmem:[%s5385 + $0x101] sm:$0xff]
        %v7536 = vld [vmem:[%s5385 + $0x111] sm:$0xff]
        %v7537 = vld [vmem:[%s5385 + $0x141] sm:$0xff]
        %v7538 = vld [vmem:[%s5385 + $0x151] sm:$0xff]
        %v7539 = vld [vmem:[%s5385 + $0x161] sm:$0xff]
        %v7540 = vld [vmem:[%s5385 + $0x171] sm:$0xff]
        %v7541 = vld [vmem:[%s5385 + $0x181] sm:$0xff]
        %v7542 = vld [vmem:[%s5385 + $0x191] sm:$0xff]
        %v7543 = vld [vmem:[%s5385 + $0x1a1] sm:$0xff]
        %v7544 = vld [vmem:[%s5385 + $0x1b1] sm:$0xff]
        %v7545 = vld [vmem:[%s5385 + $0x1e1] sm:$0xff]
        %v7546 = vld [vmem:[%s5385 + $0x1f1] sm:$0xff]
        %v7547 = vld [vmem:[%s5385 + $0x201] sm:$0xff]
        %v7548 = vld [vmem:[%s5385 + $0x211] sm:$0xff]
        %v7549 = vld [vmem:[%s5385 + $0x221] sm:$0xff]
        %v7550 = vld [vmem:[%s5385 + $0x231] sm:$0xff]
        %v7551 = vld [vmem:[%s5385 + $0x241] sm:$0xff]
        %v7552 = vld [vmem:[%s5385 + $0x251] sm:$0xff]
        %v7553 = vld [vmem:[%s5385 + $0x281] sm:$0xff]
        %v7554 = vld [vmem:[%s5385 + $0x291] sm:$0xff]
        %v7555 = vld [vmem:[%s5385 + $0x2a1] sm:$0xff]
        %v7556 = vld [vmem:[%s5385 + $0x2b1] sm:$0xff]
        %v7557 = vld [vmem:[%s5385 + $0x2c1] sm:$0xff]
        %v7558 = vld [vmem:[%s5385 + $0x2d1] sm:$0xff]
        %v7559 = vld [vmem:[%s5385 + $0x2e1] sm:$0xff]
        %v7560 = vld [vmem:[%s5385 + $0x2f1] sm:$0xff]
        %v7561 = vld [vmem:[%s5385 + $0x321] sm:$0xff]
        %v7562 = vld [vmem:[%s5385 + $0x331] sm:$0xff]
        %v7563 = vld [vmem:[%s5385 + $0x341] sm:$0xff]
        %v7564 = vld [vmem:[%s5385 + $0x351] sm:$0xff]
        %v7565 = vld [vmem:[%s5385 + $0x361] sm:$0xff]
        %v7566 = vld [vmem:[%s5385 + $0x371] sm:$0xff]
        %v7567 = vld [vmem:[%s5385 + $0x381] sm:$0xff]
        %v7568 = vld [vmem:[%s5385 + $0x391] sm:$0xff]
        %v7569 = vld [vmem:[%s5385 + $0x3c1] sm:$0xff]
        %v7570 = vld [vmem:[%s5385 + $0x3d1] sm:$0xff]
        %v7571 = vld [vmem:[%s5385 + $0x3e1] sm:$0xff]
        %v7572 = vld [vmem:[%s5385 + $0x3f1] sm:$0xff]
        %v7573 = vld [vmem:[%s5385 + $0x401] sm:$0xff]
        %v7574 = vld [vmem:[%s5385 + $0x411] sm:$0xff]
        %v7575 = vld [vmem:[%s5385 + $0x421] sm:$0xff]
        %v7576 = vld [vmem:[%s5385 + $0x431] sm:$0xff]
        %v7577 = vld [vmem:[%s5385 + $0x461] sm:$0xff]
        %v7578 = vld [vmem:[%s5385 + $0x471] sm:$0xff]
        %v7579 = vld [vmem:[%s5385 + $0x481] sm:$0xff]
        %v7580 = vld [vmem:[%s5385 + $0x491] sm:$0xff]
        %v7581 = vld [vmem:[%s5385 + $0x4a1] sm:$0xff]
        %v7582 = vld [vmem:[%s5385 + $0x4b1] sm:$0xff]
        %v7583 = vld [vmem:[%s5385 + $0x4c1] sm:$0xff]
        %v7584 = vld [vmem:[%s5385 + $0x4d1] sm:$0xff]
        %v7585 = vpack.c.bf16 %v7522, %v7521
        %v7586 = vpack.c.bf16 %v7524, %v7523
        %v7587 = vpack.c.bf16 %v7526, %v7525
        %v7588 = vpack.c.bf16 %v7528, %v7527
        %v7589 = vpack.c.bf16 %v7530, %v7529
        %v7590 = vpack.c.bf16 %v7532, %v7531
        %v7591 = vpack.c.bf16 %v7534, %v7533
        %v7592 = vpack.c.bf16 %v7536, %v7535
        %v7593 = vpack.c.bf16 %v7538, %v7537
        %v7594 = vpack.c.bf16 %v7540, %v7539
        %v7595 = vpack.c.bf16 %v7542, %v7541
        %v7596 = vpack.c.bf16 %v7544, %v7543
        %v7597 = vpack.c.bf16 %v7546, %v7545
        %v7598 = vpack.c.bf16 %v7548, %v7547
        %v7599 = vpack.c.bf16 %v7550, %v7549
        %v7600 = vpack.c.bf16 %v7552, %v7551
        %v7601 = vpack.c.bf16 %v7554, %v7553
        %v7602 = vpack.c.bf16 %v7556, %v7555
        %v7603 = vpack.c.bf16 %v7558, %v7557
        %v7604 = vpack.c.bf16 %v7560, %v7559
        %v7605 = vpack.c.bf16 %v7562, %v7561
        %v7606 = vpack.c.bf16 %v7564, %v7563
        %v7607 = vpack.c.bf16 %v7566, %v7565
        %v7608 = vpack.c.bf16 %v7568, %v7567
        %v7609 = vpack.c.bf16 %v7570, %v7569
        %v7610 = vpack.c.bf16 %v7572, %v7571
        %v7611 = vpack.c.bf16 %v7574, %v7573
        %v7612 = vpack.c.bf16 %v7576, %v7575
        %v7613 = vpack.c.bf16 %v7578, %v7577
        %v7614 = vpack.c.bf16 %v7580, %v7579
        %v7615 = vpack.c.bf16 %v7582, %v7581
        %v7616 = vpack.c.bf16 %v7584, %v7583
        %s7617 = scalar_lea.vmem %s3, 16
        %v7618 = vld [vmem:[%s7617] sm:$0xf]
        %v7620 = vsel %vm230, %v7585, 0
        %v7623 = vsel %vm230, %v7586, 0
        %v7626 = vsel %vm230, %v7587, 0
        %v7629 = vsel %vm230, %v7588, 0
        %v7632 = vsel %vm230, %v7589, 0
        %v7635 = vsel %vm230, %v7590, 0
        %v7638 = vsel %vm230, %v7591, 0
        %v7641 = vsel %vm230, %v7592, 0
        %v7644 = vsel %vm230, %v7593, 0
        %v7647 = vsel %vm230, %v7594, 0
        %v7650 = vsel %vm230, %v7595, 0
        %v7653 = vsel %vm230, %v7596, 0
        %v7656 = vsel %vm230, %v7597, 0
        %v7659 = vsel %vm230, %v7598, 0
        %v7662 = vsel %vm230, %v7599, 0
        %v7665 = vsel %vm230, %v7600, 0
        %v7668 = vsel %vm230, %v7601, 0
        %v7671 = vsel %vm230, %v7602, 0
        %v7674 = vsel %vm230, %v7603, 0
        %v7677 = vsel %vm230, %v7604, 0
        %v7680 = vsel %vm230, %v7605, 0
        %v7683 = vsel %vm230, %v7606, 0
        %v7686 = vsel %vm230, %v7607, 0
        %v7689 = vsel %vm230, %v7608, 0
        %v7692 = vsel %vm230, %v7609, 0
        %v7695 = vsel %vm230, %v7610, 0
        %v7698 = vsel %vm230, %v7611, 0
        %v7701 = vsel %vm230, %v7612, 0
        %v7704 = vsel %vm230, %v7613, 0
        %v7707 = vsel %vm230, %v7614, 0
        %v7710 = vsel %vm230, %v7615, 0
        %v7713 = vsel %vm230, %v7616, 0
        %v7716 = vsel %vm717, %v7618, 0
        %7718 = vmatprep.subr.bf16.mxu0 0
        %7719 = vmatpush1.bf16.msra.mxu0 0
        %7720 = vmatprep.subr.bf16.mxu0 0
        %7721 = vmatpush1.bf16.msra.mxu0 0
        %7722 = vmatprep.subr.bf16.mxu0 0
        %7723 = vmatpush1.bf16.msra.mxu0 0
        %7724 = vmatprep.subr.bf16.mxu0 0
        %7725 = vmatpush1.bf16.msra.mxu0 0
        %7726 = vmatprep.subr.bf16.mxu0 0
        %7727 = vmatpush1.bf16.msra.mxu0 0
        %7728 = vmatprep.subr.bf16.mxu0 0
        %7729 = vmatpush1.bf16.msra.mxu0 0
        %7730 = vmatprep.subr.bf16.mxu0 0
        %7731 = vmatpush1.bf16.msra.mxu0 0
        %7732 = vmatprep.subr.bf16.mxu0 0
        %7733 = vmatpush1.bf16.msra.mxu0 %v7716
        %7734 = vmatprep.subr.bf16.mxu0 0
        %7735 = vmatpush2.bf16.msra.mxu0 0
        %7736 = vmatprep.subr.bf16.mxu0 0
        %7737 = vmatpush2.bf16.msra.mxu0 0
        %7738 = vmatprep.subr.bf16.mxu0 0
        %7739 = vmatpush2.bf16.msra.mxu0 0
        %7740 = vmatprep.subr.bf16.mxu0 0
        %7741 = vmatpush2.bf16.msra.mxu0 0
        %7742 = vmatprep.subr.bf16.mxu0 0
        %7743 = vmatpush2.bf16.msra.mxu0 0
        %7744 = vmatprep.subr.bf16.mxu0 0
        %7745 = vmatpush2.bf16.msra.mxu0 0
        %7746 = vmatprep.subr.bf16.mxu0 0
        %7747 = vmatpush2.bf16.msra.mxu0 0
        %7748 = vmatprep.subr.bf16.mxu0 0
        %7749 = vmatpush2.bf16.msra.mxu0 0
        %7750 = vmatprep.mubr.bf16.mxu0 0
        %7751 = vmatmul.mubr.bf16.gmra.mxu0 %v7620
        %v7752 = vpop.f32.mrf.mxu0
        %v7753 = vadd.f32 0.0, %v7752
        %v7754 = vpop.f32.mrf.mxu0
        %v7755 = vpop.f32.mrf.mxu0
        %v7756 = vadd.f32 0.0, %v7755
        %v7757 = vpop.f32.mrf.mxu0
        %7758 = vmatprep.mubr.bf16.mxu0 0
        %7759 = vmatmul.mubr.bf16.gmra.mxu0 %v7623
        %v7760 = vpop.f32.mrf.mxu0
        %v7761 = vadd.f32 0.0, %v7760
        %v7762 = vpop.f32.mrf.mxu0
        %v7763 = vpop.f32.mrf.mxu0
        %v7764 = vadd.f32 0.0, %v7763
        %v7765 = vpop.f32.mrf.mxu0
        %7766 = vmatprep.mubr.bf16.mxu0 0
        %7767 = vmatmul.mubr.bf16.gmra.mxu0 %v7626
        %v7768 = vpop.f32.mrf.mxu0
        %v7769 = vadd.f32 0.0, %v7768
        %v7770 = vpop.f32.mrf.mxu0
        %v7771 = vpop.f32.mrf.mxu0
        %v7772 = vadd.f32 0.0, %v7771
        %v7773 = vpop.f32.mrf.mxu0
        %7774 = vmatprep.mubr.bf16.mxu0 0
        %7775 = vmatmul.mubr.bf16.gmra.mxu0 %v7629
        %v7776 = vpop.f32.mrf.mxu0
        %v7777 = vadd.f32 0.0, %v7776
        %v7778 = vpop.f32.mrf.mxu0
        %v7779 = vpop.f32.mrf.mxu0
        %v7780 = vadd.f32 0.0, %v7779
        %v7781 = vpop.f32.mrf.mxu0
        %7782 = vmatprep.mubr.bf16.mxu0 0
        %7783 = vmatmul.mubr.bf16.gmra.mxu0 %v7632
        %v7784 = vpop.f32.mrf.mxu0
        %v7785 = vadd.f32 0.0, %v7784
        %v7786 = vpop.f32.mrf.mxu0
        %v7787 = vpop.f32.mrf.mxu0
        %v7788 = vadd.f32 0.0, %v7787
        %v7789 = vpop.f32.mrf.mxu0
        %7790 = vmatprep.mubr.bf16.mxu0 0
        %7791 = vmatmul.mubr.bf16.gmra.mxu0 %v7635
        %v7792 = vpop.f32.mrf.mxu0
        %v7793 = vadd.f32 0.0, %v7792
        %v7794 = vpop.f32.mrf.mxu0
        %v7795 = vpop.f32.mrf.mxu0
        %v7796 = vadd.f32 0.0, %v7795
        %v7797 = vpop.f32.mrf.mxu0
        %7798 = vmatprep.mubr.bf16.mxu0 0
        %7799 = vmatmul.mubr.bf16.gmra.mxu0 %v7638
        %v7800 = vpop.f32.mrf.mxu0
        %v7801 = vadd.f32 0.0, %v7800
        %v7802 = vpop.f32.mrf.mxu0
        %v7803 = vpop.f32.mrf.mxu0
        %v7804 = vadd.f32 0.0, %v7803
        %v7805 = vpop.f32.mrf.mxu0
        %7806 = vmatprep.mubr.bf16.mxu0 0
        %7807 = vmatmul.mubr.bf16.gmra.mxu0 %v7641
        %v7808 = vpop.f32.mrf.mxu0
        %v7809 = vadd.f32 0.0, %v7808
        %v7810 = vpop.f32.mrf.mxu0
        %v7811 = vpop.f32.mrf.mxu0
        %v7812 = vadd.f32 0.0, %v7811
        %v7813 = vpop.f32.mrf.mxu0
        %7814 = vmatprep.mubr.bf16.mxu0 0
        %7815 = vmatmul.mubr.bf16.gmra.mxu0 %v7644
        %v7816 = vpop.f32.mrf.mxu0
        %v7817 = vadd.f32 0.0, %v7816
        %v7818 = vpop.f32.mrf.mxu0
        %v7819 = vpop.f32.mrf.mxu0
        %v7820 = vadd.f32 0.0, %v7819
        %v7821 = vpop.f32.mrf.mxu0
        %7822 = vmatprep.mubr.bf16.mxu0 0
        %7823 = vmatmul.mubr.bf16.gmra.mxu0 %v7647
        %v7824 = vpop.f32.mrf.mxu0
        %v7825 = vadd.f32 0.0, %v7824
        %v7826 = vpop.f32.mrf.mxu0
        %v7827 = vpop.f32.mrf.mxu0
        %v7828 = vadd.f32 0.0, %v7827
        %v7829 = vpop.f32.mrf.mxu0
        %7830 = vmatprep.mubr.bf16.mxu0 0
        %7831 = vmatmul.mubr.bf16.gmra.mxu0 %v7650
        %v7832 = vpop.f32.mrf.mxu0
        %v7833 = vadd.f32 0.0, %v7832
        %v7834 = vpop.f32.mrf.mxu0
        %v7835 = vpop.f32.mrf.mxu0
        %v7836 = vadd.f32 0.0, %v7835
        %v7837 = vpop.f32.mrf.mxu0
        %7838 = vmatprep.mubr.bf16.mxu0 0
        %7839 = vmatmul.mubr.bf16.gmra.mxu0 %v7653
        %v7840 = vpop.f32.mrf.mxu0
        %v7841 = vadd.f32 0.0, %v7840
        %v7842 = vpop.f32.mrf.mxu0
        %v7843 = vpop.f32.mrf.mxu0
        %v7844 = vadd.f32 0.0, %v7843
        %v7845 = vpop.f32.mrf.mxu0
        %7846 = vmatprep.mubr.bf16.mxu0 0
        %7847 = vmatmul.mubr.bf16.gmra.mxu0 %v7656
        %v7848 = vpop.f32.mrf.mxu0
        %v7849 = vadd.f32 0.0, %v7848
        %v7850 = vpop.f32.mrf.mxu0
        %v7851 = vpop.f32.mrf.mxu0
        %v7852 = vadd.f32 0.0, %v7851
        %v7853 = vpop.f32.mrf.mxu0
        %7854 = vmatprep.mubr.bf16.mxu0 0
        %7855 = vmatmul.mubr.bf16.gmra.mxu0 %v7659
        %v7856 = vpop.f32.mrf.mxu0
        %v7857 = vadd.f32 0.0, %v7856
        %v7858 = vpop.f32.mrf.mxu0
        %v7859 = vpop.f32.mrf.mxu0
        %v7860 = vadd.f32 0.0, %v7859
        %v7861 = vpop.f32.mrf.mxu0
        %7862 = vmatprep.mubr.bf16.mxu0 0
        %7863 = vmatmul.mubr.bf16.gmra.mxu0 %v7662
        %v7864 = vpop.f32.mrf.mxu0
        %v7865 = vadd.f32 0.0, %v7864
        %v7866 = vpop.f32.mrf.mxu0
        %v7867 = vpop.f32.mrf.mxu0
        %v7868 = vadd.f32 0.0, %v7867
        %v7869 = vpop.f32.mrf.mxu0
        %7870 = vmatprep.mubr.bf16.mxu0 0
        %7871 = vmatmul.mubr.bf16.gmra.mxu0 %v7665
        %v7872 = vpop.f32.mrf.mxu0
        %v7873 = vadd.f32 0.0, %v7872
        %v7874 = vpop.f32.mrf.mxu0
        %v7875 = vpop.f32.mrf.mxu0
        %v7876 = vadd.f32 0.0, %v7875
        %v7877 = vpop.f32.mrf.mxu0
        %7878 = vmatprep.mubr.bf16.mxu0 0
        %7879 = vmatmul.mubr.bf16.gmra.mxu0 %v7668
        %v7880 = vpop.f32.mrf.mxu0
        %v7881 = vadd.f32 0.0, %v7880
        %v7882 = vpop.f32.mrf.mxu0
        %v7883 = vpop.f32.mrf.mxu0
        %v7884 = vadd.f32 0.0, %v7883
        %v7885 = vpop.f32.mrf.mxu0
        %7886 = vmatprep.mubr.bf16.mxu0 0
        %7887 = vmatmul.mubr.bf16.gmra.mxu0 %v7671
        %v7888 = vpop.f32.mrf.mxu0
        %v7889 = vadd.f32 0.0, %v7888
        %v7890 = vpop.f32.mrf.mxu0
        %v7891 = vpop.f32.mrf.mxu0
        %v7892 = vadd.f32 0.0, %v7891
        %v7893 = vpop.f32.mrf.mxu0
        %7894 = vmatprep.mubr.bf16.mxu0 0
        %7895 = vmatmul.mubr.bf16.gmra.mxu0 %v7674
        %v7896 = vpop.f32.mrf.mxu0
        %v7897 = vadd.f32 0.0, %v7896
        %v7898 = vpop.f32.mrf.mxu0
        %v7899 = vpop.f32.mrf.mxu0
        %v7900 = vadd.f32 0.0, %v7899
        %v7901 = vpop.f32.mrf.mxu0
        %7902 = vmatprep.mubr.bf16.mxu0 0
        %7903 = vmatmul.mubr.bf16.gmra.mxu0 %v7677
        %v7904 = vpop.f32.mrf.mxu0
        %v7905 = vadd.f32 0.0, %v7904
        %v7906 = vpop.f32.mrf.mxu0
        %v7907 = vpop.f32.mrf.mxu0
        %v7908 = vadd.f32 0.0, %v7907
        %v7909 = vpop.f32.mrf.mxu0
        %7910 = vmatprep.mubr.bf16.mxu0 0
        %7911 = vmatmul.mubr.bf16.gmra.mxu0 %v7680
        %v7912 = vpop.f32.mrf.mxu0
        %v7913 = vadd.f32 0.0, %v7912
        %v7914 = vpop.f32.mrf.mxu0
        %v7915 = vpop.f32.mrf.mxu0
        %v7916 = vadd.f32 0.0, %v7915
        %v7917 = vpop.f32.mrf.mxu0
        %7918 = vmatprep.mubr.bf16.mxu0 0
        %7919 = vmatmul.mubr.bf16.gmra.mxu0 %v7683
        %v7920 = vpop.f32.mrf.mxu0
        %v7921 = vadd.f32 0.0, %v7920
        %v7922 = vpop.f32.mrf.mxu0
        %v7923 = vpop.f32.mrf.mxu0
        %v7924 = vadd.f32 0.0, %v7923
        %v7925 = vpop.f32.mrf.mxu0
        %7926 = vmatprep.mubr.bf16.mxu0 0
        %7927 = vmatmul.mubr.bf16.gmra.mxu0 %v7686
        %v7928 = vpop.f32.mrf.mxu0
        %v7929 = vadd.f32 0.0, %v7928
        %v7930 = vpop.f32.mrf.mxu0
        %v7931 = vpop.f32.mrf.mxu0
        %v7932 = vadd.f32 0.0, %v7931
        %v7933 = vpop.f32.mrf.mxu0
        %7934 = vmatprep.mubr.bf16.mxu0 0
        %7935 = vmatmul.mubr.bf16.gmra.mxu0 %v7689
        %v7936 = vpop.f32.mrf.mxu0
        %v7937 = vadd.f32 0.0, %v7936
        %v7938 = vpop.f32.mrf.mxu0
        %v7939 = vpop.f32.mrf.mxu0
        %v7940 = vadd.f32 0.0, %v7939
        %v7941 = vpop.f32.mrf.mxu0
        %7942 = vmatprep.mubr.bf16.mxu0 0
        %7943 = vmatmul.mubr.bf16.gmra.mxu0 %v7692
        %v7944 = vpop.f32.mrf.mxu0
        %v7945 = vadd.f32 0.0, %v7944
        %v7946 = vpop.f32.mrf.mxu0
        %v7947 = vpop.f32.mrf.mxu0
        %v7948 = vadd.f32 0.0, %v7947
        %v7949 = vpop.f32.mrf.mxu0
        %7950 = vmatprep.mubr.bf16.mxu0 0
        %7951 = vmatmul.mubr.bf16.gmra.mxu0 %v7695
        %v7952 = vpop.f32.mrf.mxu0
        %v7953 = vadd.f32 0.0, %v7952
        %v7954 = vpop.f32.mrf.mxu0
        %v7955 = vpop.f32.mrf.mxu0
        %v7956 = vadd.f32 0.0, %v7955
        %v7957 = vpop.f32.mrf.mxu0
        %7958 = vmatprep.mubr.bf16.mxu0 0
        %7959 = vmatmul.mubr.bf16.gmra.mxu0 %v7698
        %v7960 = vpop.f32.mrf.mxu0
        %v7961 = vadd.f32 0.0, %v7960
        %v7962 = vpop.f32.mrf.mxu0
        %v7963 = vpop.f32.mrf.mxu0
        %v7964 = vadd.f32 0.0, %v7963
        %v7965 = vpop.f32.mrf.mxu0
        %7966 = vmatprep.mubr.bf16.mxu0 0
        %7967 = vmatmul.mubr.bf16.gmra.mxu0 %v7701
        %v7968 = vpop.f32.mrf.mxu0
        %v7969 = vadd.f32 0.0, %v7968
        %v7970 = vpop.f32.mrf.mxu0
        %v7971 = vpop.f32.mrf.mxu0
        %v7972 = vadd.f32 0.0, %v7971
        %v7973 = vpop.f32.mrf.mxu0
        %7974 = vmatprep.mubr.bf16.mxu0 0
        %7975 = vmatmul.mubr.bf16.gmra.mxu0 %v7704
        %v7976 = vpop.f32.mrf.mxu0
        %v7977 = vadd.f32 0.0, %v7976
        %v7978 = vpop.f32.mrf.mxu0
        %v7979 = vpop.f32.mrf.mxu0
        %v7980 = vadd.f32 0.0, %v7979
        %v7981 = vpop.f32.mrf.mxu0
        %7982 = vmatprep.mubr.bf16.mxu0 0
        %7983 = vmatmul.mubr.bf16.gmra.mxu0 %v7707
        %v7984 = vpop.f32.mrf.mxu0
        %v7985 = vadd.f32 0.0, %v7984
        %v7986 = vpop.f32.mrf.mxu0
        %v7987 = vpop.f32.mrf.mxu0
        %v7988 = vadd.f32 0.0, %v7987
        %v7989 = vpop.f32.mrf.mxu0
        %7990 = vmatprep.mubr.bf16.mxu0 0
        %7991 = vmatmul.mubr.bf16.gmra.mxu0 %v7710
        %v7992 = vpop.f32.mrf.mxu0
        %v7993 = vadd.f32 0.0, %v7992
        %v7994 = vpop.f32.mrf.mxu0
        %v7995 = vpop.f32.mrf.mxu0
        %v7996 = vadd.f32 0.0, %v7995
        %v7997 = vpop.f32.mrf.mxu0
        %7998 = vmatprep.mubr.bf16.mxu0 0
        %7999 = vmatmul.mubr.bf16.gmra.mxu0 %v7713
        %v8000 = vpop.f32.mrf.mxu0
        %v8001 = vadd.f32 0.0, %v8000
        %v8002 = vpop.f32.mrf.mxu0
        %v8003 = vpop.f32.mrf.mxu0
        %v8004 = vadd.f32 0.0, %v8003
        %v8005 = vpop.f32.mrf.mxu0
        %8006 = vdwg.mxu0
        %v8007 = vadd.f32 %v7457, %v7753
        %v8008 = vadd.f32 %v7458, %v7756
        %v8009 = vadd.f32 %v7459, %v7761
        %v8010 = vadd.f32 %v7460, %v7764
        %v8011 = vadd.f32 %v7461, %v7769
        %v8012 = vadd.f32 %v7462, %v7772
        %v8013 = vadd.f32 %v7463, %v7777
        %v8014 = vadd.f32 %v7464, %v7780
        %v8015 = vadd.f32 %v7465, %v7785
        %v8016 = vadd.f32 %v7466, %v7788
        %v8017 = vadd.f32 %v7467, %v7793
        %v8018 = vadd.f32 %v7468, %v7796
        %v8019 = vadd.f32 %v7469, %v7801
        %v8020 = vadd.f32 %v7470, %v7804
        %v8021 = vadd.f32 %v7471, %v7809
        %v8022 = vadd.f32 %v7472, %v7812
        %v8023 = vadd.f32 %v7473, %v7817
        %v8024 = vadd.f32 %v7474, %v7820
        %v8025 = vadd.f32 %v7475, %v7825
        %v8026 = vadd.f32 %v7476, %v7828
        %v8027 = vadd.f32 %v7477, %v7833
        %v8028 = vadd.f32 %v7478, %v7836
        %v8029 = vadd.f32 %v7479, %v7841
        %v8030 = vadd.f32 %v7480, %v7844
        %v8031 = vadd.f32 %v7481, %v7849
        %v8032 = vadd.f32 %v7482, %v7852
        %v8033 = vadd.f32 %v7483, %v7857
        %v8034 = vadd.f32 %v7484, %v7860
        %v8035 = vadd.f32 %v7485, %v7865
        %v8036 = vadd.f32 %v7486, %v7868
        %v8037 = vadd.f32 %v7487, %v7873
        %v8038 = vadd.f32 %v7488, %v7876
        %v8039 = vadd.f32 %v7489, %v7881
        %v8040 = vadd.f32 %v7490, %v7884
        %v8041 = vadd.f32 %v7491, %v7889
        %v8042 = vadd.f32 %v7492, %v7892
        %v8043 = vadd.f32 %v7493, %v7897
        %v8044 = vadd.f32 %v7494, %v7900
        %v8045 = vadd.f32 %v7495, %v7905
        %v8046 = vadd.f32 %v7496, %v7908
        %v8047 = vadd.f32 %v7497, %v7913
        %v8048 = vadd.f32 %v7498, %v7916
        %v8049 = vadd.f32 %v7499, %v7921
        %v8050 = vadd.f32 %v7500, %v7924
        %v8051 = vadd.f32 %v7501, %v7929
        %v8052 = vadd.f32 %v7502, %v7932
        %v8053 = vadd.f32 %v7503, %v7937
        %v8054 = vadd.f32 %v7504, %v7940
        %v8055 = vadd.f32 %v7505, %v7945
        %v8056 = vadd.f32 %v7506, %v7948
        %v8057 = vadd.f32 %v7507, %v7953
        %v8058 = vadd.f32 %v7508, %v7956
        %v8059 = vadd.f32 %v7509, %v7961
        %v8060 = vadd.f32 %v7510, %v7964
        %v8061 = vadd.f32 %v7511, %v7969
        %v8062 = vadd.f32 %v7512, %v7972
        %v8063 = vadd.f32 %v7513, %v7977
        %v8064 = vadd.f32 %v7514, %v7980
        %v8065 = vadd.f32 %v7515, %v7985
        %v8066 = vadd.f32 %v7516, %v7988
        %v8067 = vadd.f32 %v7517, %v7993
        %v8068 = vadd.f32 %v7518, %v7996
        %v8069 = vadd.f32 %v7519, %v8001
        %v8070 = vadd.f32 %v7520, %v8004
        %v8071 = vld [vmem:[%s5385 + $0x2] sm:$0xff]
        %v8072 = vld [vmem:[%s5385 + $0x12] sm:$0xff]
        %v8073 = vld [vmem:[%s5385 + $0x22] sm:$0xff]
        %v8074 = vld [vmem:[%s5385 + $0x32] sm:$0xff]
        %v8075 = vld [vmem:[%s5385 + $0x42] sm:$0xff]
        %v8076 = vld [vmem:[%s5385 + $0x52] sm:$0xff]
        %v8077 = vld [vmem:[%s5385 + $0x62] sm:$0xff]
        %v8078 = vld [vmem:[%s5385 + $0x72] sm:$0xff]
        %v8079 = vld [vmem:[%s5385 + $0xa2] sm:$0xff]
        %v8080 = vld [vmem:[%s5385 + $0xb2] sm:$0xff]
        %v8081 = vld [vmem:[%s5385 + $0xc2] sm:$0xff]
        %v8082 = vld [vmem:[%s5385 + $0xd2] sm:$0xff]
        %v8083 = vld [vmem:[%s5385 + $0xe2] sm:$0xff]
        %v8084 = vld [vmem:[%s5385 + $0xf2] sm:$0xff]
        %v8085 = vld [vmem:[%s5385 + $0x102] sm:$0xff]
        %v8086 = vld [vmem:[%s5385 + $0x112] sm:$0xff]
        %v8087 = vld [vmem:[%s5385 + $0x142] sm:$0xff]
        %v8088 = vld [vmem:[%s5385 + $0x152] sm:$0xff]
        %v8089 = vld [vmem:[%s5385 + $0x162] sm:$0xff]
        %v8090 = vld [vmem:[%s5385 + $0x172] sm:$0xff]
        %v8091 = vld [vmem:[%s5385 + $0x182] sm:$0xff]
        %v8092 = vld [vmem:[%s5385 + $0x192] sm:$0xff]
        %v8093 = vld [vmem:[%s5385 + $0x1a2] sm:$0xff]
        %v8094 = vld [vmem:[%s5385 + $0x1b2] sm:$0xff]
        %v8095 = vld [vmem:[%s5385 + $0x1e2] sm:$0xff]
        %v8096 = vld [vmem:[%s5385 + $0x1f2] sm:$0xff]
        %v8097 = vld [vmem:[%s5385 + $0x202] sm:$0xff]
        %v8098 = vld [vmem:[%s5385 + $0x212] sm:$0xff]
        %v8099 = vld [vmem:[%s5385 + $0x222] sm:$0xff]
        %v8100 = vld [vmem:[%s5385 + $0x232] sm:$0xff]
        %v8101 = vld [vmem:[%s5385 + $0x242] sm:$0xff]
        %v8102 = vld [vmem:[%s5385 + $0x252] sm:$0xff]
        %v8103 = vld [vmem:[%s5385 + $0x282] sm:$0xff]
        %v8104 = vld [vmem:[%s5385 + $0x292] sm:$0xff]
        %v8105 = vld [vmem:[%s5385 + $0x2a2] sm:$0xff]
        %v8106 = vld [vmem:[%s5385 + $0x2b2] sm:$0xff]
        %v8107 = vld [vmem:[%s5385 + $0x2c2] sm:$0xff]
        %v8108 = vld [vmem:[%s5385 + $0x2d2] sm:$0xff]
        %v8109 = vld [vmem:[%s5385 + $0x2e2] sm:$0xff]
        %v8110 = vld [vmem:[%s5385 + $0x2f2] sm:$0xff]
        %v8111 = vld [vmem:[%s5385 + $0x322] sm:$0xff]
        %v8112 = vld [vmem:[%s5385 + $0x332] sm:$0xff]
        %v8113 = vld [vmem:[%s5385 + $0x342] sm:$0xff]
        %v8114 = vld [vmem:[%s5385 + $0x352] sm:$0xff]
        %v8115 = vld [vmem:[%s5385 + $0x362] sm:$0xff]
        %v8116 = vld [vmem:[%s5385 + $0x372] sm:$0xff]
        %v8117 = vld [vmem:[%s5385 + $0x382] sm:$0xff]
        %v8118 = vld [vmem:[%s5385 + $0x392] sm:$0xff]
        %v8119 = vld [vmem:[%s5385 + $0x3c2] sm:$0xff]
        %v8120 = vld [vmem:[%s5385 + $0x3d2] sm:$0xff]
        %v8121 = vld [vmem:[%s5385 + $0x3e2] sm:$0xff]
        %v8122 = vld [vmem:[%s5385 + $0x3f2] sm:$0xff]
        %v8123 = vld [vmem:[%s5385 + $0x402] sm:$0xff]
        %v8124 = vld [vmem:[%s5385 + $0x412] sm:$0xff]
        %v8125 = vld [vmem:[%s5385 + $0x422] sm:$0xff]
        %v8126 = vld [vmem:[%s5385 + $0x432] sm:$0xff]
        %v8127 = vld [vmem:[%s5385 + $0x462] sm:$0xff]
        %v8128 = vld [vmem:[%s5385 + $0x472] sm:$0xff]
        %v8129 = vld [vmem:[%s5385 + $0x482] sm:$0xff]
        %v8130 = vld [vmem:[%s5385 + $0x492] sm:$0xff]
        %v8131 = vld [vmem:[%s5385 + $0x4a2] sm:$0xff]
        %v8132 = vld [vmem:[%s5385 + $0x4b2] sm:$0xff]
        %v8133 = vld [vmem:[%s5385 + $0x4c2] sm:$0xff]
        %v8134 = vld [vmem:[%s5385 + $0x4d2] sm:$0xff]
        %v8135 = vpack.c.bf16 %v8072, %v8071
        %v8136 = vpack.c.bf16 %v8074, %v8073
        %v8137 = vpack.c.bf16 %v8076, %v8075
        %v8138 = vpack.c.bf16 %v8078, %v8077
        %v8139 = vpack.c.bf16 %v8080, %v8079
        %v8140 = vpack.c.bf16 %v8082, %v8081
        %v8141 = vpack.c.bf16 %v8084, %v8083
        %v8142 = vpack.c.bf16 %v8086, %v8085
        %v8143 = vpack.c.bf16 %v8088, %v8087
        %v8144 = vpack.c.bf16 %v8090, %v8089
        %v8145 = vpack.c.bf16 %v8092, %v8091
        %v8146 = vpack.c.bf16 %v8094, %v8093
        %v8147 = vpack.c.bf16 %v8096, %v8095
        %v8148 = vpack.c.bf16 %v8098, %v8097
        %v8149 = vpack.c.bf16 %v8100, %v8099
        %v8150 = vpack.c.bf16 %v8102, %v8101
        %v8151 = vpack.c.bf16 %v8104, %v8103
        %v8152 = vpack.c.bf16 %v8106, %v8105
        %v8153 = vpack.c.bf16 %v8108, %v8107
        %v8154 = vpack.c.bf16 %v8110, %v8109
        %v8155 = vpack.c.bf16 %v8112, %v8111
        %v8156 = vpack.c.bf16 %v8114, %v8113
        %v8157 = vpack.c.bf16 %v8116, %v8115
        %v8158 = vpack.c.bf16 %v8118, %v8117
        %v8159 = vpack.c.bf16 %v8120, %v8119
        %v8160 = vpack.c.bf16 %v8122, %v8121
        %v8161 = vpack.c.bf16 %v8124, %v8123
        %v8162 = vpack.c.bf16 %v8126, %v8125
        %v8163 = vpack.c.bf16 %v8128, %v8127
        %v8164 = vpack.c.bf16 %v8130, %v8129
        %v8165 = vpack.c.bf16 %v8132, %v8131
        %v8166 = vpack.c.bf16 %v8134, %v8133
        %s8167 = scalar_lea.vmem %s3, 20
        %v8168 = vld [vmem:[%s8167] sm:$0xf]
        %v8170 = vsel %vm230, %v8135, 0
        %v8173 = vsel %vm230, %v8136, 0
        %v8176 = vsel %vm230, %v8137, 0
        %v8179 = vsel %vm230, %v8138, 0
        %v8182 = vsel %vm230, %v8139, 0
        %v8185 = vsel %vm230, %v8140, 0
        %v8188 = vsel %vm230, %v8141, 0
        %v8191 = vsel %vm230, %v8142, 0
        %v8194 = vsel %vm230, %v8143, 0
        %v8197 = vsel %vm230, %v8144, 0
        %v8200 = vsel %vm230, %v8145, 0
        %v8203 = vsel %vm230, %v8146, 0
        %v8206 = vsel %vm230, %v8147, 0
        %v8209 = vsel %vm230, %v8148, 0
        %v8212 = vsel %vm230, %v8149, 0
        %v8215 = vsel %vm230, %v8150, 0
        %v8218 = vsel %vm230, %v8151, 0
        %v8221 = vsel %vm230, %v8152, 0
        %v8224 = vsel %vm230, %v8153, 0
        %v8227 = vsel %vm230, %v8154, 0
        %v8230 = vsel %vm230, %v8155, 0
        %v8233 = vsel %vm230, %v8156, 0
        %v8236 = vsel %vm230, %v8157, 0
        %v8239 = vsel %vm230, %v8158, 0
        %v8242 = vsel %vm230, %v8159, 0
        %v8245 = vsel %vm230, %v8160, 0
        %v8248 = vsel %vm230, %v8161, 0
        %v8251 = vsel %vm230, %v8162, 0
        %v8254 = vsel %vm230, %v8163, 0
        %v8257 = vsel %vm230, %v8164, 0
        %v8260 = vsel %vm230, %v8165, 0
        %v8263 = vsel %vm230, %v8166, 0
        %v8266 = vsel %vm717, %v8168, 0
        %8268 = vmatprep.subr.bf16.mxu0 0
        %8269 = vmatpush1.bf16.msra.mxu0 0
        %8270 = vmatprep.subr.bf16.mxu0 0
        %8271 = vmatpush1.bf16.msra.mxu0 0
        %8272 = vmatprep.subr.bf16.mxu0 0
        %8273 = vmatpush1.bf16.msra.mxu0 0
        %8274 = vmatprep.subr.bf16.mxu0 0
        %8275 = vmatpush1.bf16.msra.mxu0 0
        %8276 = vmatprep.subr.bf16.mxu0 0
        %8277 = vmatpush1.bf16.msra.mxu0 0
        %8278 = vmatprep.subr.bf16.mxu0 0
        %8279 = vmatpush1.bf16.msra.mxu0 0
        %8280 = vmatprep.subr.bf16.mxu0 0
        %8281 = vmatpush1.bf16.msra.mxu0 0
        %8282 = vmatprep.subr.bf16.mxu0 0
        %8283 = vmatpush1.bf16.msra.mxu0 %v8266
        %8284 = vmatprep.subr.bf16.mxu0 0
        %8285 = vmatpush2.bf16.msra.mxu0 0
        %8286 = vmatprep.subr.bf16.mxu0 0
        %8287 = vmatpush2.bf16.msra.mxu0 0
        %8288 = vmatprep.subr.bf16.mxu0 0
        %8289 = vmatpush2.bf16.msra.mxu0 0
        %8290 = vmatprep.subr.bf16.mxu0 0
        %8291 = vmatpush2.bf16.msra.mxu0 0
        %8292 = vmatprep.subr.bf16.mxu0 0
        %8293 = vmatpush2.bf16.msra.mxu0 0
        %8294 = vmatprep.subr.bf16.mxu0 0
        %8295 = vmatpush2.bf16.msra.mxu0 0
        %8296 = vmatprep.subr.bf16.mxu0 0
        %8297 = vmatpush2.bf16.msra.mxu0 0
        %8298 = vmatprep.subr.bf16.mxu0 0
        %8299 = vmatpush2.bf16.msra.mxu0 0
        %8300 = vmatprep.mubr.bf16.mxu0 0
        %8301 = vmatmul.mubr.bf16.gmra.mxu0 %v8170
        %v8302 = vpop.f32.mrf.mxu0
        %v8303 = vadd.f32 0.0, %v8302
        %v8304 = vpop.f32.mrf.mxu0
        %v8305 = vpop.f32.mrf.mxu0
        %v8306 = vadd.f32 0.0, %v8305
        %v8307 = vpop.f32.mrf.mxu0
        %8308 = vmatprep.mubr.bf16.mxu0 0
        %8309 = vmatmul.mubr.bf16.gmra.mxu0 %v8173
        %v8310 = vpop.f32.mrf.mxu0
        %v8311 = vadd.f32 0.0, %v8310
        %v8312 = vpop.f32.mrf.mxu0
        %v8313 = vpop.f32.mrf.mxu0
        %v8314 = vadd.f32 0.0, %v8313
        %v8315 = vpop.f32.mrf.mxu0
        %8316 = vmatprep.mubr.bf16.mxu0 0
        %8317 = vmatmul.mubr.bf16.gmra.mxu0 %v8176
        %v8318 = vpop.f32.mrf.mxu0
        %v8319 = vadd.f32 0.0, %v8318
        %v8320 = vpop.f32.mrf.mxu0
        %v8321 = vpop.f32.mrf.mxu0
        %v8322 = vadd.f32 0.0, %v8321
        %v8323 = vpop.f32.mrf.mxu0
        %8324 = vmatprep.mubr.bf16.mxu0 0
        %8325 = vmatmul.mubr.bf16.gmra.mxu0 %v8179
        %v8326 = vpop.f32.mrf.mxu0
        %v8327 = vadd.f32 0.0, %v8326
        %v8328 = vpop.f32.mrf.mxu0
        %v8329 = vpop.f32.mrf.mxu0
        %v8330 = vadd.f32 0.0, %v8329
        %v8331 = vpop.f32.mrf.mxu0
        %8332 = vmatprep.mubr.bf16.mxu0 0
        %8333 = vmatmul.mubr.bf16.gmra.mxu0 %v8182
        %v8334 = vpop.f32.mrf.mxu0
        %v8335 = vadd.f32 0.0, %v8334
        %v8336 = vpop.f32.mrf.mxu0
        %v8337 = vpop.f32.mrf.mxu0
        %v8338 = vadd.f32 0.0, %v8337
        %v8339 = vpop.f32.mrf.mxu0
        %8340 = vmatprep.mubr.bf16.mxu0 0
        %8341 = vmatmul.mubr.bf16.gmra.mxu0 %v8185
        %v8342 = vpop.f32.mrf.mxu0
        %v8343 = vadd.f32 0.0, %v8342
        %v8344 = vpop.f32.mrf.mxu0
        %v8345 = vpop.f32.mrf.mxu0
        %v8346 = vadd.f32 0.0, %v8345
        %v8347 = vpop.f32.mrf.mxu0
        %8348 = vmatprep.mubr.bf16.mxu0 0
        %8349 = vmatmul.mubr.bf16.gmra.mxu0 %v8188
        %v8350 = vpop.f32.mrf.mxu0
        %v8351 = vadd.f32 0.0, %v8350
        %v8352 = vpop.f32.mrf.mxu0
        %v8353 = vpop.f32.mrf.mxu0
        %v8354 = vadd.f32 0.0, %v8353
        %v8355 = vpop.f32.mrf.mxu0
        %8356 = vmatprep.mubr.bf16.mxu0 0
        %8357 = vmatmul.mubr.bf16.gmra.mxu0 %v8191
        %v8358 = vpop.f32.mrf.mxu0
        %v8359 = vadd.f32 0.0, %v8358
        %v8360 = vpop.f32.mrf.mxu0
        %v8361 = vpop.f32.mrf.mxu0
        %v8362 = vadd.f32 0.0, %v8361
        %v8363 = vpop.f32.mrf.mxu0
        %8364 = vmatprep.mubr.bf16.mxu0 0
        %8365 = vmatmul.mubr.bf16.gmra.mxu0 %v8194
        %v8366 = vpop.f32.mrf.mxu0
        %v8367 = vadd.f32 0.0, %v8366
        %v8368 = vpop.f32.mrf.mxu0
        %v8369 = vpop.f32.mrf.mxu0
        %v8370 = vadd.f32 0.0, %v8369
        %v8371 = vpop.f32.mrf.mxu0
        %8372 = vmatprep.mubr.bf16.mxu0 0
        %8373 = vmatmul.mubr.bf16.gmra.mxu0 %v8197
        %v8374 = vpop.f32.mrf.mxu0
        %v8375 = vadd.f32 0.0, %v8374
        %v8376 = vpop.f32.mrf.mxu0
        %v8377 = vpop.f32.mrf.mxu0
        %v8378 = vadd.f32 0.0, %v8377
        %v8379 = vpop.f32.mrf.mxu0
        %8380 = vmatprep.mubr.bf16.mxu0 0
        %8381 = vmatmul.mubr.bf16.gmra.mxu0 %v8200
        %v8382 = vpop.f32.mrf.mxu0
        %v8383 = vadd.f32 0.0, %v8382
        %v8384 = vpop.f32.mrf.mxu0
        %v8385 = vpop.f32.mrf.mxu0
        %v8386 = vadd.f32 0.0, %v8385
        %v8387 = vpop.f32.mrf.mxu0
        %8388 = vmatprep.mubr.bf16.mxu0 0
        %8389 = vmatmul.mubr.bf16.gmra.mxu0 %v8203
        %v8390 = vpop.f32.mrf.mxu0
        %v8391 = vadd.f32 0.0, %v8390
        %v8392 = vpop.f32.mrf.mxu0
        %v8393 = vpop.f32.mrf.mxu0
        %v8394 = vadd.f32 0.0, %v8393
        %v8395 = vpop.f32.mrf.mxu0
        %8396 = vmatprep.mubr.bf16.mxu0 0
        %8397 = vmatmul.mubr.bf16.gmra.mxu0 %v8206
        %v8398 = vpop.f32.mrf.mxu0
        %v8399 = vadd.f32 0.0, %v8398
        %v8400 = vpop.f32.mrf.mxu0
        %v8401 = vpop.f32.mrf.mxu0
        %v8402 = vadd.f32 0.0, %v8401
        %v8403 = vpop.f32.mrf.mxu0
        %8404 = vmatprep.mubr.bf16.mxu0 0
        %8405 = vmatmul.mubr.bf16.gmra.mxu0 %v8209
        %v8406 = vpop.f32.mrf.mxu0
        %v8407 = vadd.f32 0.0, %v8406
        %v8408 = vpop.f32.mrf.mxu0
        %v8409 = vpop.f32.mrf.mxu0
        %v8410 = vadd.f32 0.0, %v8409
        %v8411 = vpop.f32.mrf.mxu0
        %8412 = vmatprep.mubr.bf16.mxu0 0
        %8413 = vmatmul.mubr.bf16.gmra.mxu0 %v8212
        %v8414 = vpop.f32.mrf.mxu0
        %v8415 = vadd.f32 0.0, %v8414
        %v8416 = vpop.f32.mrf.mxu0
        %v8417 = vpop.f32.mrf.mxu0
        %v8418 = vadd.f32 0.0, %v8417
        %v8419 = vpop.f32.mrf.mxu0
        %8420 = vmatprep.mubr.bf16.mxu0 0
        %8421 = vmatmul.mubr.bf16.gmra.mxu0 %v8215
        %v8422 = vpop.f32.mrf.mxu0
        %v8423 = vadd.f32 0.0, %v8422
        %v8424 = vpop.f32.mrf.mxu0
        %v8425 = vpop.f32.mrf.mxu0
        %v8426 = vadd.f32 0.0, %v8425
        %v8427 = vpop.f32.mrf.mxu0
        %8428 = vmatprep.mubr.bf16.mxu0 0
        %8429 = vmatmul.mubr.bf16.gmra.mxu0 %v8218
        %v8430 = vpop.f32.mrf.mxu0
        %v8431 = vadd.f32 0.0, %v8430
        %v8432 = vpop.f32.mrf.mxu0
        %v8433 = vpop.f32.mrf.mxu0
        %v8434 = vadd.f32 0.0, %v8433
        %v8435 = vpop.f32.mrf.mxu0
        %8436 = vmatprep.mubr.bf16.mxu0 0
        %8437 = vmatmul.mubr.bf16.gmra.mxu0 %v8221
        %v8438 = vpop.f32.mrf.mxu0
        %v8439 = vadd.f32 0.0, %v8438
        %v8440 = vpop.f32.mrf.mxu0
        %v8441 = vpop.f32.mrf.mxu0
        %v8442 = vadd.f32 0.0, %v8441
        %v8443 = vpop.f32.mrf.mxu0
        %8444 = vmatprep.mubr.bf16.mxu0 0
        %8445 = vmatmul.mubr.bf16.gmra.mxu0 %v8224
        %v8446 = vpop.f32.mrf.mxu0
        %v8447 = vadd.f32 0.0, %v8446
        %v8448 = vpop.f32.mrf.mxu0
        %v8449 = vpop.f32.mrf.mxu0
        %v8450 = vadd.f32 0.0, %v8449
        %v8451 = vpop.f32.mrf.mxu0
        %8452 = vmatprep.mubr.bf16.mxu0 0
        %8453 = vmatmul.mubr.bf16.gmra.mxu0 %v8227
        %v8454 = vpop.f32.mrf.mxu0
        %v8455 = vadd.f32 0.0, %v8454
        %v8456 = vpop.f32.mrf.mxu0
        %v8457 = vpop.f32.mrf.mxu0
        %v8458 = vadd.f32 0.0, %v8457
        %v8459 = vpop.f32.mrf.mxu0
        %8460 = vmatprep.mubr.bf16.mxu0 0
        %8461 = vmatmul.mubr.bf16.gmra.mxu0 %v8230
        %v8462 = vpop.f32.mrf.mxu0
        %v8463 = vadd.f32 0.0, %v8462
        %v8464 = vpop.f32.mrf.mxu0
        %v8465 = vpop.f32.mrf.mxu0
        %v8466 = vadd.f32 0.0, %v8465
        %v8467 = vpop.f32.mrf.mxu0
        %8468 = vmatprep.mubr.bf16.mxu0 0
        %8469 = vmatmul.mubr.bf16.gmra.mxu0 %v8233
        %v8470 = vpop.f32.mrf.mxu0
        %v8471 = vadd.f32 0.0, %v8470
        %v8472 = vpop.f32.mrf.mxu0
        %v8473 = vpop.f32.mrf.mxu0
        %v8474 = vadd.f32 0.0, %v8473
        %v8475 = vpop.f32.mrf.mxu0
        %8476 = vmatprep.mubr.bf16.mxu0 0
        %8477 = vmatmul.mubr.bf16.gmra.mxu0 %v8236
        %v8478 = vpop.f32.mrf.mxu0
        %v8479 = vadd.f32 0.0, %v8478
        %v8480 = vpop.f32.mrf.mxu0
        %v8481 = vpop.f32.mrf.mxu0
        %v8482 = vadd.f32 0.0, %v8481
        %v8483 = vpop.f32.mrf.mxu0
        %8484 = vmatprep.mubr.bf16.mxu0 0
        %8485 = vmatmul.mubr.bf16.gmra.mxu0 %v8239
        %v8486 = vpop.f32.mrf.mxu0
        %v8487 = vadd.f32 0.0, %v8486
        %v8488 = vpop.f32.mrf.mxu0
        %v8489 = vpop.f32.mrf.mxu0
        %v8490 = vadd.f32 0.0, %v8489
        %v8491 = vpop.f32.mrf.mxu0
        %8492 = vmatprep.mubr.bf16.mxu0 0
        %8493 = vmatmul.mubr.bf16.gmra.mxu0 %v8242
        %v8494 = vpop.f32.mrf.mxu0
        %v8495 = vadd.f32 0.0, %v8494
        %v8496 = vpop.f32.mrf.mxu0
        %v8497 = vpop.f32.mrf.mxu0
        %v8498 = vadd.f32 0.0, %v8497
        %v8499 = vpop.f32.mrf.mxu0
        %8500 = vmatprep.mubr.bf16.mxu0 0
        %8501 = vmatmul.mubr.bf16.gmra.mxu0 %v8245
        %v8502 = vpop.f32.mrf.mxu0
        %v8503 = vadd.f32 0.0, %v8502
        %v8504 = vpop.f32.mrf.mxu0
        %v8505 = vpop.f32.mrf.mxu0
        %v8506 = vadd.f32 0.0, %v8505
        %v8507 = vpop.f32.mrf.mxu0
        %8508 = vmatprep.mubr.bf16.mxu0 0
        %8509 = vmatmul.mubr.bf16.gmra.mxu0 %v8248
        %v8510 = vpop.f32.mrf.mxu0
        %v8511 = vadd.f32 0.0, %v8510
        %v8512 = vpop.f32.mrf.mxu0
        %v8513 = vpop.f32.mrf.mxu0
        %v8514 = vadd.f32 0.0, %v8513
        %v8515 = vpop.f32.mrf.mxu0
        %8516 = vmatprep.mubr.bf16.mxu0 0
        %8517 = vmatmul.mubr.bf16.gmra.mxu0 %v8251
        %v8518 = vpop.f32.mrf.mxu0
        %v8519 = vadd.f32 0.0, %v8518
        %v8520 = vpop.f32.mrf.mxu0
        %v8521 = vpop.f32.mrf.mxu0
        %v8522 = vadd.f32 0.0, %v8521
        %v8523 = vpop.f32.mrf.mxu0
        %8524 = vmatprep.mubr.bf16.mxu0 0
        %8525 = vmatmul.mubr.bf16.gmra.mxu0 %v8254
        %v8526 = vpop.f32.mrf.mxu0
        %v8527 = vadd.f32 0.0, %v8526
        %v8528 = vpop.f32.mrf.mxu0
        %v8529 = vpop.f32.mrf.mxu0
        %v8530 = vadd.f32 0.0, %v8529
        %v8531 = vpop.f32.mrf.mxu0
        %8532 = vmatprep.mubr.bf16.mxu0 0
        %8533 = vmatmul.mubr.bf16.gmra.mxu0 %v8257
        %v8534 = vpop.f32.mrf.mxu0
        %v8535 = vadd.f32 0.0, %v8534
        %v8536 = vpop.f32.mrf.mxu0
        %v8537 = vpop.f32.mrf.mxu0
        %v8538 = vadd.f32 0.0, %v8537
        %v8539 = vpop.f32.mrf.mxu0
        %8540 = vmatprep.mubr.bf16.mxu0 0
        %8541 = vmatmul.mubr.bf16.gmra.mxu0 %v8260
        %v8542 = vpop.f32.mrf.mxu0
        %v8543 = vadd.f32 0.0, %v8542
        %v8544 = vpop.f32.mrf.mxu0
        %v8545 = vpop.f32.mrf.mxu0
        %v8546 = vadd.f32 0.0, %v8545
        %v8547 = vpop.f32.mrf.mxu0
        %8548 = vmatprep.mubr.bf16.mxu0 0
        %8549 = vmatmul.mubr.bf16.gmra.mxu0 %v8263
        %v8550 = vpop.f32.mrf.mxu0
        %v8551 = vadd.f32 0.0, %v8550
        %v8552 = vpop.f32.mrf.mxu0
        %v8553 = vpop.f32.mrf.mxu0
        %v8554 = vadd.f32 0.0, %v8553
        %v8555 = vpop.f32.mrf.mxu0
        %8556 = vdwg.mxu0
        %v8557 = vadd.f32 %v8007, %v8303
        %v8558 = vadd.f32 %v8008, %v8306
        %v8559 = vadd.f32 %v8009, %v8311
        %v8560 = vadd.f32 %v8010, %v8314
        %v8561 = vadd.f32 %v8011, %v8319
        %v8562 = vadd.f32 %v8012, %v8322
        %v8563 = vadd.f32 %v8013, %v8327
        %v8564 = vadd.f32 %v8014, %v8330
        %v8565 = vadd.f32 %v8015, %v8335
        %v8566 = vadd.f32 %v8016, %v8338
        %v8567 = vadd.f32 %v8017, %v8343
        %v8568 = vadd.f32 %v8018, %v8346
        %v8569 = vadd.f32 %v8019, %v8351
        %v8570 = vadd.f32 %v8020, %v8354
        %v8571 = vadd.f32 %v8021, %v8359
        %v8572 = vadd.f32 %v8022, %v8362
        %v8573 = vadd.f32 %v8023, %v8367
        %v8574 = vadd.f32 %v8024, %v8370
        %v8575 = vadd.f32 %v8025, %v8375
        %v8576 = vadd.f32 %v8026, %v8378
        %v8577 = vadd.f32 %v8027, %v8383
        %v8578 = vadd.f32 %v8028, %v8386
        %v8579 = vadd.f32 %v8029, %v8391
        %v8580 = vadd.f32 %v8030, %v8394
        %v8581 = vadd.f32 %v8031, %v8399
        %v8582 = vadd.f32 %v8032, %v8402
        %v8583 = vadd.f32 %v8033, %v8407
        %v8584 = vadd.f32 %v8034, %v8410
        %v8585 = vadd.f32 %v8035, %v8415
        %v8586 = vadd.f32 %v8036, %v8418
        %v8587 = vadd.f32 %v8037, %v8423
        %v8588 = vadd.f32 %v8038, %v8426
        %v8589 = vadd.f32 %v8039, %v8431
        %v8590 = vadd.f32 %v8040, %v8434
        %v8591 = vadd.f32 %v8041, %v8439
        %v8592 = vadd.f32 %v8042, %v8442
        %v8593 = vadd.f32 %v8043, %v8447
        %v8594 = vadd.f32 %v8044, %v8450
        %v8595 = vadd.f32 %v8045, %v8455
        %v8596 = vadd.f32 %v8046, %v8458
        %v8597 = vadd.f32 %v8047, %v8463
        %v8598 = vadd.f32 %v8048, %v8466
        %v8599 = vadd.f32 %v8049, %v8471
        %v8600 = vadd.f32 %v8050, %v8474
        %v8601 = vadd.f32 %v8051, %v8479
        %v8602 = vadd.f32 %v8052, %v8482
        %v8603 = vadd.f32 %v8053, %v8487
        %v8604 = vadd.f32 %v8054, %v8490
        %v8605 = vadd.f32 %v8055, %v8495
        %v8606 = vadd.f32 %v8056, %v8498
        %v8607 = vadd.f32 %v8057, %v8503
        %v8608 = vadd.f32 %v8058, %v8506
        %v8609 = vadd.f32 %v8059, %v8511
        %v8610 = vadd.f32 %v8060, %v8514
        %v8611 = vadd.f32 %v8061, %v8519
        %v8612 = vadd.f32 %v8062, %v8522
        %v8613 = vadd.f32 %v8063, %v8527
        %v8614 = vadd.f32 %v8064, %v8530
        %v8615 = vadd.f32 %v8065, %v8535
        %v8616 = vadd.f32 %v8066, %v8538
        %v8617 = vadd.f32 %v8067, %v8543
        %v8618 = vadd.f32 %v8068, %v8546
        %v8619 = vadd.f32 %v8069, %v8551
        %v8620 = vadd.f32 %v8070, %v8554
        %s8621 = scalar_lea.vmem [#allocation2], 32
        %v8622 = vld [vmem:[%s8621] sm:$0xff]
        %v8623 = vld [vmem:[%s8621 + $0x10] sm:$0xff]
        %v8624 = vld [vmem:[%s8621 + $0x20] sm:$0xff]
        %v8625 = vld [vmem:[%s8621 + $0x30] sm:$0xff]
        %v8626 = vld [vmem:[%s8621 + $0x40] sm:$0xff]
        %v8627 = vld [vmem:[%s8621 + $0x50] sm:$0xff]
        %v8628 = vld [vmem:[%s8621 + $0x60] sm:$0xff]
        %v8629 = vld [vmem:[%s8621 + $0x70] sm:$0xff]
        %v8630 = vld [vmem:[%s8621 + $0xa0] sm:$0xff]
        %v8631 = vld [vmem:[%s8621 + $0xb0] sm:$0xff]
        %v8632 = vld [vmem:[%s8621 + $0xc0] sm:$0xff]
        %v8633 = vld [vmem:[%s8621 + $0xd0] sm:$0xff]
        %v8634 = vld [vmem:[%s8621 + $0xe0] sm:$0xff]
        %v8635 = vld [vmem:[%s8621 + $0xf0] sm:$0xff]
        %v8636 = vld [vmem:[%s8621 + $0x100] sm:$0xff]
        %v8637 = vld [vmem:[%s8621 + $0x110] sm:$0xff]
        %v8638 = vld [vmem:[%s8621 + $0x140] sm:$0xff]
        %v8639 = vld [vmem:[%s8621 + $0x150] sm:$0xff]
        %v8640 = vld [vmem:[%s8621 + $0x160] sm:$0xff]
        %v8641 = vld [vmem:[%s8621 + $0x170] sm:$0xff]
        %v8642 = vld [vmem:[%s8621 + $0x180] sm:$0xff]
        %v8643 = vld [vmem:[%s8621 + $0x190] sm:$0xff]
        %v8644 = vld [vmem:[%s8621 + $0x1a0] sm:$0xff]
        %v8645 = vld [vmem:[%s8621 + $0x1b0] sm:$0xff]
        %v8646 = vld [vmem:[%s8621 + $0x1e0] sm:$0xff]
        %v8647 = vld [vmem:[%s8621 + $0x1f0] sm:$0xff]
        %v8648 = vld [vmem:[%s8621 + $0x200] sm:$0xff]
        %v8649 = vld [vmem:[%s8621 + $0x210] sm:$0xff]
        %v8650 = vld [vmem:[%s8621 + $0x220] sm:$0xff]
        %v8651 = vld [vmem:[%s8621 + $0x230] sm:$0xff]
        %v8652 = vld [vmem:[%s8621 + $0x240] sm:$0xff]
        %v8653 = vld [vmem:[%s8621 + $0x250] sm:$0xff]
        %v8654 = vld [vmem:[%s8621 + $0x280] sm:$0xff]
        %v8655 = vld [vmem:[%s8621 + $0x290] sm:$0xff]
        %v8656 = vld [vmem:[%s8621 + $0x2a0] sm:$0xff]
        %v8657 = vld [vmem:[%s8621 + $0x2b0] sm:$0xff]
        %v8658 = vld [vmem:[%s8621 + $0x2c0] sm:$0xff]
        %v8659 = vld [vmem:[%s8621 + $0x2d0] sm:$0xff]
        %v8660 = vld [vmem:[%s8621 + $0x2e0] sm:$0xff]
        %v8661 = vld [vmem:[%s8621 + $0x2f0] sm:$0xff]
        %v8662 = vld [vmem:[%s8621 + $0x320] sm:$0xff]
        %v8663 = vld [vmem:[%s8621 + $0x330] sm:$0xff]
        %v8664 = vld [vmem:[%s8621 + $0x340] sm:$0xff]
        %v8665 = vld [vmem:[%s8621 + $0x350] sm:$0xff]
        %v8666 = vld [vmem:[%s8621 + $0x360] sm:$0xff]
        %v8667 = vld [vmem:[%s8621 + $0x370] sm:$0xff]
        %v8668 = vld [vmem:[%s8621 + $0x380] sm:$0xff]
        %v8669 = vld [vmem:[%s8621 + $0x390] sm:$0xff]
        %v8670 = vld [vmem:[%s8621 + $0x3c0] sm:$0xff]
        %v8671 = vld [vmem:[%s8621 + $0x3d0] sm:$0xff]
        %v8672 = vld [vmem:[%s8621 + $0x3e0] sm:$0xff]
        %v8673 = vld [vmem:[%s8621 + $0x3f0] sm:$0xff]
        %v8674 = vld [vmem:[%s8621 + $0x400] sm:$0xff]
        %v8675 = vld [vmem:[%s8621 + $0x410] sm:$0xff]
        %v8676 = vld [vmem:[%s8621 + $0x420] sm:$0xff]
        %v8677 = vld [vmem:[%s8621 + $0x430] sm:$0xff]
        %v8678 = vld [vmem:[%s8621 + $0x460] sm:$0xff]
        %v8679 = vld [vmem:[%s8621 + $0x470] sm:$0xff]
        %v8680 = vld [vmem:[%s8621 + $0x480] sm:$0xff]
        %v8681 = vld [vmem:[%s8621 + $0x490] sm:$0xff]
        %v8682 = vld [vmem:[%s8621 + $0x4a0] sm:$0xff]
        %v8683 = vld [vmem:[%s8621 + $0x4b0] sm:$0xff]
        %v8684 = vld [vmem:[%s8621 + $0x4c0] sm:$0xff]
        %v8685 = vld [vmem:[%s8621 + $0x4d0] sm:$0xff]
        %v8686 = vpack.c.bf16 %v8623, %v8622
        %v8687 = vpack.c.bf16 %v8625, %v8624
        %v8688 = vpack.c.bf16 %v8627, %v8626
        %v8689 = vpack.c.bf16 %v8629, %v8628
        %v8690 = vpack.c.bf16 %v8631, %v8630
        %v8691 = vpack.c.bf16 %v8633, %v8632
        %v8692 = vpack.c.bf16 %v8635, %v8634
        %v8693 = vpack.c.bf16 %v8637, %v8636
        %v8694 = vpack.c.bf16 %v8639, %v8638
        %v8695 = vpack.c.bf16 %v8641, %v8640
        %v8696 = vpack.c.bf16 %v8643, %v8642
        %v8697 = vpack.c.bf16 %v8645, %v8644
        %v8698 = vpack.c.bf16 %v8647, %v8646
        %v8699 = vpack.c.bf16 %v8649, %v8648
        %v8700 = vpack.c.bf16 %v8651, %v8650
        %v8701 = vpack.c.bf16 %v8653, %v8652
        %v8702 = vpack.c.bf16 %v8655, %v8654
        %v8703 = vpack.c.bf16 %v8657, %v8656
        %v8704 = vpack.c.bf16 %v8659, %v8658
        %v8705 = vpack.c.bf16 %v8661, %v8660
        %v8706 = vpack.c.bf16 %v8663, %v8662
        %v8707 = vpack.c.bf16 %v8665, %v8664
        %v8708 = vpack.c.bf16 %v8667, %v8666
        %v8709 = vpack.c.bf16 %v8669, %v8668
        %v8710 = vpack.c.bf16 %v8671, %v8670
        %v8711 = vpack.c.bf16 %v8673, %v8672
        %v8712 = vpack.c.bf16 %v8675, %v8674
        %v8713 = vpack.c.bf16 %v8677, %v8676
        %v8714 = vpack.c.bf16 %v8679, %v8678
        %v8715 = vpack.c.bf16 %v8681, %v8680
        %v8716 = vpack.c.bf16 %v8683, %v8682
        %v8717 = vpack.c.bf16 %v8685, %v8684
        %s8718 = scalar_lea.vmem %s3, 24
        %v8719 = vld [vmem:[%s8718] sm:$0xf]
        %v8721 = vsel %vm230, %v8686, 0
        %v8724 = vsel %vm230, %v8687, 0
        %v8727 = vsel %vm230, %v8688, 0
        %v8730 = vsel %vm230, %v8689, 0
        %v8733 = vsel %vm230, %v8690, 0
        %v8736 = vsel %vm230, %v8691, 0
        %v8739 = vsel %vm230, %v8692, 0
        %v8742 = vsel %vm230, %v8693, 0
        %v8745 = vsel %vm230, %v8694, 0
        %v8748 = vsel %vm230, %v8695, 0
        %v8751 = vsel %vm230, %v8696, 0
        %v8754 = vsel %vm230, %v8697, 0
        %v8757 = vsel %vm230, %v8698, 0
        %v8760 = vsel %vm230, %v8699, 0
        %v8763 = vsel %vm230, %v8700, 0
        %v8766 = vsel %vm230, %v8701, 0
        %v8769 = vsel %vm230, %v8702, 0
        %v8772 = vsel %vm230, %v8703, 0
        %v8775 = vsel %vm230, %v8704, 0
        %v8778 = vsel %vm230, %v8705, 0
        %v8781 = vsel %vm230, %v8706, 0
        %v8784 = vsel %vm230, %v8707, 0
        %v8787 = vsel %vm230, %v8708, 0
        %v8790 = vsel %vm230, %v8709, 0
        %v8793 = vsel %vm230, %v8710, 0
        %v8796 = vsel %vm230, %v8711, 0
        %v8799 = vsel %vm230, %v8712, 0
        %v8802 = vsel %vm230, %v8713, 0
        %v8805 = vsel %vm230, %v8714, 0
        %v8808 = vsel %vm230, %v8715, 0
        %v8811 = vsel %vm230, %v8716, 0
        %v8814 = vsel %vm230, %v8717, 0
        %v8817 = vsel %vm717, %v8719, 0
        %8819 = vmatprep.subr.bf16.mxu0 0
        %8820 = vmatpush1.bf16.msra.mxu0 0
        %8821 = vmatprep.subr.bf16.mxu0 0
        %8822 = vmatpush1.bf16.msra.mxu0 0
        %8823 = vmatprep.subr.bf16.mxu0 0
        %8824 = vmatpush1.bf16.msra.mxu0 0
        %8825 = vmatprep.subr.bf16.mxu0 0
        %8826 = vmatpush1.bf16.msra.mxu0 0
        %8827 = vmatprep.subr.bf16.mxu0 0
        %8828 = vmatpush1.bf16.msra.mxu0 0
        %8829 = vmatprep.subr.bf16.mxu0 0
        %8830 = vmatpush1.bf16.msra.mxu0 0
        %8831 = vmatprep.subr.bf16.mxu0 0
        %8832 = vmatpush1.bf16.msra.mxu0 0
        %8833 = vmatprep.subr.bf16.mxu0 0
        %8834 = vmatpush1.bf16.msra.mxu0 %v8817
        %8835 = vmatprep.subr.bf16.mxu0 0
        %8836 = vmatpush2.bf16.msra.mxu0 0
        %8837 = vmatprep.subr.bf16.mxu0 0
        %8838 = vmatpush2.bf16.msra.mxu0 0
        %8839 = vmatprep.subr.bf16.mxu0 0
        %8840 = vmatpush2.bf16.msra.mxu0 0
        %8841 = vmatprep.subr.bf16.mxu0 0
        %8842 = vmatpush2.bf16.msra.mxu0 0
        %8843 = vmatprep.subr.bf16.mxu0 0
        %8844 = vmatpush2.bf16.msra.mxu0 0
        %8845 = vmatprep.subr.bf16.mxu0 0
        %8846 = vmatpush2.bf16.msra.mxu0 0
        %8847 = vmatprep.subr.bf16.mxu0 0
        %8848 = vmatpush2.bf16.msra.mxu0 0
        %8849 = vmatprep.subr.bf16.mxu0 0
        %8850 = vmatpush2.bf16.msra.mxu0 0
        %8851 = vmatprep.mubr.bf16.mxu0 0
        %8852 = vmatmul.mubr.bf16.gmra.mxu0 %v8721
        %v8853 = vpop.f32.mrf.mxu0
        %v8854 = vadd.f32 0.0, %v8853
        %v8855 = vpop.f32.mrf.mxu0
        %v8856 = vpop.f32.mrf.mxu0
        %v8857 = vadd.f32 0.0, %v8856
        %v8858 = vpop.f32.mrf.mxu0
        %8859 = vmatprep.mubr.bf16.mxu0 0
        %8860 = vmatmul.mubr.bf16.gmra.mxu0 %v8724
        %v8861 = vpop.f32.mrf.mxu0
        %v8862 = vadd.f32 0.0, %v8861
        %v8863 = vpop.f32.mrf.mxu0
        %v8864 = vpop.f32.mrf.mxu0
        %v8865 = vadd.f32 0.0, %v8864
        %v8866 = vpop.f32.mrf.mxu0
        %8867 = vmatprep.mubr.bf16.mxu0 0
        %8868 = vmatmul.mubr.bf16.gmra.mxu0 %v8727
        %v8869 = vpop.f32.mrf.mxu0
        %v8870 = vadd.f32 0.0, %v8869
        %v8871 = vpop.f32.mrf.mxu0
        %v8872 = vpop.f32.mrf.mxu0
        %v8873 = vadd.f32 0.0, %v8872
        %v8874 = vpop.f32.mrf.mxu0
        %8875 = vmatprep.mubr.bf16.mxu0 0
        %8876 = vmatmul.mubr.bf16.gmra.mxu0 %v8730
        %v8877 = vpop.f32.mrf.mxu0
        %v8878 = vadd.f32 0.0, %v8877
        %v8879 = vpop.f32.mrf.mxu0
        %v8880 = vpop.f32.mrf.mxu0
        %v8881 = vadd.f32 0.0, %v8880
        %v8882 = vpop.f32.mrf.mxu0
        %8883 = vmatprep.mubr.bf16.mxu0 0
        %8884 = vmatmul.mubr.bf16.gmra.mxu0 %v8733
        %v8885 = vpop.f32.mrf.mxu0
        %v8886 = vadd.f32 0.0, %v8885
        %v8887 = vpop.f32.mrf.mxu0
        %v8888 = vpop.f32.mrf.mxu0
        %v8889 = vadd.f32 0.0, %v8888
        %v8890 = vpop.f32.mrf.mxu0
        %8891 = vmatprep.mubr.bf16.mxu0 0
        %8892 = vmatmul.mubr.bf16.gmra.mxu0 %v8736
        %v8893 = vpop.f32.mrf.mxu0
        %v8894 = vadd.f32 0.0, %v8893
        %v8895 = vpop.f32.mrf.mxu0
        %v8896 = vpop.f32.mrf.mxu0
        %v8897 = vadd.f32 0.0, %v8896
        %v8898 = vpop.f32.mrf.mxu0
        %8899 = vmatprep.mubr.bf16.mxu0 0
        %8900 = vmatmul.mubr.bf16.gmra.mxu0 %v8739
        %v8901 = vpop.f32.mrf.mxu0
        %v8902 = vadd.f32 0.0, %v8901
        %v8903 = vpop.f32.mrf.mxu0
        %v8904 = vpop.f32.mrf.mxu0
        %v8905 = vadd.f32 0.0, %v8904
        %v8906 = vpop.f32.mrf.mxu0
        %8907 = vmatprep.mubr.bf16.mxu0 0
        %8908 = vmatmul.mubr.bf16.gmra.mxu0 %v8742
        %v8909 = vpop.f32.mrf.mxu0
        %v8910 = vadd.f32 0.0, %v8909
        %v8911 = vpop.f32.mrf.mxu0
        %v8912 = vpop.f32.mrf.mxu0
        %v8913 = vadd.f32 0.0, %v8912
        %v8914 = vpop.f32.mrf.mxu0
        %8915 = vmatprep.mubr.bf16.mxu0 0
        %8916 = vmatmul.mubr.bf16.gmra.mxu0 %v8745
        %v8917 = vpop.f32.mrf.mxu0
        %v8918 = vadd.f32 0.0, %v8917
        %v8919 = vpop.f32.mrf.mxu0
        %v8920 = vpop.f32.mrf.mxu0
        %v8921 = vadd.f32 0.0, %v8920
        %v8922 = vpop.f32.mrf.mxu0
        %8923 = vmatprep.mubr.bf16.mxu0 0
        %8924 = vmatmul.mubr.bf16.gmra.mxu0 %v8748
        %v8925 = vpop.f32.mrf.mxu0
        %v8926 = vadd.f32 0.0, %v8925
        %v8927 = vpop.f32.mrf.mxu0
        %v8928 = vpop.f32.mrf.mxu0
        %v8929 = vadd.f32 0.0, %v8928
        %v8930 = vpop.f32.mrf.mxu0
        %8931 = vmatprep.mubr.bf16.mxu0 0
        %8932 = vmatmul.mubr.bf16.gmra.mxu0 %v8751
        %v8933 = vpop.f32.mrf.mxu0
        %v8934 = vadd.f32 0.0, %v8933
        %v8935 = vpop.f32.mrf.mxu0
        %v8936 = vpop.f32.mrf.mxu0
        %v8937 = vadd.f32 0.0, %v8936
        %v8938 = vpop.f32.mrf.mxu0
        %8939 = vmatprep.mubr.bf16.mxu0 0
        %8940 = vmatmul.mubr.bf16.gmra.mxu0 %v8754
        %v8941 = vpop.f32.mrf.mxu0
        %v8942 = vadd.f32 0.0, %v8941
        %v8943 = vpop.f32.mrf.mxu0
        %v8944 = vpop.f32.mrf.mxu0
        %v8945 = vadd.f32 0.0, %v8944
        %v8946 = vpop.f32.mrf.mxu0
        %8947 = vmatprep.mubr.bf16.mxu0 0
        %8948 = vmatmul.mubr.bf16.gmra.mxu0 %v8757
        %v8949 = vpop.f32.mrf.mxu0
        %v8950 = vadd.f32 0.0, %v8949
        %v8951 = vpop.f32.mrf.mxu0
        %v8952 = vpop.f32.mrf.mxu0
        %v8953 = vadd.f32 0.0, %v8952
        %v8954 = vpop.f32.mrf.mxu0
        %8955 = vmatprep.mubr.bf16.mxu0 0
        %8956 = vmatmul.mubr.bf16.gmra.mxu0 %v8760
        %v8957 = vpop.f32.mrf.mxu0
        %v8958 = vadd.f32 0.0, %v8957
        %v8959 = vpop.f32.mrf.mxu0
        %v8960 = vpop.f32.mrf.mxu0
        %v8961 = vadd.f32 0.0, %v8960
        %v8962 = vpop.f32.mrf.mxu0
        %8963 = vmatprep.mubr.bf16.mxu0 0
        %8964 = vmatmul.mubr.bf16.gmra.mxu0 %v8763
        %v8965 = vpop.f32.mrf.mxu0
        %v8966 = vadd.f32 0.0, %v8965
        %v8967 = vpop.f32.mrf.mxu0
        %v8968 = vpop.f32.mrf.mxu0
        %v8969 = vadd.f32 0.0, %v8968
        %v8970 = vpop.f32.mrf.mxu0
        %8971 = vmatprep.mubr.bf16.mxu0 0
        %8972 = vmatmul.mubr.bf16.gmra.mxu0 %v8766
        %v8973 = vpop.f32.mrf.mxu0
        %v8974 = vadd.f32 0.0, %v8973
        %v8975 = vpop.f32.mrf.mxu0
        %v8976 = vpop.f32.mrf.mxu0
        %v8977 = vadd.f32 0.0, %v8976
        %v8978 = vpop.f32.mrf.mxu0
        %8979 = vmatprep.mubr.bf16.mxu0 0
        %8980 = vmatmul.mubr.bf16.gmra.mxu0 %v8769
        %v8981 = vpop.f32.mrf.mxu0
        %v8982 = vadd.f32 0.0, %v8981
        %v8983 = vpop.f32.mrf.mxu0
        %v8984 = vpop.f32.mrf.mxu0
        %v8985 = vadd.f32 0.0, %v8984
        %v8986 = vpop.f32.mrf.mxu0
        %8987 = vmatprep.mubr.bf16.mxu0 0
        %8988 = vmatmul.mubr.bf16.gmra.mxu0 %v8772
        %v8989 = vpop.f32.mrf.mxu0
        %v8990 = vadd.f32 0.0, %v8989
        %v8991 = vpop.f32.mrf.mxu0
        %v8992 = vpop.f32.mrf.mxu0
        %v8993 = vadd.f32 0.0, %v8992
        %v8994 = vpop.f32.mrf.mxu0
        %8995 = vmatprep.mubr.bf16.mxu0 0
        %8996 = vmatmul.mubr.bf16.gmra.mxu0 %v8775
        %v8997 = vpop.f32.mrf.mxu0
        %v8998 = vadd.f32 0.0, %v8997
        %v8999 = vpop.f32.mrf.mxu0
        %v9000 = vpop.f32.mrf.mxu0
        %v9001 = vadd.f32 0.0, %v9000
        %v9002 = vpop.f32.mrf.mxu0
        %9003 = vmatprep.mubr.bf16.mxu0 0
        %9004 = vmatmul.mubr.bf16.gmra.mxu0 %v8778
        %v9005 = vpop.f32.mrf.mxu0
        %v9006 = vadd.f32 0.0, %v9005
        %v9007 = vpop.f32.mrf.mxu0
        %v9008 = vpop.f32.mrf.mxu0
        %v9009 = vadd.f32 0.0, %v9008
        %v9010 = vpop.f32.mrf.mxu0
        %9011 = vmatprep.mubr.bf16.mxu0 0
        %9012 = vmatmul.mubr.bf16.gmra.mxu0 %v8781
        %v9013 = vpop.f32.mrf.mxu0
        %v9014 = vadd.f32 0.0, %v9013
        %v9015 = vpop.f32.mrf.mxu0
        %v9016 = vpop.f32.mrf.mxu0
        %v9017 = vadd.f32 0.0, %v9016
        %v9018 = vpop.f32.mrf.mxu0
        %9019 = vmatprep.mubr.bf16.mxu0 0
        %9020 = vmatmul.mubr.bf16.gmra.mxu0 %v8784
        %v9021 = vpop.f32.mrf.mxu0
        %v9022 = vadd.f32 0.0, %v9021
        %v9023 = vpop.f32.mrf.mxu0
        %v9024 = vpop.f32.mrf.mxu0
        %v9025 = vadd.f32 0.0, %v9024
        %v9026 = vpop.f32.mrf.mxu0
        %9027 = vmatprep.mubr.bf16.mxu0 0
        %9028 = vmatmul.mubr.bf16.gmra.mxu0 %v8787
        %v9029 = vpop.f32.mrf.mxu0
        %v9030 = vadd.f32 0.0, %v9029
        %v9031 = vpop.f32.mrf.mxu0
        %v9032 = vpop.f32.mrf.mxu0
        %v9033 = vadd.f32 0.0, %v9032
        %v9034 = vpop.f32.mrf.mxu0
        %9035 = vmatprep.mubr.bf16.mxu0 0
        %9036 = vmatmul.mubr.bf16.gmra.mxu0 %v8790
        %v9037 = vpop.f32.mrf.mxu0
        %v9038 = vadd.f32 0.0, %v9037
        %v9039 = vpop.f32.mrf.mxu0
        %v9040 = vpop.f32.mrf.mxu0
        %v9041 = vadd.f32 0.0, %v9040
        %v9042 = vpop.f32.mrf.mxu0
        %9043 = vmatprep.mubr.bf16.mxu0 0
        %9044 = vmatmul.mubr.bf16.gmra.mxu0 %v8793
        %v9045 = vpop.f32.mrf.mxu0
        %v9046 = vadd.f32 0.0, %v9045
        %v9047 = vpop.f32.mrf.mxu0
        %v9048 = vpop.f32.mrf.mxu0
        %v9049 = vadd.f32 0.0, %v9048
        %v9050 = vpop.f32.mrf.mxu0
        %9051 = vmatprep.mubr.bf16.mxu0 0
        %9052 = vmatmul.mubr.bf16.gmra.mxu0 %v8796
        %v9053 = vpop.f32.mrf.mxu0
        %v9054 = vadd.f32 0.0, %v9053
        %v9055 = vpop.f32.mrf.mxu0
        %v9056 = vpop.f32.mrf.mxu0
        %v9057 = vadd.f32 0.0, %v9056
        %v9058 = vpop.f32.mrf.mxu0
        %9059 = vmatprep.mubr.bf16.mxu0 0
        %9060 = vmatmul.mubr.bf16.gmra.mxu0 %v8799
        %v9061 = vpop.f32.mrf.mxu0
        %v9062 = vadd.f32 0.0, %v9061
        %v9063 = vpop.f32.mrf.mxu0
        %v9064 = vpop.f32.mrf.mxu0
        %v9065 = vadd.f32 0.0, %v9064
        %v9066 = vpop.f32.mrf.mxu0
        %9067 = vmatprep.mubr.bf16.mxu0 0
        %9068 = vmatmul.mubr.bf16.gmra.mxu0 %v8802
        %v9069 = vpop.f32.mrf.mxu0
        %v9070 = vadd.f32 0.0, %v9069
        %v9071 = vpop.f32.mrf.mxu0
        %v9072 = vpop.f32.mrf.mxu0
        %v9073 = vadd.f32 0.0, %v9072
        %v9074 = vpop.f32.mrf.mxu0
        %9075 = vmatprep.mubr.bf16.mxu0 0
        %9076 = vmatmul.mubr.bf16.gmra.mxu0 %v8805
        %v9077 = vpop.f32.mrf.mxu0
        %v9078 = vadd.f32 0.0, %v9077
        %v9079 = vpop.f32.mrf.mxu0
        %v9080 = vpop.f32.mrf.mxu0
        %v9081 = vadd.f32 0.0, %v9080
        %v9082 = vpop.f32.mrf.mxu0
        %9083 = vmatprep.mubr.bf16.mxu0 0
        %9084 = vmatmul.mubr.bf16.gmra.mxu0 %v8808
        %v9085 = vpop.f32.mrf.mxu0
        %v9086 = vadd.f32 0.0, %v9085
        %v9087 = vpop.f32.mrf.mxu0
        %v9088 = vpop.f32.mrf.mxu0
        %v9089 = vadd.f32 0.0, %v9088
        %v9090 = vpop.f32.mrf.mxu0
        %9091 = vmatprep.mubr.bf16.mxu0 0
        %9092 = vmatmul.mubr.bf16.gmra.mxu0 %v8811
        %v9093 = vpop.f32.mrf.mxu0
        %v9094 = vadd.f32 0.0, %v9093
        %v9095 = vpop.f32.mrf.mxu0
        %v9096 = vpop.f32.mrf.mxu0
        %v9097 = vadd.f32 0.0, %v9096
        %v9098 = vpop.f32.mrf.mxu0
        %9099 = vmatprep.mubr.bf16.mxu0 0
        %9100 = vmatmul.mubr.bf16.gmra.mxu0 %v8814
        %v9101 = vpop.f32.mrf.mxu0
        %v9102 = vadd.f32 0.0, %v9101
        %v9103 = vpop.f32.mrf.mxu0
        %v9104 = vpop.f32.mrf.mxu0
        %v9105 = vadd.f32 0.0, %v9104
        %v9106 = vpop.f32.mrf.mxu0
        %9107 = vdwg.mxu0
        %v9108 = vadd.f32 %v8557, %v8854
        %v9109 = vadd.f32 %v8558, %v8857
        %v9110 = vadd.f32 %v8559, %v8862
        %v9111 = vadd.f32 %v8560, %v8865
        %v9112 = vadd.f32 %v8561, %v8870
        %v9113 = vadd.f32 %v8562, %v8873
        %v9114 = vadd.f32 %v8563, %v8878
        %v9115 = vadd.f32 %v8564, %v8881
        %v9116 = vadd.f32 %v8565, %v8886
        %v9117 = vadd.f32 %v8566, %v8889
        %v9118 = vadd.f32 %v8567, %v8894
        %v9119 = vadd.f32 %v8568, %v8897
        %v9120 = vadd.f32 %v8569, %v8902
        %v9121 = vadd.f32 %v8570, %v8905
        %v9122 = vadd.f32 %v8571, %v8910
        %v9123 = vadd.f32 %v8572, %v8913
        %v9124 = vadd.f32 %v8573, %v8918
        %v9125 = vadd.f32 %v8574, %v8921
        %v9126 = vadd.f32 %v8575, %v8926
        %v9127 = vadd.f32 %v8576, %v8929
        %v9128 = vadd.f32 %v8577, %v8934
        %v9129 = vadd.f32 %v8578, %v8937
        %v9130 = vadd.f32 %v8579, %v8942
        %v9131 = vadd.f32 %v8580, %v8945
        %v9132 = vadd.f32 %v8581, %v8950
        %v9133 = vadd.f32 %v8582, %v8953
        %v9134 = vadd.f32 %v8583, %v8958
        %v9135 = vadd.f32 %v8584, %v8961
        %v9136 = vadd.f32 %v8585, %v8966
        %v9137 = vadd.f32 %v8586, %v8969
        %v9138 = vadd.f32 %v8587, %v8974
        %v9139 = vadd.f32 %v8588, %v8977
        %v9140 = vadd.f32 %v8589, %v8982
        %v9141 = vadd.f32 %v8590, %v8985
        %v9142 = vadd.f32 %v8591, %v8990
        %v9143 = vadd.f32 %v8592, %v8993
        %v9144 = vadd.f32 %v8593, %v8998
        %v9145 = vadd.f32 %v8594, %v9001
        %v9146 = vadd.f32 %v8595, %v9006
        %v9147 = vadd.f32 %v8596, %v9009
        %v9148 = vadd.f32 %v8597, %v9014
        %v9149 = vadd.f32 %v8598, %v9017
        %v9150 = vadd.f32 %v8599, %v9022
        %v9151 = vadd.f32 %v8600, %v9025
        %v9152 = vadd.f32 %v8601, %v9030
        %v9153 = vadd.f32 %v8602, %v9033
        %v9154 = vadd.f32 %v8603, %v9038
        %v9155 = vadd.f32 %v8604, %v9041
        %v9156 = vadd.f32 %v8605, %v9046
        %v9157 = vadd.f32 %v8606, %v9049
        %v9158 = vadd.f32 %v8607, %v9054
        %v9159 = vadd.f32 %v8608, %v9057
        %v9160 = vadd.f32 %v8609, %v9062
        %v9161 = vadd.f32 %v8610, %v9065
        %v9162 = vadd.f32 %v8611, %v9070
        %v9163 = vadd.f32 %v8612, %v9073
        %v9164 = vadd.f32 %v8613, %v9078
        %v9165 = vadd.f32 %v8614, %v9081
        %v9166 = vadd.f32 %v8615, %v9086
        %v9167 = vadd.f32 %v8616, %v9089
        %v9168 = vadd.f32 %v8617, %v9094
        %v9169 = vadd.f32 %v8618, %v9097
        %v9170 = vadd.f32 %v8619, %v9102
        %v9171 = vadd.f32 %v8620, %v9105
        %v9172 = vld [vmem:[%s8621 + $0x1] sm:$0xff]
        %v9173 = vld [vmem:[%s8621 + $0x11] sm:$0xff]
        %v9174 = vld [vmem:[%s8621 + $0x21] sm:$0xff]
        %v9175 = vld [vmem:[%s8621 + $0x31] sm:$0xff]
        %v9176 = vld [vmem:[%s8621 + $0x41] sm:$0xff]
        %v9177 = vld [vmem:[%s8621 + $0x51] sm:$0xff]
        %v9178 = vld [vmem:[%s8621 + $0x61] sm:$0xff]
        %v9179 = vld [vmem:[%s8621 + $0x71] sm:$0xff]
        %v9180 = vld [vmem:[%s8621 + $0xa1] sm:$0xff]
        %v9181 = vld [vmem:[%s8621 + $0xb1] sm:$0xff]
        %v9182 = vld [vmem:[%s8621 + $0xc1] sm:$0xff]
        %v9183 = vld [vmem:[%s8621 + $0xd1] sm:$0xff]
        %v9184 = vld [vmem:[%s8621 + $0xe1] sm:$0xff]
        %v9185 = vld [vmem:[%s8621 + $0xf1] sm:$0xff]
        %v9186 = vld [vmem:[%s8621 + $0x101] sm:$0xff]
        %v9187 = vld [vmem:[%s8621 + $0x111] sm:$0xff]
        %v9188 = vld [vmem:[%s8621 + $0x141] sm:$0xff]
        %v9189 = vld [vmem:[%s8621 + $0x151] sm:$0xff]
        %v9190 = vld [vmem:[%s8621 + $0x161] sm:$0xff]
        %v9191 = vld [vmem:[%s8621 + $0x171] sm:$0xff]
        %v9192 = vld [vmem:[%s8621 + $0x181] sm:$0xff]
        %v9193 = vld [vmem:[%s8621 + $0x191] sm:$0xff]
        %v9194 = vld [vmem:[%s8621 + $0x1a1] sm:$0xff]
        %v9195 = vld [vmem:[%s8621 + $0x1b1] sm:$0xff]
        %v9196 = vld [vmem:[%s8621 + $0x1e1] sm:$0xff]
        %v9197 = vld [vmem:[%s8621 + $0x1f1] sm:$0xff]
        %v9198 = vld [vmem:[%s8621 + $0x201] sm:$0xff]
        %v9199 = vld [vmem:[%s8621 + $0x211] sm:$0xff]
        %v9200 = vld [vmem:[%s8621 + $0x221] sm:$0xff]
        %v9201 = vld [vmem:[%s8621 + $0x231] sm:$0xff]
        %v9202 = vld [vmem:[%s8621 + $0x241] sm:$0xff]
        %v9203 = vld [vmem:[%s8621 + $0x251] sm:$0xff]
        %v9204 = vld [vmem:[%s8621 + $0x281] sm:$0xff]
        %v9205 = vld [vmem:[%s8621 + $0x291] sm:$0xff]
        %v9206 = vld [vmem:[%s8621 + $0x2a1] sm:$0xff]
        %v9207 = vld [vmem:[%s8621 + $0x2b1] sm:$0xff]
        %v9208 = vld [vmem:[%s8621 + $0x2c1] sm:$0xff]
        %v9209 = vld [vmem:[%s8621 + $0x2d1] sm:$0xff]
        %v9210 = vld [vmem:[%s8621 + $0x2e1] sm:$0xff]
        %v9211 = vld [vmem:[%s8621 + $0x2f1] sm:$0xff]
        %v9212 = vld [vmem:[%s8621 + $0x321] sm:$0xff]
        %v9213 = vld [vmem:[%s8621 + $0x331] sm:$0xff]
        %v9214 = vld [vmem:[%s8621 + $0x341] sm:$0xff]
        %v9215 = vld [vmem:[%s8621 + $0x351] sm:$0xff]
        %v9216 = vld [vmem:[%s8621 + $0x361] sm:$0xff]
        %v9217 = vld [vmem:[%s8621 + $0x371] sm:$0xff]
        %v9218 = vld [vmem:[%s8621 + $0x381] sm:$0xff]
        %v9219 = vld [vmem:[%s8621 + $0x391] sm:$0xff]
        %v9220 = vld [vmem:[%s8621 + $0x3c1] sm:$0xff]
        %v9221 = vld [vmem:[%s8621 + $0x3d1] sm:$0xff]
        %v9222 = vld [vmem:[%s8621 + $0x3e1] sm:$0xff]
        %v9223 = vld [vmem:[%s8621 + $0x3f1] sm:$0xff]
        %v9224 = vld [vmem:[%s8621 + $0x401] sm:$0xff]
        %v9225 = vld [vmem:[%s8621 + $0x411] sm:$0xff]
        %v9226 = vld [vmem:[%s8621 + $0x421] sm:$0xff]
        %v9227 = vld [vmem:[%s8621 + $0x431] sm:$0xff]
        %v9228 = vld [vmem:[%s8621 + $0x461] sm:$0xff]
        %v9229 = vld [vmem:[%s8621 + $0x471] sm:$0xff]
        %v9230 = vld [vmem:[%s8621 + $0x481] sm:$0xff]
        %v9231 = vld [vmem:[%s8621 + $0x491] sm:$0xff]
        %v9232 = vld [vmem:[%s8621 + $0x4a1] sm:$0xff]
        %v9233 = vld [vmem:[%s8621 + $0x4b1] sm:$0xff]
        %v9234 = vld [vmem:[%s8621 + $0x4c1] sm:$0xff]
        %v9235 = vld [vmem:[%s8621 + $0x4d1] sm:$0xff]
        %v9236 = vpack.c.bf16 %v9173, %v9172
        %v9237 = vpack.c.bf16 %v9175, %v9174
        %v9238 = vpack.c.bf16 %v9177, %v9176
        %v9239 = vpack.c.bf16 %v9179, %v9178
        %v9240 = vpack.c.bf16 %v9181, %v9180
        %v9241 = vpack.c.bf16 %v9183, %v9182
        %v9242 = vpack.c.bf16 %v9185, %v9184
        %v9243 = vpack.c.bf16 %v9187, %v9186
        %v9244 = vpack.c.bf16 %v9189, %v9188
        %v9245 = vpack.c.bf16 %v9191, %v9190
        %v9246 = vpack.c.bf16 %v9193, %v9192
        %v9247 = vpack.c.bf16 %v9195, %v9194
        %v9248 = vpack.c.bf16 %v9197, %v9196
        %v9249 = vpack.c.bf16 %v9199, %v9198
        %v9250 = vpack.c.bf16 %v9201, %v9200
        %v9251 = vpack.c.bf16 %v9203, %v9202
        %v9252 = vpack.c.bf16 %v9205, %v9204
        %v9253 = vpack.c.bf16 %v9207, %v9206
        %v9254 = vpack.c.bf16 %v9209, %v9208
        %v9255 = vpack.c.bf16 %v9211, %v9210
        %v9256 = vpack.c.bf16 %v9213, %v9212
        %v9257 = vpack.c.bf16 %v9215, %v9214
        %v9258 = vpack.c.bf16 %v9217, %v9216
        %v9259 = vpack.c.bf16 %v9219, %v9218
        %v9260 = vpack.c.bf16 %v9221, %v9220
        %v9261 = vpack.c.bf16 %v9223, %v9222
        %v9262 = vpack.c.bf16 %v9225, %v9224
        %v9263 = vpack.c.bf16 %v9227, %v9226
        %v9264 = vpack.c.bf16 %v9229, %v9228
        %v9265 = vpack.c.bf16 %v9231, %v9230
        %v9266 = vpack.c.bf16 %v9233, %v9232
        %v9267 = vpack.c.bf16 %v9235, %v9234
        %s9268 = scalar_lea.vmem %s3, 28
        %v9269 = vld [vmem:[%s9268] sm:$0xf]
        %v9271 = vsel %vm230, %v9236, 0
        %v9274 = vsel %vm230, %v9237, 0
        %v9277 = vsel %vm230, %v9238, 0
        %v9280 = vsel %vm230, %v9239, 0
        %v9283 = vsel %vm230, %v9240, 0
        %v9286 = vsel %vm230, %v9241, 0
        %v9289 = vsel %vm230, %v9242, 0
        %v9292 = vsel %vm230, %v9243, 0
        %v9295 = vsel %vm230, %v9244, 0
        %v9298 = vsel %vm230, %v9245, 0
        %v9301 = vsel %vm230, %v9246, 0
        %v9304 = vsel %vm230, %v9247, 0
        %v9307 = vsel %vm230, %v9248, 0
        %v9310 = vsel %vm230, %v9249, 0
        %v9313 = vsel %vm230, %v9250, 0
        %v9316 = vsel %vm230, %v9251, 0
        %v9319 = vsel %vm230, %v9252, 0
        %v9322 = vsel %vm230, %v9253, 0
        %v9325 = vsel %vm230, %v9254, 0
        %v9328 = vsel %vm230, %v9255, 0
        %v9331 = vsel %vm230, %v9256, 0
        %v9334 = vsel %vm230, %v9257, 0
        %v9337 = vsel %vm230, %v9258, 0
        %v9340 = vsel %vm230, %v9259, 0
        %v9343 = vsel %vm230, %v9260, 0
        %v9346 = vsel %vm230, %v9261, 0
        %v9349 = vsel %vm230, %v9262, 0
        %v9352 = vsel %vm230, %v9263, 0
        %v9355 = vsel %vm230, %v9264, 0
        %v9358 = vsel %vm230, %v9265, 0
        %v9361 = vsel %vm230, %v9266, 0
        %v9364 = vsel %vm230, %v9267, 0
        %v9367 = vsel %vm717, %v9269, 0
        %9369 = vmatprep.subr.bf16.mxu0 0
        %9370 = vmatpush1.bf16.msra.mxu0 0
        %9371 = vmatprep.subr.bf16.mxu0 0
        %9372 = vmatpush1.bf16.msra.mxu0 0
        %9373 = vmatprep.subr.bf16.mxu0 0
        %9374 = vmatpush1.bf16.msra.mxu0 0
        %9375 = vmatprep.subr.bf16.mxu0 0
        %9376 = vmatpush1.bf16.msra.mxu0 0
        %9377 = vmatprep.subr.bf16.mxu0 0
        %9378 = vmatpush1.bf16.msra.mxu0 0
        %9379 = vmatprep.subr.bf16.mxu0 0
        %9380 = vmatpush1.bf16.msra.mxu0 0
        %9381 = vmatprep.subr.bf16.mxu0 0
        %9382 = vmatpush1.bf16.msra.mxu0 0
        %9383 = vmatprep.subr.bf16.mxu0 0
        %9384 = vmatpush1.bf16.msra.mxu0 %v9367
        %9385 = vmatprep.subr.bf16.mxu0 0
        %9386 = vmatpush2.bf16.msra.mxu0 0
        %9387 = vmatprep.subr.bf16.mxu0 0
        %9388 = vmatpush2.bf16.msra.mxu0 0
        %9389 = vmatprep.subr.bf16.mxu0 0
        %9390 = vmatpush2.bf16.msra.mxu0 0
        %9391 = vmatprep.subr.bf16.mxu0 0
        %9392 = vmatpush2.bf16.msra.mxu0 0
        %9393 = vmatprep.subr.bf16.mxu0 0
        %9394 = vmatpush2.bf16.msra.mxu0 0
        %9395 = vmatprep.subr.bf16.mxu0 0
        %9396 = vmatpush2.bf16.msra.mxu0 0
        %9397 = vmatprep.subr.bf16.mxu0 0
        %9398 = vmatpush2.bf16.msra.mxu0 0
        %9399 = vmatprep.subr.bf16.mxu0 0
        %9400 = vmatpush2.bf16.msra.mxu0 0
        %9401 = vmatprep.mubr.bf16.mxu0 0
        %9402 = vmatmul.mubr.bf16.gmra.mxu0 %v9271
        %v9403 = vpop.f32.mrf.mxu0
        %v9404 = vadd.f32 0.0, %v9403
        %v9405 = vpop.f32.mrf.mxu0
        %v9406 = vpop.f32.mrf.mxu0
        %v9407 = vadd.f32 0.0, %v9406
        %v9408 = vpop.f32.mrf.mxu0
        %9409 = vmatprep.mubr.bf16.mxu0 0
        %9410 = vmatmul.mubr.bf16.gmra.mxu0 %v9274
        %v9411 = vpop.f32.mrf.mxu0
        %v9412 = vadd.f32 0.0, %v9411
        %v9413 = vpop.f32.mrf.mxu0
        %v9414 = vpop.f32.mrf.mxu0
        %v9415 = vadd.f32 0.0, %v9414
        %v9416 = vpop.f32.mrf.mxu0
        %9417 = vmatprep.mubr.bf16.mxu0 0
        %9418 = vmatmul.mubr.bf16.gmra.mxu0 %v9277
        %v9419 = vpop.f32.mrf.mxu0
        %v9420 = vadd.f32 0.0, %v9419
        %v9421 = vpop.f32.mrf.mxu0
        %v9422 = vpop.f32.mrf.mxu0
        %v9423 = vadd.f32 0.0, %v9422
        %v9424 = vpop.f32.mrf.mxu0
        %9425 = vmatprep.mubr.bf16.mxu0 0
        %9426 = vmatmul.mubr.bf16.gmra.mxu0 %v9280
        %v9427 = vpop.f32.mrf.mxu0
        %v9428 = vadd.f32 0.0, %v9427
        %v9429 = vpop.f32.mrf.mxu0
        %v9430 = vpop.f32.mrf.mxu0
        %v9431 = vadd.f32 0.0, %v9430
        %v9432 = vpop.f32.mrf.mxu0
        %9433 = vmatprep.mubr.bf16.mxu0 0
        %9434 = vmatmul.mubr.bf16.gmra.mxu0 %v9283
        %v9435 = vpop.f32.mrf.mxu0
        %v9436 = vadd.f32 0.0, %v9435
        %v9437 = vpop.f32.mrf.mxu0
        %v9438 = vpop.f32.mrf.mxu0
        %v9439 = vadd.f32 0.0, %v9438
        %v9440 = vpop.f32.mrf.mxu0
        %9441 = vmatprep.mubr.bf16.mxu0 0
        %9442 = vmatmul.mubr.bf16.gmra.mxu0 %v9286
        %v9443 = vpop.f32.mrf.mxu0
        %v9444 = vadd.f32 0.0, %v9443
        %v9445 = vpop.f32.mrf.mxu0
        %v9446 = vpop.f32.mrf.mxu0
        %v9447 = vadd.f32 0.0, %v9446
        %v9448 = vpop.f32.mrf.mxu0
        %9449 = vmatprep.mubr.bf16.mxu0 0
        %9450 = vmatmul.mubr.bf16.gmra.mxu0 %v9289
        %v9451 = vpop.f32.mrf.mxu0
        %v9452 = vadd.f32 0.0, %v9451
        %v9453 = vpop.f32.mrf.mxu0
        %v9454 = vpop.f32.mrf.mxu0
        %v9455 = vadd.f32 0.0, %v9454
        %v9456 = vpop.f32.mrf.mxu0
        %9457 = vmatprep.mubr.bf16.mxu0 0
        %9458 = vmatmul.mubr.bf16.gmra.mxu0 %v9292
        %v9459 = vpop.f32.mrf.mxu0
        %v9460 = vadd.f32 0.0, %v9459
        %v9461 = vpop.f32.mrf.mxu0
        %v9462 = vpop.f32.mrf.mxu0
        %v9463 = vadd.f32 0.0, %v9462
        %v9464 = vpop.f32.mrf.mxu0
        %9465 = vmatprep.mubr.bf16.mxu0 0
        %9466 = vmatmul.mubr.bf16.gmra.mxu0 %v9295
        %v9467 = vpop.f32.mrf.mxu0
        %v9468 = vadd.f32 0.0, %v9467
        %v9469 = vpop.f32.mrf.mxu0
        %v9470 = vpop.f32.mrf.mxu0
        %v9471 = vadd.f32 0.0, %v9470
        %v9472 = vpop.f32.mrf.mxu0
        %9473 = vmatprep.mubr.bf16.mxu0 0
        %9474 = vmatmul.mubr.bf16.gmra.mxu0 %v9298
        %v9475 = vpop.f32.mrf.mxu0
        %v9476 = vadd.f32 0.0, %v9475
        %v9477 = vpop.f32.mrf.mxu0
        %v9478 = vpop.f32.mrf.mxu0
        %v9479 = vadd.f32 0.0, %v9478
        %v9480 = vpop.f32.mrf.mxu0
        %9481 = vmatprep.mubr.bf16.mxu0 0
        %9482 = vmatmul.mubr.bf16.gmra.mxu0 %v9301
        %v9483 = vpop.f32.mrf.mxu0
        %v9484 = vadd.f32 0.0, %v9483
        %v9485 = vpop.f32.mrf.mxu0
        %v9486 = vpop.f32.mrf.mxu0
        %v9487 = vadd.f32 0.0, %v9486
        %v9488 = vpop.f32.mrf.mxu0
        %9489 = vmatprep.mubr.bf16.mxu0 0
        %9490 = vmatmul.mubr.bf16.gmra.mxu0 %v9304
        %v9491 = vpop.f32.mrf.mxu0
        %v9492 = vadd.f32 0.0, %v9491
        %v9493 = vpop.f32.mrf.mxu0
        %v9494 = vpop.f32.mrf.mxu0
        %v9495 = vadd.f32 0.0, %v9494
        %v9496 = vpop.f32.mrf.mxu0
        %9497 = vmatprep.mubr.bf16.mxu0 0
        %9498 = vmatmul.mubr.bf16.gmra.mxu0 %v9307
        %v9499 = vpop.f32.mrf.mxu0
        %v9500 = vadd.f32 0.0, %v9499
        %v9501 = vpop.f32.mrf.mxu0
        %v9502 = vpop.f32.mrf.mxu0
        %v9503 = vadd.f32 0.0, %v9502
        %v9504 = vpop.f32.mrf.mxu0
        %9505 = vmatprep.mubr.bf16.mxu0 0
        %9506 = vmatmul.mubr.bf16.gmra.mxu0 %v9310
        %v9507 = vpop.f32.mrf.mxu0
        %v9508 = vadd.f32 0.0, %v9507
        %v9509 = vpop.f32.mrf.mxu0
        %v9510 = vpop.f32.mrf.mxu0
        %v9511 = vadd.f32 0.0, %v9510
        %v9512 = vpop.f32.mrf.mxu0
        %9513 = vmatprep.mubr.bf16.mxu0 0
        %9514 = vmatmul.mubr.bf16.gmra.mxu0 %v9313
        %v9515 = vpop.f32.mrf.mxu0
        %v9516 = vadd.f32 0.0, %v9515
        %v9517 = vpop.f32.mrf.mxu0
        %v9518 = vpop.f32.mrf.mxu0
        %v9519 = vadd.f32 0.0, %v9518
        %v9520 = vpop.f32.mrf.mxu0
        %9521 = vmatprep.mubr.bf16.mxu0 0
        %9522 = vmatmul.mubr.bf16.gmra.mxu0 %v9316
        %v9523 = vpop.f32.mrf.mxu0
        %v9524 = vadd.f32 0.0, %v9523
        %v9525 = vpop.f32.mrf.mxu0
        %v9526 = vpop.f32.mrf.mxu0
        %v9527 = vadd.f32 0.0, %v9526
        %v9528 = vpop.f32.mrf.mxu0
        %9529 = vmatprep.mubr.bf16.mxu0 0
        %9530 = vmatmul.mubr.bf16.gmra.mxu0 %v9319
        %v9531 = vpop.f32.mrf.mxu0
        %v9532 = vadd.f32 0.0, %v9531
        %v9533 = vpop.f32.mrf.mxu0
        %v9534 = vpop.f32.mrf.mxu0
        %v9535 = vadd.f32 0.0, %v9534
        %v9536 = vpop.f32.mrf.mxu0
        %9537 = vmatprep.mubr.bf16.mxu0 0
        %9538 = vmatmul.mubr.bf16.gmra.mxu0 %v9322
        %v9539 = vpop.f32.mrf.mxu0
        %v9540 = vadd.f32 0.0, %v9539
        %v9541 = vpop.f32.mrf.mxu0
        %v9542 = vpop.f32.mrf.mxu0
        %v9543 = vadd.f32 0.0, %v9542
        %v9544 = vpop.f32.mrf.mxu0
        %9545 = vmatprep.mubr.bf16.mxu0 0
        %9546 = vmatmul.mubr.bf16.gmra.mxu0 %v9325
        %v9547 = vpop.f32.mrf.mxu0
        %v9548 = vadd.f32 0.0, %v9547
        %v9549 = vpop.f32.mrf.mxu0
        %v9550 = vpop.f32.mrf.mxu0
        %v9551 = vadd.f32 0.0, %v9550
        %v9552 = vpop.f32.mrf.mxu0
        %9553 = vmatprep.mubr.bf16.mxu0 0
        %9554 = vmatmul.mubr.bf16.gmra.mxu0 %v9328
        %v9555 = vpop.f32.mrf.mxu0
        %v9556 = vadd.f32 0.0, %v9555
        %v9557 = vpop.f32.mrf.mxu0
        %v9558 = vpop.f32.mrf.mxu0
        %v9559 = vadd.f32 0.0, %v9558
        %v9560 = vpop.f32.mrf.mxu0
        %9561 = vmatprep.mubr.bf16.mxu0 0
        %9562 = vmatmul.mubr.bf16.gmra.mxu0 %v9331
        %v9563 = vpop.f32.mrf.mxu0
        %v9564 = vadd.f32 0.0, %v9563
        %v9565 = vpop.f32.mrf.mxu0
        %v9566 = vpop.f32.mrf.mxu0
        %v9567 = vadd.f32 0.0, %v9566
        %v9568 = vpop.f32.mrf.mxu0
        %9569 = vmatprep.mubr.bf16.mxu0 0
        %9570 = vmatmul.mubr.bf16.gmra.mxu0 %v9334
        %v9571 = vpop.f32.mrf.mxu0
        %v9572 = vadd.f32 0.0, %v9571
        %v9573 = vpop.f32.mrf.mxu0
        %v9574 = vpop.f32.mrf.mxu0
        %v9575 = vadd.f32 0.0, %v9574
        %v9576 = vpop.f32.mrf.mxu0
        %9577 = vmatprep.mubr.bf16.mxu0 0
        %9578 = vmatmul.mubr.bf16.gmra.mxu0 %v9337
        %v9579 = vpop.f32.mrf.mxu0
        %v9580 = vadd.f32 0.0, %v9579
        %v9581 = vpop.f32.mrf.mxu0
        %v9582 = vpop.f32.mrf.mxu0
        %v9583 = vadd.f32 0.0, %v9582
        %v9584 = vpop.f32.mrf.mxu0
        %9585 = vmatprep.mubr.bf16.mxu0 0
        %9586 = vmatmul.mubr.bf16.gmra.mxu0 %v9340
        %v9587 = vpop.f32.mrf.mxu0
        %v9588 = vadd.f32 0.0, %v9587
        %v9589 = vpop.f32.mrf.mxu0
        %v9590 = vpop.f32.mrf.mxu0
        %v9591 = vadd.f32 0.0, %v9590
        %v9592 = vpop.f32.mrf.mxu0
        %9593 = vmatprep.mubr.bf16.mxu0 0
        %9594 = vmatmul.mubr.bf16.gmra.mxu0 %v9343
        %v9595 = vpop.f32.mrf.mxu0
        %v9596 = vadd.f32 0.0, %v9595
        %v9597 = vpop.f32.mrf.mxu0
        %v9598 = vpop.f32.mrf.mxu0
        %v9599 = vadd.f32 0.0, %v9598
        %v9600 = vpop.f32.mrf.mxu0
        %9601 = vmatprep.mubr.bf16.mxu0 0
        %9602 = vmatmul.mubr.bf16.gmra.mxu0 %v9346
        %v9603 = vpop.f32.mrf.mxu0
        %v9604 = vadd.f32 0.0, %v9603
        %v9605 = vpop.f32.mrf.mxu0
        %v9606 = vpop.f32.mrf.mxu0
        %v9607 = vadd.f32 0.0, %v9606
        %v9608 = vpop.f32.mrf.mxu0
        %9609 = vmatprep.mubr.bf16.mxu0 0
        %9610 = vmatmul.mubr.bf16.gmra.mxu0 %v9349
        %v9611 = vpop.f32.mrf.mxu0
        %v9612 = vadd.f32 0.0, %v9611
        %v9613 = vpop.f32.mrf.mxu0
        %v9614 = vpop.f32.mrf.mxu0
        %v9615 = vadd.f32 0.0, %v9614
        %v9616 = vpop.f32.mrf.mxu0
        %9617 = vmatprep.mubr.bf16.mxu0 0
        %9618 = vmatmul.mubr.bf16.gmra.mxu0 %v9352
        %v9619 = vpop.f32.mrf.mxu0
        %v9620 = vadd.f32 0.0, %v9619
        %v9621 = vpop.f32.mrf.mxu0
        %v9622 = vpop.f32.mrf.mxu0
        %v9623 = vadd.f32 0.0, %v9622
        %v9624 = vpop.f32.mrf.mxu0
        %9625 = vmatprep.mubr.bf16.mxu0 0
        %9626 = vmatmul.mubr.bf16.gmra.mxu0 %v9355
        %v9627 = vpop.f32.mrf.mxu0
        %v9628 = vadd.f32 0.0, %v9627
        %v9629 = vpop.f32.mrf.mxu0
        %v9630 = vpop.f32.mrf.mxu0
        %v9631 = vadd.f32 0.0, %v9630
        %v9632 = vpop.f32.mrf.mxu0
        %9633 = vmatprep.mubr.bf16.mxu0 0
        %9634 = vmatmul.mubr.bf16.gmra.mxu0 %v9358
        %v9635 = vpop.f32.mrf.mxu0
        %v9636 = vadd.f32 0.0, %v9635
        %v9637 = vpop.f32.mrf.mxu0
        %v9638 = vpop.f32.mrf.mxu0
        %v9639 = vadd.f32 0.0, %v9638
        %v9640 = vpop.f32.mrf.mxu0
        %9641 = vmatprep.mubr.bf16.mxu0 0
        %9642 = vmatmul.mubr.bf16.gmra.mxu0 %v9361
        %v9643 = vpop.f32.mrf.mxu0
        %v9644 = vadd.f32 0.0, %v9643
        %v9645 = vpop.f32.mrf.mxu0
        %v9646 = vpop.f32.mrf.mxu0
        %v9647 = vadd.f32 0.0, %v9646
        %v9648 = vpop.f32.mrf.mxu0
        %9649 = vmatprep.mubr.bf16.mxu0 0
        %9650 = vmatmul.mubr.bf16.gmra.mxu0 %v9364
        %v9651 = vpop.f32.mrf.mxu0
        %v9652 = vadd.f32 0.0, %v9651
        %v9653 = vpop.f32.mrf.mxu0
        %v9654 = vpop.f32.mrf.mxu0
        %v9655 = vadd.f32 0.0, %v9654
        %v9656 = vpop.f32.mrf.mxu0
        %9657 = vdwg.mxu0
        %v9658 = vadd.f32 %v9108, %v9404
        %v9659 = vadd.f32 %v9109, %v9407
        %v9660 = vadd.f32 %v9110, %v9412
        %v9661 = vadd.f32 %v9111, %v9415
        %v9662 = vadd.f32 %v9112, %v9420
        %v9663 = vadd.f32 %v9113, %v9423
        %v9664 = vadd.f32 %v9114, %v9428
        %v9665 = vadd.f32 %v9115, %v9431
        %v9666 = vadd.f32 %v9116, %v9436
        %v9667 = vadd.f32 %v9117, %v9439
        %v9668 = vadd.f32 %v9118, %v9444
        %v9669 = vadd.f32 %v9119, %v9447
        %v9670 = vadd.f32 %v9120, %v9452
        %v9671 = vadd.f32 %v9121, %v9455
        %v9672 = vadd.f32 %v9122, %v9460
        %v9673 = vadd.f32 %v9123, %v9463
        %v9674 = vadd.f32 %v9124, %v9468
        %v9675 = vadd.f32 %v9125, %v9471
        %v9676 = vadd.f32 %v9126, %v9476
        %v9677 = vadd.f32 %v9127, %v9479
        %v9678 = vadd.f32 %v9128, %v9484
        %v9679 = vadd.f32 %v9129, %v9487
        %v9680 = vadd.f32 %v9130, %v9492
        %v9681 = vadd.f32 %v9131, %v9495
        %v9682 = vadd.f32 %v9132, %v9500
        %v9683 = vadd.f32 %v9133, %v9503
        %v9684 = vadd.f32 %v9134, %v9508
        %v9685 = vadd.f32 %v9135, %v9511
        %v9686 = vadd.f32 %v9136, %v9516
        %v9687 = vadd.f32 %v9137, %v9519
        %v9688 = vadd.f32 %v9138, %v9524
        %v9689 = vadd.f32 %v9139, %v9527
        %v9690 = vadd.f32 %v9140, %v9532
        %v9691 = vadd.f32 %v9141, %v9535
        %v9692 = vadd.f32 %v9142, %v9540
        %v9693 = vadd.f32 %v9143, %v9543
        %v9694 = vadd.f32 %v9144, %v9548
        %v9695 = vadd.f32 %v9145, %v9551
        %v9696 = vadd.f32 %v9146, %v9556
        %v9697 = vadd.f32 %v9147, %v9559
        %v9698 = vadd.f32 %v9148, %v9564
        %v9699 = vadd.f32 %v9149, %v9567
        %v9700 = vadd.f32 %v9150, %v9572
        %v9701 = vadd.f32 %v9151, %v9575
        %v9702 = vadd.f32 %v9152, %v9580
        %v9703 = vadd.f32 %v9153, %v9583
        %v9704 = vadd.f32 %v9154, %v9588
        %v9705 = vadd.f32 %v9155, %v9591
        %v9706 = vadd.f32 %v9156, %v9596
        %v9707 = vadd.f32 %v9157, %v9599
        %v9708 = vadd.f32 %v9158, %v9604
        %v9709 = vadd.f32 %v9159, %v9607
        %v9710 = vadd.f32 %v9160, %v9612
        %v9711 = vadd.f32 %v9161, %v9615
        %v9712 = vadd.f32 %v9162, %v9620
        %v9713 = vadd.f32 %v9163, %v9623
        %v9714 = vadd.f32 %v9164, %v9628
        %v9715 = vadd.f32 %v9165, %v9631
        %v9716 = vadd.f32 %v9166, %v9636
        %v9717 = vadd.f32 %v9167, %v9639
        %v9718 = vadd.f32 %v9168, %v9644
        %v9719 = vadd.f32 %v9169, %v9647
        %v9720 = vadd.f32 %v9170, %v9652
        %v9721 = vadd.f32 %v9171, %v9655
        %v9722 = vld [vmem:[%s8621 + $0x2] sm:$0xff]
        %v9723 = vld [vmem:[%s8621 + $0x12] sm:$0xff]
        %v9724 = vld [vmem:[%s8621 + $0x22] sm:$0xff]
        %v9725 = vld [vmem:[%s8621 + $0x32] sm:$0xff]
        %v9726 = vld [vmem:[%s8621 + $0x42] sm:$0xff]
        %v9727 = vld [vmem:[%s8621 + $0x52] sm:$0xff]
        %v9728 = vld [vmem:[%s8621 + $0x62] sm:$0xff]
        %v9729 = vld [vmem:[%s8621 + $0x72] sm:$0xff]
        %v9730 = vld [vmem:[%s8621 + $0xa2] sm:$0xff]
        %v9731 = vld [vmem:[%s8621 + $0xb2] sm:$0xff]
        %v9732 = vld [vmem:[%s8621 + $0xc2] sm:$0xff]
        %v9733 = vld [vmem:[%s8621 + $0xd2] sm:$0xff]
        %v9734 = vld [vmem:[%s8621 + $0xe2] sm:$0xff]
        %v9735 = vld [vmem:[%s8621 + $0xf2] sm:$0xff]
        %v9736 = vld [vmem:[%s8621 + $0x102] sm:$0xff]
        %v9737 = vld [vmem:[%s8621 + $0x112] sm:$0xff]
        %v9738 = vld [vmem:[%s8621 + $0x142] sm:$0xff]
        %v9739 = vld [vmem:[%s8621 + $0x152] sm:$0xff]
        %v9740 = vld [vmem:[%s8621 + $0x162] sm:$0xff]
        %v9741 = vld [vmem:[%s8621 + $0x172] sm:$0xff]
        %v9742 = vld [vmem:[%s8621 + $0x182] sm:$0xff]
        %v9743 = vld [vmem:[%s8621 + $0x192] sm:$0xff]
        %v9744 = vld [vmem:[%s8621 + $0x1a2] sm:$0xff]
        %v9745 = vld [vmem:[%s8621 + $0x1b2] sm:$0xff]
        %v9746 = vld [vmem:[%s8621 + $0x1e2] sm:$0xff]
        %v9747 = vld [vmem:[%s8621 + $0x1f2] sm:$0xff]
        %v9748 = vld [vmem:[%s8621 + $0x202] sm:$0xff]
        %v9749 = vld [vmem:[%s8621 + $0x212] sm:$0xff]
        %v9750 = vld [vmem:[%s8621 + $0x222] sm:$0xff]
        %v9751 = vld [vmem:[%s8621 + $0x232] sm:$0xff]
        %v9752 = vld [vmem:[%s8621 + $0x242] sm:$0xff]
        %v9753 = vld [vmem:[%s8621 + $0x252] sm:$0xff]
        %v9754 = vld [vmem:[%s8621 + $0x282] sm:$0xff]
        %v9755 = vld [vmem:[%s8621 + $0x292] sm:$0xff]
        %v9756 = vld [vmem:[%s8621 + $0x2a2] sm:$0xff]
        %v9757 = vld [vmem:[%s8621 + $0x2b2] sm:$0xff]
        %v9758 = vld [vmem:[%s8621 + $0x2c2] sm:$0xff]
        %v9759 = vld [vmem:[%s8621 + $0x2d2] sm:$0xff]
        %v9760 = vld [vmem:[%s8621 + $0x2e2] sm:$0xff]
        %v9761 = vld [vmem:[%s8621 + $0x2f2] sm:$0xff]
        %v9762 = vld [vmem:[%s8621 + $0x322] sm:$0xff]
        %v9763 = vld [vmem:[%s8621 + $0x332] sm:$0xff]
        %v9764 = vld [vmem:[%s8621 + $0x342] sm:$0xff]
        %v9765 = vld [vmem:[%s8621 + $0x352] sm:$0xff]
        %v9766 = vld [vmem:[%s8621 + $0x362] sm:$0xff]
        %v9767 = vld [vmem:[%s8621 + $0x372] sm:$0xff]
        %v9768 = vld [vmem:[%s8621 + $0x382] sm:$0xff]
        %v9769 = vld [vmem:[%s8621 + $0x392] sm:$0xff]
        %v9770 = vld [vmem:[%s8621 + $0x3c2] sm:$0xff]
        %v9771 = vld [vmem:[%s8621 + $0x3d2] sm:$0xff]
        %v9772 = vld [vmem:[%s8621 + $0x3e2] sm:$0xff]
        %v9773 = vld [vmem:[%s8621 + $0x3f2] sm:$0xff]
        %v9774 = vld [vmem:[%s8621 + $0x402] sm:$0xff]
        %v9775 = vld [vmem:[%s8621 + $0x412] sm:$0xff]
        %v9776 = vld [vmem:[%s8621 + $0x422] sm:$0xff]
        %v9777 = vld [vmem:[%s8621 + $0x432] sm:$0xff]
        %v9778 = vld [vmem:[%s8621 + $0x462] sm:$0xff]
        %v9779 = vld [vmem:[%s8621 + $0x472] sm:$0xff]
        %v9780 = vld [vmem:[%s8621 + $0x482] sm:$0xff]
        %v9781 = vld [vmem:[%s8621 + $0x492] sm:$0xff]
        %v9782 = vld [vmem:[%s8621 + $0x4a2] sm:$0xff]
        %v9783 = vld [vmem:[%s8621 + $0x4b2] sm:$0xff]
        %v9784 = vld [vmem:[%s8621 + $0x4c2] sm:$0xff]
        %v9785 = vld [vmem:[%s8621 + $0x4d2] sm:$0xff]
        %v9786 = vpack.c.bf16 %v9723, %v9722
        %v9787 = vpack.c.bf16 %v9725, %v9724
        %v9788 = vpack.c.bf16 %v9727, %v9726
        %v9789 = vpack.c.bf16 %v9729, %v9728
        %v9790 = vpack.c.bf16 %v9731, %v9730
        %v9791 = vpack.c.bf16 %v9733, %v9732
        %v9792 = vpack.c.bf16 %v9735, %v9734
        %v9793 = vpack.c.bf16 %v9737, %v9736
        %v9794 = vpack.c.bf16 %v9739, %v9738
        %v9795 = vpack.c.bf16 %v9741, %v9740
        %v9796 = vpack.c.bf16 %v9743, %v9742
        %v9797 = vpack.c.bf16 %v9745, %v9744
        %v9798 = vpack.c.bf16 %v9747, %v9746
        %v9799 = vpack.c.bf16 %v9749, %v9748
        %v9800 = vpack.c.bf16 %v9751, %v9750
        %v9801 = vpack.c.bf16 %v9753, %v9752
        %v9802 = vpack.c.bf16 %v9755, %v9754
        %v9803 = vpack.c.bf16 %v9757, %v9756
        %v9804 = vpack.c.bf16 %v9759, %v9758
        %v9805 = vpack.c.bf16 %v9761, %v9760
        %v9806 = vpack.c.bf16 %v9763, %v9762
        %v9807 = vpack.c.bf16 %v9765, %v9764
        %v9808 = vpack.c.bf16 %v9767, %v9766
        %v9809 = vpack.c.bf16 %v9769, %v9768
        %v9810 = vpack.c.bf16 %v9771, %v9770
        %v9811 = vpack.c.bf16 %v9773, %v9772
        %v9812 = vpack.c.bf16 %v9775, %v9774
        %v9813 = vpack.c.bf16 %v9777, %v9776
        %v9814 = vpack.c.bf16 %v9779, %v9778
        %v9815 = vpack.c.bf16 %v9781, %v9780
        %v9816 = vpack.c.bf16 %v9783, %v9782
        %v9817 = vpack.c.bf16 %v9785, %v9784
        %s9818 = scalar_lea.vmem %s3, 32
        %v9819 = vld [vmem:[%s9818] sm:$0xf]
        %v9821 = vsel %vm230, %v9786, 0
        %v9824 = vsel %vm230, %v9787, 0
        %v9827 = vsel %vm230, %v9788, 0
        %v9830 = vsel %vm230, %v9789, 0
        %v9833 = vsel %vm230, %v9790, 0
        %v9836 = vsel %vm230, %v9791, 0
        %v9839 = vsel %vm230, %v9792, 0
        %v9842 = vsel %vm230, %v9793, 0
        %v9845 = vsel %vm230, %v9794, 0
        %v9848 = vsel %vm230, %v9795, 0
        %v9851 = vsel %vm230, %v9796, 0
        %v9854 = vsel %vm230, %v9797, 0
        %v9857 = vsel %vm230, %v9798, 0
        %v9860 = vsel %vm230, %v9799, 0
        %v9863 = vsel %vm230, %v9800, 0
        %v9866 = vsel %vm230, %v9801, 0
        %v9869 = vsel %vm230, %v9802, 0
        %v9872 = vsel %vm230, %v9803, 0
        %v9875 = vsel %vm230, %v9804, 0
        %v9878 = vsel %vm230, %v9805, 0
        %v9881 = vsel %vm230, %v9806, 0
        %v9884 = vsel %vm230, %v9807, 0
        %v9887 = vsel %vm230, %v9808, 0
        %v9890 = vsel %vm230, %v9809, 0
        %v9893 = vsel %vm230, %v9810, 0
        %v9896 = vsel %vm230, %v9811, 0
        %v9899 = vsel %vm230, %v9812, 0
        %v9902 = vsel %vm230, %v9813, 0
        %v9905 = vsel %vm230, %v9814, 0
        %v9908 = vsel %vm230, %v9815, 0
        %v9911 = vsel %vm230, %v9816, 0
        %v9914 = vsel %vm230, %v9817, 0
        %v9917 = vsel %vm717, %v9819, 0
        %9919 = vmatprep.subr.bf16.mxu0 0
        %9920 = vmatpush1.bf16.msra.mxu0 0
        %9921 = vmatprep.subr.bf16.mxu0 0
        %9922 = vmatpush1.bf16.msra.mxu0 0
        %9923 = vmatprep.subr.bf16.mxu0 0
        %9924 = vmatpush1.bf16.msra.mxu0 0
        %9925 = vmatprep.subr.bf16.mxu0 0
        %9926 = vmatpush1.bf16.msra.mxu0 0
        %9927 = vmatprep.subr.bf16.mxu0 0
        %9928 = vmatpush1.bf16.msra.mxu0 0
        %9929 = vmatprep.subr.bf16.mxu0 0
        %9930 = vmatpush1.bf16.msra.mxu0 0
        %9931 = vmatprep.subr.bf16.mxu0 0
        %9932 = vmatpush1.bf16.msra.mxu0 0
        %9933 = vmatprep.subr.bf16.mxu0 0
        %9934 = vmatpush1.bf16.msra.mxu0 %v9917
        %9935 = vmatprep.subr.bf16.mxu0 0
        %9936 = vmatpush2.bf16.msra.mxu0 0
        %9937 = vmatprep.subr.bf16.mxu0 0
        %9938 = vmatpush2.bf16.msra.mxu0 0
        %9939 = vmatprep.subr.bf16.mxu0 0
        %9940 = vmatpush2.bf16.msra.mxu0 0
        %9941 = vmatprep.subr.bf16.mxu0 0
        %9942 = vmatpush2.bf16.msra.mxu0 0
        %9943 = vmatprep.subr.bf16.mxu0 0
        %9944 = vmatpush2.bf16.msra.mxu0 0
        %9945 = vmatprep.subr.bf16.mxu0 0
        %9946 = vmatpush2.bf16.msra.mxu0 0
        %9947 = vmatprep.subr.bf16.mxu0 0
        %9948 = vmatpush2.bf16.msra.mxu0 0
        %9949 = vmatprep.subr.bf16.mxu0 0
        %9950 = vmatpush2.bf16.msra.mxu0 0
        %9951 = vmatprep.mubr.bf16.mxu0 0
        %9952 = vmatmul.mubr.bf16.gmra.mxu0 %v9821
        %v9953 = vpop.f32.mrf.mxu0
        %v9954 = vadd.f32 0.0, %v9953
        %v9955 = vpop.f32.mrf.mxu0
        %v9956 = vpop.f32.mrf.mxu0
        %v9957 = vadd.f32 0.0, %v9956
        %v9958 = vpop.f32.mrf.mxu0
        %9959 = vmatprep.mubr.bf16.mxu0 0
        %9960 = vmatmul.mubr.bf16.gmra.mxu0 %v9824
        %v9961 = vpop.f32.mrf.mxu0
        %v9962 = vadd.f32 0.0, %v9961
        %v9963 = vpop.f32.mrf.mxu0
        %v9964 = vpop.f32.mrf.mxu0
        %v9965 = vadd.f32 0.0, %v9964
        %v9966 = vpop.f32.mrf.mxu0
        %9967 = vmatprep.mubr.bf16.mxu0 0
        %9968 = vmatmul.mubr.bf16.gmra.mxu0 %v9827
        %v9969 = vpop.f32.mrf.mxu0
        %v9970 = vadd.f32 0.0, %v9969
        %v9971 = vpop.f32.mrf.mxu0
        %v9972 = vpop.f32.mrf.mxu0
        %v9973 = vadd.f32 0.0, %v9972
        %v9974 = vpop.f32.mrf.mxu0
        %9975 = vmatprep.mubr.bf16.mxu0 0
        %9976 = vmatmul.mubr.bf16.gmra.mxu0 %v9830
        %v9977 = vpop.f32.mrf.mxu0
        %v9978 = vadd.f32 0.0, %v9977
        %v9979 = vpop.f32.mrf.mxu0
        %v9980 = vpop.f32.mrf.mxu0
        %v9981 = vadd.f32 0.0, %v9980
        %v9982 = vpop.f32.mrf.mxu0
        %9983 = vmatprep.mubr.bf16.mxu0 0
        %9984 = vmatmul.mubr.bf16.gmra.mxu0 %v9833
        %v9985 = vpop.f32.mrf.mxu0
        %v9986 = vadd.f32 0.0, %v9985
        %v9987 = vpop.f32.mrf.mxu0
        %v9988 = vpop.f32.mrf.mxu0
        %v9989 = vadd.f32 0.0, %v9988
        %v9990 = vpop.f32.mrf.mxu0
        %9991 = vmatprep.mubr.bf16.mxu0 0
        %9992 = vmatmul.mubr.bf16.gmra.mxu0 %v9836
        %v9993 = vpop.f32.mrf.mxu0
        %v9994 = vadd.f32 0.0, %v9993
        %v9995 = vpop.f32.mrf.mxu0
        %v9996 = vpop.f32.mrf.mxu0
        %v9997 = vadd.f32 0.0, %v9996
        %v9998 = vpop.f32.mrf.mxu0
        %9999 = vmatprep.mubr.bf16.mxu0 0
        %10000 = vmatmul.mubr.bf16.gmra.mxu0 %v9839
        %v10001 = vpop.f32.mrf.mxu0
        %v10002 = vadd.f32 0.0, %v10001
        %v10003 = vpop.f32.mrf.mxu0
        %v10004 = vpop.f32.mrf.mxu0
        %v10005 = vadd.f32 0.0, %v10004
        %v10006 = vpop.f32.mrf.mxu0
        %10007 = vmatprep.mubr.bf16.mxu0 0
        %10008 = vmatmul.mubr.bf16.gmra.mxu0 %v9842
        %v10009 = vpop.f32.mrf.mxu0
        %v10010 = vadd.f32 0.0, %v10009
        %v10011 = vpop.f32.mrf.mxu0
        %v10012 = vpop.f32.mrf.mxu0
        %v10013 = vadd.f32 0.0, %v10012
        %v10014 = vpop.f32.mrf.mxu0
        %10015 = vmatprep.mubr.bf16.mxu0 0
        %10016 = vmatmul.mubr.bf16.gmra.mxu0 %v9845
        %v10017 = vpop.f32.mrf.mxu0
        %v10018 = vadd.f32 0.0, %v10017
        %v10019 = vpop.f32.mrf.mxu0
        %v10020 = vpop.f32.mrf.mxu0
        %v10021 = vadd.f32 0.0, %v10020
        %v10022 = vpop.f32.mrf.mxu0
        %10023 = vmatprep.mubr.bf16.mxu0 0
        %10024 = vmatmul.mubr.bf16.gmra.mxu0 %v9848
        %v10025 = vpop.f32.mrf.mxu0
        %v10026 = vadd.f32 0.0, %v10025
        %v10027 = vpop.f32.mrf.mxu0
        %v10028 = vpop.f32.mrf.mxu0
        %v10029 = vadd.f32 0.0, %v10028
        %v10030 = vpop.f32.mrf.mxu0
        %10031 = vmatprep.mubr.bf16.mxu0 0
        %10032 = vmatmul.mubr.bf16.gmra.mxu0 %v9851
        %v10033 = vpop.f32.mrf.mxu0
        %v10034 = vadd.f32 0.0, %v10033
        %v10035 = vpop.f32.mrf.mxu0
        %v10036 = vpop.f32.mrf.mxu0
        %v10037 = vadd.f32 0.0, %v10036
        %v10038 = vpop.f32.mrf.mxu0
        %10039 = vmatprep.mubr.bf16.mxu0 0
        %10040 = vmatmul.mubr.bf16.gmra.mxu0 %v9854
        %v10041 = vpop.f32.mrf.mxu0
        %v10042 = vadd.f32 0.0, %v10041
        %v10043 = vpop.f32.mrf.mxu0
        %v10044 = vpop.f32.mrf.mxu0
        %v10045 = vadd.f32 0.0, %v10044
        %v10046 = vpop.f32.mrf.mxu0
        %10047 = vmatprep.mubr.bf16.mxu0 0
        %10048 = vmatmul.mubr.bf16.gmra.mxu0 %v9857
        %v10049 = vpop.f32.mrf.mxu0
        %v10050 = vadd.f32 0.0, %v10049
        %v10051 = vpop.f32.mrf.mxu0
        %v10052 = vpop.f32.mrf.mxu0
        %v10053 = vadd.f32 0.0, %v10052
        %v10054 = vpop.f32.mrf.mxu0
        %10055 = vmatprep.mubr.bf16.mxu0 0
        %10056 = vmatmul.mubr.bf16.gmra.mxu0 %v9860
        %v10057 = vpop.f32.mrf.mxu0
        %v10058 = vadd.f32 0.0, %v10057
        %v10059 = vpop.f32.mrf.mxu0
        %v10060 = vpop.f32.mrf.mxu0
        %v10061 = vadd.f32 0.0, %v10060
        %v10062 = vpop.f32.mrf.mxu0
        %10063 = vmatprep.mubr.bf16.mxu0 0
        %10064 = vmatmul.mubr.bf16.gmra.mxu0 %v9863
        %v10065 = vpop.f32.mrf.mxu0
        %v10066 = vadd.f32 0.0, %v10065
        %v10067 = vpop.f32.mrf.mxu0
        %v10068 = vpop.f32.mrf.mxu0
        %v10069 = vadd.f32 0.0, %v10068
        %v10070 = vpop.f32.mrf.mxu0
        %10071 = vmatprep.mubr.bf16.mxu0 0
        %10072 = vmatmul.mubr.bf16.gmra.mxu0 %v9866
        %v10073 = vpop.f32.mrf.mxu0
        %v10074 = vadd.f32 0.0, %v10073
        %v10075 = vpop.f32.mrf.mxu0
        %v10076 = vpop.f32.mrf.mxu0
        %v10077 = vadd.f32 0.0, %v10076
        %v10078 = vpop.f32.mrf.mxu0
        %10079 = vmatprep.mubr.bf16.mxu0 0
        %10080 = vmatmul.mubr.bf16.gmra.mxu0 %v9869
        %v10081 = vpop.f32.mrf.mxu0
        %v10082 = vadd.f32 0.0, %v10081
        %v10083 = vpop.f32.mrf.mxu0
        %v10084 = vpop.f32.mrf.mxu0
        %v10085 = vadd.f32 0.0, %v10084
        %v10086 = vpop.f32.mrf.mxu0
        %10087 = vmatprep.mubr.bf16.mxu0 0
        %10088 = vmatmul.mubr.bf16.gmra.mxu0 %v9872
        %v10089 = vpop.f32.mrf.mxu0
        %v10090 = vadd.f32 0.0, %v10089
        %v10091 = vpop.f32.mrf.mxu0
        %v10092 = vpop.f32.mrf.mxu0
        %v10093 = vadd.f32 0.0, %v10092
        %v10094 = vpop.f32.mrf.mxu0
        %10095 = vmatprep.mubr.bf16.mxu0 0
        %10096 = vmatmul.mubr.bf16.gmra.mxu0 %v9875
        %v10097 = vpop.f32.mrf.mxu0
        %v10098 = vadd.f32 0.0, %v10097
        %v10099 = vpop.f32.mrf.mxu0
        %v10100 = vpop.f32.mrf.mxu0
        %v10101 = vadd.f32 0.0, %v10100
        %v10102 = vpop.f32.mrf.mxu0
        %10103 = vmatprep.mubr.bf16.mxu0 0
        %10104 = vmatmul.mubr.bf16.gmra.mxu0 %v9878
        %v10105 = vpop.f32.mrf.mxu0
        %v10106 = vadd.f32 0.0, %v10105
        %v10107 = vpop.f32.mrf.mxu0
        %v10108 = vpop.f32.mrf.mxu0
        %v10109 = vadd.f32 0.0, %v10108
        %v10110 = vpop.f32.mrf.mxu0
        %10111 = vmatprep.mubr.bf16.mxu0 0
        %10112 = vmatmul.mubr.bf16.gmra.mxu0 %v9881
        %v10113 = vpop.f32.mrf.mxu0
        %v10114 = vadd.f32 0.0, %v10113
        %v10115 = vpop.f32.mrf.mxu0
        %v10116 = vpop.f32.mrf.mxu0
        %v10117 = vadd.f32 0.0, %v10116
        %v10118 = vpop.f32.mrf.mxu0
        %10119 = vmatprep.mubr.bf16.mxu0 0
        %10120 = vmatmul.mubr.bf16.gmra.mxu0 %v9884
        %v10121 = vpop.f32.mrf.mxu0
        %v10122 = vadd.f32 0.0, %v10121
        %v10123 = vpop.f32.mrf.mxu0
        %v10124 = vpop.f32.mrf.mxu0
        %v10125 = vadd.f32 0.0, %v10124
        %v10126 = vpop.f32.mrf.mxu0
        %10127 = vmatprep.mubr.bf16.mxu0 0
        %10128 = vmatmul.mubr.bf16.gmra.mxu0 %v9887
        %v10129 = vpop.f32.mrf.mxu0
        %v10130 = vadd.f32 0.0, %v10129
        %v10131 = vpop.f32.mrf.mxu0
        %v10132 = vpop.f32.mrf.mxu0
        %v10133 = vadd.f32 0.0, %v10132
        %v10134 = vpop.f32.mrf.mxu0
        %10135 = vmatprep.mubr.bf16.mxu0 0
        %10136 = vmatmul.mubr.bf16.gmra.mxu0 %v9890
        %v10137 = vpop.f32.mrf.mxu0
        %v10138 = vadd.f32 0.0, %v10137
        %v10139 = vpop.f32.mrf.mxu0
        %v10140 = vpop.f32.mrf.mxu0
        %v10141 = vadd.f32 0.0, %v10140
        %v10142 = vpop.f32.mrf.mxu0
        %10143 = vmatprep.mubr.bf16.mxu0 0
        %10144 = vmatmul.mubr.bf16.gmra.mxu0 %v9893
        %v10145 = vpop.f32.mrf.mxu0
        %v10146 = vadd.f32 0.0, %v10145
        %v10147 = vpop.f32.mrf.mxu0
        %v10148 = vpop.f32.mrf.mxu0
        %v10149 = vadd.f32 0.0, %v10148
        %v10150 = vpop.f32.mrf.mxu0
        %10151 = vmatprep.mubr.bf16.mxu0 0
        %10152 = vmatmul.mubr.bf16.gmra.mxu0 %v9896
        %v10153 = vpop.f32.mrf.mxu0
        %v10154 = vadd.f32 0.0, %v10153
        %v10155 = vpop.f32.mrf.mxu0
        %v10156 = vpop.f32.mrf.mxu0
        %v10157 = vadd.f32 0.0, %v10156
        %v10158 = vpop.f32.mrf.mxu0
        %10159 = vmatprep.mubr.bf16.mxu0 0
        %10160 = vmatmul.mubr.bf16.gmra.mxu0 %v9899
        %v10161 = vpop.f32.mrf.mxu0
        %v10162 = vadd.f32 0.0, %v10161
        %v10163 = vpop.f32.mrf.mxu0
        %v10164 = vpop.f32.mrf.mxu0
        %v10165 = vadd.f32 0.0, %v10164
        %v10166 = vpop.f32.mrf.mxu0
        %10167 = vmatprep.mubr.bf16.mxu0 0
        %10168 = vmatmul.mubr.bf16.gmra.mxu0 %v9902
        %v10169 = vpop.f32.mrf.mxu0
        %v10170 = vadd.f32 0.0, %v10169
        %v10171 = vpop.f32.mrf.mxu0
        %v10172 = vpop.f32.mrf.mxu0
        %v10173 = vadd.f32 0.0, %v10172
        %v10174 = vpop.f32.mrf.mxu0
        %10175 = vmatprep.mubr.bf16.mxu0 0
        %10176 = vmatmul.mubr.bf16.gmra.mxu0 %v9905
        %v10177 = vpop.f32.mrf.mxu0
        %v10178 = vadd.f32 0.0, %v10177
        %v10179 = vpop.f32.mrf.mxu0
        %v10180 = vpop.f32.mrf.mxu0
        %v10181 = vadd.f32 0.0, %v10180
        %v10182 = vpop.f32.mrf.mxu0
        %10183 = vmatprep.mubr.bf16.mxu0 0
        %10184 = vmatmul.mubr.bf16.gmra.mxu0 %v9908
        %v10185 = vpop.f32.mrf.mxu0
        %v10186 = vadd.f32 0.0, %v10185
        %v10187 = vpop.f32.mrf.mxu0
        %v10188 = vpop.f32.mrf.mxu0
        %v10189 = vadd.f32 0.0, %v10188
        %v10190 = vpop.f32.mrf.mxu0
        %10191 = vmatprep.mubr.bf16.mxu0 0
        %10192 = vmatmul.mubr.bf16.gmra.mxu0 %v9911
        %v10193 = vpop.f32.mrf.mxu0
        %v10194 = vadd.f32 0.0, %v10193
        %v10195 = vpop.f32.mrf.mxu0
        %v10196 = vpop.f32.mrf.mxu0
        %v10197 = vadd.f32 0.0, %v10196
        %v10198 = vpop.f32.mrf.mxu0
        %10199 = vmatprep.mubr.bf16.mxu0 0
        %10200 = vmatmul.mubr.bf16.gmra.mxu0 %v9914
        %v10201 = vpop.f32.mrf.mxu0
        %v10202 = vadd.f32 0.0, %v10201
        %v10203 = vpop.f32.mrf.mxu0
        %v10204 = vpop.f32.mrf.mxu0
        %v10205 = vadd.f32 0.0, %v10204
        %v10206 = vpop.f32.mrf.mxu0
        %10207 = vdwg.mxu0
        %v10208 = vadd.f32 %v9658, %v9954
        %v10209 = vadd.f32 %v9659, %v9957
        %v10210 = vadd.f32 %v9660, %v9962
        %v10211 = vadd.f32 %v9661, %v9965
        %v10212 = vadd.f32 %v9662, %v9970
        %v10213 = vadd.f32 %v9663, %v9973
        %v10214 = vadd.f32 %v9664, %v9978
        %v10215 = vadd.f32 %v9665, %v9981
        %v10216 = vadd.f32 %v9666, %v9986
        %v10217 = vadd.f32 %v9667, %v9989
        %v10218 = vadd.f32 %v9668, %v9994
        %v10219 = vadd.f32 %v9669, %v9997
        %v10220 = vadd.f32 %v9670, %v10002
        %v10221 = vadd.f32 %v9671, %v10005
        %v10222 = vadd.f32 %v9672, %v10010
        %v10223 = vadd.f32 %v9673, %v10013
        %v10224 = vadd.f32 %v9674, %v10018
        %v10225 = vadd.f32 %v9675, %v10021
        %v10226 = vadd.f32 %v9676, %v10026
        %v10227 = vadd.f32 %v9677, %v10029
        %v10228 = vadd.f32 %v9678, %v10034
        %v10229 = vadd.f32 %v9679, %v10037
        %v10230 = vadd.f32 %v9680, %v10042
        %v10231 = vadd.f32 %v9681, %v10045
        %v10232 = vadd.f32 %v9682, %v10050
        %v10233 = vadd.f32 %v9683, %v10053
        %v10234 = vadd.f32 %v9684, %v10058
        %v10235 = vadd.f32 %v9685, %v10061
        %v10236 = vadd.f32 %v9686, %v10066
        %v10237 = vadd.f32 %v9687, %v10069
        %v10238 = vadd.f32 %v9688, %v10074
        %v10239 = vadd.f32 %v9689, %v10077
        %v10240 = vadd.f32 %v9690, %v10082
        %v10241 = vadd.f32 %v9691, %v10085
        %v10242 = vadd.f32 %v9692, %v10090
        %v10243 = vadd.f32 %v9693, %v10093
        %v10244 = vadd.f32 %v9694, %v10098
        %v10245 = vadd.f32 %v9695, %v10101
        %v10246 = vadd.f32 %v9696, %v10106
        %v10247 = vadd.f32 %v9697, %v10109
        %v10248 = vadd.f32 %v9698, %v10114
        %v10249 = vadd.f32 %v9699, %v10117
        %v10250 = vadd.f32 %v9700, %v10122
        %v10251 = vadd.f32 %v9701, %v10125
        %v10252 = vadd.f32 %v9702, %v10130
        %v10253 = vadd.f32 %v9703, %v10133
        %v10254 = vadd.f32 %v9704, %v10138
        %v10255 = vadd.f32 %v9705, %v10141
        %v10256 = vadd.f32 %v9706, %v10146
        %v10257 = vadd.f32 %v9707, %v10149
        %v10258 = vadd.f32 %v9708, %v10154
        %v10259 = vadd.f32 %v9709, %v10157
        %v10260 = vadd.f32 %v9710, %v10162
        %v10261 = vadd.f32 %v9711, %v10165
        %v10262 = vadd.f32 %v9712, %v10170
        %v10263 = vadd.f32 %v9713, %v10173
        %v10264 = vadd.f32 %v9714, %v10178
        %v10265 = vadd.f32 %v9715, %v10181
        %v10266 = vadd.f32 %v9716, %v10186
        %v10267 = vadd.f32 %v9717, %v10189
        %v10268 = vadd.f32 %v9718, %v10194
        %v10269 = vadd.f32 %v9719, %v10197
        %v10270 = vadd.f32 %v9720, %v10202
        %v10271 = vadd.f32 %v9721, %v10205
        %v10272 = vld [vmem:[%s4] sm:$0x1]
        %v10274 = vlaneseq
        %v10275 = vshrl.u32 %v10274, 7
        %v10276 = vsub.s32 0, %v10275
        %v10277 = vrot.slane %v10272, %v10276
        %v10279 = vadd.f32 %v10208, %v10277
        %v10280 = vadd.f32 %v10209, %v10277
        %v10281 = vadd.f32 %v10210, %v10277
        %v10282 = vadd.f32 %v10211, %v10277
        %v10283 = vadd.f32 %v10212, %v10277
        %v10284 = vadd.f32 %v10213, %v10277
        %v10285 = vadd.f32 %v10214, %v10277
        %v10286 = vadd.f32 %v10215, %v10277
        %v10287 = vadd.f32 %v10216, %v10277
        %v10288 = vadd.f32 %v10217, %v10277
        %v10289 = vadd.f32 %v10218, %v10277
        %v10290 = vadd.f32 %v10219, %v10277
        %v10291 = vadd.f32 %v10220, %v10277
        %v10292 = vadd.f32 %v10221, %v10277
        %v10293 = vadd.f32 %v10222, %v10277
        %v10294 = vadd.f32 %v10223, %v10277
        %v10295 = vadd.f32 %v10224, %v10277
        %v10296 = vadd.f32 %v10225, %v10277
        %v10297 = vadd.f32 %v10226, %v10277
        %v10298 = vadd.f32 %v10227, %v10277
        %v10299 = vadd.f32 %v10228, %v10277
        %v10300 = vadd.f32 %v10229, %v10277
        %v10301 = vadd.f32 %v10230, %v10277
        %v10302 = vadd.f32 %v10231, %v10277
        %v10303 = vadd.f32 %v10232, %v10277
        %v10304 = vadd.f32 %v10233, %v10277
        %v10305 = vadd.f32 %v10234, %v10277
        %v10306 = vadd.f32 %v10235, %v10277
        %v10307 = vadd.f32 %v10236, %v10277
        %v10308 = vadd.f32 %v10237, %v10277
        %v10309 = vadd.f32 %v10238, %v10277
        %v10310 = vadd.f32 %v10239, %v10277
        %v10311 = vadd.f32 %v10240, %v10277
        %v10312 = vadd.f32 %v10241, %v10277
        %v10313 = vadd.f32 %v10242, %v10277
        %v10314 = vadd.f32 %v10243, %v10277
        %v10315 = vadd.f32 %v10244, %v10277
        %v10316 = vadd.f32 %v10245, %v10277
        %v10317 = vadd.f32 %v10246, %v10277
        %v10318 = vadd.f32 %v10247, %v10277
        %v10319 = vadd.f32 %v10248, %v10277
        %v10320 = vadd.f32 %v10249, %v10277
        %v10321 = vadd.f32 %v10250, %v10277
        %v10322 = vadd.f32 %v10251, %v10277
        %v10323 = vadd.f32 %v10252, %v10277
        %v10324 = vadd.f32 %v10253, %v10277
        %v10325 = vadd.f32 %v10254, %v10277
        %v10326 = vadd.f32 %v10255, %v10277
        %v10327 = vadd.f32 %v10256, %v10277
        %v10328 = vadd.f32 %v10257, %v10277
        %v10329 = vadd.f32 %v10258, %v10277
        %v10330 = vadd.f32 %v10259, %v10277
        %v10331 = vadd.f32 %v10260, %v10277
        %v10332 = vadd.f32 %v10261, %v10277
        %v10333 = vadd.f32 %v10262, %v10277
        %v10334 = vadd.f32 %v10263, %v10277
        %v10335 = vadd.f32 %v10264, %v10277
        %v10336 = vadd.f32 %v10265, %v10277
        %v10337 = vadd.f32 %v10266, %v10277
        %v10338 = vadd.f32 %v10267, %v10277
        %v10339 = vadd.f32 %v10268, %v10277
        %v10340 = vadd.f32 %v10269, %v10277
        %v10341 = vadd.f32 %v10270, %v10277
        %v10342 = vadd.f32 %v10271, %v10277
        %v10343 = vmax.f32 %v10279, 0.0
        %v10344 = vmax.f32 %v10280, 0.0
        %v10345 = vmax.f32 %v10281, 0.0
        %v10346 = vmax.f32 %v10282, 0.0
        %v10347 = vmax.f32 %v10283, 0.0
        %v10348 = vmax.f32 %v10284, 0.0
        %v10349 = vmax.f32 %v10285, 0.0
        %v10350 = vmax.f32 %v10286, 0.0
        %v10351 = vmax.f32 %v10287, 0.0
        %v10352 = vmax.f32 %v10288, 0.0
        %v10353 = vmax.f32 %v10289, 0.0
        %v10354 = vmax.f32 %v10290, 0.0
        %v10355 = vmax.f32 %v10291, 0.0
        %v10356 = vmax.f32 %v10292, 0.0
        %v10357 = vmax.f32 %v10293, 0.0
        %v10358 = vmax.f32 %v10294, 0.0
        %v10359 = vmax.f32 %v10295, 0.0
        %v10360 = vmax.f32 %v10296, 0.0
        %v10361 = vmax.f32 %v10297, 0.0
        %v10362 = vmax.f32 %v10298, 0.0
        %v10363 = vmax.f32 %v10299, 0.0
        %v10364 = vmax.f32 %v10300, 0.0
        %v10365 = vmax.f32 %v10301, 0.0
        %v10366 = vmax.f32 %v10302, 0.0
        %v10367 = vmax.f32 %v10303, 0.0
        %v10368 = vmax.f32 %v10304, 0.0
        %v10369 = vmax.f32 %v10305, 0.0
        %v10370 = vmax.f32 %v10306, 0.0
        %v10371 = vmax.f32 %v10307, 0.0
        %v10372 = vmax.f32 %v10308, 0.0
        %v10373 = vmax.f32 %v10309, 0.0
        %v10374 = vmax.f32 %v10310, 0.0
        %v10375 = vmax.f32 %v10311, 0.0
        %v10376 = vmax.f32 %v10312, 0.0
        %v10377 = vmax.f32 %v10313, 0.0
        %v10378 = vmax.f32 %v10314, 0.0
        %v10379 = vmax.f32 %v10315, 0.0
        %v10380 = vmax.f32 %v10316, 0.0
        %v10381 = vmax.f32 %v10317, 0.0
        %v10382 = vmax.f32 %v10318, 0.0
        %v10383 = vmax.f32 %v10319, 0.0
        %v10384 = vmax.f32 %v10320, 0.0
        %v10385 = vmax.f32 %v10321, 0.0
        %v10386 = vmax.f32 %v10322, 0.0
        %v10387 = vmax.f32 %v10323, 0.0
        %v10388 = vmax.f32 %v10324, 0.0
        %v10389 = vmax.f32 %v10325, 0.0
        %v10390 = vmax.f32 %v10326, 0.0
        %v10391 = vmax.f32 %v10327, 0.0
        %v10392 = vmax.f32 %v10328, 0.0
        %v10393 = vmax.f32 %v10329, 0.0
        %v10394 = vmax.f32 %v10330, 0.0
        %v10395 = vmax.f32 %v10331, 0.0
        %v10396 = vmax.f32 %v10332, 0.0
        %v10397 = vmax.f32 %v10333, 0.0
        %v10398 = vmax.f32 %v10334, 0.0
        %v10399 = vmax.f32 %v10335, 0.0
        %v10400 = vmax.f32 %v10336, 0.0
        %v10401 = vmax.f32 %v10337, 0.0
        %v10402 = vmax.f32 %v10338, 0.0
        %v10403 = vmax.f32 %v10339, 0.0
        %v10404 = vmax.f32 %v10340, 0.0
        %v10405 = vmax.f32 %v10341, 0.0
        %v10406 = vmax.f32 %v10342, 0.0
        %10407 = vxpose.xlu0.b32.start [1/16] %v10343, 128
        %10408 = vxpose.xlu0.b32.cont [2/16] %v10344, 128
        %10409 = vxpose.xlu0.b32.cont [3/16] %v10345, 128
        %10410 = vxpose.xlu0.b32.cont [4/16] %v10346, 128
        %10411 = vxpose.xlu0.b32.cont [5/16] %v10347, 128
        %10412 = vxpose.xlu0.b32.cont [6/16] %v10348, 128
        %10413 = vxpose.xlu0.b32.cont [7/16] %v10349, 128
        %10414 = vxpose.xlu0.b32.cont [8/16] %v10350, 128
        %10415 = vxpose.xlu0.b32.cont [9/16] %v10351, 128
        %10416 = vxpose.xlu0.b32.cont [10/16] %v10352, 128
        %10417 = vxpose.xlu0.b32.cont [11/16] %v10353, 128
        %10418 = vxpose.xlu0.b32.cont [12/16] %v10354, 128
        %10419 = vxpose.xlu0.b32.cont [13/16] %v10355, 128
        %10420 = vxpose.xlu0.b32.cont [14/16] %v10356, 128
        %10421 = vxpose.xlu0.b32.cont [15/16] %v10357, 128
        %10422 = vxpose.xlu0.b32.end [16/16] %v10358, 128
        %v10423 = vpop.trf.xlu0
        %v10424 = vpop.trf.xlu0
        %v10425 = vpop.trf.xlu0
        %v10426 = vpop.trf.xlu0
        %v10427 = vpop.trf.xlu0
        %v10428 = vpop.trf.xlu0
        %v10429 = vpop.trf.xlu0
        %v10430 = vpop.trf.xlu0
        %v10431 = vpop.trf.xlu0
        %v10432 = vpop.trf.xlu0
        %v10433 = vpop.trf.xlu0
        %v10434 = vpop.trf.xlu0
        %v10435 = vpop.trf.xlu0
        %v10436 = vpop.trf.xlu0
        %v10437 = vpop.trf.xlu0
        %v10438 = vpop.trf.xlu0
        %10439 = vxpose.xlu0.b32.start [1/16] %v10359, 128
        %10440 = vxpose.xlu0.b32.cont [2/16] %v10360, 128
        %10441 = vxpose.xlu0.b32.cont [3/16] %v10361, 128
        %10442 = vxpose.xlu0.b32.cont [4/16] %v10362, 128
        %10443 = vxpose.xlu0.b32.cont [5/16] %v10363, 128
        %10444 = vxpose.xlu0.b32.cont [6/16] %v10364, 128
        %10445 = vxpose.xlu0.b32.cont [7/16] %v10365, 128
        %10446 = vxpose.xlu0.b32.cont [8/16] %v10366, 128
        %10447 = vxpose.xlu0.b32.cont [9/16] %v10367, 128
        %10448 = vxpose.xlu0.b32.cont [10/16] %v10368, 128
        %10449 = vxpose.xlu0.b32.cont [11/16] %v10369, 128
        %10450 = vxpose.xlu0.b32.cont [12/16] %v10370, 128
        %10451 = vxpose.xlu0.b32.cont [13/16] %v10371, 128
        %10452 = vxpose.xlu0.b32.cont [14/16] %v10372, 128
        %10453 = vxpose.xlu0.b32.cont [15/16] %v10373, 128
        %10454 = vxpose.xlu0.b32.end [16/16] %v10374, 128
        %v10455 = vpop.trf.xlu0
        %v10456 = vpop.trf.xlu0
        %v10457 = vpop.trf.xlu0
        %v10458 = vpop.trf.xlu0
        %v10459 = vpop.trf.xlu0
        %v10460 = vpop.trf.xlu0
        %v10461 = vpop.trf.xlu0
        %v10462 = vpop.trf.xlu0
        %v10463 = vpop.trf.xlu0
        %v10464 = vpop.trf.xlu0
        %v10465 = vpop.trf.xlu0
        %v10466 = vpop.trf.xlu0
        %v10467 = vpop.trf.xlu0
        %v10468 = vpop.trf.xlu0
        %v10469 = vpop.trf.xlu0
        %v10470 = vpop.trf.xlu0
        %10471 = vxpose.xlu0.b32.start [1/16] %v10375, 128
        %10472 = vxpose.xlu0.b32.cont [2/16] %v10376, 128
        %10473 = vxpose.xlu0.b32.cont [3/16] %v10377, 128
        %10474 = vxpose.xlu0.b32.cont [4/16] %v10378, 128
        %10475 = vxpose.xlu0.b32.cont [5/16] %v10379, 128
        %10476 = vxpose.xlu0.b32.cont [6/16] %v10380, 128
        %10477 = vxpose.xlu0.b32.cont [7/16] %v10381, 128
        %10478 = vxpose.xlu0.b32.cont [8/16] %v10382, 128
        %10479 = vxpose.xlu0.b32.cont [9/16] %v10383, 128
        %10480 = vxpose.xlu0.b32.cont [10/16] %v10384, 128
        %10481 = vxpose.xlu0.b32.cont [11/16] %v10385, 128
        %10482 = vxpose.xlu0.b32.cont [12/16] %v10386, 128
        %10483 = vxpose.xlu0.b32.cont [13/16] %v10387, 128
        %10484 = vxpose.xlu0.b32.cont [14/16] %v10388, 128
        %10485 = vxpose.xlu0.b32.cont [15/16] %v10389, 128
        %10486 = vxpose.xlu0.b32.end [16/16] %v10390, 128
        %v10487 = vpop.trf.xlu0
        %v10488 = vpop.trf.xlu0
        %v10489 = vpop.trf.xlu0
        %v10490 = vpop.trf.xlu0
        %v10491 = vpop.trf.xlu0
        %v10492 = vpop.trf.xlu0
        %v10493 = vpop.trf.xlu0
        %v10494 = vpop.trf.xlu0
        %v10495 = vpop.trf.xlu0
        %v10496 = vpop.trf.xlu0
        %v10497 = vpop.trf.xlu0
        %v10498 = vpop.trf.xlu0
        %v10499 = vpop.trf.xlu0
        %v10500 = vpop.trf.xlu0
        %v10501 = vpop.trf.xlu0
        %v10502 = vpop.trf.xlu0
        %10503 = vxpose.xlu0.b32.start [1/16] %v10391, 128
        %10504 = vxpose.xlu0.b32.cont [2/16] %v10392, 128
        %10505 = vxpose.xlu0.b32.cont [3/16] %v10393, 128
        %10506 = vxpose.xlu0.b32.cont [4/16] %v10394, 128
        %10507 = vxpose.xlu0.b32.cont [5/16] %v10395, 128
        %10508 = vxpose.xlu0.b32.cont [6/16] %v10396, 128
        %10509 = vxpose.xlu0.b32.cont [7/16] %v10397, 128
        %10510 = vxpose.xlu0.b32.cont [8/16] %v10398, 128
        %10511 = vxpose.xlu0.b32.cont [9/16] %v10399, 128
        %10512 = vxpose.xlu0.b32.cont [10/16] %v10400, 128
        %10513 = vxpose.xlu0.b32.cont [11/16] %v10401, 128
        %10514 = vxpose.xlu0.b32.cont [12/16] %v10402, 128
        %10515 = vxpose.xlu0.b32.cont [13/16] %v10403, 128
        %10516 = vxpose.xlu0.b32.cont [14/16] %v10404, 128
        %10517 = vxpose.xlu0.b32.cont [15/16] %v10405, 128
        %10518 = vxpose.xlu0.b32.end [16/16] %v10406, 128
        %v10519 = vpop.trf.xlu0
        %v10520 = vpop.trf.xlu0
        %v10521 = vpop.trf.xlu0
        %v10522 = vpop.trf.xlu0
        %v10523 = vpop.trf.xlu0
        %v10524 = vpop.trf.xlu0
        %v10525 = vpop.trf.xlu0
        %v10526 = vpop.trf.xlu0
        %v10527 = vpop.trf.xlu0
        %v10528 = vpop.trf.xlu0
        %v10529 = vpop.trf.xlu0
        %v10530 = vpop.trf.xlu0
        %v10531 = vpop.trf.xlu0
        %v10532 = vpop.trf.xlu0
        %v10533 = vpop.trf.xlu0
        %v10534 = vpop.trf.xlu0
        %v10535 = vpack.c.bf16 %v10423, %v10423
        %v10536 = vpack.c.bf16 %v10455, %v10455
        %v10537 = vpack.c.bf16 %v10487, %v10487
        %v10538 = vpack.c.bf16 %v10519, %v10519
        %v10543 = vunpack.c.l.b16 %v10535
        %v10544 = vunpack.c.l.b16 %v10536
        %v10545 = vunpack.c.l.b16 %v10537
        %v10546 = vunpack.c.l.b16 %v10538
        %v10547 = vpack.c.b16 %v10544, %v10543
        %v10548 = vpack.c.b16 %v10546, %v10545
        %10551 = vst [vmem:[%s220] sm:$0xff] %v10547
        %10552 = vst [vmem:[%s220 + $0x8] sm:$0xff] %v10548
        %s10553 = sand.u32 %s137, 1
        %s10554 = scalar_lea.sflag [#allocation4], %s10553
        %s10555 = sand.u32 %s137, 1
        %s10556 = smul.addr %s10555, 16
        %s10557 = scalar_lea.vmem [#allocation3], %s10556
        // Predicated region
        $region41: #{tpu_custom_call.1} parent=39 // pred_check
          %p10558 = pneg %p147
        $region42: #{tpu_custom_call.1} parent=39 // pred_check_branch
          %10560 = sbr.rel (%p10558) target = $region44
        $region43: #{tpu_custom_call.1} parent=39 // pred_region
          %s10561 = smul.u32 4, %s19
          %s10563 = ssub.s32 256, 256
          %10564 = vsyncadd %s10554, %s10563
          %s10565 = smul.addr %s10561, 64
          %s10566 = scalar_lea.hbm %s5, %s10565
          %s10568 = sshll.u32 %s10557, 4
          %s10569 = int_to_ptr.vmem [resolvable:$true] %s10568
          %10571 = dma.vmem_to_hbm [thread:$0]  %s10569, 256, %s10566, %s10554
        $region44: #{tpu_custom_call.1} parent=39 // pred_fallthru
          _
      $region40: #{tpu_custom_call.1} parent=5 // pred_fallthru
        _
      %p10572 = scmp.le.s32.totalorder 2, %s14
      // Predicated region
      $region45: #{tpu_custom_call.1} parent=5 // pred_check
        %p10573 = pneg %p10572
      $region46: #{tpu_custom_call.1} parent=5 // pred_check_branch
        %10575 = sbr.rel (%p10573) target = $region48
      $region47: #{tpu_custom_call.1} parent=5 // pred_region
        %s10576 = ssub.s32 %s14, 2
        // Predicated region
        $region49: #{tpu_custom_call.1} parent=47 // pred_check
          %p10577 = pneg %p153
        $region50: #{tpu_custom_call.1} parent=47 // pred_check_branch
          %10579 = sbr.rel (%p10577) target = $region52
        $region51: #{tpu_custom_call.1} parent=47 // pred_region
          %s10580 = sand.u32 %s138, 1
          %s10581 = scalar_lea.sflag [#allocation4], %s10580
          %s10582 = sand.u32 %s138, 1
          %s10583 = smul.addr %s10582, 16
          %s10584 = scalar_lea.vmem [#allocation3], %s10583
          %10585 = dma.done %s10581, 256
        $region52: #{tpu_custom_call.1} parent=47 // pred_fallthru
          _
      $region48: #{tpu_custom_call.1} parent=5 // pred_fallthru
        _
    $region6: #{tpu_custom_call.1} parent=1 // loop_footer
      %s18 = sadd.s32 1, %s14
    $region7: #{tpu_custom_call.1} parent=1 // loop_footer_branch
      %13 = sbr.rel target = $region3
    $region8: #{tpu_custom_call.1} parent=1 // loop_exit
      _
    %10586 = vsyncpa [#allocation4], 1
    %s10587 = scalar_lea.sflag [#allocation4], 1
    %10588 = vsyncpa %s10587, 1

</llo_original>
